<compile_context>
chip_gen: v7x
topology: tpu7x:2x2x1
jax: 0.10.0
libtpu: 0.0.40
codegen_flags: <defaults>
</compile_context>

<pallas_src>
import functools

import numpy as np
import jax
import jax.numpy as jnp
from jax.experimental import pallas as pl
from jax.experimental.pallas import tpu as pltpu

NUM_NEIGHBORS = 9
SIGMA = 4.0
_VMEM_LIMIT = 48 * 1024 * 1024     # above scoped default, safe on v5e/v6e/v7x


def _round_up(a, b):
    return ((a + b - 1) // b) * b


# ----------------------------------------------------------------------------
# 1. Tiled MXU matmul with fused bias + ReLU epilogue
# ----------------------------------------------------------------------------
def _matmul_kernel(a_ref, b_ref, bias_ref, o_ref, acc_ref, *, relu):
    @pl.when(pl.program_id(2) == 0)
    def _():
        acc_ref[...] = jnp.zeros_like(acc_ref)

    acc_ref[...] += jnp.dot(a_ref[...], b_ref[...],
                            preferred_element_type=jnp.float32)

    @pl.when(pl.program_id(2) == pl.num_programs(2) - 1)
    def _():
        r = acc_ref[...] + bias_ref[...]
        if relu:
            r = jnp.maximum(r, 0.0)
        o_ref[...] = r.astype(o_ref.dtype)


def pallas_matmul(a, b, bias=None, relu=False,
                  operand_dtype=jnp.bfloat16, out_dtype=jnp.float32,
                  tm=256, tn=256, tk=512):
    """[M, K] @ [K, N] (+ bias, ReLU) -> [M, N], tiled for the 256-wide MXU.

    Thin-K inputs use a full-K block (block dim == array dim is legal), so K
    is never padded with zero columns and the k grid axis collapses to 1.
    """
    m, k = a.shape
    k2, n = b.shape
    assert k == k2
    if k <= tk:                       # thin-K / moderate-K: single full-K block
        tk_eff, kp = k, k
    else:
        tk_eff, kp = tk, _round_up(k, tk)
    tm = min(tm, _round_up(m, 128))
    tn = min(tn, _round_up(n, 128))
    mp, np_ = _round_up(m, tm), _round_up(n, tn)

    a_p = jnp.pad(a.astype(operand_dtype), ((0, mp - m), (0, kp - k)))
    b_p = jnp.pad(b.astype(operand_dtype), ((0, kp - k), (0, np_ - n)))
    if bias is None:
        bias_p = jnp.zeros((1, np_), jnp.float32)
    else:
        bias_p = jnp.pad(bias.astype(jnp.float32).reshape(1, -1),
                         ((0, 0), (0, np_ - n)))

    out = pl.pallas_call(
        functools.partial(_matmul_kernel, relu=relu),
        grid=(mp // tm, np_ // tn, kp // tk_eff),
        in_specs=[
            pl.BlockSpec((tm, tk_eff), lambda i, j, kk: (i, kk)),
            pl.BlockSpec((tk_eff, tn), lambda i, j, kk: (kk, j)),
            pl.BlockSpec((1, tn), lambda i, j, kk: (0, j)),
        ],
        out_specs=pl.BlockSpec((tm, tn), lambda i, j, kk: (i, j)),
        out_shape=jax.ShapeDtypeStruct((mp, np_), out_dtype),
        scratch_shapes=[pltpu.VMEM((tm, tn), jnp.float32)],
        compiler_params=pltpu.CompilerParams(
            dimension_semantics=("parallel", "parallel", "arbitrary"),
            vmem_limit_bytes=_VMEM_LIMIT),
    )(a_p, b_p, bias_p)
    return out[:m, :n]


# ----------------------------------------------------------------------------
# 2. AvgPool2d(kernel=3, stride=1, pad=1), count_include_pad=True.
#    Zero halo is built in a VMEM scratch inside the kernel (no wrapper pad /
#    extra HBM round trip of the feature map); tiled over (batch, channels).
# ----------------------------------------------------------------------------
def pallas_avgpool3(x):
    """x: [B, H, W, C] float32 -> same shape, float32."""
    b, h, w, c = x.shape
    tc = 128 if c % 128 == 0 else c

    def kernel(x_ref, o_ref, pad_sc):
        pad_sc[...] = jnp.zeros_like(pad_sc)
        pad_sc[1:h + 1, 1:w + 1, :] = x_ref[0]                # interior copy
        vert = pad_sc[0:h] + pad_sc[1:h + 1] + pad_sc[2:h + 2]   # (H, W+2, TC)
        out = vert[:, 0:w] + vert[:, 1:w + 1] + vert[:, 2:w + 2]
        o_ref[0] = out * (1.0 / 9.0)

    return pl.pallas_call(
        kernel,
        grid=(b, c // tc),
        in_specs=[pl.BlockSpec((1, h, w, tc), lambda i, j: (i, 0, 0, j))],
        out_specs=pl.BlockSpec((1, h, w, tc), lambda i, j: (i, 0, 0, j)),
        out_shape=jax.ShapeDtypeStruct((b, h, w, c), jnp.float32),
        scratch_shapes=[pltpu.VMEM((h + 2, w + 2, tc), jnp.float32)],
        compiler_params=pltpu.CompilerParams(
            dimension_semantics=("parallel", "parallel"),
            vmem_limit_bytes=_VMEM_LIMIT),
    )(x.astype(jnp.float32))


# ----------------------------------------------------------------------------
# 3. Nearest neighbour search against the memory bank (exact 1-NN).
#    Tiled over (query tiles, bank tiles); running min/argmin of SQUARED
#    distances in VMEM scratch; no [N, M] matrix ever touches HBM.
#    The query matrix is pre-transposed to [Dp, Np] so the dot is a plain
#    (M,K)x(K,N) contraction on the MXU.
# ----------------------------------------------------------------------------
def _nn_kernel(xt_ref, xn_ref, y_ref, yn_ref, mind_ref, amin_ref,
               msq_sc, arg_sc, iota_sc):
    kk = pl.program_id(1)
    tm = y_ref.shape[0]

    @pl.when(kk == 0)
    def _():
        msq_sc[...] = jnp.full(msq_sc.shape, jnp.inf, jnp.float32)
        arg_sc[...] = jnp.zeros(arg_sc.shape, jnp.int32)
        iota_sc[...] = jax.lax.broadcasted_iota(jnp.int32, iota_sc.shape, 0)

    # -2 * y @ x^T as (TM, Dp) @ (Dp, TN): bf16 operands, f32 accumulation.
    xy = jnp.dot(y_ref[...], xt_ref[...], preferred_element_type=jnp.float32)
    d2 = yn_ref[...] - 2.0 * xy + xn_ref[...]                 # (TM, TN) f32

    tmin = jnp.min(d2, axis=0, keepdims=True)                 # (1, TN)
    loc = jnp.min(jnp.where(d2 <= tmin, iota_sc[...], jnp.int32(2 ** 30)),
                  axis=0, keepdims=True)                      # local row idx
    targ = loc + kk * tm                                      # global bank row

    better = tmin < msq_sc[...]
    arg_sc[...] = jnp.where(better, targ, arg_sc[...])
    msq_sc[...] = jnp.where(better, tmin, msq_sc[...])

    @pl.when(kk == pl.num_programs(1) - 1)
    def _():
        mind_ref[...] = msq_sc[...]
        amin_ref[...] = arg_sc[...]


def prepare_memory_bank(memory_bank, tm_max=512):
    """One-time bank preparation — call OUTSIDE the jitted forward.

    Returns a dict of arrays only (safe to pass through jit):
      y        [Mp, Dp] bf16 — operand for the -2*x@y^T MXU term
      y32      [Mp, Dp] f32  — exact copy for the tiny re-weighting distances
      norm_col [Mp, 1] / norm_row [1, Mp] f32 (padded rows get a huge norm)
    """
    m, d = memory_bank.shape
    dp = _round_up(d, 128)
    tm = min(tm_max, _round_up(m, 128))
    mp = _round_up(m, tm)
    y32 = jnp.pad(memory_bank.astype(jnp.float32), ((0, mp - m), (0, dp - d)))
    norm = jnp.sum(y32 * y32, axis=-1)
    norm = jnp.where(jnp.arange(mp) < m, norm, jnp.float32(1e30))
    return {"y": y32.astype(jnp.bfloat16), "y32": y32,
            "norm_col": norm[:, None], "norm_row": norm[None, :]}


def pallas_nearest_neighbors(x, bank, tn=512, tm_max=512):
    """x: [N, D] f32 embedding -> (min squared dist [N] f32, argmin [N] i32).

    TODO(synk): bf16 cross-term vs f32 torch.cdist can perturb ties for
                near-duplicate patches; kept bf16 here for MXU throughput.
    """
    n, d = x.shape
    mp, dp = bank["y"].shape
    tm = min(tm_max, mp)                      # same tiling rule as prepare_*
    tn = min(tn, _round_up(n, 128))
    np_ = _round_up(n, tn)

    xp = jnp.pad(x.astype(jnp.float32), ((0, np_ - n), (0, dp - d)))
    xnorm = jnp.sum(xp * xp, axis=-1)[None, :]                # (1, Np) f32
    x_t = xp.T.astype(jnp.bfloat16)                           # (Dp, Np) one-time

    n_tiles, m_tiles = np_ // tn, mp // tm
    minsq, amin = pl.pallas_call(
        _nn_kernel,
        grid=(n_tiles, m_tiles),
        in_specs=[
            pl.BlockSpec((dp, tn), lambda i, kk: (0, i)),     # query^T tile
            pl.BlockSpec((1, tn), lambda i, kk: (0, i)),      # |x|^2 row
            pl.BlockSpec((tm, dp), lambda i, kk: (kk, 0)),    # bank tile (bf16)
            pl.BlockSpec((tm, 1), lambda i, kk: (kk, 0)),     # |y|^2 col
        ],
        out_specs=[
            pl.BlockSpec((1, tn), lambda i, kk: (i, 0)),
            pl.BlockSpec((1, tn), lambda i, kk: (i, 0)),
        ],
        out_shape=(
            jax.ShapeDtypeStruct((n_tiles, tn), jnp.float32),  # lane-dense
            jax.ShapeDtypeStruct((n_tiles, tn), jnp.int32),
        ),
        scratch_shapes=[pltpu.VMEM((1, tn), jnp.float32),
                        pltpu.VMEM((1, tn), jnp.int32),
                        pltpu.VMEM((tm, tn), jnp.int32)],      # row iota
        compiler_params=pltpu.CompilerParams(
            dimension_semantics=("parallel", "arbitrary"),
            vmem_limit_bytes=_VMEM_LIMIT),
    )(x_t, xnorm, bank["y"], bank["norm_col"])
    return minsq.reshape(-1)[:n], amin.reshape(-1)[:n]


def _sqdist_kernel(q_ref, qn_ref, y_ref, yn_ref, o_ref):
    xy = jax.lax.dot_general(q_ref[...], y_ref[...], (((1,), (1,)), ((), ())),
                             preferred_element_type=jnp.float32)
    o_ref[...] = qn_ref[...] - 2.0 * xy + yn_ref[...]


def pallas_sq_dists(q, bank, m_true, tm_max=512):
    """Exact f32 squared distances from a few query rows to the whole bank."""
    nq, d = q.shape
    mp, dp = bank["y32"].shape
    tm = min(tm_max, mp)
    qp = _round_up(max(nq, 8), 8)

    qpad = jnp.pad(q.astype(jnp.float32), ((0, qp - nq), (0, dp - d)))
    qnorm = jnp.sum(qpad * qpad, axis=-1)[:, None]            # (Qp, 1)

    out = pl.pallas_call(
        _sqdist_kernel,
        grid=(mp // tm,),
        in_specs=[
            pl.BlockSpec((qp, dp), lambda kk: (0, 0)),
            pl.BlockSpec((qp, 1), lambda kk: (0, 0)),
            pl.BlockSpec((tm, dp), lambda kk: (kk, 0)),
            pl.BlockSpec((1, tm), lambda kk: (0, kk)),
        ],
        out_specs=pl.BlockSpec((qp, tm), lambda kk: (0, kk)),
        out_shape=jax.ShapeDtypeStruct((qp, mp), jnp.float32),
        compiler_params=pltpu.CompilerParams(
            dimension_semantics=("parallel",),
            vmem_limit_bytes=_VMEM_LIMIT),
    )(qpad, qnorm, bank["y32"], bank["norm_row"])
    return out[:nq, :m_true]


# ----------------------------------------------------------------------------
# 4. Separable multi-channel bilinear upsample (deep layer -> shallow layer
#    resolution), fused per image: row dot + batched column dot, grid over B.
# ----------------------------------------------------------------------------
def _upsample_kernel(mh_ref, mwb_ref, x_ref, o_ref):
    x = x_ref[0]                                              # (h2, w2, c2)
    h2, w2, c2 = x.shape
    h1 = mh_ref.shape[0]
    t = jnp.dot(mh_ref[...], x.reshape(h2, w2 * c2),
                preferred_element_type=jnp.float32)           # (h1, w2*c2)
    t = t.reshape(h1, w2, c2)
    # Batched over the h1 output rows: (w1, w2) @ (w2, c2) per row.
    out = jax.lax.dot_general(mwb_ref[...], t,
                              (((2,), (1,)), ((0,), (0,))),
                              preferred_element_type=jnp.float32)  # (h1, w1, c2)
    o_ref[0] = out


def pallas_bilinear_upsample(x, out_hw):
    """x: [B, h2, w2, C] f32 -> [B, h1, w1, C] (F.interpolate bilinear)."""
    b, h2, w2, c2 = x.shape
    h1, w1 = out_hw
    mh = jnp.asarray(_bilinear_matrix(h1, h2))                       # (h1, h2)
    mwb = jnp.asarray(np.broadcast_to(_bilinear_matrix(w1, w2),
                                      (h1, w1, w2)).copy())          # tiny
    return pl.pallas_call(
        _upsample_kernel,
        grid=(b,),
        in_specs=[
            pl.BlockSpec((h1, h2), lambda i: (0, 0)),
            pl.BlockSpec((h1, w1, w2), lambda i: (0, 0, 0)),
            pl.BlockSpec((1, h2, w2, c2), lambda i: (i, 0, 0, 0)),
        ],
        out_specs=pl.BlockSpec((1, h1, w1, c2), lambda i: (i, 0, 0, 0)),
        out_shape=jax.ShapeDtypeStruct((b, h1, w1, c2), jnp.float32),
        compiler_params=pltpu.CompilerParams(
            dimension_semantics=("parallel",),
            vmem_limit_bytes=_VMEM_LIMIT),
    )(mh, mwb, x.astype(jnp.float32))


# ----------------------------------------------------------------------------
# 5. Fused (bilinear upsample -> Gaussian blur) anomaly-map kernel.
#    Both are separable linear ops, composed into one per-axis operator; the
#    intermediate never leaves VMEM.
# ----------------------------------------------------------------------------
def _anomap_kernel(mh_ref, mwt_ref, s_ref, o_ref):
    t = jnp.dot(mh_ref[...], s_ref[0], preferred_element_type=jnp.float32)
    o_ref[0] = jnp.dot(t, mwt_ref[...], preferred_element_type=jnp.float32)


def pallas_anomaly_map(scores, mh, mwt):
    """scores: [B, P1, P2]; mh: [H, P1]; mwt: [P2, W] -> [B, H, W]."""
    b, p1, p2 = scores.shape
    hh = mh.shape[0]
    ww = mwt.shape[1]
    return pl.pallas_call(
        _anomap_kernel,
        grid=(b,),
        in_specs=[
            pl.BlockSpec((hh, p1), lambda i: (0, 0)),
            pl.BlockSpec((p2, ww), lambda i: (0, 0)),
            pl.BlockSpec((1, p1, p2), lambda i: (i, 0, 0)),
        ],
        out_specs=pl.BlockSpec((1, hh, ww), lambda i: (i, 0, 0)),
        out_shape=jax.ShapeDtypeStruct((b, hh, ww), jnp.float32),
        compiler_params=pltpu.CompilerParams(
            dimension_semantics=("parallel",),
            vmem_limit_bytes=_VMEM_LIMIT),
    )(mh, mwt, scores.astype(jnp.float32))


# ----------------------------------------------------------------------------
# Glue helpers (numpy parameter construction for resize / blur operators)
# ----------------------------------------------------------------------------
def _bilinear_matrix(out_len, in_len):
    """Row-interp matrix matching F.interpolate(mode='bilinear', align_corners=False)."""
    u = np.zeros((out_len, in_len), np.float32)
    if in_len == 1:
        u[:, 0] = 1.0
        return u
    scale = in_len / out_len
    for i in range(out_len):
        src = max((i + 0.5) * scale - 0.5, 0.0)
        i0 = int(np.floor(src))
        w = src - i0
        i0c = min(max(i0, 0), in_len - 1)
        i1c = min(max(i0 + 1, 0), in_len - 1)
        u[i, i0c] += 1.0 - w
        u[i, i1c] += w
    return u


def _gaussian_blur_matrix(n, sigma):
    """Dense 1D Gaussian-blur matrix with reflect padding (kornia-style)."""
    ksize = 2 * int(4.0 * sigma + 0.5) + 1
    x = np.arange(ksize, dtype=np.float64) - ksize // 2
    g = np.exp(-(x ** 2) / (2.0 * sigma ** 2))
    g /= g.sum()
    half = ksize // 2
    bm = np.zeros((n, n), np.float32)
    for i in range(n):
        for t in range(ksize):
            j = i + t - half
            if j < 0:
                j = -j
            if j > n - 1:
                j = 2 * (n - 1) - j
            bm[i, j] += g[t]
    return bm


def _avgpool2x2(x):
    b, h, w, c = x.shape
    return x.reshape(b, h // 2, 2, w // 2, 2, c).mean(axis=(2, 4))


# ----------------------------------------------------------------------------
# PatchCore forward
# ----------------------------------------------------------------------------
@functools.partial(jax.jit, static_argnames=("training",))
def patchcore_forward(x_nchw, params, memory_bank, bank, training=False):
    """PatchcoreModel.forward.

    x_nchw: [B, C, H, W] float32 (PyTorch layout).
    bank:   dict from prepare_memory_bank (prepared ONCE outside this jit).
    Returns embedding [B*P*P, D] if training, else
    {'anomaly_map': [B, 1, H, W], 'pred_score': [B]}.
    """
    b, c_in, h_img, w_img = x_nchw.shape
    x = jnp.transpose(x_nchw, (0, 2, 3, 1)).astype(jnp.float32)   # NHWC

    # ---- synthetic feature extractor (two "layers"), bias+ReLU fused ----
    w1p, b1p = params["w1"], params["b1"]
    w2p, b2p = params["w2"], params["b2"]
    c1, c2 = w1p.shape[1], w2p.shape[1]

    s1 = _avgpool2x2(x)                                           # [B,H/2,W/2,C]
    h1, w1s = s1.shape[1], s1.shape[2]
    f1 = pallas_matmul(s1.reshape(-1, c_in), w1p, bias=b1p,
                       relu=True).reshape(b, h1, w1s, c1)
    s2 = _avgpool2x2(f1)                                          # [B,H/4,W/4,C1]
    h2, w2s = s2.shape[1], s2.shape[2]
    f2 = pallas_matmul(s2.reshape(-1, c1), w2p, bias=b2p,
                       relu=True).reshape(b, h2, w2s, c2)

    # ---- feature_pooler: AvgPool2d(3, 1, 1) ----
    p1 = pallas_avgpool3(f1)
    p2 = pallas_avgpool3(f2)

    # ---- generate_embedding: bilinear upsample of deeper layer + concat ----
    up2 = pallas_bilinear_upsample(p2, (h1, w1s))                 # [B,h1,w1,C2]
    embedding = jnp.concatenate([p1, up2], axis=-1)               # [B,h1,w1,D]
    width, height = embedding.shape[1], embedding.shape[2]
    d_emb = embedding.shape[3]

    # ---- reshape_embedding: -> [B*P*P, D] ----
    emb_flat = embedding.reshape(-1, d_emb)

    if training:
        return emb_flat

    # ---- nearest_neighbors (exact 1-NN against the memory bank) ----
    m_bank = memory_bank.shape[0]
    min_sq, argmin = pallas_nearest_neighbors(emb_flat, bank)
    num_patches = width * height
    patch_scores = jnp.sqrt(jnp.maximum(min_sq, 0.0)).reshape(b, num_patches)
    locations = argmin.reshape(b, num_patches)

    # ---- compute_anomaly_score (num_neighbors = 9) ----
    batch_idx = jnp.arange(b)
    max_patches = jnp.argmax(patch_scores, axis=1)                # [B]
    score = patch_scores[batch_idx, max_patches]                  # [B]
    nn_index = locations[batch_idx, max_patches]                  # [B]
    nn_sample = memory_bank[nn_index]                             # [B, D]
    max_feats = emb_flat[batch_idx * num_patches + max_patches]   # [B, D]

    k = min(NUM_NEIGHBORS, m_bank)
    # One tiny tiled kernel call (exact f32) for both query sets (2B rows).
    sq = pallas_sq_dists(jnp.concatenate([nn_sample, max_feats], axis=0),
                         bank, m_bank)
    sq_ns, sq_max = sq[:b], sq[b:]
    _, support_samples = jax.lax.top_k(-sq_ns, k)                 # [B, k]
    distances = jnp.sqrt(jnp.maximum(
        jnp.take_along_axis(sq_max, support_samples, axis=1), 0.0))
    weights = (1.0 - jax.nn.softmax(distances, axis=1))[:, 0]     # [B]
    pred_score = weights * score                                  # [B]

    # ---- anomaly map: fused bilinear upsample + Gaussian blur (sigma=4) ----
    mh_am = _gaussian_blur_matrix(h_img, SIGMA) @ _bilinear_matrix(h_img, width)
    mw_am = _gaussian_blur_matrix(w_img, SIGMA) @ _bilinear_matrix(w_img, height)
    amap = pallas_anomaly_map(patch_scores.reshape(b, width, height),
                              jnp.asarray(mh_am), jnp.asarray(mw_am.T))
    anomaly_map = amap[:, None, :, :]                             # [B,1,H,W]

    return {"anomaly_map": anomaly_map, "pred_score": pred_score}


# ----------------------------------------------------------------------------
# Main
# ----------------------------------------------------------------------------
if __name__ == "__main__":
    key = jax.random.PRNGKey(0)
    k_x, k_w1, k_b1, k_w2, k_b2, k_mb = jax.random.split(key, 6)

    B, C_IN, H, W = 2, 4, 32, 32
    C1, C2 = 16, 32                      # synthetic backbone channel widths
    D_EMB = C1 + C2                      # 48
    M_BANK = 64                          # memory bank size

    x = jax.random.normal(k_x, (B, C_IN, H, W), dtype=jnp.float32)
    params = {
        "w1": 0.3 * jax.random.normal(k_w1, (C_IN, C1), dtype=jnp.float32),
        "b1": 0.05 * jax.random.normal(k_b1, (C1,), dtype=jnp.float32),
        "w2": 0.3 * jax.random.normal(k_w2, (C1, C2), dtype=jnp.float32),
        "b2": 0.05 * jax.random.normal(k_b2, (C2,), dtype=jnp.float32),
    }
    memory_bank = jax.random.normal(k_mb, (M_BANK, D_EMB), dtype=jnp.float32)

    # One-time bank preparation (hoisted out of the jitted forward).
    bank = prepare_memory_bank(memory_bank)
    bank = {kk: jax.block_until_ready(vv) for kk, vv in bank.items()}

    # inference path (anomaly map + image-level score)
    out = patchcore_forward(x, params, memory_bank, bank, training=False)
    jax.block_until_ready(out["anomaly_map"])
    jax.block_until_ready(out["pred_score"])
    assert out["anomaly_map"].shape == (B, 1, H, W)
    assert out["pred_score"].shape == (B,)
    assert bool(jnp.all(jnp.isfinite(out["anomaly_map"])))
    assert bool(jnp.all(jnp.isfinite(out["pred_score"])))

    # training path (embedding)
    emb = patchcore_forward(x, params, memory_bank, bank, training=True)
    jax.block_until_ready(emb)
    assert emb.shape == (B * (H // 2) * (W // 2), D_EMB)

    print("KERNEL_OK")
</pallas_src>

<mosaic_0001>
module attributes {stable_mosaic.version = 11 : i64} {
  func.func @_matmul_kernel(%arg0: i32, %arg1: i32, %arg2: i32, %arg3: memref<256x4xbf16, #tpu.memory_space<vmem>>, %arg4: memref<4x128xbf16, #tpu.memory_space<vmem>>, %arg5: memref<1x128xf32, #tpu.memory_space<vmem>>, %arg6: memref<256x128xf32, #tpu.memory_space<vmem>>, %arg7: memref<256x128xf32, #tpu.memory_space<vmem>>) attributes {dimension_semantics = [#tpu.dimension_semantics<parallel>, #tpu.dimension_semantics<parallel>, #tpu.dimension_semantics<arbitrary>], iteration_bounds = array<i64: 2, 1, 1>, scalar_prefetch = 0 : i64, scratch_operands = 1 : i64, tpu.core_type = #tpu.core_type<tc>, window_params = [{transform_indices = @transform_0, window_bounds = array<i64: 256, 4>}, {transform_indices = @transform_1, window_bounds = array<i64: 4, 128>}, {transform_indices = @transform_2, window_bounds = array<i64: 1, 128>}, {transform_indices = @transform_3, window_bounds = array<i64: 256, 128>}]} {
    %c0_i32 = arith.constant 0 : i32
    %0 = arith.cmpi eq, %arg2, %c0_i32 : i32
    %1 = arith.extui %0 : i1 to i32
    %c0_i32_0 = arith.constant 0 : i32
    %2 = arith.cmpi ne, %1, %c0_i32_0 : i32
    scf.if %2 {
      %cst_10 = arith.constant 0.000000e+00 : f32
      %12 = vector.broadcast %cst_10 : f32 to vector<256x128xf32>
      %c0_11 = arith.constant 0 : index
      %c0_12 = arith.constant 0 : index
      %13 = vector.load %arg7[%c0_11, %c0_12] : memref<256x128xf32, #tpu.memory_space<vmem>>, vector<256x128xf32>
      tpu.vector_store %arg7[%c0_11, %c0_12], %12 {strides = array<i32>} : memref<256x128xf32, #tpu.memory_space<vmem>>, vector<256x128xf32>,
    } else {
    }
    %c0 = arith.constant 0 : index
    %c0_1 = arith.constant 0 : index
    %3 = vector.load %arg7[%c0, %c0_1] : memref<256x128xf32, #tpu.memory_space<vmem>>, vector<256x128xf32>
    %c0_2 = arith.constant 0 : index
    %c0_3 = arith.constant 0 : index
    %4 = vector.load %arg3[%c0_2, %c0_3] : memref<256x4xbf16, #tpu.memory_space<vmem>>, vector<256x4xbf16>
    %c0_4 = arith.constant 0 : index
    %c0_5 = arith.constant 0 : index
    %5 = vector.load %arg4[%c0_4, %c0_5] : memref<4x128xbf16, #tpu.memory_space<vmem>>, vector<4x128xbf16>
    %cst = arith.constant dense<0.000000e+00> : vector<256x128xf32>
    %6 = tpu.matmul %4, %5, %cst {dimension_numbers = #tpu.dot_dimension_numbers<[1], [0], [0], [1], [0, 0, 1, 1], [], []>} : vector<256x4xbf16>, vector<4x128xbf16>, vector<256x128xf32> -> vector<256x128xf32>
    %7 = arith.addf %3, %6 : vector<256x128xf32>
    %c0_6 = arith.constant 0 : index
    %c0_7 = arith.constant 0 : index
    %8 = vector.load %arg7[%c0_6, %c0_7] : memref<256x128xf32, #tpu.memory_space<vmem>>, vector<256x128xf32>
    tpu.vector_store %arg7[%c0_6, %c0_7], %7 {strides = array<i32>} : memref<256x128xf32, #tpu.memory_space<vmem>>, vector<256x128xf32>,
    %c0_i32_8 = arith.constant 0 : i32
    %9 = arith.cmpi eq, %arg2, %c0_i32_8 : i32
    %10 = arith.extui %9 : i1 to i32
    %c0_i32_9 = arith.constant 0 : i32
    %11 = arith.cmpi ne, %10, %c0_i32_9 : i32
    scf.if %11 {
      %c0_10 = arith.constant 0 : index
      %c0_11 = arith.constant 0 : index
      %12 = vector.load %arg7[%c0_10, %c0_11] : memref<256x128xf32, #tpu.memory_space<vmem>>, vector<256x128xf32>
      %c0_12 = arith.constant 0 : index
      %c0_13 = arith.constant 0 : index
      %13 = vector.load %arg5[%c0_12, %c0_13] : memref<1x128xf32, #tpu.memory_space<vmem>>, vector<1x128xf32>
      %14 = vector.broadcast %13 : vector<1x128xf32> to vector<256x128xf32>
      %15 = arith.addf %12, %14 : vector<256x128xf32>
      %cst_14 = arith.constant 0.000000e+00 : f32
      %16 = vector.broadcast %cst_14 : f32 to vector<256x128xf32>
      %17 = arith.maximumf %15, %16 : vector<256x128xf32>
      %c0_15 = arith.constant 0 : index
      %c0_16 = arith.constant 0 : index
      %18 = vector.load %arg6[%c0_15, %c0_16] : memref<256x128xf32, #tpu.memory_space<vmem>>, vector<256x128xf32>
      tpu.vector_store %arg6[%c0_15, %c0_16], %17 {strides = array<i32>} : memref<256x128xf32, #tpu.memory_space<vmem>>, vector<256x128xf32>,
    } else {
    }
    return
  }
  func.func @transform_0(%arg0: i32, %arg1: i32, %arg2: i32) -> (i32, i32) {
    %c0_i32 = arith.constant 0 : i32
    return %arg0, %arg2 : i32, i32
  }
  func.func @transform_1(%arg0: i32, %arg1: i32, %arg2: i32) -> (i32, i32) {
    %c0_i32 = arith.constant 0 : i32
    return %arg2, %arg1 : i32, i32
  }
  func.func @transform_2(%arg0: i32, %arg1: i32, %arg2: i32) -> (i32, i32) {
    %c0_i32 = arith.constant 0 : i32
    %c0_i32_0 = arith.constant 0 : i32
    return %c0_i32, %arg1 : i32, i32
  }
  func.func @transform_3(%arg0: i32, %arg1: i32, %arg2: i32) -> (i32, i32) {
    %c0_i32 = arith.constant 0 : i32
    return %arg0, %arg1 : i32, i32
  }
}

module attributes {stable_mosaic.version = 11 : i64} {
  func.func @_matmul_kernel(%arg0: i32, %arg1: i32, %arg2: i32, %arg3: memref<128x16xbf16, #tpu.memory_space<vmem>>, %arg4: memref<16x128xbf16, #tpu.memory_space<vmem>>, %arg5: memref<1x128xf32, #tpu.memory_space<vmem>>, %arg6: memref<128x128xf32, #tpu.memory_space<vmem>>, %arg7: memref<128x128xf32, #tpu.memory_space<vmem>>) attributes {dimension_semantics = [#tpu.dimension_semantics<parallel>, #tpu.dimension_semantics<parallel>, #tpu.dimension_semantics<arbitrary>], iteration_bounds = array<i64: 1, 1, 1>, scalar_prefetch = 0 : i64, scratch_operands = 1 : i64, tpu.core_type = #tpu.core_type<tc>, window_params = [{transform_indices = @transform_0, window_bounds = array<i64: 128, 16>}, {transform_indices = @transform_1, window_bounds = array<i64: 16, 128>}, {transform_indices = @transform_2, window_bounds = array<i64: 1, 128>}, {transform_indices = @transform_3, window_bounds = array<i64: 128, 128>}]} {
    %c0_i32 = arith.constant 0 : i32
    %0 = arith.cmpi eq, %arg2, %c0_i32 : i32
    %1 = arith.extui %0 : i1 to i32
    %c0_i32_0 = arith.constant 0 : i32
    %2 = arith.cmpi ne, %1, %c0_i32_0 : i32
    scf.if %2 {
      %cst_10 = arith.constant 0.000000e+00 : f32
      %12 = vector.broadcast %cst_10 : f32 to vector<128x128xf32>
      %c0_11 = arith.constant 0 : index
      %c0_12 = arith.constant 0 : index
      %13 = vector.load %arg7[%c0_11, %c0_12] : memref<128x128xf32, #tpu.memory_space<vmem>>, vector<128x128xf32>
      tpu.vector_store %arg7[%c0_11, %c0_12], %12 {strides = array<i32>} : memref<128x128xf32, #tpu.memory_space<vmem>>, vector<128x128xf32>,
    } else {
    }
    %c0 = arith.constant 0 : index
    %c0_1 = arith.constant 0 : index
    %3 = vector.load %arg7[%c0, %c0_1] : memref<128x128xf32, #tpu.memory_space<vmem>>, vector<128x128xf32>
    %c0_2 = arith.constant 0 : index
    %c0_3 = arith.constant 0 : index
    %4 = vector.load %arg3[%c0_2, %c0_3] : memref<128x16xbf16, #tpu.memory_space<vmem>>, vector<128x16xbf16>
    %c0_4 = arith.constant 0 : index
    %c0_5 = arith.constant 0 : index
    %5 = vector.load %arg4[%c0_4, %c0_5] : memref<16x128xbf16, #tpu.memory_space<vmem>>, vector<16x128xbf16>
    %cst = arith.constant dense<0.000000e+00> : vector<128x128xf32>
    %6 = tpu.matmul %4, %5, %cst {dimension_numbers = #tpu.dot_dimension_numbers<[1], [0], [0], [1], [0, 0, 1, 1], [], []>} : vector<128x16xbf16>, vector<16x128xbf16>, vector<128x128xf32> -> vector<128x128xf32>
    %7 = arith.addf %3, %6 : vector<128x128xf32>
    %c0_6 = arith.constant 0 : index
    %c0_7 = arith.constant 0 : index
    %8 = vector.load %arg7[%c0_6, %c0_7] : memref<128x128xf32, #tpu.memory_space<vmem>>, vector<128x128xf32>
    tpu.vector_store %arg7[%c0_6, %c0_7], %7 {strides = array<i32>} : memref<128x128xf32, #tpu.memory_space<vmem>>, vector<128x128xf32>,
    %c0_i32_8 = arith.constant 0 : i32
    %9 = arith.cmpi eq, %arg2, %c0_i32_8 : i32
    %10 = arith.extui %9 : i1 to i32
    %c0_i32_9 = arith.constant 0 : i32
    %11 = arith.cmpi ne, %10, %c0_i32_9 : i32
    scf.if %11 {
      %c0_10 = arith.constant 0 : index
      %c0_11 = arith.constant 0 : index
      %12 = vector.load %arg7[%c0_10, %c0_11] : memref<128x128xf32, #tpu.memory_space<vmem>>, vector<128x128xf32>
      %c0_12 = arith.constant 0 : index
      %c0_13 = arith.constant 0 : index
      %13 = vector.load %arg5[%c0_12, %c0_13] : memref<1x128xf32, #tpu.memory_space<vmem>>, vector<1x128xf32>
      %14 = vector.broadcast %13 : vector<1x128xf32> to vector<128x128xf32>
      %15 = arith.addf %12, %14 : vector<128x128xf32>
      %cst_14 = arith.constant 0.000000e+00 : f32
      %16 = vector.broadcast %cst_14 : f32 to vector<128x128xf32>
      %17 = arith.maximumf %15, %16 : vector<128x128xf32>
      %c0_15 = arith.constant 0 : index
      %c0_16 = arith.constant 0 : index
      %18 = vector.load %arg6[%c0_15, %c0_16] : memref<128x128xf32, #tpu.memory_space<vmem>>, vector<128x128xf32>
      tpu.vector_store %arg6[%c0_15, %c0_16], %17 {strides = array<i32>} : memref<128x128xf32, #tpu.memory_space<vmem>>, vector<128x128xf32>,
    } else {
    }
    return
  }
  func.func @transform_0(%arg0: i32, %arg1: i32, %arg2: i32) -> (i32, i32) {
    %c0_i32 = arith.constant 0 : i32
    return %arg0, %arg2 : i32, i32
  }
  func.func @transform_1(%arg0: i32, %arg1: i32, %arg2: i32) -> (i32, i32) {
    %c0_i32 = arith.constant 0 : i32
    return %arg2, %arg1 : i32, i32
  }
  func.func @transform_2(%arg0: i32, %arg1: i32, %arg2: i32) -> (i32, i32) {
    %c0_i32 = arith.constant 0 : i32
    %c0_i32_0 = arith.constant 0 : i32
    return %c0_i32, %arg1 : i32, i32
  }
  func.func @transform_3(%arg0: i32, %arg1: i32, %arg2: i32) -> (i32, i32) {
    %c0_i32 = arith.constant 0 : i32
    return %arg0, %arg1 : i32, i32
  }
}

module attributes {stable_mosaic.version = 11 : i64} {
  func.func @kernel(%arg0: i32, %arg1: i32, %arg2: memref<1x16x16x16xf32, #tpu.memory_space<vmem>>, %arg3: memref<1x16x16x16xf32, #tpu.memory_space<vmem>>, %arg4: memref<18x18x16xf32, #tpu.memory_space<vmem>>) attributes {dimension_semantics = [#tpu.dimension_semantics<parallel>, #tpu.dimension_semantics<parallel>], iteration_bounds = array<i64: 2, 1>, scalar_prefetch = 0 : i64, scratch_operands = 1 : i64, tpu.core_type = #tpu.core_type<tc>, window_params = [{transform_indices = @transform_0, window_bounds = array<i64: 1, 16, 16, 16>}, {transform_indices = @transform_1, window_bounds = array<i64: 1, 16, 16, 16>}]} {
    %cst = arith.constant 0.000000e+00 : f32
    %0 = vector.broadcast %cst : f32 to vector<18x18x16xf32>
    %c0 = arith.constant 0 : index
    %c0_0 = arith.constant 0 : index
    %c0_1 = arith.constant 0 : index
    %1 = vector.load %arg4[%c0, %c0_0, %c0_1] : memref<18x18x16xf32, #tpu.memory_space<vmem>>, vector<18x18x16xf32>
    tpu.vector_store %arg4[%c0, %c0_0, %c0_1], %0 {strides = array<i32>} : memref<18x18x16xf32, #tpu.memory_space<vmem>>, vector<18x18x16xf32>,
    %c0_2 = arith.constant 0 : index
    %c0_3 = arith.constant 0 : index
    %c0_4 = arith.constant 0 : index
    %c0_5 = arith.constant 0 : index
    %2 = vector.load %arg2[%c0_2, %c0_3, %c0_4, %c0_5] : memref<1x16x16x16xf32, #tpu.memory_space<vmem>>, vector<1x16x16x16xf32>
    %3 = vector.shape_cast %2 : vector<1x16x16x16xf32> to vector<16x16x16xf32>
    %c1 = arith.constant 1 : index
    %c1_6 = arith.constant 1 : index
    %c0_7 = arith.constant 0 : index
    %4 = vector.load %arg4[%c1, %c1_6, %c0_7] : memref<18x18x16xf32, #tpu.memory_space<vmem>>, vector<16x16x16xf32>
    tpu.vector_store %arg4[%c1, %c1_6, %c0_7], %3 {strides = array<i32>} : memref<18x18x16xf32, #tpu.memory_space<vmem>>, vector<16x16x16xf32>,
    %c0_8 = arith.constant 0 : index
    %c0_9 = arith.constant 0 : index
    %c0_10 = arith.constant 0 : index
    %5 = vector.load %arg4[%c0_8, %c0_9, %c0_10] : memref<18x18x16xf32, #tpu.memory_space<vmem>>, vector<16x18x16xf32>
    %c1_11 = arith.constant 1 : index
    %c0_12 = arith.constant 0 : index
    %c0_13 = arith.constant 0 : index
    %6 = vector.load %arg4[%c1_11, %c0_12, %c0_13] : memref<18x18x16xf32, #tpu.memory_space<vmem>>, vector<16x18x16xf32>
    %7 = arith.addf %5, %6 : vector<16x18x16xf32>
    %c2 = arith.constant 2 : index
    %c0_14 = arith.constant 0 : index
    %c0_15 = arith.constant 0 : index
    %8 = vector.load %arg4[%c2, %c0_14, %c0_15] : memref<18x18x16xf32, #tpu.memory_space<vmem>>, vector<16x18x16xf32>
    %9 = arith.addf %7, %8 : vector<16x18x16xf32>
    %10 = vector.extract_strided_slice %9 {offsets = [0, 0, 0], sizes = [16, 16, 16], strides = [1, 1, 1]} : vector<16x18x16xf32> to vector<16x16x16xf32>
    %11 = vector.extract_strided_slice %9 {offsets = [0, 1, 0], sizes = [16, 16, 16], strides = [1, 1, 1]} : vector<16x18x16xf32> to vector<16x16x16xf32>
    %12 = arith.addf %10, %11 : vector<16x16x16xf32>
    %13 = vector.extract_strided_slice %9 {offsets = [0, 2, 0], sizes = [16, 16, 16], strides = [1, 1, 1]} : vector<16x18x16xf32> to vector<16x16x16xf32>
    %14 = arith.addf %12, %13 : vector<16x16x16xf32>
    %cst_16 = arith.constant 0.111111112 : f32
    %15 = vector.broadcast %cst_16 : f32 to vector<16x16x16xf32>
    %16 = arith.mulf %14, %15 : vector<16x16x16xf32>
    %c0_17 = arith.constant 0 : index
    %c0_18 = arith.constant 0 : index
    %c0_19 = arith.constant 0 : index
    %c0_20 = arith.constant 0 : index
    %17 = vector.load %arg3[%c0_17, %c0_18, %c0_19, %c0_20] : memref<1x16x16x16xf32, #tpu.memory_space<vmem>>, vector<1x16x16x16xf32>
    %18 = vector.shape_cast %17 : vector<1x16x16x16xf32> to vector<16x16x16xf32>
    %19 = vector.shape_cast %16 : vector<16x16x16xf32> to vector<1x16x16x16xf32>
    tpu.vector_store %arg3[%c0_17, %c0_18, %c0_19, %c0_20], %19 {strides = array<i32>} : memref<1x16x16x16xf32, #tpu.memory_space<vmem>>, vector<1x16x16x16xf32>,
    return
  }
  func.func @transform_0(%arg0: i32, %arg1: i32) -> (i32, i32, i32, i32) {
    %c0_i32 = arith.constant 0 : i32
    %c0_i32_0 = arith.constant 0 : i32
    %c0_i32_1 = arith.constant 0 : i32
    return %arg0, %c0_i32, %c0_i32_0, %arg1 : i32, i32, i32, i32
  }
  func.func @transform_1(%arg0: i32, %arg1: i32) -> (i32, i32, i32, i32) {
    %c0_i32 = arith.constant 0 : i32
    %c0_i32_0 = arith.constant 0 : i32
    %c0_i32_1 = arith.constant 0 : i32
    return %arg0, %c0_i32, %c0_i32_0, %arg1 : i32, i32, i32, i32
  }
}

module attributes {stable_mosaic.version = 11 : i64} {
  func.func @kernel(%arg0: i32, %arg1: i32, %arg2: memref<1x8x8x32xf32, #tpu.memory_space<vmem>>, %arg3: memref<1x8x8x32xf32, #tpu.memory_space<vmem>>, %arg4: memref<10x10x32xf32, #tpu.memory_space<vmem>>) attributes {dimension_semantics = [#tpu.dimension_semantics<parallel>, #tpu.dimension_semantics<parallel>], iteration_bounds = array<i64: 2, 1>, scalar_prefetch = 0 : i64, scratch_operands = 1 : i64, tpu.core_type = #tpu.core_type<tc>, window_params = [{transform_indices = @transform_0, window_bounds = array<i64: 1, 8, 8, 32>}, {transform_indices = @transform_1, window_bounds = array<i64: 1, 8, 8, 32>}]} {
    %cst = arith.constant 0.000000e+00 : f32
    %0 = vector.broadcast %cst : f32 to vector<10x10x32xf32>
    %c0 = arith.constant 0 : index
    %c0_0 = arith.constant 0 : index
    %c0_1 = arith.constant 0 : index
    %1 = vector.load %arg4[%c0, %c0_0, %c0_1] : memref<10x10x32xf32, #tpu.memory_space<vmem>>, vector<10x10x32xf32>
    tpu.vector_store %arg4[%c0, %c0_0, %c0_1], %0 {strides = array<i32>} : memref<10x10x32xf32, #tpu.memory_space<vmem>>, vector<10x10x32xf32>,
    %c0_2 = arith.constant 0 : index
    %c0_3 = arith.constant 0 : index
    %c0_4 = arith.constant 0 : index
    %c0_5 = arith.constant 0 : index
    %2 = vector.load %arg2[%c0_2, %c0_3, %c0_4, %c0_5] : memref<1x8x8x32xf32, #tpu.memory_space<vmem>>, vector<1x8x8x32xf32>
    %3 = vector.shape_cast %2 : vector<1x8x8x32xf32> to vector<8x8x32xf32>
    %c1 = arith.constant 1 : index
    %c1_6 = arith.constant 1 : index
    %c0_7 = arith.constant 0 : index
    %4 = vector.load %arg4[%c1, %c1_6, %c0_7] : memref<10x10x32xf32, #tpu.memory_space<vmem>>, vector<8x8x32xf32>
    tpu.vector_store %arg4[%c1, %c1_6, %c0_7], %3 {strides = array<i32>} : memref<10x10x32xf32, #tpu.memory_space<vmem>>, vector<8x8x32xf32>,
    %c0_8 = arith.constant 0 : index
    %c0_9 = arith.constant 0 : index
    %c0_10 = arith.constant 0 : index
    %5 = vector.load %arg4[%c0_8, %c0_9, %c0_10] : memref<10x10x32xf32, #tpu.memory_space<vmem>>, vector<8x10x32xf32>
    %c1_11 = arith.constant 1 : index
    %c0_12 = arith.constant 0 : index
    %c0_13 = arith.constant 0 : index
    %6 = vector.load %arg4[%c1_11, %c0_12, %c0_13] : memref<10x10x32xf32, #tpu.memory_space<vmem>>, vector<8x10x32xf32>
    %7 = arith.addf %5, %6 : vector<8x10x32xf32>
    %c2 = arith.constant 2 : index
    %c0_14 = arith.constant 0 : index
    %c0_15 = arith.constant 0 : index
    %8 = vector.load %arg4[%c2, %c0_14, %c0_15] : memref<10x10x32xf32, #tpu.memory_space<vmem>>, vector<8x10x32xf32>
    %9 = arith.addf %7, %8 : vector<8x10x32xf32>
    %10 = vector.extract_strided_slice %9 {offsets = [0, 0, 0], sizes = [8, 8, 32], strides = [1, 1, 1]} : vector<8x10x32xf32> to vector<8x8x32xf32>
    %11 = vector.extract_strided_slice %9 {offsets = [0, 1, 0], sizes = [8, 8, 32], strides = [1, 1, 1]} : vector<8x10x32xf32> to vector<8x8x32xf32>
    %12 = arith.addf %10, %11 : vector<8x8x32xf32>
    %13 = vector.extract_strided_slice %9 {offsets = [0, 2, 0], sizes = [8, 8, 32], strides = [1, 1, 1]} : vector<8x10x32xf32> to vector<8x8x32xf32>
    %14 = arith.addf %12, %13 : vector<8x8x32xf32>
    %cst_16 = arith.constant 0.111111112 : f32
    %15 = vector.broadcast %cst_16 : f32 to vector<8x8x32xf32>
    %16 = arith.mulf %14, %15 : vector<8x8x32xf32>
    %c0_17 = arith.constant 0 : index
    %c0_18 = arith.constant 0 : index
    %c0_19 = arith.constant 0 : index
    %c0_20 = arith.constant 0 : index
    %17 = vector.load %arg3[%c0_17, %c0_18, %c0_19, %c0_20] : memref<1x8x8x32xf32, #tpu.memory_space<vmem>>, vector<1x8x8x32xf32>
    %18 = vector.shape_cast %17 : vector<1x8x8x32xf32> to vector<8x8x32xf32>
    %19 = vector.shape_cast %16 : vector<8x8x32xf32> to vector<1x8x8x32xf32>
    tpu.vector_store %arg3[%c0_17, %c0_18, %c0_19, %c0_20], %19 {strides = array<i32>} : memref<1x8x8x32xf32, #tpu.memory_space<vmem>>, vector<1x8x8x32xf32>,
    return
  }
  func.func @transform_0(%arg0: i32, %arg1: i32) -> (i32, i32, i32, i32) {
    %c0_i32 = arith.constant 0 : i32
    %c0_i32_0 = arith.constant 0 : i32
    %c0_i32_1 = arith.constant 0 : i32
    return %arg0, %c0_i32, %c0_i32_0, %arg1 : i32, i32, i32, i32
  }
  func.func @transform_1(%arg0: i32, %arg1: i32) -> (i32, i32, i32, i32) {
    %c0_i32 = arith.constant 0 : i32
    %c0_i32_0 = arith.constant 0 : i32
    %c0_i32_1 = arith.constant 0 : i32
    return %arg0, %c0_i32, %c0_i32_0, %arg1 : i32, i32, i32, i32
  }
}

module attributes {stable_mosaic.version = 11 : i64} {
  func.func @_upsample_kernel(%arg0: i32, %arg1: memref<16x8xf32, #tpu.memory_space<vmem>>, %arg2: memref<16x16x8xf32, #tpu.memory_space<vmem>>, %arg3: memref<1x8x8x32xf32, #tpu.memory_space<vmem>>, %arg4: memref<1x16x16x32xf32, #tpu.memory_space<vmem>>) attributes {dimension_semantics = [#tpu.dimension_semantics<parallel>], iteration_bounds = array<i64: 2>, scalar_prefetch = 0 : i64, scratch_operands = 0 : i64, tpu.core_type = #tpu.core_type<tc>, window_params = [{pipeline_mode = #tpu.pipeline_mode<synchronous>, transform_indices = @transform_0, window_bounds = array<i64: 16, 8>}, {pipeline_mode = #tpu.pipeline_mode<synchronous>, transform_indices = @transform_1, window_bounds = array<i64: 16, 16, 8>}, {transform_indices = @transform_2, window_bounds = array<i64: 1, 8, 8, 32>}, {transform_indices = @transform_3, window_bounds = array<i64: 1, 16, 16, 32>}]} {
    %c0 = arith.constant 0 : index
    %c0_0 = arith.constant 0 : index
    %c0_1 = arith.constant 0 : index
    %c0_2 = arith.constant 0 : index
    %0 = vector.load %arg3[%c0, %c0_0, %c0_1, %c0_2] : memref<1x8x8x32xf32, #tpu.memory_space<vmem>>, vector<1x8x8x32xf32>
    %1 = vector.shape_cast %0 : vector<1x8x8x32xf32> to vector<8x8x32xf32>
    %c0_3 = arith.constant 0 : index
    %c0_4 = arith.constant 0 : index
    %2 = vector.load %arg1[%c0_3, %c0_4] : memref<16x8xf32, #tpu.memory_space<vmem>>, vector<16x8xf32>
    %3 = vector.shape_cast %1 : vector<8x8x32xf32> to vector<8x256xf32>
    %cst = arith.constant dense<0.000000e+00> : vector<16x256xf32>
    %4 = tpu.matmul %2, %3, %cst {dimension_numbers = #tpu.dot_dimension_numbers<[1], [0], [0], [1], [0, 0, 1, 1], [], []>} : vector<16x8xf32>, vector<8x256xf32>, vector<16x256xf32> -> vector<16x256xf32>
    %5 = vector.shape_cast %4 : vector<16x256xf32> to vector<16x8x32xf32>
    %c0_5 = arith.constant 0 : index
    %c0_6 = arith.constant 0 : index
    %c0_7 = arith.constant 0 : index
    %6 = vector.load %arg2[%c0_5, %c0_6, %c0_7] : memref<16x16x8xf32, #tpu.memory_space<vmem>>, vector<16x16x8xf32>
    %cst_8 = arith.constant dense<0.000000e+00> : vector<16x16x32xf32>
    %7 = tpu.matmul %6, %5, %cst_8 {dimension_numbers = #tpu.dot_dimension_numbers<[2], [1], [1], [2], [0, 0, 0, 1, 1, 2], [0], [0]>} : vector<16x16x8xf32>, vector<16x8x32xf32>, vector<16x16x32xf32> -> vector<16x16x32xf32>
    %c0_9 = arith.constant 0 : index
    %c0_10 = arith.constant 0 : index
    %c0_11 = arith.constant 0 : index
    %c0_12 = arith.constant 0 : index
    %8 = vector.load %arg4[%c0_9, %c0_10, %c0_11, %c0_12] : memref<1x16x16x32xf32, #tpu.memory_space<vmem>>, vector<1x16x16x32xf32>
    %9 = vector.shape_cast %8 : vector<1x16x16x32xf32> to vector<16x16x32xf32>
    %10 = vector.shape_cast %7 : vector<16x16x32xf32> to vector<1x16x16x32xf32>
    tpu.vector_store %arg4[%c0_9, %c0_10, %c0_11, %c0_12], %10 {strides = array<i32>} : memref<1x16x16x32xf32, #tpu.memory_space<vmem>>, vector<1x16x16x32xf32>,
    return
  }
  func.func @transform_0(%arg0: i32) -> (i32, i32) {
    %c0_i32 = arith.constant 0 : i32
    %c0_i32_0 = arith.constant 0 : i32
    %c0_i32_1 = arith.constant 0 : i32
    return %c0_i32, %c0_i32_0 : i32, i32
  }
  func.func @transform_1(%arg0: i32) -> (i32, i32, i32) {
    %c0_i32 = arith.constant 0 : i32
    %c0_i32_0 = arith.constant 0 : i32
    %c0_i32_1 = arith.constant 0 : i32
    %c0_i32_2 = arith.constant 0 : i32
    return %c0_i32, %c0_i32_0, %c0_i32_1 : i32, i32, i32
  }
  func.func @transform_2(%arg0: i32) -> (i32, i32, i32, i32) {
    %c0_i32 = arith.constant 0 : i32
    %c0_i32_0 = arith.constant 0 : i32
    %c0_i32_1 = arith.constant 0 : i32
    %c0_i32_2 = arith.constant 0 : i32
    return %arg0, %c0_i32, %c0_i32_0, %c0_i32_1 : i32, i32, i32, i32
  }
  func.func @transform_3(%arg0: i32) -> (i32, i32, i32, i32) {
    %c0_i32 = arith.constant 0 : i32
    %c0_i32_0 = arith.constant 0 : i32
    %c0_i32_1 = arith.constant 0 : i32
    %c0_i32_2 = arith.constant 0 : i32
    return %arg0, %c0_i32, %c0_i32_0, %c0_i32_1 : i32, i32, i32, i32
  }
}

module attributes {stable_mosaic.version = 11 : i64} {
  func.func @_nn_kernel(%arg0: i32, %arg1: i32, %arg2: memref<128x512xbf16, #tpu.memory_space<vmem>>, %arg3: memref<1x512xf32, #tpu.memory_space<vmem>>, %arg4: memref<128x128xbf16, #tpu.memory_space<vmem>>, %arg5: memref<128x1xf32, #tpu.memory_space<vmem>>, %arg6: memref<1x512xf32, #tpu.memory_space<vmem>>, %arg7: memref<1x512xi32, #tpu.memory_space<vmem>>, %arg8: memref<1x512xf32, #tpu.memory_space<vmem>>, %arg9: memref<1x512xi32, #tpu.memory_space<vmem>>, %arg10: memref<128x512xi32, #tpu.memory_space<vmem>>) attributes {dimension_semantics = [#tpu.dimension_semantics<parallel>, #tpu.dimension_semantics<arbitrary>], iteration_bounds = array<i64: 1, 1>, scalar_prefetch = 0 : i64, scratch_operands = 3 : i64, tpu.core_type = #tpu.core_type<tc>, window_params = [{transform_indices = @transform_0, window_bounds = array<i64: 128, 512>}, {transform_indices = @transform_1, window_bounds = array<i64: 1, 512>}, {transform_indices = @transform_2, window_bounds = array<i64: 128, 128>}, {transform_indices = @transform_3, window_bounds = array<i64: 128, 1>}, {transform_indices = @transform_4, window_bounds = array<i64: 1, 512>}, {transform_indices = @transform_5, window_bounds = array<i64: 1, 512>}]} {
    %c0_i32 = arith.constant 0 : i32
    %0 = arith.cmpi eq, %arg1, %c0_i32 : i32
    %1 = arith.extui %0 : i1 to i32
    %c0_i32_0 = arith.constant 0 : i32
    %2 = arith.cmpi ne, %1, %c0_i32_0 : i32
    scf.if %2 {
      %cst_25 = arith.constant 0x7F800000 : f32
      %37 = vector.broadcast %cst_25 : f32 to vector<1x512xf32>
      %c0_26 = arith.constant 0 : index
      %c0_27 = arith.constant 0 : index
      %38 = vector.load %arg8[%c0_26, %c0_27] : memref<1x512xf32, #tpu.memory_space<vmem>>, vector<1x512xf32>
      tpu.vector_store %arg8[%c0_26, %c0_27], %37 {strides = array<i32>} : memref<1x512xf32, #tpu.memory_space<vmem>>, vector<1x512xf32>,
      %c0_i32_28 = arith.constant 0 : i32
      %39 = vector.broadcast %c0_i32_28 : i32 to vector<1x512xi32>
      %c0_29 = arith.constant 0 : index
      %c0_30 = arith.constant 0 : index
      %40 = vector.load %arg9[%c0_29, %c0_30] : memref<1x512xi32, #tpu.memory_space<vmem>>, vector<1x512xi32>
      tpu.vector_store %arg9[%c0_29, %c0_30], %39 {strides = array<i32>} : memref<1x512xi32, #tpu.memory_space<vmem>>, vector<1x512xi32>,
      %41 = tpu.iota {dimensions = array<i32: 0>} : vector<128x512xi32>
      %c0_31 = arith.constant 0 : index
      %c0_32 = arith.constant 0 : index
      %42 = vector.load %arg10[%c0_31, %c0_32] : memref<128x512xi32, #tpu.memory_space<vmem>>, vector<128x512xi32>
      tpu.vector_store %arg10[%c0_31, %c0_32], %41 {strides = array<i32>} : memref<128x512xi32, #tpu.memory_space<vmem>>, vector<128x512xi32>,
    } else {
    }
    %c0 = arith.constant 0 : index
    %c0_1 = arith.constant 0 : index
    %3 = vector.load %arg4[%c0, %c0_1] : memref<128x128xbf16, #tpu.memory_space<vmem>>, vector<128x128xbf16>
    %c0_2 = arith.constant 0 : index
    %c0_3 = arith.constant 0 : index
    %4 = vector.load %arg2[%c0_2, %c0_3] : memref<128x512xbf16, #tpu.memory_space<vmem>>, vector<128x512xbf16>
    %cst = arith.constant dense<0.000000e+00> : vector<128x512xf32>
    %5 = tpu.matmul %3, %4, %cst {dimension_numbers = #tpu.dot_dimension_numbers<[1], [0], [0], [1], [0, 0, 1, 1], [], []>} : vector<128x128xbf16>, vector<128x512xbf16>, vector<128x512xf32> -> vector<128x512xf32>
    %c0_4 = arith.constant 0 : index
    %c0_5 = arith.constant 0 : index
    %6 = vector.load %arg5[%c0_4, %c0_5] : memref<128x1xf32, #tpu.memory_space<vmem>>, vector<128x1xf32>
    %cst_6 = arith.constant 2.000000e+00 : f32
    %7 = vector.broadcast %cst_6 : f32 to vector<128x512xf32>
    %8 = arith.mulf %7, %5 : vector<128x512xf32>
    %9 = vector.broadcast %6 : vector<128x1xf32> to vector<128x512xf32>
    %10 = arith.subf %9, %8 : vector<128x512xf32>
    %c0_7 = arith.constant 0 : index
    %c0_8 = arith.constant 0 : index
    %11 = vector.load %arg3[%c0_7, %c0_8] : memref<1x512xf32, #tpu.memory_space<vmem>>, vector<1x512xf32>
    %12 = vector.broadcast %11 : vector<1x512xf32> to vector<128x512xf32>
    %13 = arith.addf %10, %12 : vector<128x512xf32>
    %cst_9 = arith.constant dense<0x7F800000> : vector<512xf32>
    %14 = vector.multi_reduction <minimumf>, %13, %cst_9 [0] : vector<128x512xf32> to vector<512xf32>
    %15 = vector.shape_cast %14 : vector<512xf32> to vector<1x512xf32>
    %16 = vector.broadcast %15 : vector<1x512xf32> to vector<128x512xf32>
    %17 = arith.cmpf ole, %13, %16 : vector<128x512xf32>
    %c0_10 = arith.constant 0 : index
    %c0_11 = arith.constant 0 : index
    %18 = vector.load %arg10[%c0_10, %c0_11] : memref<128x512xi32, #tpu.memory_space<vmem>>, vector<128x512xi32>
    %c1073741824_i32 = arith.constant 1073741824 : i32
    %19 = vector.broadcast %c1073741824_i32 : i32 to vector<128x512xi32>
    %20 = arith.select %17, %18, %19 : vector<128x512xi1>, vector<128x512xi32>
    %cst_12 = arith.constant dense<2147483647> : vector<512xi32>
    %21 = vector.multi_reduction <minsi>, %20, %cst_12 [0] : vector<128x512xi32> to vector<512xi32>
    %22 = vector.shape_cast %21 : vector<512xi32> to vector<1x512xi32>
    %c128_i32 = arith.constant 128 : i32
    %23 = arith.muli %arg1, %c128_i32 : i32
    %24 = vector.broadcast %23 : i32 to vector<1x512xi32>
    %25 = arith.addi %22, %24 : vector<1x512xi32>
    %c0_13 = arith.constant 0 : index
    %c0_14 = arith.constant 0 : index
    %26 = vector.load %arg8[%c0_13, %c0_14] : memref<1x512xf32, #tpu.memory_space<vmem>>, vector<1x512xf32>
    %27 = arith.cmpf olt, %15, %26 : vector<1x512xf32>
    %c0_15 = arith.constant 0 : index
    %c0_16 = arith.constant 0 : index
    %28 = vector.load %arg9[%c0_15, %c0_16] : memref<1x512xi32, #tpu.memory_space<vmem>>, vector<1x512xi32>
    %29 = arith.select %27, %25, %28 : vector<1x512xi1>, vector<1x512xi32>
    %c0_17 = arith.constant 0 : index
    %c0_18 = arith.constant 0 : index
    %30 = vector.load %arg9[%c0_17, %c0_18] : memref<1x512xi32, #tpu.memory_space<vmem>>, vector<1x512xi32>
    tpu.vector_store %arg9[%c0_17, %c0_18], %29 {strides = array<i32>} : memref<1x512xi32, #tpu.memory_space<vmem>>, vector<1x512xi32>,
    %c0_19 = arith.constant 0 : index
    %c0_20 = arith.constant 0 : index
    %31 = vector.load %arg8[%c0_19, %c0_20] : memref<1x512xf32, #tpu.memory_space<vmem>>, vector<1x512xf32>
    %32 = arith.select %27, %15, %31 : vector<1x512xi1>, vector<1x512xf32>
    %c0_21 = arith.constant 0 : index
    %c0_22 = arith.constant 0 : index
    %33 = vector.load %arg8[%c0_21, %c0_22] : memref<1x512xf32, #tpu.memory_space<vmem>>, vector<1x512xf32>
    tpu.vector_store %arg8[%c0_21, %c0_22], %32 {strides = array<i32>} : memref<1x512xf32, #tpu.memory_space<vmem>>, vector<1x512xf32>,
    %c0_i32_23 = arith.constant 0 : i32
    %34 = arith.cmpi eq, %arg1, %c0_i32_23 : i32
    %35 = arith.extui %34 : i1 to i32
    %c0_i32_24 = arith.constant 0 : i32
    %36 = arith.cmpi ne, %35, %c0_i32_24 : i32
    scf.if %36 {
      %c0_25 = arith.constant 0 : index
      %c0_26 = arith.constant 0 : index
      %37 = vector.load %arg8[%c0_25, %c0_26] : memref<1x512xf32, #tpu.memory_space<vmem>>, vector<1x512xf32>
      %c0_27 = arith.constant 0 : index
      %c0_28 = arith.constant 0 : index
      %38 = vector.load %arg6[%c0_27, %c0_28] : memref<1x512xf32, #tpu.memory_space<vmem>>, vector<1x512xf32>
      tpu.vector_store %arg6[%c0_27, %c0_28], %37 {strides = array<i32>} : memref<1x512xf32, #tpu.memory_space<vmem>>, vector<1x512xf32>,
      %c0_29 = arith.constant 0 : index
      %c0_30 = arith.constant 0 : index
      %39 = vector.load %arg9[%c0_29, %c0_30] : memref<1x512xi32, #tpu.memory_space<vmem>>, vector<1x512xi32>
      %c0_31 = arith.constant 0 : index
      %c0_32 = arith.constant 0 : index
      %40 = vector.load %arg7[%c0_31, %c0_32] : memref<1x512xi32, #tpu.memory_space<vmem>>, vector<1x512xi32>
      tpu.vector_store %arg7[%c0_31, %c0_32], %39 {strides = array<i32>} : memref<1x512xi32, #tpu.memory_space<vmem>>, vector<1x512xi32>,
    } else {
    }
    return
  }
  func.func @transform_0(%arg0: i32, %arg1: i32) -> (i32, i32) {
    %c0_i32 = arith.constant 0 : i32
    %c0_i32_0 = arith.constant 0 : i32
    return %c0_i32, %arg0 : i32, i32
  }
  func.func @transform_1(%arg0: i32, %arg1: i32) -> (i32, i32) {
    %c0_i32 = arith.constant 0 : i32
    %c0_i32_0 = arith.constant 0 : i32
    return %c0_i32, %arg0 : i32, i32
  }
  func.func @transform_2(%arg0: i32, %arg1: i32) -> (i32, i32) {
    %c0_i32 = arith.constant 0 : i32
    %c0_i32_0 = arith.constant 0 : i32
    return %arg1, %c0_i32 : i32, i32
  }
  func.func @transform_3(%arg0: i32, %arg1: i32) -> (i32, i32) {
    %c0_i32 = arith.constant 0 : i32
    %c0_i32_0 = arith.constant 0 : i32
    return %arg1, %c0_i32 : i32, i32
  }
  func.func @transform_4(%arg0: i32, %arg1: i32) -> (i32, i32) {
    %c0_i32 = arith.constant 0 : i32
    %c0_i32_0 = arith.constant 0 : i32
    return %arg0, %c0_i32 : i32, i32
  }
  func.func @transform_5(%arg0: i32, %arg1: i32) -> (i32, i32) {
    %c0_i32 = arith.constant 0 : i32
    %c0_i32_0 = arith.constant 0 : i32
    return %arg0, %c0_i32 : i32, i32
  }
}

module attributes {stable_mosaic.version = 11 : i64} {
  func.func @_sqdist_kernel(%arg0: i32, %arg1: memref<8x128xf32, #tpu.memory_space<vmem>>, %arg2: memref<8x1xf32, #tpu.memory_space<vmem>>, %arg3: memref<128x128xf32, #tpu.memory_space<vmem>>, %arg4: memref<1x128xf32, #tpu.memory_space<vmem>>, %arg5: memref<8x128xf32, #tpu.memory_space<vmem>>) attributes {dimension_semantics = [#tpu.dimension_semantics<parallel>], iteration_bounds = array<i64: 1>, scalar_prefetch = 0 : i64, scratch_operands = 0 : i64, tpu.core_type = #tpu.core_type<tc>, window_params = [{pipeline_mode = #tpu.pipeline_mode<synchronous>, transform_indices = @transform_0, window_bounds = array<i64: 8, 128>}, {pipeline_mode = #tpu.pipeline_mode<synchronous>, transform_indices = @transform_1, window_bounds = array<i64: 8, 1>}, {transform_indices = @transform_2, window_bounds = array<i64: 128, 128>}, {transform_indices = @transform_3, window_bounds = array<i64: 1, 128>}, {transform_indices = @transform_4, window_bounds = array<i64: 8, 128>}]} {
    %c0 = arith.constant 0 : index
    %c0_0 = arith.constant 0 : index
    %0 = vector.load %arg1[%c0, %c0_0] : memref<8x128xf32, #tpu.memory_space<vmem>>, vector<8x128xf32>
    %c0_1 = arith.constant 0 : index
    %c0_2 = arith.constant 0 : index
    %1 = vector.load %arg3[%c0_1, %c0_2] : memref<128x128xf32, #tpu.memory_space<vmem>>, vector<128x128xf32>
    %cst = arith.constant dense<0.000000e+00> : vector<8x128xf32>
    %2 = tpu.matmul %0, %1, %cst {dimension_numbers = #tpu.dot_dimension_numbers<[1], [1], [0], [0], [0, 0, 1, 0], [], []>} : vector<8x128xf32>, vector<128x128xf32>, vector<8x128xf32> -> vector<8x128xf32>
    %c0_3 = arith.constant 0 : index
    %c0_4 = arith.constant 0 : index
    %3 = vector.load %arg2[%c0_3, %c0_4] : memref<8x1xf32, #tpu.memory_space<vmem>>, vector<8x1xf32>
    %cst_5 = arith.constant 2.000000e+00 : f32
    %4 = vector.broadcast %cst_5 : f32 to vector<8x128xf32>
    %5 = arith.mulf %4, %2 : vector<8x128xf32>
    %6 = vector.broadcast %3 : vector<8x1xf32> to vector<8x128xf32>
    %7 = arith.subf %6, %5 : vector<8x128xf32>
    %c0_6 = arith.constant 0 : index
    %c0_7 = arith.constant 0 : index
    %8 = vector.load %arg4[%c0_6, %c0_7] : memref<1x128xf32, #tpu.memory_space<vmem>>, vector<1x128xf32>
    %9 = vector.broadcast %8 : vector<1x128xf32> to vector<8x128xf32>
    %10 = arith.addf %7, %9 : vector<8x128xf32>
    %c0_8 = arith.constant 0 : index
    %c0_9 = arith.constant 0 : index
    %11 = vector.load %arg5[%c0_8, %c0_9] : memref<8x128xf32, #tpu.memory_space<vmem>>, vector<8x128xf32>
    tpu.vector_store %arg5[%c0_8, %c0_9], %10 {strides = array<i32>} : memref<8x128xf32, #tpu.memory_space<vmem>>, vector<8x128xf32>,
    return
  }
  func.func @transform_0(%arg0: i32) -> (i32, i32) {
    %c0_i32 = arith.constant 0 : i32
    %c0_i32_0 = arith.constant 0 : i32
    %c0_i32_1 = arith.constant 0 : i32
    return %c0_i32, %c0_i32_0 : i32, i32
  }
  func.func @transform_1(%arg0: i32) -> (i32, i32) {
    %c0_i32 = arith.constant 0 : i32
    %c0_i32_0 = arith.constant 0 : i32
    %c0_i32_1 = arith.constant 0 : i32
    return %c0_i32, %c0_i32_0 : i32, i32
  }
  func.func @transform_2(%arg0: i32) -> (i32, i32) {
    %c0_i32 = arith.constant 0 : i32
    %c0_i32_0 = arith.constant 0 : i32
    return %arg0, %c0_i32 : i32, i32
  }
  func.func @transform_3(%arg0: i32) -> (i32, i32) {
    %c0_i32 = arith.constant 0 : i32
    %c0_i32_0 = arith.constant 0 : i32
    return %c0_i32, %arg0 : i32, i32
  }
  func.func @transform_4(%arg0: i32) -> (i32, i32) {
    %c0_i32 = arith.constant 0 : i32
    %c0_i32_0 = arith.constant 0 : i32
    return %c0_i32, %arg0 : i32, i32
  }
}

module attributes {stable_mosaic.version = 11 : i64} {
  func.func @_anomap_kernel(%arg0: i32, %arg1: memref<32x16xf32, #tpu.memory_space<vmem>>, %arg2: memref<16x32xf32, #tpu.memory_space<vmem>>, %arg3: memref<1x16x16xf32, #tpu.memory_space<vmem>>, %arg4: memref<1x32x32xf32, #tpu.memory_space<vmem>>) attributes {dimension_semantics = [#tpu.dimension_semantics<parallel>], iteration_bounds = array<i64: 2>, scalar_prefetch = 0 : i64, scratch_operands = 0 : i64, tpu.core_type = #tpu.core_type<tc>, window_params = [{pipeline_mode = #tpu.pipeline_mode<synchronous>, transform_indices = @transform_0, window_bounds = array<i64: 32, 16>}, {pipeline_mode = #tpu.pipeline_mode<synchronous>, transform_indices = @transform_1, window_bounds = array<i64: 16, 32>}, {transform_indices = @transform_2, window_bounds = array<i64: 1, 16, 16>}, {transform_indices = @transform_3, window_bounds = array<i64: 1, 32, 32>}]} {
    %c0 = arith.constant 0 : index
    %c0_0 = arith.constant 0 : index
    %0 = vector.load %arg1[%c0, %c0_0] : memref<32x16xf32, #tpu.memory_space<vmem>>, vector<32x16xf32>
    %c0_1 = arith.constant 0 : index
    %c0_2 = arith.constant 0 : index
    %c0_3 = arith.constant 0 : index
    %1 = vector.load %arg3[%c0_1, %c0_2, %c0_3] : memref<1x16x16xf32, #tpu.memory_space<vmem>>, vector<1x16x16xf32>
    %2 = vector.shape_cast %1 : vector<1x16x16xf32> to vector<16x16xf32>
    %cst = arith.constant dense<0.000000e+00> : vector<32x16xf32>
    %3 = tpu.matmul %0, %2, %cst {dimension_numbers = #tpu.dot_dimension_numbers<[1], [0], [0], [1], [0, 0, 1, 1], [], []>} : vector<32x16xf32>, vector<16x16xf32>, vector<32x16xf32> -> vector<32x16xf32>
    %c0_4 = arith.constant 0 : index
    %c0_5 = arith.constant 0 : index
    %4 = vector.load %arg2[%c0_4, %c0_5] : memref<16x32xf32, #tpu.memory_space<vmem>>, vector<16x32xf32>
    %cst_6 = arith.constant dense<0.000000e+00> : vector<32x32xf32>
    %5 = tpu.matmul %3, %4, %cst_6 {dimension_numbers = #tpu.dot_dimension_numbers<[1], [0], [0], [1], [0, 0, 1, 1], [], []>} : vector<32x16xf32>, vector<16x32xf32>, vector<32x32xf32> -> vector<32x32xf32>
    %c0_7 = arith.constant 0 : index
    %c0_8 = arith.constant 0 : index
    %c0_9 = arith.constant 0 : index
    %6 = vector.load %arg4[%c0_7, %c0_8, %c0_9] : memref<1x32x32xf32, #tpu.memory_space<vmem>>, vector<1x32x32xf32>
    %7 = vector.shape_cast %6 : vector<1x32x32xf32> to vector<32x32xf32>
    %8 = vector.shape_cast %5 : vector<32x32xf32> to vector<1x32x32xf32>
    tpu.vector_store %arg4[%c0_7, %c0_8, %c0_9], %8 {strides = array<i32>} : memref<1x32x32xf32, #tpu.memory_space<vmem>>, vector<1x32x32xf32>,
    return
  }
  func.func @transform_0(%arg0: i32) -> (i32, i32) {
    %c0_i32 = arith.constant 0 : i32
    %c0_i32_0 = arith.constant 0 : i32
    %c0_i32_1 = arith.constant 0 : i32
    return %c0_i32, %c0_i32_0 : i32, i32
  }
  func.func @transform_1(%arg0: i32) -> (i32, i32) {
    %c0_i32 = arith.constant 0 : i32
    %c0_i32_0 = arith.constant 0 : i32
    %c0_i32_1 = arith.constant 0 : i32
    return %c0_i32, %c0_i32_0 : i32, i32
  }
  func.func @transform_2(%arg0: i32) -> (i32, i32, i32) {
    %c0_i32 = arith.constant 0 : i32
    %c0_i32_0 = arith.constant 0 : i32
    %c0_i32_1 = arith.constant 0 : i32
    return %arg0, %c0_i32, %c0_i32_0 : i32, i32, i32
  }
  func.func @transform_3(%arg0: i32) -> (i32, i32, i32) {
    %c0_i32 = arith.constant 0 : i32
    %c0_i32_0 = arith.constant 0 : i32
    %c0_i32_1 = arith.constant 0 : i32
    return %arg0, %c0_i32, %c0_i32_0 : i32, i32, i32
  }
}

</mosaic_0001>

<llo_original>
// kernel: patchcore_forward.8
$region0: #{patchcore_forward.8}
  #allocation0 [shape = 'u32[]', space=smem, size = 0x4, offset = 0x4, fixed_abs, tag = 'smem constant byte address 0x4 - core index']
  #allocation1 [shape = 'u32[144,128]{1,0:T(1,128)}', space=vmem, size = 0x12000, scoped, tag = 'internal scratch']
  #allocation2 [shape = 'f32[256,128]{1,0:T(8,128)}', space=vmem, size = 0x20000, scoped, tag = 'scratch operand']
  %s0 = inlined_call_operand.vmem [shape: bf16[512,4], index: 0, kind: input, shape index: {}]
  %s1 = inlined_call_operand.vmem [shape: bf16[4,128], index: 1, kind: input, shape index: {}]
  %s2 = inlined_call_operand.vmem [shape: f32[1,128], index: 2, kind: input, shape index: {}]
  %s3 = inlined_call_operand.vmem [shape: f32[512,128], index: 3, kind: output, shape index: {}]
  %s4 = sld [smem:[#allocation0]]
  $region53: #{patchcore_forward.8} parent=0
    _
  %s6 = ssub.s32 1, %s4
  %s7 = scalar_select 0, %s6, %s4
  loop: start=0, step=1, limit=4
  $region2: #{patchcore_forward.8} parent=0 // loop_pre_header
    _
  $region3: #{patchcore_forward.8} parent=0 // loop_header
    %s9 = sphi 0, %s13
    %p10 = scmp.ge.s32.totalorder %s9, 4
    %s16 = sphi 0, %s35
    %s17 = sphi 0, %s31
    %s18 = sphi 0, %s27
    %s19 = sphi 0, %s16
    %s20 = sphi 0, %s17
    %s21 = sphi 0, %s18
    %s22 = sphi 0, %s19
    %s23 = sphi 0, %s20
    %s24 = sphi 0, %s21
    %s40 = sphi 0, %s42
    %s43 = sphi 0, %s40
    %s44 = sphi 0, %s43
    %s60 = sphi 0, %s44
    %s68 = sphi 0, %s70
    %s71 = sphi 0, %s68
    %s72 = sphi 0, %s71
    %s88 = sphi 0, %s72
    %s94 = sphi 0, %s96
    %s97 = sphi 0, %s94
    %s98 = sphi 0, %s97
    %s114 = sphi 0, %s98
    %s122 = sphi 0, %s124
    %s125 = sphi 0, %s122
    %s126 = sphi 0, %s125
    %s142 = sphi 0, %s126
  $region4: #{patchcore_forward.8} parent=0 // loop_header_branch
    %12 = sbr.rel (%p10) target = $region8
  $region5: #{patchcore_forward.8} parent=0 // loop_body
    %s14 = ssub.s32 %s9, 1
    %s15 = ssub.s32 %s9, 2
    %s25 = sadd.s32 1, %s18
    %p26 = scmp.ge.s32.totalorder %s25, 1
    %s27 = scalar_select %p26, 0, %s25
    %s28 = sadd.s32 1, %s17
    %s29 = scalar_select %p26, %s28, %s17
    %p30 = scmp.ge.s32.totalorder %s29, 1
    %s31 = scalar_select %p30, 0, %s29
    %s32 = sadd.s32 1, %s16
    %s33 = scalar_select %p30, %s32, %s16
    %p34 = scmp.ge.s32.totalorder %s33, 2
    %s35 = scalar_select %p34, 0, %s33
    %s36 = ssub.s32 %s16, %s35
    %s37 = ssub.s32 %s18, %s27
    %s38 = sor.u32 %s36, %s37
    %p39 = scmp.eq.s32.totalorder %s38, 0
    %s41 = sadd.s32 %s40, 1
    %s42 = scalar_select %p39, %s40, %s41
    %p45 = pneg %p39
    %p46 = scmp.eq.s32.totalorder %s9, 1
    %p47 = por %p45, %p46
    %p48 = scmp.ne.s32.totalorder %s40, %s43
    %p49 = scmp.eq.s32.totalorder %s9, 0
    %p50 = por %p48, %p49
    %p51 = scmp.ne.s32.totalorder %s40, %s43
    %p52 = scmp.eq.s32.totalorder %s14, 1
    %p53 = por %p51, %p52
    %p54 = scmp.ne.s32.totalorder %s43, %s44
    %p55 = scmp.eq.s32.totalorder %s14, 0
    %p56 = por %p54, %p55
    %p57 = scmp.ne.s32.totalorder %s43, %s44
    %p58 = scmp.eq.s32.totalorder %s15, 1
    %p59 = por %p57, %p58
    %p61 = scmp.ne.s32.totalorder %s44, %s60
    %p62 = scmp.eq.s32.totalorder %s15, 0
    %p63 = por %p61, %p62
    %s64 = ssub.s32 %s18, %s27
    %s65 = ssub.s32 %s17, %s31
    %s66 = sor.u32 %s64, %s65
    %p67 = scmp.eq.s32.totalorder %s66, 0
    %s69 = sadd.s32 %s68, 1
    %s70 = scalar_select %p67, %s68, %s69
    %p73 = pneg %p67
    %p74 = scmp.eq.s32.totalorder %s9, 1
    %p75 = por %p73, %p74
    %p76 = scmp.ne.s32.totalorder %s68, %s71
    %p77 = scmp.eq.s32.totalorder %s9, 0
    %p78 = por %p76, %p77
    %p79 = scmp.ne.s32.totalorder %s68, %s71
    %p80 = scmp.eq.s32.totalorder %s14, 1
    %p81 = por %p79, %p80
    %p82 = scmp.ne.s32.totalorder %s71, %s72
    %p83 = scmp.eq.s32.totalorder %s14, 0
    %p84 = por %p82, %p83
    %p85 = scmp.ne.s32.totalorder %s71, %s72
    %p86 = scmp.eq.s32.totalorder %s15, 1
    %p87 = por %p85, %p86
    %p89 = scmp.ne.s32.totalorder %s72, %s88
    %p90 = scmp.eq.s32.totalorder %s15, 0
    %p91 = por %p89, %p90
    %s92 = ssub.s32 %s17, %s31
    %p93 = scmp.eq.s32.totalorder %s92, 0
    %s95 = sadd.s32 %s94, 1
    %s96 = scalar_select %p93, %s94, %s95
    %p99 = pneg %p93
    %p100 = scmp.eq.s32.totalorder %s9, 1
    %p101 = por %p99, %p100
    %p102 = scmp.ne.s32.totalorder %s94, %s97
    %p103 = scmp.eq.s32.totalorder %s9, 0
    %p104 = por %p102, %p103
    %p105 = scmp.ne.s32.totalorder %s94, %s97
    %p106 = scmp.eq.s32.totalorder %s14, 1
    %p107 = por %p105, %p106
    %p108 = scmp.ne.s32.totalorder %s97, %s98
    %p109 = scmp.eq.s32.totalorder %s14, 0
    %p110 = por %p108, %p109
    %p111 = scmp.ne.s32.totalorder %s97, %s98
    %p112 = scmp.eq.s32.totalorder %s15, 1
    %p113 = por %p111, %p112
    %p115 = scmp.ne.s32.totalorder %s98, %s114
    %p116 = scmp.eq.s32.totalorder %s15, 0
    %p117 = por %p115, %p116
    %s118 = ssub.s32 %s16, %s35
    %s119 = ssub.s32 %s17, %s31
    %s120 = sor.u32 %s118, %s119
    %p121 = scmp.eq.s32.totalorder %s120, 0
    %s123 = sadd.s32 %s122, 1
    %s124 = scalar_select %p121, %s122, %s123
    %p127 = pneg %p121
    %p128 = scmp.eq.s32.totalorder %s9, 1
    %p129 = por %p127, %p128
    %p130 = scmp.ne.s32.totalorder %s122, %s125
    %p131 = scmp.eq.s32.totalorder %s9, 0
    %p132 = por %p130, %p131
    %p133 = scmp.ne.s32.totalorder %s122, %s125
    %p134 = scmp.eq.s32.totalorder %s14, 1
    %p135 = por %p133, %p134
    %p136 = scmp.ne.s32.totalorder %s125, %s126
    %p137 = scmp.eq.s32.totalorder %s14, 0
    %p138 = por %p136, %p137
    %p139 = scmp.ne.s32.totalorder %s125, %s126
    %p140 = scmp.eq.s32.totalorder %s15, 1
    %p141 = por %p139, %p140
    %p143 = scmp.ne.s32.totalorder %s126, %s142
    %p144 = scmp.eq.s32.totalorder %s15, 0
    %p145 = por %p143, %p144
    %p146 = scmp.le.s32.totalorder 1, %s9
    %p147 = scmp.lt.s32.totalorder %s9, 3
    %p148 = pnand %p146, %p147
    %p149 = pneg %p148
    // Predicated region
    $region9: #{patchcore_forward.8} parent=5 // pred_check
      _
    $region10: #{patchcore_forward.8} parent=5 // pred_check_branch
      %151 = sbr.rel (%p148) target = $region12
    $region11: #{patchcore_forward.8} parent=5 // pred_region
      %s152 = ssub.s32 %s9, 1
      // Predicated region
      $region13: #{patchcore_forward.8} parent=11 // pred_check
        %p153 = pneg %p84
      $region14: #{patchcore_forward.8} parent=11 // pred_check_branch
        %155 = sbr.rel (%p153) target = $region16
      $region15: #{patchcore_forward.8} parent=11 // pred_region
        %p156 = scmp.lt.s32.totalorder %s21, 0
        %s157 = scalar_select %p156, %s21, 0
        %p158 = scmp.lt.s32.totalorder %s20, 0
        %s159 = scalar_select %p158, %s20, 0
        %s160 = sadd.s32 %s159, %s157
        %s161 = smul.addr %s160, 2
        %s162 = scalar_lea.vmem %s1, %s161
      $region16: #{patchcore_forward.8} parent=11 // pred_fallthru
        _
      // Predicated region
      $region17: #{patchcore_forward.8} parent=11 // pred_check
        %p163 = pneg %p110
      $region18: #{patchcore_forward.8} parent=11 // pred_check_branch
        %165 = sbr.rel (%p163) target = $region20
      $region19: #{patchcore_forward.8} parent=11 // pred_region
        %p166 = scmp.lt.s32.totalorder %s20, 0
        %s167 = scalar_select %p166, %s20, 0
        %s168 = scalar_lea.vmem %s2, %s167
      $region20: #{patchcore_forward.8} parent=11 // pred_fallthru
        _
    $region12: #{patchcore_forward.8} parent=5 // pred_fallthru
      _
    %p169 = scmp.lt.s32.totalorder %s9, 2
    // Predicated region
    $region21: #{patchcore_forward.8} parent=5 // pred_check
      %p170 = pneg %p169
    $region22: #{patchcore_forward.8} parent=5 // pred_check_branch
      %172 = sbr.rel (%p170) target = $region24
    $region23: #{patchcore_forward.8} parent=5 // pred_region
      // Predicated region
      $region25: #{patchcore_forward.8} parent=23 // pred_check
        %p173 = pneg %p50
      $region26: #{patchcore_forward.8} parent=23 // pred_check_branch
        %175 = sbr.rel (%p173) target = $region28
      $region27: #{patchcore_forward.8} parent=23 // pred_region
        %s176 = smul.u32 32, %s16
        %p177 = scmp.lt.s32.totalorder %s176, 63
        %s178 = scalar_select %p177, %s176, 63
        %p179 = scmp.lt.s32.totalorder %s18, 0
        %s180 = scalar_select %p179, %s18, 0
        %s181 = sadd.s32 %s180, %s178
        %s182 = smul.addr %s181, 4
        %s183 = scalar_lea.vmem %s0, %s182
        %s184 = smul.u32 32, %s16
      $region28: #{patchcore_forward.8} parent=23 // pred_fallthru
        _
    $region24: #{patchcore_forward.8} parent=5 // pred_fallthru
      _
    %p185 = scmp.le.s32.totalorder 1, %s9
    %p186 = scmp.lt.s32.totalorder %s9, 3
    %p187 = pnand %p185, %p186
    %p188 = pneg %p187
    // Predicated region
    $region29: #{patchcore_forward.8} parent=5 // pred_check
      _
    $region30: #{patchcore_forward.8} parent=5 // pred_check_branch
      %190 = sbr.rel (%p187) target = $region32
    $region31: #{patchcore_forward.8} parent=5 // pred_region
      %s191 = ssub.s32 %s9, 1
      %s192 = smul.u32 32, %s19
      %p193 = scmp.lt.s32.totalorder %s192, 63
      %s194 = scalar_select %p193, %s192, 63
      %p195 = scmp.lt.s32.totalorder %s21, 0
      %s196 = scalar_select %p195, %s21, 0
      %s197 = sadd.s32 %s196, %s194
      %s198 = smul.addr %s197, 4
      %s199 = scalar_lea.vmem %s0, %s198
      %p200 = pneg %p56
      %p201 = pneg %p53
      %p202 = scmp.lt.s32.totalorder %s21, 0
      %s203 = scalar_select %p202, %s21, 0
      %p204 = scmp.lt.s32.totalorder %s20, 0
      %s205 = scalar_select %p204, %s20, 0
      %s206 = sadd.s32 %s205, %s203
      %s207 = smul.addr %s206, 2
      %s208 = scalar_lea.vmem %s1, %s207
      %p209 = pneg %p84
      %p210 = pneg %p81
      %p211 = scmp.lt.s32.totalorder %s20, 0
      %s212 = scalar_select %p211, %s20, 0
      %s213 = scalar_lea.vmem %s2, %s212
      %p214 = pneg %p110
      %p215 = pneg %p107
      %p216 = pneg %p138
      %p217 = pneg %p135
      %s218 = smul.u32 32, %s19
      %p219 = scmp.lt.s32.totalorder %s218, 63
      %s220 = scalar_select %p219, %s218, 63
      %p221 = scmp.lt.s32.totalorder %s20, 0
      %s222 = scalar_select %p221, %s20, 0
      %s223 = sadd.s32 %s222, %s220
      %s224 = smul.addr %s223, 8
      %s225 = scalar_lea.vmem %s3, %s224
      %s226 = smul.u32 32, %s19
      %p227 = scmp.lt.s32.totalorder %s226, 63
      %s228 = scalar_select %p227, %s226, 63
      %p229 = scmp.lt.s32.totalorder %s21, 0
      %s230 = scalar_select %p229, %s21, 0
      %s231 = sadd.s32 %s230, %s228
      %s232 = smul.addr %s231, 4
      %s233 = scalar_lea.vmem %s0, %s232
      %s234 = smul.u32 32, %s19
      %p235 = scmp.lt.s32.totalorder %s21, 0
      %s236 = scalar_select %p235, %s21, 0
      %p237 = scmp.lt.s32.totalorder %s20, 0
      %s238 = scalar_select %p237, %s20, 0
      %s239 = sadd.s32 %s238, %s236
      %s240 = smul.addr %s239, 2
      %s241 = scalar_lea.vmem %s1, %s240
      %p242 = scmp.lt.s32.totalorder %s20, 0
      %s243 = scalar_select %p242, %s20, 0
      %s244 = scalar_lea.vmem %s2, %s243
      %s245 = smul.u32 32, %s19
      %p246 = scmp.lt.s32.totalorder %s245, 63
      %s247 = scalar_select %p246, %s245, 63
      %p248 = scmp.lt.s32.totalorder %s20, 0
      %s249 = scalar_select %p248, %s20, 0
      %s250 = sadd.s32 %s249, %s247
      %s251 = smul.addr %s250, 8
      %s252 = scalar_lea.vmem %s3, %s251
      %s253 = smul.u32 32, %s19
      %p255 = scmp.eq.s32.totalorder %s21, 0
      // Predicated region
      $region33: #{patchcore_forward.8} parent=31 // pred_check
        %p256 = pneg %p255
      $region34: #{patchcore_forward.8} parent=31 // pred_check_branch
        %258 = sbr.rel (%p256) target = $region36
      $region35: #{patchcore_forward.8} parent=31 // pred_region
        %259 = vst [vmem:[#allocation2] sm:$0xff] 0.0
        %260 = vst [vmem:[#allocation2 + $0x8] sm:$0xff] 0.0
        %261 = vst [vmem:[#allocation2 + $0x10] sm:$0xff] 0.0
        %262 = vst [vmem:[#allocation2 + $0x18] sm:$0xff] 0.0
        %263 = vst [vmem:[#allocation2 + $0x20] sm:$0xff] 0.0
        %264 = vst [vmem:[#allocation2 + $0x28] sm:$0xff] 0.0
        %265 = vst [vmem:[#allocation2 + $0x30] sm:$0xff] 0.0
        %266 = vst [vmem:[#allocation2 + $0x38] sm:$0xff] 0.0
        %267 = vst [vmem:[#allocation2 + $0x40] sm:$0xff] 0.0
        %268 = vst [vmem:[#allocation2 + $0x48] sm:$0xff] 0.0
        %269 = vst [vmem:[#allocation2 + $0x50] sm:$0xff] 0.0
        %270 = vst [vmem:[#allocation2 + $0x58] sm:$0xff] 0.0
        %271 = vst [vmem:[#allocation2 + $0x60] sm:$0xff] 0.0
        %272 = vst [vmem:[#allocation2 + $0x68] sm:$0xff] 0.0
        %273 = vst [vmem:[#allocation2 + $0x70] sm:$0xff] 0.0
        %274 = vst [vmem:[#allocation2 + $0x78] sm:$0xff] 0.0
        %275 = vst [vmem:[#allocation2 + $0x80] sm:$0xff] 0.0
        %276 = vst [vmem:[#allocation2 + $0x88] sm:$0xff] 0.0
        %277 = vst [vmem:[#allocation2 + $0x90] sm:$0xff] 0.0
        %278 = vst [vmem:[#allocation2 + $0x98] sm:$0xff] 0.0
        %279 = vst [vmem:[#allocation2 + $0xa0] sm:$0xff] 0.0
        %280 = vst [vmem:[#allocation2 + $0xa8] sm:$0xff] 0.0
        %281 = vst [vmem:[#allocation2 + $0xb0] sm:$0xff] 0.0
        %282 = vst [vmem:[#allocation2 + $0xb8] sm:$0xff] 0.0
        %283 = vst [vmem:[#allocation2 + $0xc0] sm:$0xff] 0.0
        %284 = vst [vmem:[#allocation2 + $0xc8] sm:$0xff] 0.0
        %285 = vst [vmem:[#allocation2 + $0xd0] sm:$0xff] 0.0
        %286 = vst [vmem:[#allocation2 + $0xd8] sm:$0xff] 0.0
        %287 = vst [vmem:[#allocation2 + $0xe0] sm:$0xff] 0.0
        %288 = vst [vmem:[#allocation2 + $0xe8] sm:$0xff] 0.0
        %289 = vst [vmem:[#allocation2 + $0xf0] sm:$0xff] 0.0
        %290 = vst [vmem:[#allocation2 + $0xf8] sm:$0xff] 0.0
      $region36: #{patchcore_forward.8} parent=31 // pred_fallthru
        _
      %v291 = vld [vmem:[#allocation2] sm:$0xff]
      %v292 = vld [vmem:[#allocation2 + $0x8] sm:$0xff]
      %v293 = vld [vmem:[#allocation2 + $0x10] sm:$0xff]
      %v294 = vld [vmem:[#allocation2 + $0x18] sm:$0xff]
      %v295 = vld [vmem:[#allocation2 + $0x20] sm:$0xff]
      %v296 = vld [vmem:[#allocation2 + $0x28] sm:$0xff]
      %v297 = vld [vmem:[#allocation2 + $0x30] sm:$0xff]
      %v298 = vld [vmem:[#allocation2 + $0x38] sm:$0xff]
      %v299 = vld [vmem:[#allocation2 + $0x40] sm:$0xff]
      %v300 = vld [vmem:[#allocation2 + $0x48] sm:$0xff]
      %v301 = vld [vmem:[#allocation2 + $0x50] sm:$0xff]
      %v302 = vld [vmem:[#allocation2 + $0x58] sm:$0xff]
      %v303 = vld [vmem:[#allocation2 + $0x60] sm:$0xff]
      %v304 = vld [vmem:[#allocation2 + $0x68] sm:$0xff]
      %v305 = vld [vmem:[#allocation2 + $0x70] sm:$0xff]
      %v306 = vld [vmem:[#allocation2 + $0x78] sm:$0xff]
      %v307 = vld [vmem:[#allocation2 + $0x80] sm:$0xff]
      %v308 = vld [vmem:[#allocation2 + $0x88] sm:$0xff]
      %v309 = vld [vmem:[#allocation2 + $0x90] sm:$0xff]
      %v310 = vld [vmem:[#allocation2 + $0x98] sm:$0xff]
      %v311 = vld [vmem:[#allocation2 + $0xa0] sm:$0xff]
      %v312 = vld [vmem:[#allocation2 + $0xa8] sm:$0xff]
      %v313 = vld [vmem:[#allocation2 + $0xb0] sm:$0xff]
      %v314 = vld [vmem:[#allocation2 + $0xb8] sm:$0xff]
      %v315 = vld [vmem:[#allocation2 + $0xc0] sm:$0xff]
      %v316 = vld [vmem:[#allocation2 + $0xc8] sm:$0xff]
      %v317 = vld [vmem:[#allocation2 + $0xd0] sm:$0xff]
      %v318 = vld [vmem:[#allocation2 + $0xd8] sm:$0xff]
      %v319 = vld [vmem:[#allocation2 + $0xe0] sm:$0xff]
      %v320 = vld [vmem:[#allocation2 + $0xe8] sm:$0xff]
      %v321 = vld [vmem:[#allocation2 + $0xf0] sm:$0xff]
      %v322 = vld [vmem:[#allocation2 + $0xf8] sm:$0xff]
      %v323 = vld [vmem:[%s233] sm:$0xf]
      %v324 = vld [vmem:[%s233 + $0x4] sm:$0xf]
      %v325 = vld [vmem:[%s233 + $0x8] sm:$0xf]
      %v326 = vld [vmem:[%s233 + $0xc] sm:$0xf]
      %v327 = vld [vmem:[%s233 + $0x10] sm:$0xf]
      %v328 = vld [vmem:[%s233 + $0x14] sm:$0xf]
      %v329 = vld [vmem:[%s233 + $0x18] sm:$0xf]
      %v330 = vld [vmem:[%s233 + $0x1c] sm:$0xf]
      %v331 = vld [vmem:[%s233 + $0x20] sm:$0xf]
      %v332 = vld [vmem:[%s233 + $0x24] sm:$0xf]
      %v333 = vld [vmem:[%s233 + $0x28] sm:$0xf]
      %v334 = vld [vmem:[%s233 + $0x2c] sm:$0xf]
      %v335 = vld [vmem:[%s233 + $0x30] sm:$0xf]
      %v336 = vld [vmem:[%s233 + $0x34] sm:$0xf]
      %v337 = vld [vmem:[%s233 + $0x38] sm:$0xf]
      %v338 = vld [vmem:[%s233 + $0x3c] sm:$0xf]
      %v339 = vld [vmem:[%s233 + $0x40] sm:$0xf]
      %v340 = vld [vmem:[%s233 + $0x44] sm:$0xf]
      %v341 = vld [vmem:[%s233 + $0x48] sm:$0xf]
      %v342 = vld [vmem:[%s233 + $0x4c] sm:$0xf]
      %v343 = vld [vmem:[%s233 + $0x50] sm:$0xf]
      %v344 = vld [vmem:[%s233 + $0x54] sm:$0xf]
      %v345 = vld [vmem:[%s233 + $0x58] sm:$0xf]
      %v346 = vld [vmem:[%s233 + $0x5c] sm:$0xf]
      %v347 = vld [vmem:[%s233 + $0x60] sm:$0xf]
      %v348 = vld [vmem:[%s233 + $0x64] sm:$0xf]
      %v349 = vld [vmem:[%s233 + $0x68] sm:$0xf]
      %v350 = vld [vmem:[%s233 + $0x6c] sm:$0xf]
      %v351 = vld [vmem:[%s233 + $0x70] sm:$0xf]
      %v352 = vld [vmem:[%s233 + $0x74] sm:$0xf]
      %v353 = vld [vmem:[%s233 + $0x78] sm:$0xf]
      %v354 = vld [vmem:[%s233 + $0x7c] sm:$0xf]
      %v355 = vld [vmem:[%s241] sm:$0x3]
      %v388 = vunpack.c.l.b16 %v323
      %v389 = vunpack.c.l.b16 %v324
      %v390 = vunpack.c.l.b16 %v325
      %v391 = vunpack.c.l.b16 %v326
      %v392 = vunpack.c.l.b16 %v327
      %v393 = vunpack.c.l.b16 %v328
      %v394 = vunpack.c.l.b16 %v329
      %v395 = vunpack.c.l.b16 %v330
      %v396 = vunpack.c.l.b16 %v331
      %v397 = vunpack.c.l.b16 %v332
      %v398 = vunpack.c.l.b16 %v333
      %v399 = vunpack.c.l.b16 %v334
      %v400 = vunpack.c.l.b16 %v335
      %v401 = vunpack.c.l.b16 %v336
      %v402 = vunpack.c.l.b16 %v337
      %v403 = vunpack.c.l.b16 %v338
      %v404 = vunpack.c.l.b16 %v339
      %v405 = vunpack.c.l.b16 %v340
      %v406 = vunpack.c.l.b16 %v341
      %v407 = vunpack.c.l.b16 %v342
      %v408 = vunpack.c.l.b16 %v343
      %v409 = vunpack.c.l.b16 %v344
      %v410 = vunpack.c.l.b16 %v345
      %v411 = vunpack.c.l.b16 %v346
      %v412 = vunpack.c.l.b16 %v347
      %v413 = vunpack.c.l.b16 %v348
      %v414 = vunpack.c.l.b16 %v349
      %v415 = vunpack.c.l.b16 %v350
      %v416 = vunpack.c.l.b16 %v351
      %v417 = vunpack.c.l.b16 %v352
      %v418 = vunpack.c.l.b16 %v353
      %v419 = vunpack.c.l.b16 %v354
      %v420 = vpack.c.b16 %v389, %v388
      %v421 = vpack.c.b16 %v391, %v390
      %v422 = vpack.c.b16 %v393, %v392
      %v423 = vpack.c.b16 %v395, %v394
      %v424 = vpack.c.b16 %v397, %v396
      %v425 = vpack.c.b16 %v399, %v398
      %v426 = vpack.c.b16 %v401, %v400
      %v427 = vpack.c.b16 %v403, %v402
      %v428 = vpack.c.b16 %v405, %v404
      %v429 = vpack.c.b16 %v407, %v406
      %v430 = vpack.c.b16 %v409, %v408
      %v431 = vpack.c.b16 %v411, %v410
      %v432 = vpack.c.b16 %v413, %v412
      %v433 = vpack.c.b16 %v415, %v414
      %v434 = vpack.c.b16 %v417, %v416
      %v435 = vpack.c.b16 %v419, %v418
      %vm436 = vcmask 31744
      %v438 = vsel %vm436, %v420, 0
      %v441 = vsel %vm436, %v421, 0
      %v444 = vsel %vm436, %v422, 0
      %v447 = vsel %vm436, %v423, 0
      %v450 = vsel %vm436, %v424, 0
      %v453 = vsel %vm436, %v425, 0
      %v456 = vsel %vm436, %v426, 0
      %v459 = vsel %vm436, %v427, 0
      %v462 = vsel %vm436, %v428, 0
      %v465 = vsel %vm436, %v429, 0
      %v468 = vsel %vm436, %v430, 0
      %v471 = vsel %vm436, %v431, 0
      %v474 = vsel %vm436, %v432, 0
      %v477 = vsel %vm436, %v433, 0
      %v480 = vsel %vm436, %v434, 0
      %v483 = vsel %vm436, %v435, 0
      %vm485 = vcmask 1041408
      %v487 = vsel %vm485, %v355, 0
      %489 = vmatprep.subr.bf16.mxu0 0
      %490 = vmatpush1.bf16.msra.mxu0 %v487
      %491 = vmatprep.subr.bf16.mxu0 0
      %492 = vmatpush1.bf16.msra.mxu0 0
      %493 = vmatprep.subr.bf16.mxu0 0
      %494 = vmatpush1.bf16.msra.mxu0 0
      %495 = vmatprep.subr.bf16.mxu0 0
      %496 = vmatpush1.bf16.msra.mxu0 0
      %497 = vmatprep.subr.bf16.mxu0 0
      %498 = vmatpush1.bf16.msra.mxu0 0
      %499 = vmatprep.subr.bf16.mxu0 0
      %500 = vmatpush1.bf16.msra.mxu0 0
      %501 = vmatprep.subr.bf16.mxu0 0
      %502 = vmatpush1.bf16.msra.mxu0 0
      %503 = vmatprep.subr.bf16.mxu0 0
      %504 = vmatpush1.bf16.msra.mxu0 0
      %505 = vmatprep.subr.bf16.mxu0 0
      %506 = vmatpush1.bf16.msra.mxu0 0
      %507 = vmatprep.subr.bf16.mxu0 0
      %508 = vmatpush1.bf16.msra.mxu0 0
      %509 = vmatprep.subr.bf16.mxu0 0
      %510 = vmatpush1.bf16.msra.mxu0 0
      %511 = vmatprep.subr.bf16.mxu0 0
      %512 = vmatpush1.bf16.msra.mxu0 0
      %513 = vmatprep.subr.bf16.mxu0 0
      %514 = vmatpush1.bf16.msra.mxu0 0
      %515 = vmatprep.subr.bf16.mxu0 0
      %516 = vmatpush1.bf16.msra.mxu0 0
      %517 = vmatprep.subr.bf16.mxu0 0
      %518 = vmatpush1.bf16.msra.mxu0 0
      %519 = vmatprep.subr.bf16.mxu0 0
      %520 = vmatpush1.bf16.msra.mxu0 0
      %521 = vmatprep.mubr.bf16.mxu0 0
      %522 = vmatmul.mubr.bf16.gmra.mrb[0].mxu0 %v438
      %v523 = vpop.f32.mrb[0].mxu0
      %v524 = vadd.f32 0.0, %v523
      %v525 = vpop.f32.mrb[0].mxu0
      %v526 = vpop.f32.mrb[0].mxu0
      %v527 = vadd.f32 0.0, %v526
      %v528 = vpop.f32.mrb[0].mxu0
      %529 = vmatprep.mubr.bf16.mxu0 0
      %530 = vmatmul.mubr.bf16.gmra.mrb[0].mxu0 %v441
      %v531 = vpop.f32.mrb[0].mxu0
      %v532 = vadd.f32 0.0, %v531
      %v533 = vpop.f32.mrb[0].mxu0
      %v534 = vpop.f32.mrb[0].mxu0
      %v535 = vadd.f32 0.0, %v534
      %v536 = vpop.f32.mrb[0].mxu0
      %537 = vmatprep.mubr.bf16.mxu0 0
      %538 = vmatmul.mubr.bf16.gmra.mrb[0].mxu0 %v444
      %v539 = vpop.f32.mrb[0].mxu0
      %v540 = vadd.f32 0.0, %v539
      %v541 = vpop.f32.mrb[0].mxu0
      %v542 = vpop.f32.mrb[0].mxu0
      %v543 = vadd.f32 0.0, %v542
      %v544 = vpop.f32.mrb[0].mxu0
      %545 = vmatprep.mubr.bf16.mxu0 0
      %546 = vmatmul.mubr.bf16.gmra.mrb[0].mxu0 %v447
      %v547 = vpop.f32.mrb[0].mxu0
      %v548 = vadd.f32 0.0, %v547
      %v549 = vpop.f32.mrb[0].mxu0
      %v550 = vpop.f32.mrb[0].mxu0
      %v551 = vadd.f32 0.0, %v550
      %v552 = vpop.f32.mrb[0].mxu0
      %553 = vmatprep.mubr.bf16.mxu0 0
      %554 = vmatmul.mubr.bf16.gmra.mrb[0].mxu0 %v450
      %v555 = vpop.f32.mrb[0].mxu0
      %v556 = vadd.f32 0.0, %v555
      %v557 = vpop.f32.mrb[0].mxu0
      %v558 = vpop.f32.mrb[0].mxu0
      %v559 = vadd.f32 0.0, %v558
      %v560 = vpop.f32.mrb[0].mxu0
      %561 = vmatprep.mubr.bf16.mxu0 0
      %562 = vmatmul.mubr.bf16.gmra.mrb[0].mxu0 %v453
      %v563 = vpop.f32.mrb[0].mxu0
      %v564 = vadd.f32 0.0, %v563
      %v565 = vpop.f32.mrb[0].mxu0
      %v566 = vpop.f32.mrb[0].mxu0
      %v567 = vadd.f32 0.0, %v566
      %v568 = vpop.f32.mrb[0].mxu0
      %569 = vmatprep.mubr.bf16.mxu0 0
      %570 = vmatmul.mubr.bf16.gmra.mrb[0].mxu0 %v456
      %v571 = vpop.f32.mrb[0].mxu0
      %v572 = vadd.f32 0.0, %v571
      %v573 = vpop.f32.mrb[0].mxu0
      %v574 = vpop.f32.mrb[0].mxu0
      %v575 = vadd.f32 0.0, %v574
      %v576 = vpop.f32.mrb[0].mxu0
      %577 = vmatprep.mubr.bf16.mxu0 0
      %578 = vmatmul.mubr.bf16.gmra.mrb[0].mxu0 %v459
      %v579 = vpop.f32.mrb[0].mxu0
      %v580 = vadd.f32 0.0, %v579
      %v581 = vpop.f32.mrb[0].mxu0
      %v582 = vpop.f32.mrb[0].mxu0
      %v583 = vadd.f32 0.0, %v582
      %v584 = vpop.f32.mrb[0].mxu0
      %585 = vmatprep.mubr.bf16.mxu0 0
      %586 = vmatmul.mubr.bf16.gmra.mrb[0].mxu0 %v462
      %v587 = vpop.f32.mrb[0].mxu0
      %v588 = vadd.f32 0.0, %v587
      %v589 = vpop.f32.mrb[0].mxu0
      %v590 = vpop.f32.mrb[0].mxu0
      %v591 = vadd.f32 0.0, %v590
      %v592 = vpop.f32.mrb[0].mxu0
      %593 = vmatprep.mubr.bf16.mxu0 0
      %594 = vmatmul.mubr.bf16.gmra.mrb[0].mxu0 %v465
      %v595 = vpop.f32.mrb[0].mxu0
      %v596 = vadd.f32 0.0, %v595
      %v597 = vpop.f32.mrb[0].mxu0
      %v598 = vpop.f32.mrb[0].mxu0
      %v599 = vadd.f32 0.0, %v598
      %v600 = vpop.f32.mrb[0].mxu0
      %601 = vmatprep.mubr.bf16.mxu0 0
      %602 = vmatmul.mubr.bf16.gmra.mrb[0].mxu0 %v468
      %v603 = vpop.f32.mrb[0].mxu0
      %v604 = vadd.f32 0.0, %v603
      %v605 = vpop.f32.mrb[0].mxu0
      %v606 = vpop.f32.mrb[0].mxu0
      %v607 = vadd.f32 0.0, %v606
      %v608 = vpop.f32.mrb[0].mxu0
      %609 = vmatprep.mubr.bf16.mxu0 0
      %610 = vmatmul.mubr.bf16.gmra.mrb[0].mxu0 %v471
      %v611 = vpop.f32.mrb[0].mxu0
      %v612 = vadd.f32 0.0, %v611
      %v613 = vpop.f32.mrb[0].mxu0
      %v614 = vpop.f32.mrb[0].mxu0
      %v615 = vadd.f32 0.0, %v614
      %v616 = vpop.f32.mrb[0].mxu0
      %617 = vmatprep.mubr.bf16.mxu0 0
      %618 = vmatmul.mubr.bf16.gmra.mrb[0].mxu0 %v474
      %v619 = vpop.f32.mrb[0].mxu0
      %v620 = vadd.f32 0.0, %v619
      %v621 = vpop.f32.mrb[0].mxu0
      %v622 = vpop.f32.mrb[0].mxu0
      %v623 = vadd.f32 0.0, %v622
      %v624 = vpop.f32.mrb[0].mxu0
      %625 = vmatprep.mubr.bf16.mxu0 0
      %626 = vmatmul.mubr.bf16.gmra.mrb[0].mxu0 %v477
      %v627 = vpop.f32.mrb[0].mxu0
      %v628 = vadd.f32 0.0, %v627
      %v629 = vpop.f32.mrb[0].mxu0
      %v630 = vpop.f32.mrb[0].mxu0
      %v631 = vadd.f32 0.0, %v630
      %v632 = vpop.f32.mrb[0].mxu0
      %633 = vmatprep.mubr.bf16.mxu0 0
      %634 = vmatmul.mubr.bf16.gmra.mrb[0].mxu0 %v480
      %v635 = vpop.f32.mrb[0].mxu0
      %v636 = vadd.f32 0.0, %v635
      %v637 = vpop.f32.mrb[0].mxu0
      %v638 = vpop.f32.mrb[0].mxu0
      %v639 = vadd.f32 0.0, %v638
      %v640 = vpop.f32.mrb[0].mxu0
      %641 = vmatprep.mubr.bf16.mxu0 0
      %642 = vmatmul.mubr.bf16.gmra.mrb[0].mxu0 %v483
      %v643 = vpop.f32.mrb[0].mxu0
      %v644 = vadd.f32 0.0, %v643
      %v645 = vpop.f32.mrb[0].mxu0
      %v646 = vpop.f32.mrb[0].mxu0
      %v647 = vadd.f32 0.0, %v646
      %v648 = vpop.f32.mrb[0].mxu0
      %649 = vdwg.mxu0
      %v650 = vadd.f32 %v291, %v524
      %v651 = vadd.f32 %v292, %v527
      %v652 = vadd.f32 %v293, %v532
      %v653 = vadd.f32 %v294, %v535
      %v654 = vadd.f32 %v295, %v540
      %v655 = vadd.f32 %v296, %v543
      %v656 = vadd.f32 %v297, %v548
      %v657 = vadd.f32 %v298, %v551
      %v658 = vadd.f32 %v299, %v556
      %v659 = vadd.f32 %v300, %v559
      %v660 = vadd.f32 %v301, %v564
      %v661 = vadd.f32 %v302, %v567
      %v662 = vadd.f32 %v303, %v572
      %v663 = vadd.f32 %v304, %v575
      %v664 = vadd.f32 %v305, %v580
      %v665 = vadd.f32 %v306, %v583
      %v666 = vadd.f32 %v307, %v588
      %v667 = vadd.f32 %v308, %v591
      %v668 = vadd.f32 %v309, %v596
      %v669 = vadd.f32 %v310, %v599
      %v670 = vadd.f32 %v311, %v604
      %v671 = vadd.f32 %v312, %v607
      %v672 = vadd.f32 %v313, %v612
      %v673 = vadd.f32 %v314, %v615
      %v674 = vadd.f32 %v315, %v620
      %v675 = vadd.f32 %v316, %v623
      %v676 = vadd.f32 %v317, %v628
      %v677 = vadd.f32 %v318, %v631
      %v678 = vadd.f32 %v319, %v636
      %v679 = vadd.f32 %v320, %v639
      %v680 = vadd.f32 %v321, %v644
      %v681 = vadd.f32 %v322, %v647
      %682 = vst [vmem:[#allocation2] sm:$0xff] %v650
      %683 = vst [vmem:[#allocation2 + $0x8] sm:$0xff] %v651
      %684 = vst [vmem:[#allocation2 + $0x10] sm:$0xff] %v652
      %685 = vst [vmem:[#allocation2 + $0x18] sm:$0xff] %v653
      %686 = vst [vmem:[#allocation2 + $0x20] sm:$0xff] %v654
      %687 = vst [vmem:[#allocation2 + $0x28] sm:$0xff] %v655
      %688 = vst [vmem:[#allocation2 + $0x30] sm:$0xff] %v656
      %689 = vst [vmem:[#allocation2 + $0x38] sm:$0xff] %v657
      %690 = vst [vmem:[#allocation2 + $0x40] sm:$0xff] %v658
      %691 = vst [vmem:[#allocation2 + $0x48] sm:$0xff] %v659
      %692 = vst [vmem:[#allocation2 + $0x50] sm:$0xff] %v660
      %693 = vst [vmem:[#allocation2 + $0x58] sm:$0xff] %v661
      %694 = vst [vmem:[#allocation2 + $0x60] sm:$0xff] %v662
      %695 = vst [vmem:[#allocation2 + $0x68] sm:$0xff] %v663
      %696 = vst [vmem:[#allocation2 + $0x70] sm:$0xff] %v664
      %697 = vst [vmem:[#allocation2 + $0x78] sm:$0xff] %v665
      %698 = vst [vmem:[#allocation2 + $0x80] sm:$0xff] %v666
      %699 = vst [vmem:[#allocation2 + $0x88] sm:$0xff] %v667
      %700 = vst [vmem:[#allocation2 + $0x90] sm:$0xff] %v668
      %701 = vst [vmem:[#allocation2 + $0x98] sm:$0xff] %v669
      %702 = vst [vmem:[#allocation2 + $0xa0] sm:$0xff] %v670
      %703 = vst [vmem:[#allocation2 + $0xa8] sm:$0xff] %v671
      %704 = vst [vmem:[#allocation2 + $0xb0] sm:$0xff] %v672
      %705 = vst [vmem:[#allocation2 + $0xb8] sm:$0xff] %v673
      %706 = vst [vmem:[#allocation2 + $0xc0] sm:$0xff] %v674
      %707 = vst [vmem:[#allocation2 + $0xc8] sm:$0xff] %v675
      %708 = vst [vmem:[#allocation2 + $0xd0] sm:$0xff] %v676
      %709 = vst [vmem:[#allocation2 + $0xd8] sm:$0xff] %v677
      %710 = vst [vmem:[#allocation2 + $0xe0] sm:$0xff] %v678
      %711 = vst [vmem:[#allocation2 + $0xe8] sm:$0xff] %v679
      %712 = vst [vmem:[#allocation2 + $0xf0] sm:$0xff] %v680
      %713 = vst [vmem:[#allocation2 + $0xf8] sm:$0xff] %v681
      // Predicated region
      $region37: #{patchcore_forward.8} parent=31 // pred_check
        %p714 = pneg %p255
      $region38: #{patchcore_forward.8} parent=31 // pred_check_branch
        %716 = sbr.rel (%p714) target = $region40
      $region39: #{patchcore_forward.8} parent=31 // pred_region
        %v717 = vld [vmem:[#allocation2] sm:$0xff]
        %v718 = vld [vmem:[#allocation2 + $0x8] sm:$0xff]
        %v719 = vld [vmem:[#allocation2 + $0x10] sm:$0xff]
        %v720 = vld [vmem:[#allocation2 + $0x18] sm:$0xff]
        %v721 = vld [vmem:[#allocation2 + $0x20] sm:$0xff]
        %v722 = vld [vmem:[#allocation2 + $0x28] sm:$0xff]
        %v723 = vld [vmem:[#allocation2 + $0x30] sm:$0xff]
        %v724 = vld [vmem:[#allocation2 + $0x38] sm:$0xff]
        %v725 = vld [vmem:[#allocation2 + $0x40] sm:$0xff]
        %v726 = vld [vmem:[#allocation2 + $0x48] sm:$0xff]
        %v727 = vld [vmem:[#allocation2 + $0x50] sm:$0xff]
        %v728 = vld [vmem:[#allocation2 + $0x58] sm:$0xff]
        %v729 = vld [vmem:[#allocation2 + $0x60] sm:$0xff]
        %v730 = vld [vmem:[#allocation2 + $0x68] sm:$0xff]
        %v731 = vld [vmem:[#allocation2 + $0x70] sm:$0xff]
        %v732 = vld [vmem:[#allocation2 + $0x78] sm:$0xff]
        %v733 = vld [vmem:[#allocation2 + $0x80] sm:$0xff]
        %v734 = vld [vmem:[#allocation2 + $0x88] sm:$0xff]
        %v735 = vld [vmem:[#allocation2 + $0x90] sm:$0xff]
        %v736 = vld [vmem:[#allocation2 + $0x98] sm:$0xff]
        %v737 = vld [vmem:[#allocation2 + $0xa0] sm:$0xff]
        %v738 = vld [vmem:[#allocation2 + $0xa8] sm:$0xff]
        %v739 = vld [vmem:[#allocation2 + $0xb0] sm:$0xff]
        %v740 = vld [vmem:[#allocation2 + $0xb8] sm:$0xff]
        %v741 = vld [vmem:[#allocation2 + $0xc0] sm:$0xff]
        %v742 = vld [vmem:[#allocation2 + $0xc8] sm:$0xff]
        %v743 = vld [vmem:[#allocation2 + $0xd0] sm:$0xff]
        %v744 = vld [vmem:[#allocation2 + $0xd8] sm:$0xff]
        %v745 = vld [vmem:[#allocation2 + $0xe0] sm:$0xff]
        %v746 = vld [vmem:[#allocation2 + $0xe8] sm:$0xff]
        %v747 = vld [vmem:[#allocation2 + $0xf0] sm:$0xff]
        %v748 = vld [vmem:[#allocation2 + $0xf8] sm:$0xff]
        %v749 = vld [vmem:[%s244] sm:$0x1]
        %v751 = vlaneseq
        %v752 = vshrl.u32 %v751, 7
        %v753 = vsub.s32 0, %v752
        %v754 = vrot.slane %v749, %v753
        %v756 = vadd.f32 %v717, %v754
        %v757 = vadd.f32 %v718, %v754
        %v758 = vadd.f32 %v719, %v754
        %v759 = vadd.f32 %v720, %v754
        %v760 = vadd.f32 %v721, %v754
        %v761 = vadd.f32 %v722, %v754
        %v762 = vadd.f32 %v723, %v754
        %v763 = vadd.f32 %v724, %v754
        %v764 = vadd.f32 %v725, %v754
        %v765 = vadd.f32 %v726, %v754
        %v766 = vadd.f32 %v727, %v754
        %v767 = vadd.f32 %v728, %v754
        %v768 = vadd.f32 %v729, %v754
        %v769 = vadd.f32 %v730, %v754
        %v770 = vadd.f32 %v731, %v754
        %v771 = vadd.f32 %v732, %v754
        %v772 = vadd.f32 %v733, %v754
        %v773 = vadd.f32 %v734, %v754
        %v774 = vadd.f32 %v735, %v754
        %v775 = vadd.f32 %v736, %v754
        %v776 = vadd.f32 %v737, %v754
        %v777 = vadd.f32 %v738, %v754
        %v778 = vadd.f32 %v739, %v754
        %v779 = vadd.f32 %v740, %v754
        %v780 = vadd.f32 %v741, %v754
        %v781 = vadd.f32 %v742, %v754
        %v782 = vadd.f32 %v743, %v754
        %v783 = vadd.f32 %v744, %v754
        %v784 = vadd.f32 %v745, %v754
        %v785 = vadd.f32 %v746, %v754
        %v786 = vadd.f32 %v747, %v754
        %v787 = vadd.f32 %v748, %v754
        %v788 = vmax.f32 %v756, 0.0
        %v789 = vmax.f32 %v757, 0.0
        %v790 = vmax.f32 %v758, 0.0
        %v791 = vmax.f32 %v759, 0.0
        %v792 = vmax.f32 %v760, 0.0
        %v793 = vmax.f32 %v761, 0.0
        %v794 = vmax.f32 %v762, 0.0
        %v795 = vmax.f32 %v763, 0.0
        %v796 = vmax.f32 %v764, 0.0
        %v797 = vmax.f32 %v765, 0.0
        %v798 = vmax.f32 %v766, 0.0
        %v799 = vmax.f32 %v767, 0.0
        %v800 = vmax.f32 %v768, 0.0
        %v801 = vmax.f32 %v769, 0.0
        %v802 = vmax.f32 %v770, 0.0
        %v803 = vmax.f32 %v771, 0.0
        %v804 = vmax.f32 %v772, 0.0
        %v805 = vmax.f32 %v773, 0.0
        %v806 = vmax.f32 %v774, 0.0
        %v807 = vmax.f32 %v775, 0.0
        %v808 = vmax.f32 %v776, 0.0
        %v809 = vmax.f32 %v777, 0.0
        %v810 = vmax.f32 %v778, 0.0
        %v811 = vmax.f32 %v779, 0.0
        %v812 = vmax.f32 %v780, 0.0
        %v813 = vmax.f32 %v781, 0.0
        %v814 = vmax.f32 %v782, 0.0
        %v815 = vmax.f32 %v783, 0.0
        %v816 = vmax.f32 %v784, 0.0
        %v817 = vmax.f32 %v785, 0.0
        %v818 = vmax.f32 %v786, 0.0
        %v819 = vmax.f32 %v787, 0.0
        %820 = vst [vmem:[%s252] sm:$0xff] %v788
        %821 = vst [vmem:[%s252 + $0x8] sm:$0xff] %v789
        %822 = vst [vmem:[%s252 + $0x10] sm:$0xff] %v790
        %823 = vst [vmem:[%s252 + $0x18] sm:$0xff] %v791
        %824 = vst [vmem:[%s252 + $0x20] sm:$0xff] %v792
        %825 = vst [vmem:[%s252 + $0x28] sm:$0xff] %v793
        %826 = vst [vmem:[%s252 + $0x30] sm:$0xff] %v794
        %827 = vst [vmem:[%s252 + $0x38] sm:$0xff] %v795
        %828 = vst [vmem:[%s252 + $0x40] sm:$0xff] %v796
        %829 = vst [vmem:[%s252 + $0x48] sm:$0xff] %v797
        %830 = vst [vmem:[%s252 + $0x50] sm:$0xff] %v798
        %831 = vst [vmem:[%s252 + $0x58] sm:$0xff] %v799
        %832 = vst [vmem:[%s252 + $0x60] sm:$0xff] %v800
        %833 = vst [vmem:[%s252 + $0x68] sm:$0xff] %v801
        %834 = vst [vmem:[%s252 + $0x70] sm:$0xff] %v802
        %835 = vst [vmem:[%s252 + $0x78] sm:$0xff] %v803
        %836 = vst [vmem:[%s252 + $0x80] sm:$0xff] %v804
        %837 = vst [vmem:[%s252 + $0x88] sm:$0xff] %v805
        %838 = vst [vmem:[%s252 + $0x90] sm:$0xff] %v806
        %839 = vst [vmem:[%s252 + $0x98] sm:$0xff] %v807
        %840 = vst [vmem:[%s252 + $0xa0] sm:$0xff] %v808
        %841 = vst [vmem:[%s252 + $0xa8] sm:$0xff] %v809
        %842 = vst [vmem:[%s252 + $0xb0] sm:$0xff] %v810
        %843 = vst [vmem:[%s252 + $0xb8] sm:$0xff] %v811
        %844 = vst [vmem:[%s252 + $0xc0] sm:$0xff] %v812
        %845 = vst [vmem:[%s252 + $0xc8] sm:$0xff] %v813
        %846 = vst [vmem:[%s252 + $0xd0] sm:$0xff] %v814
        %847 = vst [vmem:[%s252 + $0xd8] sm:$0xff] %v815
        %848 = vst [vmem:[%s252 + $0xe0] sm:$0xff] %v816
        %849 = vst [vmem:[%s252 + $0xe8] sm:$0xff] %v817
        %850 = vst [vmem:[%s252 + $0xf0] sm:$0xff] %v818
        %851 = vst [vmem:[%s252 + $0xf8] sm:$0xff] %v819
      $region40: #{patchcore_forward.8} parent=31 // pred_fallthru
        _
      %s852 = smul.u32 32, %s19
      %p853 = scmp.lt.s32.totalorder %s852, 63
      %s854 = scalar_select %p853, %s852, 63
      %p855 = scmp.lt.s32.totalorder %s20, 0
      %s856 = scalar_select %p855, %s20, 0
      %s857 = sadd.s32 %s856, %s854
      %s858 = smul.addr %s857, 8
      %s859 = scalar_lea.vmem %s3, %s858
      // Predicated region
      $region41: #{patchcore_forward.8} parent=31 // pred_check
        %p860 = pneg %p135
      $region42: #{patchcore_forward.8} parent=31 // pred_check_branch
        %862 = sbr.rel (%p860) target = $region44
      $region43: #{patchcore_forward.8} parent=31 // pred_region
        %s863 = smul.u32 32, %s19
      $region44: #{patchcore_forward.8} parent=31 // pred_fallthru
        _
    $region32: #{patchcore_forward.8} parent=5 // pred_fallthru
      _
    %p864 = scmp.le.s32.totalorder 2, %s9
    // Predicated region
    $region45: #{patchcore_forward.8} parent=5 // pred_check
      %p865 = pneg %p864
    $region46: #{patchcore_forward.8} parent=5 // pred_check_branch
      %867 = sbr.rel (%p865) target = $region48
    $region47: #{patchcore_forward.8} parent=5 // pred_region
      %s868 = ssub.s32 %s9, 2
      // Predicated region
      $region49: #{patchcore_forward.8} parent=47 // pred_check
        %p869 = pneg %p141
      $region50: #{patchcore_forward.8} parent=47 // pred_check_branch
        %871 = sbr.rel (%p869) target = $region52
      $region51: #{patchcore_forward.8} parent=47 // pred_region
        %s872 = smul.u32 32, %s22
        %p873 = scmp.lt.s32.totalorder %s872, 63
        %s874 = scalar_select %p873, %s872, 63
        %p875 = scmp.lt.s32.totalorder %s23, 0
        %s876 = scalar_select %p875, %s23, 0
        %s877 = sadd.s32 %s876, %s874
        %s878 = smul.addr %s877, 8
        %s879 = scalar_lea.vmem %s3, %s878
      $region52: #{patchcore_forward.8} parent=47 // pred_fallthru
        _
    $region48: #{patchcore_forward.8} parent=5 // pred_fallthru
      _
  $region6: #{patchcore_forward.8} parent=0 // loop_footer
    %s13 = sadd.s32 1, %s9
  $region7: #{patchcore_forward.8} parent=0 // loop_footer_branch
    %8 = sbr.rel target = $region3
  $region8: #{patchcore_forward.8} parent=0 // loop_exit
    _

// kernel: patchcore_forward.9
$region0: #{patchcore_forward.9}
  #allocation0 [shape = 'u32[]', space=smem, size = 0x4, offset = 0x4, fixed_abs, tag = 'smem constant byte address 0x4 - core index']
  #allocation1 [shape = 'u32[144,128]{1,0:T(1,128)}', space=vmem, size = 0x12000, scoped, tag = 'internal scratch']
  #allocation2 [shape = 'f32[128,128]{1,0:T(8,128)}', space=vmem, size = 0x10000, scoped, tag = 'scratch operand']
  %s0 = inlined_call_operand.vmem [shape: bf16[128,16], index: 0, kind: input, shape index: {}]
  %s1 = inlined_call_operand.vmem [shape: bf16[16,128], index: 1, kind: input, shape index: {}]
  %s2 = inlined_call_operand.vmem [shape: f32[1,128], index: 2, kind: input, shape index: {}]
  %s3 = inlined_call_operand.vmem [shape: f32[128,128], index: 3, kind: output, shape index: {}]
  %s4 = sld [smem:[#allocation0]]
  $region30: #{patchcore_forward.9} parent=0
    _
  %s6 = ssub.s32 1, %s4
  %s7 = scalar_select 0, %s6, %s4
  // Predicated region
  $region2: #{patchcore_forward.9} parent=0 // pred_check
    _
  $region3: #{patchcore_forward.9} parent=0 // pred_check_branch
    %9 = sbr.rel (0) target = $region5
  $region4: #{patchcore_forward.9} parent=0 // pred_region
    _
  $region5: #{patchcore_forward.9} parent=0 // pred_fallthru
    _
  // Predicated region
  $region6: #{patchcore_forward.9} parent=0 // pred_check
    _
  $region7: #{patchcore_forward.9} parent=0 // pred_check_branch
    %11 = sbr.rel (0) target = $region9
  $region8: #{patchcore_forward.9} parent=0 // pred_region
    _
  $region9: #{patchcore_forward.9} parent=0 // pred_fallthru
    _
  // Predicated region
  $region10: #{patchcore_forward.9} parent=0 // pred_check
    _
  $region11: #{patchcore_forward.9} parent=0 // pred_check_branch
    %13 = sbr.rel (0) target = $region13
  $region12: #{patchcore_forward.9} parent=0 // pred_region
    _
  $region13: #{patchcore_forward.9} parent=0 // pred_fallthru
    _
  %p15 = scmp.eq.s32.totalorder 0, 0
  // Predicated region
  $region14: #{patchcore_forward.9} parent=0 // pred_check
    %p16 = pneg %p15
  $region15: #{patchcore_forward.9} parent=0 // pred_check_branch
    %18 = sbr.rel (%p16) target = $region17
  $region16: #{patchcore_forward.9} parent=0 // pred_region
    %19 = vst [vmem:[#allocation2] sm:$0xff] 0.0
    %20 = vst [vmem:[#allocation2 + $0x8] sm:$0xff] 0.0
    %21 = vst [vmem:[#allocation2 + $0x10] sm:$0xff] 0.0
    %22 = vst [vmem:[#allocation2 + $0x18] sm:$0xff] 0.0
    %23 = vst [vmem:[#allocation2 + $0x20] sm:$0xff] 0.0
    %24 = vst [vmem:[#allocation2 + $0x28] sm:$0xff] 0.0
    %25 = vst [vmem:[#allocation2 + $0x30] sm:$0xff] 0.0
    %26 = vst [vmem:[#allocation2 + $0x38] sm:$0xff] 0.0
    %27 = vst [vmem:[#allocation2 + $0x40] sm:$0xff] 0.0
    %28 = vst [vmem:[#allocation2 + $0x48] sm:$0xff] 0.0
    %29 = vst [vmem:[#allocation2 + $0x50] sm:$0xff] 0.0
    %30 = vst [vmem:[#allocation2 + $0x58] sm:$0xff] 0.0
    %31 = vst [vmem:[#allocation2 + $0x60] sm:$0xff] 0.0
    %32 = vst [vmem:[#allocation2 + $0x68] sm:$0xff] 0.0
    %33 = vst [vmem:[#allocation2 + $0x70] sm:$0xff] 0.0
    %34 = vst [vmem:[#allocation2 + $0x78] sm:$0xff] 0.0
  $region17: #{patchcore_forward.9} parent=0 // pred_fallthru
    _
  %v35 = vld [vmem:[#allocation2] sm:$0xff]
  %v36 = vld [vmem:[#allocation2 + $0x8] sm:$0xff]
  %v37 = vld [vmem:[#allocation2 + $0x10] sm:$0xff]
  %v38 = vld [vmem:[#allocation2 + $0x18] sm:$0xff]
  %v39 = vld [vmem:[#allocation2 + $0x20] sm:$0xff]
  %v40 = vld [vmem:[#allocation2 + $0x28] sm:$0xff]
  %v41 = vld [vmem:[#allocation2 + $0x30] sm:$0xff]
  %v42 = vld [vmem:[#allocation2 + $0x38] sm:$0xff]
  %v43 = vld [vmem:[#allocation2 + $0x40] sm:$0xff]
  %v44 = vld [vmem:[#allocation2 + $0x48] sm:$0xff]
  %v45 = vld [vmem:[#allocation2 + $0x50] sm:$0xff]
  %v46 = vld [vmem:[#allocation2 + $0x58] sm:$0xff]
  %v47 = vld [vmem:[#allocation2 + $0x60] sm:$0xff]
  %v48 = vld [vmem:[#allocation2 + $0x68] sm:$0xff]
  %v49 = vld [vmem:[#allocation2 + $0x70] sm:$0xff]
  %v50 = vld [vmem:[#allocation2 + $0x78] sm:$0xff]
  %v51 = vld [vmem:[%s0] sm:$0xf]
  %v52 = vld [vmem:[%s0 + $0x4] sm:$0xf]
  %v53 = vld [vmem:[%s0 + $0x8] sm:$0xf]
  %v54 = vld [vmem:[%s0 + $0xc] sm:$0xf]
  %v55 = vld [vmem:[%s0 + $0x10] sm:$0xf]
  %v56 = vld [vmem:[%s0 + $0x14] sm:$0xf]
  %v57 = vld [vmem:[%s0 + $0x18] sm:$0xf]
  %v58 = vld [vmem:[%s0 + $0x1c] sm:$0xf]
  %v59 = vld [vmem:[%s0 + $0x20] sm:$0xf]
  %v60 = vld [vmem:[%s0 + $0x24] sm:$0xf]
  %v61 = vld [vmem:[%s0 + $0x28] sm:$0xf]
  %v62 = vld [vmem:[%s0 + $0x2c] sm:$0xf]
  %v63 = vld [vmem:[%s0 + $0x30] sm:$0xf]
  %v64 = vld [vmem:[%s0 + $0x34] sm:$0xf]
  %v65 = vld [vmem:[%s0 + $0x38] sm:$0xf]
  %v66 = vld [vmem:[%s0 + $0x3c] sm:$0xf]
  %v67 = vld [vmem:[%s1] sm:$0xf]
  %v68 = vld [vmem:[%s1 + $0x4] sm:$0xf]
  %v85 = vunpack.c.l.b16 %v51
  %v86 = vunpack.c.l.b16 %v52
  %v87 = vunpack.c.l.b16 %v53
  %v88 = vunpack.c.l.b16 %v54
  %v89 = vunpack.c.l.b16 %v55
  %v90 = vunpack.c.l.b16 %v56
  %v91 = vunpack.c.l.b16 %v57
  %v92 = vunpack.c.l.b16 %v58
  %v93 = vunpack.c.l.b16 %v59
  %v94 = vunpack.c.l.b16 %v60
  %v95 = vunpack.c.l.b16 %v61
  %v96 = vunpack.c.l.b16 %v62
  %v97 = vunpack.c.l.b16 %v63
  %v98 = vunpack.c.l.b16 %v64
  %v99 = vunpack.c.l.b16 %v65
  %v100 = vunpack.c.l.b16 %v66
  %v101 = vpack.c.b16 %v86, %v85
  %v102 = vpack.c.b16 %v88, %v87
  %v103 = vpack.c.b16 %v90, %v89
  %v104 = vpack.c.b16 %v92, %v91
  %v105 = vpack.c.b16 %v94, %v93
  %v106 = vpack.c.b16 %v96, %v95
  %v107 = vpack.c.b16 %v98, %v97
  %v108 = vpack.c.b16 %v100, %v99
  %v111 = vunpack.c.l.b16 %v67
  %v112 = vunpack.c.l.b16 %v68
  %v113 = vpack.c.b16 %v112, %v111
  %vm115 = vcmask 130048
  %v117 = vsel %vm115, %v101, 0
  %v120 = vsel %vm115, %v102, 0
  %v123 = vsel %vm115, %v103, 0
  %v126 = vsel %vm115, %v104, 0
  %v129 = vsel %vm115, %v105, 0
  %v132 = vsel %vm115, %v106, 0
  %v135 = vsel %vm115, %v107, 0
  %v138 = vsel %vm115, %v108, 0
  %140 = vmatprep.subr.bf16.mxu0 0
  %141 = vmatpush1.bf16.msra.mxu0 %v113
  %142 = vmatprep.subr.bf16.mxu0 0
  %143 = vmatpush1.bf16.msra.mxu0 0
  %144 = vmatprep.subr.bf16.mxu0 0
  %145 = vmatpush1.bf16.msra.mxu0 0
  %146 = vmatprep.subr.bf16.mxu0 0
  %147 = vmatpush1.bf16.msra.mxu0 0
  %148 = vmatprep.subr.bf16.mxu0 0
  %149 = vmatpush1.bf16.msra.mxu0 0
  %150 = vmatprep.subr.bf16.mxu0 0
  %151 = vmatpush1.bf16.msra.mxu0 0
  %152 = vmatprep.subr.bf16.mxu0 0
  %153 = vmatpush1.bf16.msra.mxu0 0
  %154 = vmatprep.subr.bf16.mxu0 0
  %155 = vmatpush1.bf16.msra.mxu0 0
  %156 = vmatprep.subr.bf16.mxu0 0
  %157 = vmatpush1.bf16.msra.mxu0 0
  %158 = vmatprep.subr.bf16.mxu0 0
  %159 = vmatpush1.bf16.msra.mxu0 0
  %160 = vmatprep.subr.bf16.mxu0 0
  %161 = vmatpush1.bf16.msra.mxu0 0
  %162 = vmatprep.subr.bf16.mxu0 0
  %163 = vmatpush1.bf16.msra.mxu0 0
  %164 = vmatprep.subr.bf16.mxu0 0
  %165 = vmatpush1.bf16.msra.mxu0 0
  %166 = vmatprep.subr.bf16.mxu0 0
  %167 = vmatpush1.bf16.msra.mxu0 0
  %168 = vmatprep.subr.bf16.mxu0 0
  %169 = vmatpush1.bf16.msra.mxu0 0
  %170 = vmatprep.subr.bf16.mxu0 0
  %171 = vmatpush1.bf16.msra.mxu0 0
  %172 = vmatprep.mubr.bf16.mxu0 0
  %173 = vmatmul.mubr.bf16.gmra.mrb[0].mxu0 %v117
  %v174 = vpop.f32.mrb[0].mxu0
  %v175 = vadd.f32 0.0, %v174
  %v176 = vpop.f32.mrb[0].mxu0
  %v177 = vpop.f32.mrb[0].mxu0
  %v178 = vadd.f32 0.0, %v177
  %v179 = vpop.f32.mrb[0].mxu0
  %180 = vmatprep.mubr.bf16.mxu0 0
  %181 = vmatmul.mubr.bf16.gmra.mrb[0].mxu0 %v120
  %v182 = vpop.f32.mrb[0].mxu0
  %v183 = vadd.f32 0.0, %v182
  %v184 = vpop.f32.mrb[0].mxu0
  %v185 = vpop.f32.mrb[0].mxu0
  %v186 = vadd.f32 0.0, %v185
  %v187 = vpop.f32.mrb[0].mxu0
  %188 = vmatprep.mubr.bf16.mxu0 0
  %189 = vmatmul.mubr.bf16.gmra.mrb[0].mxu0 %v123
  %v190 = vpop.f32.mrb[0].mxu0
  %v191 = vadd.f32 0.0, %v190
  %v192 = vpop.f32.mrb[0].mxu0
  %v193 = vpop.f32.mrb[0].mxu0
  %v194 = vadd.f32 0.0, %v193
  %v195 = vpop.f32.mrb[0].mxu0
  %196 = vmatprep.mubr.bf16.mxu0 0
  %197 = vmatmul.mubr.bf16.gmra.mrb[0].mxu0 %v126
  %v198 = vpop.f32.mrb[0].mxu0
  %v199 = vadd.f32 0.0, %v198
  %v200 = vpop.f32.mrb[0].mxu0
  %v201 = vpop.f32.mrb[0].mxu0
  %v202 = vadd.f32 0.0, %v201
  %v203 = vpop.f32.mrb[0].mxu0
  %204 = vmatprep.mubr.bf16.mxu0 0
  %205 = vmatmul.mubr.bf16.gmra.mrb[0].mxu0 %v129
  %v206 = vpop.f32.mrb[0].mxu0
  %v207 = vadd.f32 0.0, %v206
  %v208 = vpop.f32.mrb[0].mxu0
  %v209 = vpop.f32.mrb[0].mxu0
  %v210 = vadd.f32 0.0, %v209
  %v211 = vpop.f32.mrb[0].mxu0
  %212 = vmatprep.mubr.bf16.mxu0 0
  %213 = vmatmul.mubr.bf16.gmra.mrb[0].mxu0 %v132
  %v214 = vpop.f32.mrb[0].mxu0
  %v215 = vadd.f32 0.0, %v214
  %v216 = vpop.f32.mrb[0].mxu0
  %v217 = vpop.f32.mrb[0].mxu0
  %v218 = vadd.f32 0.0, %v217
  %v219 = vpop.f32.mrb[0].mxu0
  %220 = vmatprep.mubr.bf16.mxu0 0
  %221 = vmatmul.mubr.bf16.gmra.mrb[0].mxu0 %v135
  %v222 = vpop.f32.mrb[0].mxu0
  %v223 = vadd.f32 0.0, %v222
  %v224 = vpop.f32.mrb[0].mxu0
  %v225 = vpop.f32.mrb[0].mxu0
  %v226 = vadd.f32 0.0, %v225
  %v227 = vpop.f32.mrb[0].mxu0
  %228 = vmatprep.mubr.bf16.mxu0 0
  %229 = vmatmul.mubr.bf16.gmra.mrb[0].mxu0 %v138
  %v230 = vpop.f32.mrb[0].mxu0
  %v231 = vadd.f32 0.0, %v230
  %v232 = vpop.f32.mrb[0].mxu0
  %v233 = vpop.f32.mrb[0].mxu0
  %v234 = vadd.f32 0.0, %v233
  %v235 = vpop.f32.mrb[0].mxu0
  %236 = vdwg.mxu0
  %v237 = vadd.f32 %v35, %v175
  %v238 = vadd.f32 %v36, %v178
  %v239 = vadd.f32 %v37, %v183
  %v240 = vadd.f32 %v38, %v186
  %v241 = vadd.f32 %v39, %v191
  %v242 = vadd.f32 %v40, %v194
  %v243 = vadd.f32 %v41, %v199
  %v244 = vadd.f32 %v42, %v202
  %v245 = vadd.f32 %v43, %v207
  %v246 = vadd.f32 %v44, %v210
  %v247 = vadd.f32 %v45, %v215
  %v248 = vadd.f32 %v46, %v218
  %v249 = vadd.f32 %v47, %v223
  %v250 = vadd.f32 %v48, %v226
  %v251 = vadd.f32 %v49, %v231
  %v252 = vadd.f32 %v50, %v234
  %253 = vst [vmem:[#allocation2] sm:$0xff] %v237
  %254 = vst [vmem:[#allocation2 + $0x8] sm:$0xff] %v238
  %255 = vst [vmem:[#allocation2 + $0x10] sm:$0xff] %v239
  %256 = vst [vmem:[#allocation2 + $0x18] sm:$0xff] %v240
  %257 = vst [vmem:[#allocation2 + $0x20] sm:$0xff] %v241
  %258 = vst [vmem:[#allocation2 + $0x28] sm:$0xff] %v242
  %259 = vst [vmem:[#allocation2 + $0x30] sm:$0xff] %v243
  %260 = vst [vmem:[#allocation2 + $0x38] sm:$0xff] %v244
  %261 = vst [vmem:[#allocation2 + $0x40] sm:$0xff] %v245
  %262 = vst [vmem:[#allocation2 + $0x48] sm:$0xff] %v246
  %263 = vst [vmem:[#allocation2 + $0x50] sm:$0xff] %v247
  %264 = vst [vmem:[#allocation2 + $0x58] sm:$0xff] %v248
  %265 = vst [vmem:[#allocation2 + $0x60] sm:$0xff] %v249
  %266 = vst [vmem:[#allocation2 + $0x68] sm:$0xff] %v250
  %267 = vst [vmem:[#allocation2 + $0x70] sm:$0xff] %v251
  %268 = vst [vmem:[#allocation2 + $0x78] sm:$0xff] %v252
  // Predicated region
  $region18: #{patchcore_forward.9} parent=0 // pred_check
    %p269 = pneg %p15
  $region19: #{patchcore_forward.9} parent=0 // pred_check_branch
    %271 = sbr.rel (%p269) target = $region21
  $region20: #{patchcore_forward.9} parent=0 // pred_region
    %v272 = vld [vmem:[#allocation2] sm:$0xff]
    %v273 = vld [vmem:[#allocation2 + $0x8] sm:$0xff]
    %v274 = vld [vmem:[#allocation2 + $0x10] sm:$0xff]
    %v275 = vld [vmem:[#allocation2 + $0x18] sm:$0xff]
    %v276 = vld [vmem:[#allocation2 + $0x20] sm:$0xff]
    %v277 = vld [vmem:[#allocation2 + $0x28] sm:$0xff]
    %v278 = vld [vmem:[#allocation2 + $0x30] sm:$0xff]
    %v279 = vld [vmem:[#allocation2 + $0x38] sm:$0xff]
    %v280 = vld [vmem:[#allocation2 + $0x40] sm:$0xff]
    %v281 = vld [vmem:[#allocation2 + $0x48] sm:$0xff]
    %v282 = vld [vmem:[#allocation2 + $0x50] sm:$0xff]
    %v283 = vld [vmem:[#allocation2 + $0x58] sm:$0xff]
    %v284 = vld [vmem:[#allocation2 + $0x60] sm:$0xff]
    %v285 = vld [vmem:[#allocation2 + $0x68] sm:$0xff]
    %v286 = vld [vmem:[#allocation2 + $0x70] sm:$0xff]
    %v287 = vld [vmem:[#allocation2 + $0x78] sm:$0xff]
    %v288 = vld [vmem:[%s2] sm:$0x1]
    %v290 = vlaneseq
    %v291 = vshrl.u32 %v290, 7
    %v292 = vsub.s32 0, %v291
    %v293 = vrot.slane %v288, %v292
    %v295 = vadd.f32 %v272, %v293
    %v296 = vadd.f32 %v273, %v293
    %v297 = vadd.f32 %v274, %v293
    %v298 = vadd.f32 %v275, %v293
    %v299 = vadd.f32 %v276, %v293
    %v300 = vadd.f32 %v277, %v293
    %v301 = vadd.f32 %v278, %v293
    %v302 = vadd.f32 %v279, %v293
    %v303 = vadd.f32 %v280, %v293
    %v304 = vadd.f32 %v281, %v293
    %v305 = vadd.f32 %v282, %v293
    %v306 = vadd.f32 %v283, %v293
    %v307 = vadd.f32 %v284, %v293
    %v308 = vadd.f32 %v285, %v293
    %v309 = vadd.f32 %v286, %v293
    %v310 = vadd.f32 %v287, %v293
    %v311 = vmax.f32 %v295, 0.0
    %v312 = vmax.f32 %v296, 0.0
    %v313 = vmax.f32 %v297, 0.0
    %v314 = vmax.f32 %v298, 0.0
    %v315 = vmax.f32 %v299, 0.0
    %v316 = vmax.f32 %v300, 0.0
    %v317 = vmax.f32 %v301, 0.0
    %v318 = vmax.f32 %v302, 0.0
    %v319 = vmax.f32 %v303, 0.0
    %v320 = vmax.f32 %v304, 0.0
    %v321 = vmax.f32 %v305, 0.0
    %v322 = vmax.f32 %v306, 0.0
    %v323 = vmax.f32 %v307, 0.0
    %v324 = vmax.f32 %v308, 0.0
    %v325 = vmax.f32 %v309, 0.0
    %v326 = vmax.f32 %v310, 0.0
    %327 = vst [vmem:[%s3] sm:$0xff] %v311
    %328 = vst [vmem:[%s3 + $0x8] sm:$0xff] %v312
    %329 = vst [vmem:[%s3 + $0x10] sm:$0xff] %v313
    %330 = vst [vmem:[%s3 + $0x18] sm:$0xff] %v314
    %331 = vst [vmem:[%s3 + $0x20] sm:$0xff] %v315
    %332 = vst [vmem:[%s3 + $0x28] sm:$0xff] %v316
    %333 = vst [vmem:[%s3 + $0x30] sm:$0xff] %v317
    %334 = vst [vmem:[%s3 + $0x38] sm:$0xff] %v318
    %335 = vst [vmem:[%s3 + $0x40] sm:$0xff] %v319
    %336 = vst [vmem:[%s3 + $0x48] sm:$0xff] %v320
    %337 = vst [vmem:[%s3 + $0x50] sm:$0xff] %v321
    %338 = vst [vmem:[%s3 + $0x58] sm:$0xff] %v322
    %339 = vst [vmem:[%s3 + $0x60] sm:$0xff] %v323
    %340 = vst [vmem:[%s3 + $0x68] sm:$0xff] %v324
    %341 = vst [vmem:[%s3 + $0x70] sm:$0xff] %v325
    %342 = vst [vmem:[%s3 + $0x78] sm:$0xff] %v326
  $region21: #{patchcore_forward.9} parent=0 // pred_fallthru
    _
  // Predicated region
  $region22: #{patchcore_forward.9} parent=0 // pred_check
    _
  $region23: #{patchcore_forward.9} parent=0 // pred_check_branch
    %344 = sbr.rel (0) target = $region25
  $region24: #{patchcore_forward.9} parent=0 // pred_region
    _
  $region25: #{patchcore_forward.9} parent=0 // pred_fallthru
    _
  // Predicated region
  $region26: #{patchcore_forward.9} parent=0 // pred_check
    _
  $region27: #{patchcore_forward.9} parent=0 // pred_check_branch
    %346 = sbr.rel (0) target = $region29
  $region28: #{patchcore_forward.9} parent=0 // pred_region
    _
  $region29: #{patchcore_forward.9} parent=0 // pred_fallthru
    _

// kernel: patchcore_forward.11
$region0: #{patchcore_forward.11}
  #allocation0 [shape = 'u32[]', space=smem, size = 0x4, offset = 0x4, fixed_abs, tag = 'smem constant byte address 0x4 - core index']
  #allocation1 [shape = 'u32[144,128]{1,0:T(1,128)}', space=vmem, size = 0x12000, scoped, tag = 'internal scratch']
  #allocation2 [shape = 'f32[10,10,32]{2,1,0:T(8,128)}', space=vmem, size = 0x14000, scoped, tag = 'scratch operand']
  %s0 = inlined_call_operand.vmem [shape: f32[2,8,8,32], index: 0, kind: input, shape index: {}]
  %s1 = inlined_call_operand.vmem [shape: f32[2,8,8,32], index: 1, kind: output, shape index: {}]
  %s2 = sld [smem:[#allocation0]]
  $region37: #{patchcore_forward.11} parent=0
    _
  %s4 = ssub.s32 1, %s2
  %s5 = scalar_select 0, %s4, %s2
  loop: start=0, step=1, limit=4
  $region2: #{patchcore_forward.11} parent=0 // loop_pre_header
    _
  $region3: #{patchcore_forward.11} parent=0 // loop_header
    %s7 = sphi 0, %s11
    %p8 = scmp.ge.s32.totalorder %s7, 4
    %s14 = sphi 0, %s26
    %s15 = sphi 0, %s22
    %s16 = sphi 0, %s14
    %s17 = sphi 0, %s15
    %s18 = sphi 0, %s16
    %s19 = sphi 0, %s17
    %s31 = sphi 0, %s33
    %s34 = sphi 0, %s31
    %s35 = sphi 0, %s34
    %s51 = sphi 0, %s35
    %s59 = sphi 0, %s61
    %s62 = sphi 0, %s59
    %s63 = sphi 0, %s62
    %s79 = sphi 0, %s63
  $region4: #{patchcore_forward.11} parent=0 // loop_header_branch
    %10 = sbr.rel (%p8) target = $region8
  $region5: #{patchcore_forward.11} parent=0 // loop_body
    %s12 = ssub.s32 %s7, 1
    %s13 = ssub.s32 %s7, 2
    %s20 = sadd.s32 1, %s15
    %p21 = scmp.ge.s32.totalorder %s20, 1
    %s22 = scalar_select %p21, 0, %s20
    %s23 = sadd.s32 1, %s14
    %s24 = scalar_select %p21, %s23, %s14
    %p25 = scmp.ge.s32.totalorder %s24, 2
    %s26 = scalar_select %p25, 0, %s24
    %s27 = ssub.s32 %s14, %s26
    %s28 = ssub.s32 %s15, %s22
    %s29 = sor.u32 %s27, %s28
    %p30 = scmp.eq.s32.totalorder %s29, 0
    %s32 = sadd.s32 %s31, 1
    %s33 = scalar_select %p30, %s31, %s32
    %p36 = pneg %p30
    %p37 = scmp.eq.s32.totalorder %s7, 1
    %p38 = por %p36, %p37
    %p39 = scmp.ne.s32.totalorder %s31, %s34
    %p40 = scmp.eq.s32.totalorder %s7, 0
    %p41 = por %p39, %p40
    %p42 = scmp.ne.s32.totalorder %s31, %s34
    %p43 = scmp.eq.s32.totalorder %s12, 1
    %p44 = por %p42, %p43
    %p45 = scmp.ne.s32.totalorder %s34, %s35
    %p46 = scmp.eq.s32.totalorder %s12, 0
    %p47 = por %p45, %p46
    %p48 = scmp.ne.s32.totalorder %s34, %s35
    %p49 = scmp.eq.s32.totalorder %s13, 1
    %p50 = por %p48, %p49
    %p52 = scmp.ne.s32.totalorder %s35, %s51
    %p53 = scmp.eq.s32.totalorder %s13, 0
    %p54 = por %p52, %p53
    %s55 = ssub.s32 %s14, %s26
    %s56 = ssub.s32 %s15, %s22
    %s57 = sor.u32 %s55, %s56
    %p58 = scmp.eq.s32.totalorder %s57, 0
    %s60 = sadd.s32 %s59, 1
    %s61 = scalar_select %p58, %s59, %s60
    %p64 = pneg %p58
    %p65 = scmp.eq.s32.totalorder %s7, 1
    %p66 = por %p64, %p65
    %p67 = scmp.ne.s32.totalorder %s59, %s62
    %p68 = scmp.eq.s32.totalorder %s7, 0
    %p69 = por %p67, %p68
    %p70 = scmp.ne.s32.totalorder %s59, %s62
    %p71 = scmp.eq.s32.totalorder %s12, 1
    %p72 = por %p70, %p71
    %p73 = scmp.ne.s32.totalorder %s62, %s63
    %p74 = scmp.eq.s32.totalorder %s12, 0
    %p75 = por %p73, %p74
    %p76 = scmp.ne.s32.totalorder %s62, %s63
    %p77 = scmp.eq.s32.totalorder %s13, 1
    %p78 = por %p76, %p77
    %p80 = scmp.ne.s32.totalorder %s63, %s79
    %p81 = scmp.eq.s32.totalorder %s13, 0
    %p82 = por %p80, %p81
    %p83 = scmp.le.s32.totalorder 1, %s7
    %p84 = scmp.lt.s32.totalorder %s7, 3
    %p85 = pnand %p83, %p84
    %p86 = pneg %p85
    // Predicated region
    $region9: #{patchcore_forward.11} parent=5 // pred_check
      _
    $region10: #{patchcore_forward.11} parent=5 // pred_check_branch
      %88 = sbr.rel (%p85) target = $region12
    $region11: #{patchcore_forward.11} parent=5 // pred_region
      %s89 = ssub.s32 %s7, 1
    $region12: #{patchcore_forward.11} parent=5 // pred_fallthru
      _
    %p90 = scmp.lt.s32.totalorder %s7, 2
    // Predicated region
    $region13: #{patchcore_forward.11} parent=5 // pred_check
      %p91 = pneg %p90
    $region14: #{patchcore_forward.11} parent=5 // pred_check_branch
      %93 = sbr.rel (%p91) target = $region16
    $region15: #{patchcore_forward.11} parent=5 // pred_region
      // Predicated region
      $region17: #{patchcore_forward.11} parent=15 // pred_check
        %p94 = pneg %p41
      $region18: #{patchcore_forward.11} parent=15 // pred_check_branch
        %96 = sbr.rel (%p94) target = $region20
      $region19: #{patchcore_forward.11} parent=15 // pred_region
        %p97 = scmp.lt.s32.totalorder %s14, 1
        %s98 = scalar_select %p97, %s14, 1
        %p99 = scmp.lt.s32.totalorder %s15, 0
        %s100 = scalar_select %p99, %s15, 0
        %s101 = smul.addr %s98, 8
        %s102 = sadd.s32 %s100, %s101
        %s103 = smul.addr %s102, 8
        %s104 = scalar_lea.vmem %s0, %s103
      $region20: #{patchcore_forward.11} parent=15 // pred_fallthru
        _
    $region16: #{patchcore_forward.11} parent=5 // pred_fallthru
      _
    %p105 = scmp.le.s32.totalorder 1, %s7
    %p106 = scmp.lt.s32.totalorder %s7, 3
    %p107 = pnand %p105, %p106
    %p108 = pneg %p107
    // Predicated region
    $region21: #{patchcore_forward.11} parent=5 // pred_check
      _
    $region22: #{patchcore_forward.11} parent=5 // pred_check_branch
      %110 = sbr.rel (%p107) target = $region24
    $region23: #{patchcore_forward.11} parent=5 // pred_region
      %s111 = ssub.s32 %s7, 1
      %p112 = scmp.lt.s32.totalorder %s16, 1
      %s113 = scalar_select %p112, %s16, 1
      %p114 = scmp.lt.s32.totalorder %s17, 0
      %s115 = scalar_select %p114, %s17, 0
      %s116 = smul.addr %s113, 8
      %s117 = sadd.s32 %s115, %s116
      %s118 = smul.addr %s117, 8
      %s119 = scalar_lea.vmem %s0, %s118
      %p120 = pneg %p47
      %p121 = pneg %p44
      %p122 = pneg %p75
      %p123 = pneg %p72
      %p124 = scmp.lt.s32.totalorder %s16, 1
      %s125 = scalar_select %p124, %s16, 1
      %p126 = scmp.lt.s32.totalorder %s17, 0
      %s127 = scalar_select %p126, %s17, 0
      %s128 = smul.addr %s125, 8
      %s129 = sadd.s32 %s127, %s128
      %s130 = smul.addr %s129, 8
      %s131 = scalar_lea.vmem %s1, %s130
      %p132 = scmp.lt.s32.totalorder %s16, 1
      %s133 = scalar_select %p132, %s16, 1
      %p134 = scmp.lt.s32.totalorder %s17, 0
      %s135 = scalar_select %p134, %s17, 0
      %s136 = smul.addr %s133, 8
      %s137 = sadd.s32 %s135, %s136
      %s138 = smul.addr %s137, 8
      %s139 = scalar_lea.vmem %s0, %s138
      %p140 = scmp.lt.s32.totalorder %s16, 1
      %s141 = scalar_select %p140, %s16, 1
      %p142 = scmp.lt.s32.totalorder %s17, 0
      %s143 = scalar_select %p142, %s17, 0
      %s144 = smul.addr %s141, 8
      %s145 = sadd.s32 %s143, %s144
      %s146 = smul.addr %s145, 8
      %s147 = scalar_lea.vmem %s1, %s146
      %vm148 = vcmask 261120
      %149 = vst.msk [vmem:[#allocation2] sm:$0xff] %vm148, 0.0
      %vm150 = vcmask 254976
      %151 = vst.msk [vmem:[#allocation2 + $0x8] sm:$0x3] %vm150, 0.0
      %152 = vst.msk [vmem:[#allocation2 + $0x10] sm:$0xff] %vm148, 0.0
      %153 = vst.msk [vmem:[#allocation2 + $0x18] sm:$0x3] %vm150, 0.0
      %154 = vst.msk [vmem:[#allocation2 + $0x20] sm:$0xff] %vm148, 0.0
      %155 = vst.msk [vmem:[#allocation2 + $0x28] sm:$0x3] %vm150, 0.0
      %156 = vst.msk [vmem:[#allocation2 + $0x30] sm:$0xff] %vm148, 0.0
      %157 = vst.msk [vmem:[#allocation2 + $0x38] sm:$0x3] %vm150, 0.0
      %158 = vst.msk [vmem:[#allocation2 + $0x40] sm:$0xff] %vm148, 0.0
      %159 = vst.msk [vmem:[#allocation2 + $0x48] sm:$0x3] %vm150, 0.0
      %160 = vst.msk [vmem:[#allocation2 + $0x50] sm:$0xff] %vm148, 0.0
      %161 = vst.msk [vmem:[#allocation2 + $0x58] sm:$0x3] %vm150, 0.0
      %162 = vst.msk [vmem:[#allocation2 + $0x60] sm:$0xff] %vm148, 0.0
      %163 = vst.msk [vmem:[#allocation2 + $0x68] sm:$0x3] %vm150, 0.0
      %164 = vst.msk [vmem:[#allocation2 + $0x70] sm:$0xff] %vm148, 0.0
      %165 = vst.msk [vmem:[#allocation2 + $0x78] sm:$0x3] %vm150, 0.0
      %166 = vst.msk [vmem:[#allocation2 + $0x80] sm:$0xff] %vm148, 0.0
      %167 = vst.msk [vmem:[#allocation2 + $0x88] sm:$0x3] %vm150, 0.0
      %168 = vst.msk [vmem:[#allocation2 + $0x90] sm:$0xff] %vm148, 0.0
      %169 = vst.msk [vmem:[#allocation2 + $0x98] sm:$0x3] %vm150, 0.0
      %v170 = vld [vmem:[%s139] sm:$0xff]
      %v171 = vld [vmem:[%s139 + $0x8] sm:$0xff]
      %v172 = vld [vmem:[%s139 + $0x10] sm:$0xff]
      %v173 = vld [vmem:[%s139 + $0x18] sm:$0xff]
      %v174 = vld [vmem:[%s139 + $0x20] sm:$0xff]
      %v175 = vld [vmem:[%s139 + $0x28] sm:$0xff]
      %v176 = vld [vmem:[%s139 + $0x30] sm:$0xff]
      %v177 = vld [vmem:[%s139 + $0x38] sm:$0xff]
      %s178 = scalar_lea.vmem [#allocation2], 16
      %179 = vst.msk [vmem:[%s178 + $0x1] sm:$0xff] %vm148, %v170
      %180 = vst.msk [vmem:[%s178 + $0x11] sm:$0xff] %vm148, %v171
      %181 = vst.msk [vmem:[%s178 + $0x21] sm:$0xff] %vm148, %v172
      %182 = vst.msk [vmem:[%s178 + $0x31] sm:$0xff] %vm148, %v173
      %183 = vst.msk [vmem:[%s178 + $0x41] sm:$0xff] %vm148, %v174
      %184 = vst.msk [vmem:[%s178 + $0x51] sm:$0xff] %vm148, %v175
      %185 = vst.msk [vmem:[%s178 + $0x61] sm:$0xff] %vm148, %v176
      %186 = vst.msk [vmem:[%s178 + $0x71] sm:$0xff] %vm148, %v177
      %v187 = vld [vmem:[#allocation2] sm:$0xff]
      %v188 = vld [vmem:[#allocation2 + $0x8] sm:$0x3]
      %v189 = vld [vmem:[#allocation2 + $0x10] sm:$0xff]
      %v190 = vld [vmem:[#allocation2 + $0x18] sm:$0x3]
      %v191 = vld [vmem:[#allocation2 + $0x20] sm:$0xff]
      %v192 = vld [vmem:[#allocation2 + $0x28] sm:$0x3]
      %v193 = vld [vmem:[#allocation2 + $0x30] sm:$0xff]
      %v194 = vld [vmem:[#allocation2 + $0x38] sm:$0x3]
      %v195 = vld [vmem:[#allocation2 + $0x40] sm:$0xff]
      %v196 = vld [vmem:[#allocation2 + $0x48] sm:$0x3]
      %v197 = vld [vmem:[#allocation2 + $0x50] sm:$0xff]
      %v198 = vld [vmem:[#allocation2 + $0x58] sm:$0x3]
      %v199 = vld [vmem:[#allocation2 + $0x60] sm:$0xff]
      %v200 = vld [vmem:[#allocation2 + $0x68] sm:$0x3]
      %v201 = vld [vmem:[#allocation2 + $0x70] sm:$0xff]
      %v202 = vld [vmem:[#allocation2 + $0x78] sm:$0x3]
      %v203 = vld [vmem:[%s178] sm:$0xff]
      %v204 = vld [vmem:[%s178 + $0x8] sm:$0x3]
      %v205 = vld [vmem:[%s178 + $0x10] sm:$0xff]
      %v206 = vld [vmem:[%s178 + $0x18] sm:$0x3]
      %v207 = vld [vmem:[%s178 + $0x20] sm:$0xff]
      %v208 = vld [vmem:[%s178 + $0x28] sm:$0x3]
      %v209 = vld [vmem:[%s178 + $0x30] sm:$0xff]
      %v210 = vld [vmem:[%s178 + $0x38] sm:$0x3]
      %v211 = vld [vmem:[%s178 + $0x40] sm:$0xff]
      %v212 = vld [vmem:[%s178 + $0x48] sm:$0x3]
      %v213 = vld [vmem:[%s178 + $0x50] sm:$0xff]
      %v214 = vld [vmem:[%s178 + $0x58] sm:$0x3]
      %v215 = vld [vmem:[%s178 + $0x60] sm:$0xff]
      %v216 = vld [vmem:[%s178 + $0x68] sm:$0x3]
      %v217 = vld [vmem:[%s178 + $0x70] sm:$0xff]
      %v218 = vld [vmem:[%s178 + $0x78] sm:$0x3]
      %v219 = vadd.f32 %v187, %v203
      %v220 = vadd.f32 %v188, %v204
      %v221 = vadd.f32 %v189, %v205
      %v222 = vadd.f32 %v190, %v206
      %v223 = vadd.f32 %v191, %v207
      %v224 = vadd.f32 %v192, %v208
      %v225 = vadd.f32 %v193, %v209
      %v226 = vadd.f32 %v194, %v210
      %v227 = vadd.f32 %v195, %v211
      %v228 = vadd.f32 %v196, %v212
      %v229 = vadd.f32 %v197, %v213
      %v230 = vadd.f32 %v198, %v214
      %v231 = vadd.f32 %v199, %v215
      %v232 = vadd.f32 %v200, %v216
      %v233 = vadd.f32 %v201, %v217
      %v234 = vadd.f32 %v202, %v218
      %s235 = scalar_lea.vmem [#allocation2], 32
      %v236 = vld [vmem:[%s235] sm:$0xff]
      %v237 = vld [vmem:[%s235 + $0x8] sm:$0x3]
      %v238 = vld [vmem:[%s235 + $0x10] sm:$0xff]
      %v239 = vld [vmem:[%s235 + $0x18] sm:$0x3]
      %v240 = vld [vmem:[%s235 + $0x20] sm:$0xff]
      %v241 = vld [vmem:[%s235 + $0x28] sm:$0x3]
      %v242 = vld [vmem:[%s235 + $0x30] sm:$0xff]
      %v243 = vld [vmem:[%s235 + $0x38] sm:$0x3]
      %v244 = vld [vmem:[%s235 + $0x40] sm:$0xff]
      %v245 = vld [vmem:[%s235 + $0x48] sm:$0x3]
      %v246 = vld [vmem:[%s235 + $0x50] sm:$0xff]
      %v247 = vld [vmem:[%s235 + $0x58] sm:$0x3]
      %v248 = vld [vmem:[%s235 + $0x60] sm:$0xff]
      %v249 = vld [vmem:[%s235 + $0x68] sm:$0x3]
      %v250 = vld [vmem:[%s235 + $0x70] sm:$0xff]
      %v251 = vld [vmem:[%s235 + $0x78] sm:$0x3]
      %v252 = vadd.f32 %v219, %v236
      %v253 = vadd.f32 %v220, %v237
      %v254 = vadd.f32 %v221, %v238
      %v255 = vadd.f32 %v222, %v239
      %v256 = vadd.f32 %v223, %v240
      %v257 = vadd.f32 %v224, %v241
      %v258 = vadd.f32 %v225, %v242
      %v259 = vadd.f32 %v226, %v243
      %v260 = vadd.f32 %v227, %v244
      %v261 = vadd.f32 %v228, %v245
      %v262 = vadd.f32 %v229, %v246
      %v263 = vadd.f32 %v230, %v247
      %v264 = vadd.f32 %v231, %v248
      %v265 = vadd.f32 %v232, %v249
      %v266 = vadd.f32 %v233, %v250
      %v267 = vadd.f32 %v234, %v251
      %vm284 = vcmask 1046528
      %v285 = vrot.slane %v252, 1
      %v286 = vrot.slane %v253, 1
      %v287 = vsel %vm284, %v285, %v286
      %v288 = vrot.slane %v254, 1
      %v289 = vrot.slane %v255, 1
      %v290 = vsel %vm284, %v288, %v289
      %v291 = vrot.slane %v256, 1
      %v292 = vrot.slane %v257, 1
      %v293 = vsel %vm284, %v291, %v292
      %v294 = vrot.slane %v258, 1
      %v295 = vrot.slane %v259, 1
      %v296 = vsel %vm284, %v294, %v295
      %v297 = vrot.slane %v260, 1
      %v298 = vrot.slane %v261, 1
      %v299 = vsel %vm284, %v297, %v298
      %v300 = vrot.slane %v262, 1
      %v301 = vrot.slane %v263, 1
      %v302 = vsel %vm284, %v300, %v301
      %v303 = vrot.slane %v264, 1
      %v304 = vrot.slane %v265, 1
      %v305 = vsel %vm284, %v303, %v304
      %v306 = vrot.slane %v266, 1
      %v307 = vrot.slane %v267, 1
      %v308 = vsel %vm284, %v306, %v307
      %v317 = vadd.f32 %v252, %v287
      %v318 = vadd.f32 %v254, %v290
      %v319 = vadd.f32 %v256, %v293
      %v320 = vadd.f32 %v258, %v296
      %v321 = vadd.f32 %v260, %v299
      %v322 = vadd.f32 %v262, %v302
      %v323 = vadd.f32 %v264, %v305
      %v324 = vadd.f32 %v266, %v308
      %vm325 = vcmask 1045504
      %v326 = vrot.slane %v252, 2
      %v327 = vrot.slane %v253, 2
      %v328 = vsel %vm325, %v326, %v327
      %v329 = vrot.slane %v254, 2
      %v330 = vrot.slane %v255, 2
      %v331 = vsel %vm325, %v329, %v330
      %v332 = vrot.slane %v256, 2
      %v333 = vrot.slane %v257, 2
      %v334 = vsel %vm325, %v332, %v333
      %v335 = vrot.slane %v258, 2
      %v336 = vrot.slane %v259, 2
      %v337 = vsel %vm325, %v335, %v336
      %v338 = vrot.slane %v260, 2
      %v339 = vrot.slane %v261, 2
      %v340 = vsel %vm325, %v338, %v339
      %v341 = vrot.slane %v262, 2
      %v342 = vrot.slane %v263, 2
      %v343 = vsel %vm325, %v341, %v342
      %v344 = vrot.slane %v264, 2
      %v345 = vrot.slane %v265, 2
      %v346 = vsel %vm325, %v344, %v345
      %v347 = vrot.slane %v266, 2
      %v348 = vrot.slane %v267, 2
      %v349 = vsel %vm325, %v347, %v348
      %v358 = vadd.f32 %v317, %v328
      %v359 = vadd.f32 %v318, %v331
      %v360 = vadd.f32 %v319, %v334
      %v361 = vadd.f32 %v320, %v337
      %v362 = vadd.f32 %v321, %v340
      %v363 = vadd.f32 %v322, %v343
      %v364 = vadd.f32 %v323, %v346
      %v365 = vadd.f32 %v324, %v349
      %v366 = vmul.f32 %v358, 0.11111111
      %v367 = vmul.f32 %v359, 0.11111111
      %v368 = vmul.f32 %v360, 0.11111111
      %v369 = vmul.f32 %v361, 0.11111111
      %v370 = vmul.f32 %v362, 0.11111111
      %v371 = vmul.f32 %v363, 0.11111111
      %v372 = vmul.f32 %v364, 0.11111111
      %v373 = vmul.f32 %v365, 0.11111111
      %374 = vst.msk [vmem:[%s147] sm:$0xff] %vm148, %v366
      %375 = vst.msk [vmem:[%s147 + $0x8] sm:$0xff] %vm148, %v367
      %376 = vst.msk [vmem:[%s147 + $0x10] sm:$0xff] %vm148, %v368
      %377 = vst.msk [vmem:[%s147 + $0x18] sm:$0xff] %vm148, %v369
      %378 = vst.msk [vmem:[%s147 + $0x20] sm:$0xff] %vm148, %v370
      %379 = vst.msk [vmem:[%s147 + $0x28] sm:$0xff] %vm148, %v371
      %380 = vst.msk [vmem:[%s147 + $0x30] sm:$0xff] %vm148, %v372
      %381 = vst.msk [vmem:[%s147 + $0x38] sm:$0xff] %vm148, %v373
      %p382 = scmp.lt.s32.totalorder %s16, 1
      %s383 = scalar_select %p382, %s16, 1
      %p384 = scmp.lt.s32.totalorder %s17, 0
      %s385 = scalar_select %p384, %s17, 0
      %s386 = smul.addr %s383, 8
      %s387 = sadd.s32 %s385, %s386
      %s388 = smul.addr %s387, 8
      %s389 = scalar_lea.vmem %s1, %s388
      // Predicated region
      $region25: #{patchcore_forward.11} parent=23 // pred_check
        %p390 = pneg %p72
      $region26: #{patchcore_forward.11} parent=23 // pred_check_branch
        %392 = sbr.rel (%p390) target = $region28
      $region27: #{patchcore_forward.11} parent=23 // pred_region
        _
      $region28: #{patchcore_forward.11} parent=23 // pred_fallthru
        _
    $region24: #{patchcore_forward.11} parent=5 // pred_fallthru
      _
    %p393 = scmp.le.s32.totalorder 2, %s7
    // Predicated region
    $region29: #{patchcore_forward.11} parent=5 // pred_check
      %p394 = pneg %p393
    $region30: #{patchcore_forward.11} parent=5 // pred_check_branch
      %396 = sbr.rel (%p394) target = $region32
    $region31: #{patchcore_forward.11} parent=5 // pred_region
      %s397 = ssub.s32 %s7, 2
      // Predicated region
      $region33: #{patchcore_forward.11} parent=31 // pred_check
        %p398 = pneg %p78
      $region34: #{patchcore_forward.11} parent=31 // pred_check_branch
        %400 = sbr.rel (%p398) target = $region36
      $region35: #{patchcore_forward.11} parent=31 // pred_region
        %p401 = scmp.lt.s32.totalorder %s18, 1
        %s402 = scalar_select %p401, %s18, 1
        %p403 = scmp.lt.s32.totalorder %s19, 0
        %s404 = scalar_select %p403, %s19, 0
        %s405 = smul.addr %s402, 8
        %s406 = sadd.s32 %s404, %s405
        %s407 = smul.addr %s406, 8
        %s408 = scalar_lea.vmem %s1, %s407
      $region36: #{patchcore_forward.11} parent=31 // pred_fallthru
        _
    $region32: #{patchcore_forward.11} parent=5 // pred_fallthru
      _
  $region6: #{patchcore_forward.11} parent=0 // loop_footer
    %s11 = sadd.s32 1, %s7
  $region7: #{patchcore_forward.11} parent=0 // loop_footer_branch
    %6 = sbr.rel target = $region3
  $region8: #{patchcore_forward.11} parent=0 // loop_exit
    _

// kernel: patchcore_forward.10
$region0: #{patchcore_forward.10}
  #allocation0 [shape = 'u32[]', space=smem, size = 0x4, offset = 0x4, fixed_abs, tag = 'smem constant byte address 0x4 - core index']
  #allocation1 [shape = 'u32[144,128]{1,0:T(1,128)}', space=vmem, size = 0x12000, scoped, tag = 'internal scratch']
  #allocation2 [shape = 'f32[18,18,16]{2,1,0:T(8,128)}', space=vmem, size = 0x36000, scoped, tag = 'scratch operand']
  %s0 = inlined_call_operand.vmem [shape: f32[2,16,16,16], index: 0, kind: input, shape index: {}]
  %s1 = inlined_call_operand.vmem [shape: f32[2,16,16,16], index: 1, kind: output, shape index: {}]
  %s2 = sld [smem:[#allocation0]]
  $region37: #{patchcore_forward.10} parent=0
    _
  %s4 = ssub.s32 1, %s2
  %s5 = scalar_select 0, %s4, %s2
  loop: start=0, step=1, limit=4
  $region2: #{patchcore_forward.10} parent=0 // loop_pre_header
    _
  $region3: #{patchcore_forward.10} parent=0 // loop_header
    %s7 = sphi 0, %s11
    %p8 = scmp.ge.s32.totalorder %s7, 4
    %s14 = sphi 0, %s26
    %s15 = sphi 0, %s22
    %s16 = sphi 0, %s14
    %s17 = sphi 0, %s15
    %s18 = sphi 0, %s16
    %s19 = sphi 0, %s17
    %s31 = sphi 0, %s33
    %s34 = sphi 0, %s31
    %s35 = sphi 0, %s34
    %s51 = sphi 0, %s35
    %s59 = sphi 0, %s61
    %s62 = sphi 0, %s59
    %s63 = sphi 0, %s62
    %s79 = sphi 0, %s63
  $region4: #{patchcore_forward.10} parent=0 // loop_header_branch
    %10 = sbr.rel (%p8) target = $region8
  $region5: #{patchcore_forward.10} parent=0 // loop_body
    %s12 = ssub.s32 %s7, 1
    %s13 = ssub.s32 %s7, 2
    %s20 = sadd.s32 1, %s15
    %p21 = scmp.ge.s32.totalorder %s20, 1
    %s22 = scalar_select %p21, 0, %s20
    %s23 = sadd.s32 1, %s14
    %s24 = scalar_select %p21, %s23, %s14
    %p25 = scmp.ge.s32.totalorder %s24, 2
    %s26 = scalar_select %p25, 0, %s24
    %s27 = ssub.s32 %s14, %s26
    %s28 = ssub.s32 %s15, %s22
    %s29 = sor.u32 %s27, %s28
    %p30 = scmp.eq.s32.totalorder %s29, 0
    %s32 = sadd.s32 %s31, 1
    %s33 = scalar_select %p30, %s31, %s32
    %p36 = pneg %p30
    %p37 = scmp.eq.s32.totalorder %s7, 1
    %p38 = por %p36, %p37
    %p39 = scmp.ne.s32.totalorder %s31, %s34
    %p40 = scmp.eq.s32.totalorder %s7, 0
    %p41 = por %p39, %p40
    %p42 = scmp.ne.s32.totalorder %s31, %s34
    %p43 = scmp.eq.s32.totalorder %s12, 1
    %p44 = por %p42, %p43
    %p45 = scmp.ne.s32.totalorder %s34, %s35
    %p46 = scmp.eq.s32.totalorder %s12, 0
    %p47 = por %p45, %p46
    %p48 = scmp.ne.s32.totalorder %s34, %s35
    %p49 = scmp.eq.s32.totalorder %s13, 1
    %p50 = por %p48, %p49
    %p52 = scmp.ne.s32.totalorder %s35, %s51
    %p53 = scmp.eq.s32.totalorder %s13, 0
    %p54 = por %p52, %p53
    %s55 = ssub.s32 %s14, %s26
    %s56 = ssub.s32 %s15, %s22
    %s57 = sor.u32 %s55, %s56
    %p58 = scmp.eq.s32.totalorder %s57, 0
    %s60 = sadd.s32 %s59, 1
    %s61 = scalar_select %p58, %s59, %s60
    %p64 = pneg %p58
    %p65 = scmp.eq.s32.totalorder %s7, 1
    %p66 = por %p64, %p65
    %p67 = scmp.ne.s32.totalorder %s59, %s62
    %p68 = scmp.eq.s32.totalorder %s7, 0
    %p69 = por %p67, %p68
    %p70 = scmp.ne.s32.totalorder %s59, %s62
    %p71 = scmp.eq.s32.totalorder %s12, 1
    %p72 = por %p70, %p71
    %p73 = scmp.ne.s32.totalorder %s62, %s63
    %p74 = scmp.eq.s32.totalorder %s12, 0
    %p75 = por %p73, %p74
    %p76 = scmp.ne.s32.totalorder %s62, %s63
    %p77 = scmp.eq.s32.totalorder %s13, 1
    %p78 = por %p76, %p77
    %p80 = scmp.ne.s32.totalorder %s63, %s79
    %p81 = scmp.eq.s32.totalorder %s13, 0
    %p82 = por %p80, %p81
    %p83 = scmp.le.s32.totalorder 1, %s7
    %p84 = scmp.lt.s32.totalorder %s7, 3
    %p85 = pnand %p83, %p84
    %p86 = pneg %p85
    // Predicated region
    $region9: #{patchcore_forward.10} parent=5 // pred_check
      _
    $region10: #{patchcore_forward.10} parent=5 // pred_check_branch
      %88 = sbr.rel (%p85) target = $region12
    $region11: #{patchcore_forward.10} parent=5 // pred_region
      %s89 = ssub.s32 %s7, 1
    $region12: #{patchcore_forward.10} parent=5 // pred_fallthru
      _
    %p90 = scmp.lt.s32.totalorder %s7, 2
    // Predicated region
    $region13: #{patchcore_forward.10} parent=5 // pred_check
      %p91 = pneg %p90
    $region14: #{patchcore_forward.10} parent=5 // pred_check_branch
      %93 = sbr.rel (%p91) target = $region16
    $region15: #{patchcore_forward.10} parent=5 // pred_region
      // Predicated region
      $region17: #{patchcore_forward.10} parent=15 // pred_check
        %p94 = pneg %p41
      $region18: #{patchcore_forward.10} parent=15 // pred_check_branch
        %96 = sbr.rel (%p94) target = $region20
      $region19: #{patchcore_forward.10} parent=15 // pred_region
        %p97 = scmp.lt.s32.totalorder %s14, 1
        %s98 = scalar_select %p97, %s14, 1
        %p99 = scmp.lt.s32.totalorder %s15, 0
        %s100 = scalar_select %p99, %s15, 0
        %s101 = smul.addr %s98, 32
        %s102 = sadd.s32 %s100, %s101
        %s103 = smul.addr %s102, 8
        %s104 = scalar_lea.vmem %s0, %s103
      $region20: #{patchcore_forward.10} parent=15 // pred_fallthru
        _
    $region16: #{patchcore_forward.10} parent=5 // pred_fallthru
      _
    %p105 = scmp.le.s32.totalorder 1, %s7
    %p106 = scmp.lt.s32.totalorder %s7, 3
    %p107 = pnand %p105, %p106
    %p108 = pneg %p107
    // Predicated region
    $region21: #{patchcore_forward.10} parent=5 // pred_check
      _
    $region22: #{patchcore_forward.10} parent=5 // pred_check_branch
      %110 = sbr.rel (%p107) target = $region24
    $region23: #{patchcore_forward.10} parent=5 // pred_region
      %s111 = ssub.s32 %s7, 1
      %p112 = scmp.lt.s32.totalorder %s16, 1
      %s113 = scalar_select %p112, %s16, 1
      %p114 = scmp.lt.s32.totalorder %s17, 0
      %s115 = scalar_select %p114, %s17, 0
      %s116 = smul.addr %s113, 32
      %s117 = sadd.s32 %s115, %s116
      %s118 = smul.addr %s117, 8
      %s119 = scalar_lea.vmem %s0, %s118
      %p120 = pneg %p47
      %p121 = pneg %p44
      %p122 = pneg %p75
      %p123 = pneg %p72
      %p124 = scmp.lt.s32.totalorder %s16, 1
      %s125 = scalar_select %p124, %s16, 1
      %p126 = scmp.lt.s32.totalorder %s17, 0
      %s127 = scalar_select %p126, %s17, 0
      %s128 = smul.addr %s125, 32
      %s129 = sadd.s32 %s127, %s128
      %s130 = smul.addr %s129, 8
      %s131 = scalar_lea.vmem %s1, %s130
      %p132 = scmp.lt.s32.totalorder %s16, 1
      %s133 = scalar_select %p132, %s16, 1
      %p134 = scmp.lt.s32.totalorder %s17, 0
      %s135 = scalar_select %p134, %s17, 0
      %s136 = smul.addr %s133, 32
      %s137 = sadd.s32 %s135, %s136
      %s138 = smul.addr %s137, 8
      %s139 = scalar_lea.vmem %s0, %s138
      %p140 = scmp.lt.s32.totalorder %s16, 1
      %s141 = scalar_select %p140, %s16, 1
      %p142 = scmp.lt.s32.totalorder %s17, 0
      %s143 = scalar_select %p142, %s17, 0
      %s144 = smul.addr %s141, 32
      %s145 = sadd.s32 %s143, %s144
      %s146 = smul.addr %s145, 8
      %s147 = scalar_lea.vmem %s1, %s146
      %vm148 = vcmask 130048
      %149 = vst.msk [vmem:[#allocation2] sm:$0xff] %vm148, 0.0
      %150 = vst.msk [vmem:[#allocation2 + $0x8] sm:$0xff] %vm148, 0.0
      %vm151 = vcmask 123904
      %152 = vst.msk [vmem:[#allocation2 + $0x10] sm:$0x3] %vm151, 0.0
      %153 = vst.msk [vmem:[#allocation2 + $0x18] sm:$0xff] %vm148, 0.0
      %154 = vst.msk [vmem:[#allocation2 + $0x20] sm:$0xff] %vm148, 0.0
      %155 = vst.msk [vmem:[#allocation2 + $0x28] sm:$0x3] %vm151, 0.0
      %156 = vst.msk [vmem:[#allocation2 + $0x30] sm:$0xff] %vm148, 0.0
      %157 = vst.msk [vmem:[#allocation2 + $0x38] sm:$0xff] %vm148, 0.0
      %158 = vst.msk [vmem:[#allocation2 + $0x40] sm:$0x3] %vm151, 0.0
      %159 = vst.msk [vmem:[#allocation2 + $0x48] sm:$0xff] %vm148, 0.0
      %160 = vst.msk [vmem:[#allocation2 + $0x50] sm:$0xff] %vm148, 0.0
      %161 = vst.msk [vmem:[#allocation2 + $0x58] sm:$0x3] %vm151, 0.0
      %162 = vst.msk [vmem:[#allocation2 + $0x60] sm:$0xff] %vm148, 0.0
      %163 = vst.msk [vmem:[#allocation2 + $0x68] sm:$0xff] %vm148, 0.0
      %164 = vst.msk [vmem:[#allocation2 + $0x70] sm:$0x3] %vm151, 0.0
      %165 = vst.msk [vmem:[#allocation2 + $0x78] sm:$0xff] %vm148, 0.0
      %166 = vst.msk [vmem:[#allocation2 + $0x80] sm:$0xff] %vm148, 0.0
      %167 = vst.msk [vmem:[#allocation2 + $0x88] sm:$0x3] %vm151, 0.0
      %168 = vst.msk [vmem:[#allocation2 + $0x90] sm:$0xff] %vm148, 0.0
      %169 = vst.msk [vmem:[#allocation2 + $0x98] sm:$0xff] %vm148, 0.0
      %170 = vst.msk [vmem:[#allocation2 + $0xa0] sm:$0x3] %vm151, 0.0
      %171 = vst.msk [vmem:[#allocation2 + $0xa8] sm:$0xff] %vm148, 0.0
      %172 = vst.msk [vmem:[#allocation2 + $0xb0] sm:$0xff] %vm148, 0.0
      %173 = vst.msk [vmem:[#allocation2 + $0xb8] sm:$0x3] %vm151, 0.0
      %174 = vst.msk [vmem:[#allocation2 + $0xc0] sm:$0xff] %vm148, 0.0
      %175 = vst.msk [vmem:[#allocation2 + $0xc8] sm:$0xff] %vm148, 0.0
      %176 = vst.msk [vmem:[#allocation2 + $0xd0] sm:$0x3] %vm151, 0.0
      %177 = vst.msk [vmem:[#allocation2 + $0xd8] sm:$0xff] %vm148, 0.0
      %178 = vst.msk [vmem:[#allocation2 + $0xe0] sm:$0xff] %vm148, 0.0
      %179 = vst.msk [vmem:[#allocation2 + $0xe8] sm:$0x3] %vm151, 0.0
      %180 = vst.msk [vmem:[#allocation2 + $0xf0] sm:$0xff] %vm148, 0.0
      %181 = vst.msk [vmem:[#allocation2 + $0xf8] sm:$0xff] %vm148, 0.0
      %182 = vst.msk [vmem:[#allocation2 + $0x100] sm:$0x3] %vm151, 0.0
      %183 = vst.msk [vmem:[#allocation2 + $0x108] sm:$0xff] %vm148, 0.0
      %184 = vst.msk [vmem:[#allocation2 + $0x110] sm:$0xff] %vm148, 0.0
      %185 = vst.msk [vmem:[#allocation2 + $0x118] sm:$0x3] %vm151, 0.0
      %186 = vst.msk [vmem:[#allocation2 + $0x120] sm:$0xff] %vm148, 0.0
      %187 = vst.msk [vmem:[#allocation2 + $0x128] sm:$0xff] %vm148, 0.0
      %188 = vst.msk [vmem:[#allocation2 + $0x130] sm:$0x3] %vm151, 0.0
      %189 = vst.msk [vmem:[#allocation2 + $0x138] sm:$0xff] %vm148, 0.0
      %190 = vst.msk [vmem:[#allocation2 + $0x140] sm:$0xff] %vm148, 0.0
      %191 = vst.msk [vmem:[#allocation2 + $0x148] sm:$0x3] %vm151, 0.0
      %192 = vst.msk [vmem:[#allocation2 + $0x150] sm:$0xff] %vm148, 0.0
      %193 = vst.msk [vmem:[#allocation2 + $0x158] sm:$0xff] %vm148, 0.0
      %194 = vst.msk [vmem:[#allocation2 + $0x160] sm:$0x3] %vm151, 0.0
      %195 = vst.msk [vmem:[#allocation2 + $0x168] sm:$0xff] %vm148, 0.0
      %196 = vst.msk [vmem:[#allocation2 + $0x170] sm:$0xff] %vm148, 0.0
      %197 = vst.msk [vmem:[#allocation2 + $0x178] sm:$0x3] %vm151, 0.0
      %198 = vst.msk [vmem:[#allocation2 + $0x180] sm:$0xff] %vm148, 0.0
      %199 = vst.msk [vmem:[#allocation2 + $0x188] sm:$0xff] %vm148, 0.0
      %200 = vst.msk [vmem:[#allocation2 + $0x190] sm:$0x3] %vm151, 0.0
      %201 = vst.msk [vmem:[#allocation2 + $0x198] sm:$0xff] %vm148, 0.0
      %202 = vst.msk [vmem:[#allocation2 + $0x1a0] sm:$0xff] %vm148, 0.0
      %203 = vst.msk [vmem:[#allocation2 + $0x1a8] sm:$0x3] %vm151, 0.0
      %v204 = vld [vmem:[%s139] sm:$0xff]
      %v205 = vld [vmem:[%s139 + $0x8] sm:$0xff]
      %v206 = vld [vmem:[%s139 + $0x10] sm:$0xff]
      %v207 = vld [vmem:[%s139 + $0x18] sm:$0xff]
      %v208 = vld [vmem:[%s139 + $0x20] sm:$0xff]
      %v209 = vld [vmem:[%s139 + $0x28] sm:$0xff]
      %v210 = vld [vmem:[%s139 + $0x30] sm:$0xff]
      %v211 = vld [vmem:[%s139 + $0x38] sm:$0xff]
      %v212 = vld [vmem:[%s139 + $0x40] sm:$0xff]
      %v213 = vld [vmem:[%s139 + $0x48] sm:$0xff]
      %v214 = vld [vmem:[%s139 + $0x50] sm:$0xff]
      %v215 = vld [vmem:[%s139 + $0x58] sm:$0xff]
      %v216 = vld [vmem:[%s139 + $0x60] sm:$0xff]
      %v217 = vld [vmem:[%s139 + $0x68] sm:$0xff]
      %v218 = vld [vmem:[%s139 + $0x70] sm:$0xff]
      %v219 = vld [vmem:[%s139 + $0x78] sm:$0xff]
      %v220 = vld [vmem:[%s139 + $0x80] sm:$0xff]
      %v221 = vld [vmem:[%s139 + $0x88] sm:$0xff]
      %v222 = vld [vmem:[%s139 + $0x90] sm:$0xff]
      %v223 = vld [vmem:[%s139 + $0x98] sm:$0xff]
      %v224 = vld [vmem:[%s139 + $0xa0] sm:$0xff]
      %v225 = vld [vmem:[%s139 + $0xa8] sm:$0xff]
      %v226 = vld [vmem:[%s139 + $0xb0] sm:$0xff]
      %v227 = vld [vmem:[%s139 + $0xb8] sm:$0xff]
      %v228 = vld [vmem:[%s139 + $0xc0] sm:$0xff]
      %v229 = vld [vmem:[%s139 + $0xc8] sm:$0xff]
      %v230 = vld [vmem:[%s139 + $0xd0] sm:$0xff]
      %v231 = vld [vmem:[%s139 + $0xd8] sm:$0xff]
      %v232 = vld [vmem:[%s139 + $0xe0] sm:$0xff]
      %v233 = vld [vmem:[%s139 + $0xe8] sm:$0xff]
      %v234 = vld [vmem:[%s139 + $0xf0] sm:$0xff]
      %v235 = vld [vmem:[%s139 + $0xf8] sm:$0xff]
      %s236 = scalar_lea.vmem [#allocation2], 24
      %237 = vst.msk [vmem:[%s236 + $0x1] sm:$0xff] %vm148, %v204
      %238 = vst.msk [vmem:[%s236 + $0x9] sm:$0xff] %vm148, %v205
      %239 = vst.msk [vmem:[%s236 + $0x19] sm:$0xff] %vm148, %v206
      %240 = vst.msk [vmem:[%s236 + $0x21] sm:$0xff] %vm148, %v207
      %241 = vst.msk [vmem:[%s236 + $0x31] sm:$0xff] %vm148, %v208
      %242 = vst.msk [vmem:[%s236 + $0x39] sm:$0xff] %vm148, %v209
      %243 = vst.msk [vmem:[%s236 + $0x49] sm:$0xff] %vm148, %v210
      %244 = vst.msk [vmem:[%s236 + $0x51] sm:$0xff] %vm148, %v211
      %245 = vst.msk [vmem:[%s236 + $0x61] sm:$0xff] %vm148, %v212
      %246 = vst.msk [vmem:[%s236 + $0x69] sm:$0xff] %vm148, %v213
      %247 = vst.msk [vmem:[%s236 + $0x79] sm:$0xff] %vm148, %v214
      %248 = vst.msk [vmem:[%s236 + $0x81] sm:$0xff] %vm148, %v215
      %249 = vst.msk [vmem:[%s236 + $0x91] sm:$0xff] %vm148, %v216
      %250 = vst.msk [vmem:[%s236 + $0x99] sm:$0xff] %vm148, %v217
      %251 = vst.msk [vmem:[%s236 + $0xa9] sm:$0xff] %vm148, %v218
      %252 = vst.msk [vmem:[%s236 + $0xb1] sm:$0xff] %vm148, %v219
      %253 = vst.msk [vmem:[%s236 + $0xc1] sm:$0xff] %vm148, %v220
      %254 = vst.msk [vmem:[%s236 + $0xc9] sm:$0xff] %vm148, %v221
      %255 = vst.msk [vmem:[%s236 + $0xd9] sm:$0xff] %vm148, %v222
      %256 = vst.msk [vmem:[%s236 + $0xe1] sm:$0xff] %vm148, %v223
      %257 = vst.msk [vmem:[%s236 + $0xf1] sm:$0xff] %vm148, %v224
      %258 = vst.msk [vmem:[%s236 + $0xf9] sm:$0xff] %vm148, %v225
      %259 = vst.msk [vmem:[%s236 + $0x109] sm:$0xff] %vm148, %v226
      %260 = vst.msk [vmem:[%s236 + $0x111] sm:$0xff] %vm148, %v227
      %261 = vst.msk [vmem:[%s236 + $0x121] sm:$0xff] %vm148, %v228
      %262 = vst.msk [vmem:[%s236 + $0x129] sm:$0xff] %vm148, %v229
      %263 = vst.msk [vmem:[%s236 + $0x139] sm:$0xff] %vm148, %v230
      %264 = vst.msk [vmem:[%s236 + $0x141] sm:$0xff] %vm148, %v231
      %265 = vst.msk [vmem:[%s236 + $0x151] sm:$0xff] %vm148, %v232
      %266 = vst.msk [vmem:[%s236 + $0x159] sm:$0xff] %vm148, %v233
      %267 = vst.msk [vmem:[%s236 + $0x169] sm:$0xff] %vm148, %v234
      %268 = vst.msk [vmem:[%s236 + $0x171] sm:$0xff] %vm148, %v235
      %v269 = vld [vmem:[#allocation2] sm:$0xff]
      %v270 = vld [vmem:[#allocation2 + $0x8] sm:$0xff]
      %v271 = vld [vmem:[#allocation2 + $0x10] sm:$0x3]
      %v272 = vld [vmem:[#allocation2 + $0x18] sm:$0xff]
      %v273 = vld [vmem:[#allocation2 + $0x20] sm:$0xff]
      %v274 = vld [vmem:[#allocation2 + $0x28] sm:$0x3]
      %v275 = vld [vmem:[#allocation2 + $0x30] sm:$0xff]
      %v276 = vld [vmem:[#allocation2 + $0x38] sm:$0xff]
      %v277 = vld [vmem:[#allocation2 + $0x40] sm:$0x3]
      %v278 = vld [vmem:[#allocation2 + $0x48] sm:$0xff]
      %v279 = vld [vmem:[#allocation2 + $0x50] sm:$0xff]
      %v280 = vld [vmem:[#allocation2 + $0x58] sm:$0x3]
      %v281 = vld [vmem:[#allocation2 + $0x60] sm:$0xff]
      %v282 = vld [vmem:[#allocation2 + $0x68] sm:$0xff]
      %v283 = vld [vmem:[#allocation2 + $0x70] sm:$0x3]
      %v284 = vld [vmem:[#allocation2 + $0x78] sm:$0xff]
      %v285 = vld [vmem:[#allocation2 + $0x80] sm:$0xff]
      %v286 = vld [vmem:[#allocation2 + $0x88] sm:$0x3]
      %v287 = vld [vmem:[#allocation2 + $0x90] sm:$0xff]
      %v288 = vld [vmem:[#allocation2 + $0x98] sm:$0xff]
      %v289 = vld [vmem:[#allocation2 + $0xa0] sm:$0x3]
      %v290 = vld [vmem:[#allocation2 + $0xa8] sm:$0xff]
      %v291 = vld [vmem:[#allocation2 + $0xb0] sm:$0xff]
      %v292 = vld [vmem:[#allocation2 + $0xb8] sm:$0x3]
      %v293 = vld [vmem:[#allocation2 + $0xc0] sm:$0xff]
      %v294 = vld [vmem:[#allocation2 + $0xc8] sm:$0xff]
      %v295 = vld [vmem:[#allocation2 + $0xd0] sm:$0x3]
      %v296 = vld [vmem:[#allocation2 + $0xd8] sm:$0xff]
      %v297 = vld [vmem:[#allocation2 + $0xe0] sm:$0xff]
      %v298 = vld [vmem:[#allocation2 + $0xe8] sm:$0x3]
      %v299 = vld [vmem:[#allocation2 + $0xf0] sm:$0xff]
      %v300 = vld [vmem:[#allocation2 + $0xf8] sm:$0xff]
      %v301 = vld [vmem:[#allocation2 + $0x100] sm:$0x3]
      %v302 = vld [vmem:[#allocation2 + $0x108] sm:$0xff]
      %v303 = vld [vmem:[#allocation2 + $0x110] sm:$0xff]
      %v304 = vld [vmem:[#allocation2 + $0x118] sm:$0x3]
      %v305 = vld [vmem:[#allocation2 + $0x120] sm:$0xff]
      %v306 = vld [vmem:[#allocation2 + $0x128] sm:$0xff]
      %v307 = vld [vmem:[#allocation2 + $0x130] sm:$0x3]
      %v308 = vld [vmem:[#allocation2 + $0x138] sm:$0xff]
      %v309 = vld [vmem:[#allocation2 + $0x140] sm:$0xff]
      %v310 = vld [vmem:[#allocation2 + $0x148] sm:$0x3]
      %v311 = vld [vmem:[#allocation2 + $0x150] sm:$0xff]
      %v312 = vld [vmem:[#allocation2 + $0x158] sm:$0xff]
      %v313 = vld [vmem:[#allocation2 + $0x160] sm:$0x3]
      %v314 = vld [vmem:[#allocation2 + $0x168] sm:$0xff]
      %v315 = vld [vmem:[#allocation2 + $0x170] sm:$0xff]
      %v316 = vld [vmem:[#allocation2 + $0x178] sm:$0x3]
      %v317 = vld [vmem:[%s236] sm:$0xff]
      %v318 = vld [vmem:[%s236 + $0x8] sm:$0xff]
      %v319 = vld [vmem:[%s236 + $0x10] sm:$0x3]
      %v320 = vld [vmem:[%s236 + $0x18] sm:$0xff]
      %v321 = vld [vmem:[%s236 + $0x20] sm:$0xff]
      %v322 = vld [vmem:[%s236 + $0x28] sm:$0x3]
      %v323 = vld [vmem:[%s236 + $0x30] sm:$0xff]
      %v324 = vld [vmem:[%s236 + $0x38] sm:$0xff]
      %v325 = vld [vmem:[%s236 + $0x40] sm:$0x3]
      %v326 = vld [vmem:[%s236 + $0x48] sm:$0xff]
      %v327 = vld [vmem:[%s236 + $0x50] sm:$0xff]
      %v328 = vld [vmem:[%s236 + $0x58] sm:$0x3]
      %v329 = vld [vmem:[%s236 + $0x60] sm:$0xff]
      %v330 = vld [vmem:[%s236 + $0x68] sm:$0xff]
      %v331 = vld [vmem:[%s236 + $0x70] sm:$0x3]
      %v332 = vld [vmem:[%s236 + $0x78] sm:$0xff]
      %v333 = vld [vmem:[%s236 + $0x80] sm:$0xff]
      %v334 = vld [vmem:[%s236 + $0x88] sm:$0x3]
      %v335 = vld [vmem:[%s236 + $0x90] sm:$0xff]
      %v336 = vld [vmem:[%s236 + $0x98] sm:$0xff]
      %v337 = vld [vmem:[%s236 + $0xa0] sm:$0x3]
      %v338 = vld [vmem:[%s236 + $0xa8] sm:$0xff]
      %v339 = vld [vmem:[%s236 + $0xb0] sm:$0xff]
      %v340 = vld [vmem:[%s236 + $0xb8] sm:$0x3]
      %v341 = vld [vmem:[%s236 + $0xc0] sm:$0xff]
      %v342 = vld [vmem:[%s236 + $0xc8] sm:$0xff]
      %v343 = vld [vmem:[%s236 + $0xd0] sm:$0x3]
      %v344 = vld [vmem:[%s236 + $0xd8] sm:$0xff]
      %v345 = vld [vmem:[%s236 + $0xe0] sm:$0xff]
      %v346 = vld [vmem:[%s236 + $0xe8] sm:$0x3]
      %v347 = vld [vmem:[%s236 + $0xf0] sm:$0xff]
      %v348 = vld [vmem:[%s236 + $0xf8] sm:$0xff]
      %v349 = vld [vmem:[%s236 + $0x100] sm:$0x3]
      %v350 = vld [vmem:[%s236 + $0x108] sm:$0xff]
      %v351 = vld [vmem:[%s236 + $0x110] sm:$0xff]
      %v352 = vld [vmem:[%s236 + $0x118] sm:$0x3]
      %v353 = vld [vmem:[%s236 + $0x120] sm:$0xff]
      %v354 = vld [vmem:[%s236 + $0x128] sm:$0xff]
      %v355 = vld [vmem:[%s236 + $0x130] sm:$0x3]
      %v356 = vld [vmem:[%s236 + $0x138] sm:$0xff]
      %v357 = vld [vmem:[%s236 + $0x140] sm:$0xff]
      %v358 = vld [vmem:[%s236 + $0x148] sm:$0x3]
      %v359 = vld [vmem:[%s236 + $0x150] sm:$0xff]
      %v360 = vld [vmem:[%s236 + $0x158] sm:$0xff]
      %v361 = vld [vmem:[%s236 + $0x160] sm:$0x3]
      %v362 = vld [vmem:[%s236 + $0x168] sm:$0xff]
      %v363 = vld [vmem:[%s236 + $0x170] sm:$0xff]
      %v364 = vld [vmem:[%s236 + $0x178] sm:$0x3]
      %v365 = vadd.f32 %v269, %v317
      %v366 = vadd.f32 %v270, %v318
      %v367 = vadd.f32 %v271, %v319
      %v368 = vadd.f32 %v272, %v320
      %v369 = vadd.f32 %v273, %v321
      %v370 = vadd.f32 %v274, %v322
      %v371 = vadd.f32 %v275, %v323
      %v372 = vadd.f32 %v276, %v324
      %v373 = vadd.f32 %v277, %v325
      %v374 = vadd.f32 %v278, %v326
      %v375 = vadd.f32 %v279, %v327
      %v376 = vadd.f32 %v280, %v328
      %v377 = vadd.f32 %v281, %v329
      %v378 = vadd.f32 %v282, %v330
      %v379 = vadd.f32 %v283, %v331
      %v380 = vadd.f32 %v284, %v332
      %v381 = vadd.f32 %v285, %v333
      %v382 = vadd.f32 %v286, %v334
      %v383 = vadd.f32 %v287, %v335
      %v384 = vadd.f32 %v288, %v336
      %v385 = vadd.f32 %v289, %v337
      %v386 = vadd.f32 %v290, %v338
      %v387 = vadd.f32 %v291, %v339
      %v388 = vadd.f32 %v292, %v340
      %v389 = vadd.f32 %v293, %v341
      %v390 = vadd.f32 %v294, %v342
      %v391 = vadd.f32 %v295, %v343
      %v392 = vadd.f32 %v296, %v344
      %v393 = vadd.f32 %v297, %v345
      %v394 = vadd.f32 %v298, %v346
      %v395 = vadd.f32 %v299, %v347
      %v396 = vadd.f32 %v300, %v348
      %v397 = vadd.f32 %v301, %v349
      %v398 = vadd.f32 %v302, %v350
      %v399 = vadd.f32 %v303, %v351
      %v400 = vadd.f32 %v304, %v352
      %v401 = vadd.f32 %v305, %v353
      %v402 = vadd.f32 %v306, %v354
      %v403 = vadd.f32 %v307, %v355
      %v404 = vadd.f32 %v308, %v356
      %v405 = vadd.f32 %v309, %v357
      %v406 = vadd.f32 %v310, %v358
      %v407 = vadd.f32 %v311, %v359
      %v408 = vadd.f32 %v312, %v360
      %v409 = vadd.f32 %v313, %v361
      %v410 = vadd.f32 %v314, %v362
      %v411 = vadd.f32 %v315, %v363
      %v412 = vadd.f32 %v316, %v364
      %s413 = scalar_lea.vmem [#allocation2], 48
      %v414 = vld [vmem:[%s413] sm:$0xff]
      %v415 = vld [vmem:[%s413 + $0x8] sm:$0xff]
      %v416 = vld [vmem:[%s413 + $0x10] sm:$0x3]
      %v417 = vld [vmem:[%s413 + $0x18] sm:$0xff]
      %v418 = vld [vmem:[%s413 + $0x20] sm:$0xff]
      %v419 = vld [vmem:[%s413 + $0x28] sm:$0x3]
      %v420 = vld [vmem:[%s413 + $0x30] sm:$0xff]
      %v421 = vld [vmem:[%s413 + $0x38] sm:$0xff]
      %v422 = vld [vmem:[%s413 + $0x40] sm:$0x3]
      %v423 = vld [vmem:[%s413 + $0x48] sm:$0xff]
      %v424 = vld [vmem:[%s413 + $0x50] sm:$0xff]
      %v425 = vld [vmem:[%s413 + $0x58] sm:$0x3]
      %v426 = vld [vmem:[%s413 + $0x60] sm:$0xff]
      %v427 = vld [vmem:[%s413 + $0x68] sm:$0xff]
      %v428 = vld [vmem:[%s413 + $0x70] sm:$0x3]
      %v429 = vld [vmem:[%s413 + $0x78] sm:$0xff]
      %v430 = vld [vmem:[%s413 + $0x80] sm:$0xff]
      %v431 = vld [vmem:[%s413 + $0x88] sm:$0x3]
      %v432 = vld [vmem:[%s413 + $0x90] sm:$0xff]
      %v433 = vld [vmem:[%s413 + $0x98] sm:$0xff]
      %v434 = vld [vmem:[%s413 + $0xa0] sm:$0x3]
      %v435 = vld [vmem:[%s413 + $0xa8] sm:$0xff]
      %v436 = vld [vmem:[%s413 + $0xb0] sm:$0xff]
      %v437 = vld [vmem:[%s413 + $0xb8] sm:$0x3]
      %v438 = vld [vmem:[%s413 + $0xc0] sm:$0xff]
      %v439 = vld [vmem:[%s413 + $0xc8] sm:$0xff]
      %v440 = vld [vmem:[%s413 + $0xd0] sm:$0x3]
      %v441 = vld [vmem:[%s413 + $0xd8] sm:$0xff]
      %v442 = vld [vmem:[%s413 + $0xe0] sm:$0xff]
      %v443 = vld [vmem:[%s413 + $0xe8] sm:$0x3]
      %v444 = vld [vmem:[%s413 + $0xf0] sm:$0xff]
      %v445 = vld [vmem:[%s413 + $0xf8] sm:$0xff]
      %v446 = vld [vmem:[%s413 + $0x100] sm:$0x3]
      %v447 = vld [vmem:[%s413 + $0x108] sm:$0xff]
      %v448 = vld [vmem:[%s413 + $0x110] sm:$0xff]
      %v449 = vld [vmem:[%s413 + $0x118] sm:$0x3]
      %v450 = vld [vmem:[%s413 + $0x120] sm:$0xff]
      %v451 = vld [vmem:[%s413 + $0x128] sm:$0xff]
      %v452 = vld [vmem:[%s413 + $0x130] sm:$0x3]
      %v453 = vld [vmem:[%s413 + $0x138] sm:$0xff]
      %v454 = vld [vmem:[%s413 + $0x140] sm:$0xff]
      %v455 = vld [vmem:[%s413 + $0x148] sm:$0x3]
      %v456 = vld [vmem:[%s413 + $0x150] sm:$0xff]
      %v457 = vld [vmem:[%s413 + $0x158] sm:$0xff]
      %v458 = vld [vmem:[%s413 + $0x160] sm:$0x3]
      %v459 = vld [vmem:[%s413 + $0x168] sm:$0xff]
      %v460 = vld [vmem:[%s413 + $0x170] sm:$0xff]
      %v461 = vld [vmem:[%s413 + $0x178] sm:$0x3]
      %v462 = vadd.f32 %v365, %v414
      %v463 = vadd.f32 %v366, %v415
      %v464 = vadd.f32 %v367, %v416
      %v465 = vadd.f32 %v368, %v417
      %v466 = vadd.f32 %v369, %v418
      %v467 = vadd.f32 %v370, %v419
      %v468 = vadd.f32 %v371, %v420
      %v469 = vadd.f32 %v372, %v421
      %v470 = vadd.f32 %v373, %v422
      %v471 = vadd.f32 %v374, %v423
      %v472 = vadd.f32 %v375, %v424
      %v473 = vadd.f32 %v376, %v425
      %v474 = vadd.f32 %v377, %v426
      %v475 = vadd.f32 %v378, %v427
      %v476 = vadd.f32 %v379, %v428
      %v477 = vadd.f32 %v380, %v429
      %v478 = vadd.f32 %v381, %v430
      %v479 = vadd.f32 %v382, %v431
      %v480 = vadd.f32 %v383, %v432
      %v481 = vadd.f32 %v384, %v433
      %v482 = vadd.f32 %v385, %v434
      %v483 = vadd.f32 %v386, %v435
      %v484 = vadd.f32 %v387, %v436
      %v485 = vadd.f32 %v388, %v437
      %v486 = vadd.f32 %v389, %v438
      %v487 = vadd.f32 %v390, %v439
      %v488 = vadd.f32 %v391, %v440
      %v489 = vadd.f32 %v392, %v441
      %v490 = vadd.f32 %v393, %v442
      %v491 = vadd.f32 %v394, %v443
      %v492 = vadd.f32 %v395, %v444
      %v493 = vadd.f32 %v396, %v445
      %v494 = vadd.f32 %v397, %v446
      %v495 = vadd.f32 %v398, %v447
      %v496 = vadd.f32 %v399, %v448
      %v497 = vadd.f32 %v400, %v449
      %v498 = vadd.f32 %v401, %v450
      %v499 = vadd.f32 %v402, %v451
      %v500 = vadd.f32 %v403, %v452
      %v501 = vadd.f32 %v404, %v453
      %v502 = vadd.f32 %v405, %v454
      %v503 = vadd.f32 %v406, %v455
      %v504 = vadd.f32 %v407, %v456
      %v505 = vadd.f32 %v408, %v457
      %v506 = vadd.f32 %v409, %v458
      %v507 = vadd.f32 %v410, %v459
      %v508 = vadd.f32 %v411, %v460
      %v509 = vadd.f32 %v412, %v461
      %vm558 = vcmask 1046528
      %v559 = vrot.slane %v462, 1
      %v560 = vrot.slane %v463, 1
      %v561 = vsel %vm558, %v559, %v560
      %v562 = vrot.slane %v464, 1
      %v563 = vsel %vm558, %v560, %v562
      %v564 = vrot.slane %v465, 1
      %v565 = vrot.slane %v466, 1
      %v566 = vsel %vm558, %v564, %v565
      %v567 = vrot.slane %v467, 1
      %v568 = vsel %vm558, %v565, %v567
      %v569 = vrot.slane %v468, 1
      %v570 = vrot.slane %v469, 1
      %v571 = vsel %vm558, %v569, %v570
      %v572 = vrot.slane %v470, 1
      %v573 = vsel %vm558, %v570, %v572
      %v574 = vrot.slane %v471, 1
      %v575 = vrot.slane %v472, 1
      %v576 = vsel %vm558, %v574, %v575
      %v577 = vrot.slane %v473, 1
      %v578 = vsel %vm558, %v575, %v577
      %v579 = vrot.slane %v474, 1
      %v580 = vrot.slane %v475, 1
      %v581 = vsel %vm558, %v579, %v580
      %v582 = vrot.slane %v476, 1
      %v583 = vsel %vm558, %v580, %v582
      %v584 = vrot.slane %v477, 1
      %v585 = vrot.slane %v478, 1
      %v586 = vsel %vm558, %v584, %v585
      %v587 = vrot.slane %v479, 1
      %v588 = vsel %vm558, %v585, %v587
      %v589 = vrot.slane %v480, 1
      %v590 = vrot.slane %v481, 1
      %v591 = vsel %vm558, %v589, %v590
      %v592 = vrot.slane %v482, 1
      %v593 = vsel %vm558, %v590, %v592
      %v594 = vrot.slane %v483, 1
      %v595 = vrot.slane %v484, 1
      %v596 = vsel %vm558, %v594, %v595
      %v597 = vrot.slane %v485, 1
      %v598 = vsel %vm558, %v595, %v597
      %v599 = vrot.slane %v486, 1
      %v600 = vrot.slane %v487, 1
      %v601 = vsel %vm558, %v599, %v600
      %v602 = vrot.slane %v488, 1
      %v603 = vsel %vm558, %v600, %v602
      %v604 = vrot.slane %v489, 1
      %v605 = vrot.slane %v490, 1
      %v606 = vsel %vm558, %v604, %v605
      %v607 = vrot.slane %v491, 1
      %v608 = vsel %vm558, %v605, %v607
      %v609 = vrot.slane %v492, 1
      %v610 = vrot.slane %v493, 1
      %v611 = vsel %vm558, %v609, %v610
      %v612 = vrot.slane %v494, 1
      %v613 = vsel %vm558, %v610, %v612
      %v614 = vrot.slane %v495, 1
      %v615 = vrot.slane %v496, 1
      %v616 = vsel %vm558, %v614, %v615
      %v617 = vrot.slane %v497, 1
      %v618 = vsel %vm558, %v615, %v617
      %v619 = vrot.slane %v498, 1
      %v620 = vrot.slane %v499, 1
      %v621 = vsel %vm558, %v619, %v620
      %v622 = vrot.slane %v500, 1
      %v623 = vsel %vm558, %v620, %v622
      %v624 = vrot.slane %v501, 1
      %v625 = vrot.slane %v502, 1
      %v626 = vsel %vm558, %v624, %v625
      %v627 = vrot.slane %v503, 1
      %v628 = vsel %vm558, %v625, %v627
      %v629 = vrot.slane %v504, 1
      %v630 = vrot.slane %v505, 1
      %v631 = vsel %vm558, %v629, %v630
      %v632 = vrot.slane %v506, 1
      %v633 = vsel %vm558, %v630, %v632
      %v634 = vrot.slane %v507, 1
      %v635 = vrot.slane %v508, 1
      %v636 = vsel %vm558, %v634, %v635
      %v637 = vrot.slane %v509, 1
      %v638 = vsel %vm558, %v635, %v637
      %v671 = vadd.f32 %v462, %v561
      %v672 = vadd.f32 %v463, %v563
      %v673 = vadd.f32 %v465, %v566
      %v674 = vadd.f32 %v466, %v568
      %v675 = vadd.f32 %v468, %v571
      %v676 = vadd.f32 %v469, %v573
      %v677 = vadd.f32 %v471, %v576
      %v678 = vadd.f32 %v472, %v578
      %v679 = vadd.f32 %v474, %v581
      %v680 = vadd.f32 %v475, %v583
      %v681 = vadd.f32 %v477, %v586
      %v682 = vadd.f32 %v478, %v588
      %v683 = vadd.f32 %v480, %v591
      %v684 = vadd.f32 %v481, %v593
      %v685 = vadd.f32 %v483, %v596
      %v686 = vadd.f32 %v484, %v598
      %v687 = vadd.f32 %v486, %v601
      %v688 = vadd.f32 %v487, %v603
      %v689 = vadd.f32 %v489, %v606
      %v690 = vadd.f32 %v490, %v608
      %v691 = vadd.f32 %v492, %v611
      %v692 = vadd.f32 %v493, %v613
      %v693 = vadd.f32 %v495, %v616
      %v694 = vadd.f32 %v496, %v618
      %v695 = vadd.f32 %v498, %v621
      %v696 = vadd.f32 %v499, %v623
      %v697 = vadd.f32 %v501, %v626
      %v698 = vadd.f32 %v502, %v628
      %v699 = vadd.f32 %v504, %v631
      %v700 = vadd.f32 %v505, %v633
      %v701 = vadd.f32 %v507, %v636
      %v702 = vadd.f32 %v508, %v638
      %vm703 = vcmask 1045504
      %v704 = vrot.slane %v462, 2
      %v705 = vrot.slane %v463, 2
      %v706 = vsel %vm703, %v704, %v705
      %v707 = vrot.slane %v464, 2
      %v708 = vsel %vm703, %v705, %v707
      %v709 = vrot.slane %v465, 2
      %v710 = vrot.slane %v466, 2
      %v711 = vsel %vm703, %v709, %v710
      %v712 = vrot.slane %v467, 2
      %v713 = vsel %vm703, %v710, %v712
      %v714 = vrot.slane %v468, 2
      %v715 = vrot.slane %v469, 2
      %v716 = vsel %vm703, %v714, %v715
      %v717 = vrot.slane %v470, 2
      %v718 = vsel %vm703, %v715, %v717
      %v719 = vrot.slane %v471, 2
      %v720 = vrot.slane %v472, 2
      %v721 = vsel %vm703, %v719, %v720
      %v722 = vrot.slane %v473, 2
      %v723 = vsel %vm703, %v720, %v722
      %v724 = vrot.slane %v474, 2
      %v725 = vrot.slane %v475, 2
      %v726 = vsel %vm703, %v724, %v725
      %v727 = vrot.slane %v476, 2
      %v728 = vsel %vm703, %v725, %v727
      %v729 = vrot.slane %v477, 2
      %v730 = vrot.slane %v478, 2
      %v731 = vsel %vm703, %v729, %v730
      %v732 = vrot.slane %v479, 2
      %v733 = vsel %vm703, %v730, %v732
      %v734 = vrot.slane %v480, 2
      %v735 = vrot.slane %v481, 2
      %v736 = vsel %vm703, %v734, %v735
      %v737 = vrot.slane %v482, 2
      %v738 = vsel %vm703, %v735, %v737
      %v739 = vrot.slane %v483, 2
      %v740 = vrot.slane %v484, 2
      %v741 = vsel %vm703, %v739, %v740
      %v742 = vrot.slane %v485, 2
      %v743 = vsel %vm703, %v740, %v742
      %v744 = vrot.slane %v486, 2
      %v745 = vrot.slane %v487, 2
      %v746 = vsel %vm703, %v744, %v745
      %v747 = vrot.slane %v488, 2
      %v748 = vsel %vm703, %v745, %v747
      %v749 = vrot.slane %v489, 2
      %v750 = vrot.slane %v490, 2
      %v751 = vsel %vm703, %v749, %v750
      %v752 = vrot.slane %v491, 2
      %v753 = vsel %vm703, %v750, %v752
      %v754 = vrot.slane %v492, 2
      %v755 = vrot.slane %v493, 2
      %v756 = vsel %vm703, %v754, %v755
      %v757 = vrot.slane %v494, 2
      %v758 = vsel %vm703, %v755, %v757
      %v759 = vrot.slane %v495, 2
      %v760 = vrot.slane %v496, 2
      %v761 = vsel %vm703, %v759, %v760
      %v762 = vrot.slane %v497, 2
      %v763 = vsel %vm703, %v760, %v762
      %v764 = vrot.slane %v498, 2
      %v765 = vrot.slane %v499, 2
      %v766 = vsel %vm703, %v764, %v765
      %v767 = vrot.slane %v500, 2
      %v768 = vsel %vm703, %v765, %v767
      %v769 = vrot.slane %v501, 2
      %v770 = vrot.slane %v502, 2
      %v771 = vsel %vm703, %v769, %v770
      %v772 = vrot.slane %v503, 2
      %v773 = vsel %vm703, %v770, %v772
      %v774 = vrot.slane %v504, 2
      %v775 = vrot.slane %v505, 2
      %v776 = vsel %vm703, %v774, %v775
      %v777 = vrot.slane %v506, 2
      %v778 = vsel %vm703, %v775, %v777
      %v779 = vrot.slane %v507, 2
      %v780 = vrot.slane %v508, 2
      %v781 = vsel %vm703, %v779, %v780
      %v782 = vrot.slane %v509, 2
      %v783 = vsel %vm703, %v780, %v782
      %v816 = vadd.f32 %v671, %v706
      %v817 = vadd.f32 %v672, %v708
      %v818 = vadd.f32 %v673, %v711
      %v819 = vadd.f32 %v674, %v713
      %v820 = vadd.f32 %v675, %v716
      %v821 = vadd.f32 %v676, %v718
      %v822 = vadd.f32 %v677, %v721
      %v823 = vadd.f32 %v678, %v723
      %v824 = vadd.f32 %v679, %v726
      %v825 = vadd.f32 %v680, %v728
      %v826 = vadd.f32 %v681, %v731
      %v827 = vadd.f32 %v682, %v733
      %v828 = vadd.f32 %v683, %v736
      %v829 = vadd.f32 %v684, %v738
      %v830 = vadd.f32 %v685, %v741
      %v831 = vadd.f32 %v686, %v743
      %v832 = vadd.f32 %v687, %v746
      %v833 = vadd.f32 %v688, %v748
      %v834 = vadd.f32 %v689, %v751
      %v835 = vadd.f32 %v690, %v753
      %v836 = vadd.f32 %v691, %v756
      %v837 = vadd.f32 %v692, %v758
      %v838 = vadd.f32 %v693, %v761
      %v839 = vadd.f32 %v694, %v763
      %v840 = vadd.f32 %v695, %v766
      %v841 = vadd.f32 %v696, %v768
      %v842 = vadd.f32 %v697, %v771
      %v843 = vadd.f32 %v698, %v773
      %v844 = vadd.f32 %v699, %v776
      %v845 = vadd.f32 %v700, %v778
      %v846 = vadd.f32 %v701, %v781
      %v847 = vadd.f32 %v702, %v783
      %v848 = vmul.f32 %v816, 0.11111111
      %v849 = vmul.f32 %v817, 0.11111111
      %v850 = vmul.f32 %v818, 0.11111111
      %v851 = vmul.f32 %v819, 0.11111111
      %v852 = vmul.f32 %v820, 0.11111111
      %v853 = vmul.f32 %v821, 0.11111111
      %v854 = vmul.f32 %v822, 0.11111111
      %v855 = vmul.f32 %v823, 0.11111111
      %v856 = vmul.f32 %v824, 0.11111111
      %v857 = vmul.f32 %v825, 0.11111111
      %v858 = vmul.f32 %v826, 0.11111111
      %v859 = vmul.f32 %v827, 0.11111111
      %v860 = vmul.f32 %v828, 0.11111111
      %v861 = vmul.f32 %v829, 0.11111111
      %v862 = vmul.f32 %v830, 0.11111111
      %v863 = vmul.f32 %v831, 0.11111111
      %v864 = vmul.f32 %v832, 0.11111111
      %v865 = vmul.f32 %v833, 0.11111111
      %v866 = vmul.f32 %v834, 0.11111111
      %v867 = vmul.f32 %v835, 0.11111111
      %v868 = vmul.f32 %v836, 0.11111111
      %v869 = vmul.f32 %v837, 0.11111111
      %v870 = vmul.f32 %v838, 0.11111111
      %v871 = vmul.f32 %v839, 0.11111111
      %v872 = vmul.f32 %v840, 0.11111111
      %v873 = vmul.f32 %v841, 0.11111111
      %v874 = vmul.f32 %v842, 0.11111111
      %v875 = vmul.f32 %v843, 0.11111111
      %v876 = vmul.f32 %v844, 0.11111111
      %v877 = vmul.f32 %v845, 0.11111111
      %v878 = vmul.f32 %v846, 0.11111111
      %v879 = vmul.f32 %v847, 0.11111111
      %880 = vst.msk [vmem:[%s147] sm:$0xff] %vm148, %v848
      %881 = vst.msk [vmem:[%s147 + $0x8] sm:$0xff] %vm148, %v849
      %882 = vst.msk [vmem:[%s147 + $0x10] sm:$0xff] %vm148, %v850
      %883 = vst.msk [vmem:[%s147 + $0x18] sm:$0xff] %vm148, %v851
      %884 = vst.msk [vmem:[%s147 + $0x20] sm:$0xff] %vm148, %v852
      %885 = vst.msk [vmem:[%s147 + $0x28] sm:$0xff] %vm148, %v853
      %886 = vst.msk [vmem:[%s147 + $0x30] sm:$0xff] %vm148, %v854
      %887 = vst.msk [vmem:[%s147 + $0x38] sm:$0xff] %vm148, %v855
      %888 = vst.msk [vmem:[%s147 + $0x40] sm:$0xff] %vm148, %v856
      %889 = vst.msk [vmem:[%s147 + $0x48] sm:$0xff] %vm148, %v857
      %890 = vst.msk [vmem:[%s147 + $0x50] sm:$0xff] %vm148, %v858
      %891 = vst.msk [vmem:[%s147 + $0x58] sm:$0xff] %vm148, %v859
      %892 = vst.msk [vmem:[%s147 + $0x60] sm:$0xff] %vm148, %v860
      %893 = vst.msk [vmem:[%s147 + $0x68] sm:$0xff] %vm148, %v861
      %894 = vst.msk [vmem:[%s147 + $0x70] sm:$0xff] %vm148, %v862
      %895 = vst.msk [vmem:[%s147 + $0x78] sm:$0xff] %vm148, %v863
      %896 = vst.msk [vmem:[%s147 + $0x80] sm:$0xff] %vm148, %v864
      %897 = vst.msk [vmem:[%s147 + $0x88] sm:$0xff] %vm148, %v865
      %898 = vst.msk [vmem:[%s147 + $0x90] sm:$0xff] %vm148, %v866
      %899 = vst.msk [vmem:[%s147 + $0x98] sm:$0xff] %vm148, %v867
      %900 = vst.msk [vmem:[%s147 + $0xa0] sm:$0xff] %vm148, %v868
      %901 = vst.msk [vmem:[%s147 + $0xa8] sm:$0xff] %vm148, %v869
      %902 = vst.msk [vmem:[%s147 + $0xb0] sm:$0xff] %vm148, %v870
      %903 = vst.msk [vmem:[%s147 + $0xb8] sm:$0xff] %vm148, %v871
      %904 = vst.msk [vmem:[%s147 + $0xc0] sm:$0xff] %vm148, %v872
      %905 = vst.msk [vmem:[%s147 + $0xc8] sm:$0xff] %vm148, %v873
      %906 = vst.msk [vmem:[%s147 + $0xd0] sm:$0xff] %vm148, %v874
      %907 = vst.msk [vmem:[%s147 + $0xd8] sm:$0xff] %vm148, %v875
      %908 = vst.msk [vmem:[%s147 + $0xe0] sm:$0xff] %vm148, %v876
      %909 = vst.msk [vmem:[%s147 + $0xe8] sm:$0xff] %vm148, %v877
      %910 = vst.msk [vmem:[%s147 + $0xf0] sm:$0xff] %vm148, %v878
      %911 = vst.msk [vmem:[%s147 + $0xf8] sm:$0xff] %vm148, %v879
      %p912 = scmp.lt.s32.totalorder %s16, 1
      %s913 = scalar_select %p912, %s16, 1
      %p914 = scmp.lt.s32.totalorder %s17, 0
      %s915 = scalar_select %p914, %s17, 0
      %s916 = smul.addr %s913, 32
      %s917 = sadd.s32 %s915, %s916
      %s918 = smul.addr %s917, 8
      %s919 = scalar_lea.vmem %s1, %s918
      // Predicated region
      $region25: #{patchcore_forward.10} parent=23 // pred_check
        %p920 = pneg %p72
      $region26: #{patchcore_forward.10} parent=23 // pred_check_branch
        %922 = sbr.rel (%p920) target = $region28
      $region27: #{patchcore_forward.10} parent=23 // pred_region
        _
      $region28: #{patchcore_forward.10} parent=23 // pred_fallthru
        _
    $region24: #{patchcore_forward.10} parent=5 // pred_fallthru
      _
    %p923 = scmp.le.s32.totalorder 2, %s7
    // Predicated region
    $region29: #{patchcore_forward.10} parent=5 // pred_check
      %p924 = pneg %p923
    $region30: #{patchcore_forward.10} parent=5 // pred_check_branch
      %926 = sbr.rel (%p924) target = $region32
    $region31: #{patchcore_forward.10} parent=5 // pred_region
      %s927 = ssub.s32 %s7, 2
      // Predicated region
      $region33: #{patchcore_forward.10} parent=31 // pred_check
        %p928 = pneg %p78
      $region34: #{patchcore_forward.10} parent=31 // pred_check_branch
        %930 = sbr.rel (%p928) target = $region36
      $region35: #{patchcore_forward.10} parent=31 // pred_region
        %p931 = scmp.lt.s32.totalorder %s18, 1
        %s932 = scalar_select %p931, %s18, 1
        %p933 = scmp.lt.s32.totalorder %s19, 0
        %s934 = scalar_select %p933, %s19, 0
        %s935 = smul.addr %s932, 32
        %s936 = sadd.s32 %s934, %s935
        %s937 = smul.addr %s936, 8
        %s938 = scalar_lea.vmem %s1, %s937
      $region36: #{patchcore_forward.10} parent=31 // pred_fallthru
        _
    $region32: #{patchcore_forward.10} parent=5 // pred_fallthru
      _
  $region6: #{patchcore_forward.10} parent=0 // loop_footer
    %s11 = sadd.s32 1, %s7
  $region7: #{patchcore_forward.10} parent=0 // loop_footer_branch
    %6 = sbr.rel target = $region3
  $region8: #{patchcore_forward.10} parent=0 // loop_exit
    _

// kernel: patchcore_forward.12
$region0: #{patchcore_forward.12}
  #allocation0 [shape = 'u32[]', space=smem, size = 0x4, offset = 0x4, fixed_abs, tag = 'smem constant byte address 0x4 - core index']
  #allocation1 [shape = 'u32[144,128]{1,0:T(1,128)}', space=vmem, size = 0x12000, scoped, tag = 'internal scratch']
  %s0 = inlined_call_operand.vmem [shape: f32[16,8], index: 0, kind: input, shape index: {}]
  %s1 = inlined_call_operand.vmem [shape: f32[16,16,8], index: 1, kind: input, shape index: {}]
  %s2 = inlined_call_operand.vmem [shape: f32[2,8,8,32], index: 2, kind: input, shape index: {}]
  %s3 = inlined_call_operand.vmem [shape: f32[2,16,16,32], index: 3, kind: output, shape index: {}]
  %s4 = sld [smem:[#allocation0]]
  $region45: #{patchcore_forward.12} parent=0
    _
  %s6 = ssub.s32 1, %s4
  %s7 = scalar_select 0, %s6, %s4
  loop: start=0, step=1, limit=4
  $region2: #{patchcore_forward.12} parent=0 // loop_pre_header
    _
  $region3: #{patchcore_forward.12} parent=0 // loop_header
    %s9 = sphi 0, %s13
    %p10 = scmp.ge.s32.totalorder %s9, 4
    %s17 = sphi 0, %s17
    %s19 = sphi 0, %s17
    %s20 = sphi 0, %s19
    %s34 = sphi 0, %s20
    %s38 = sphi 0, %s38
    %s40 = sphi 0, %s38
    %s41 = sphi 0, %s40
    %s55 = sphi 0, %s41
    %s61 = sphi 0, %s63
    %s64 = sphi 0, %s61
    %s65 = sphi 0, %s64
    %s81 = sphi 0, %s65
    %s87 = sphi 0, %s89
    %s90 = sphi 0, %s87
    %s91 = sphi 0, %s90
    %s107 = sphi 0, %s91
  $region4: #{patchcore_forward.12} parent=0 // loop_header_branch
    %12 = sbr.rel (%p10) target = $region8
  $region5: #{patchcore_forward.12} parent=0 // loop_body
    %s14 = ssub.s32 %s9, 1
    %s15 = ssub.s32 %s9, 2
    %s16 = sadd.s32 %s9, 1
    %s18 = sadd.s32 %s17, 1
    %p21 = scmp.eq.s32.totalorder %s9, 1
    %p22 = scmp.ne.s32.totalorder %s17, %s19
    %p23 = scmp.eq.s32.totalorder %s9, 0
    %p24 = por %p22, %p23
    %p25 = scmp.ne.s32.totalorder %s17, %s19
    %p26 = scmp.eq.s32.totalorder %s14, 1
    %p27 = por %p25, %p26
    %p28 = scmp.ne.s32.totalorder %s19, %s20
    %p29 = scmp.eq.s32.totalorder %s14, 0
    %p30 = por %p28, %p29
    %p31 = scmp.ne.s32.totalorder %s19, %s20
    %p32 = scmp.eq.s32.totalorder %s15, 1
    %p33 = por %p31, %p32
    %p35 = scmp.ne.s32.totalorder %s20, %s34
    %p36 = scmp.eq.s32.totalorder %s15, 0
    %p37 = por %p35, %p36
    %s39 = sadd.s32 %s38, 1
    %p42 = scmp.eq.s32.totalorder %s9, 1
    %p43 = scmp.ne.s32.totalorder %s38, %s40
    %p44 = scmp.eq.s32.totalorder %s9, 0
    %p45 = por %p43, %p44
    %p46 = scmp.ne.s32.totalorder %s38, %s40
    %p47 = scmp.eq.s32.totalorder %s14, 1
    %p48 = por %p46, %p47
    %p49 = scmp.ne.s32.totalorder %s40, %s41
    %p50 = scmp.eq.s32.totalorder %s14, 0
    %p51 = por %p49, %p50
    %p52 = scmp.ne.s32.totalorder %s40, %s41
    %p53 = scmp.eq.s32.totalorder %s15, 1
    %p54 = por %p52, %p53
    %p56 = scmp.ne.s32.totalorder %s41, %s55
    %p57 = scmp.eq.s32.totalorder %s15, 0
    %p58 = por %p56, %p57
    %s59 = ssub.s32 %s9, %s16
    %p60 = scmp.eq.s32.totalorder %s59, 0
    %s62 = sadd.s32 %s61, 1
    %s63 = scalar_select %p60, %s61, %s62
    %p66 = pneg %p60
    %p67 = scmp.eq.s32.totalorder %s9, 1
    %p68 = por %p66, %p67
    %p69 = scmp.ne.s32.totalorder %s61, %s64
    %p70 = scmp.eq.s32.totalorder %s9, 0
    %p71 = por %p69, %p70
    %p72 = scmp.ne.s32.totalorder %s61, %s64
    %p73 = scmp.eq.s32.totalorder %s14, 1
    %p74 = por %p72, %p73
    %p75 = scmp.ne.s32.totalorder %s64, %s65
    %p76 = scmp.eq.s32.totalorder %s14, 0
    %p77 = por %p75, %p76
    %p78 = scmp.ne.s32.totalorder %s64, %s65
    %p79 = scmp.eq.s32.totalorder %s15, 1
    %p80 = por %p78, %p79
    %p82 = scmp.ne.s32.totalorder %s65, %s81
    %p83 = scmp.eq.s32.totalorder %s15, 0
    %p84 = por %p82, %p83
    %s85 = ssub.s32 %s9, %s16
    %p86 = scmp.eq.s32.totalorder %s85, 0
    %s88 = sadd.s32 %s87, 1
    %s89 = scalar_select %p86, %s87, %s88
    %p92 = pneg %p86
    %p93 = scmp.eq.s32.totalorder %s9, 1
    %p94 = por %p92, %p93
    %p95 = scmp.ne.s32.totalorder %s87, %s90
    %p96 = scmp.eq.s32.totalorder %s9, 0
    %p97 = por %p95, %p96
    %p98 = scmp.ne.s32.totalorder %s87, %s90
    %p99 = scmp.eq.s32.totalorder %s14, 1
    %p100 = por %p98, %p99
    %p101 = scmp.ne.s32.totalorder %s90, %s91
    %p102 = scmp.eq.s32.totalorder %s14, 0
    %p103 = por %p101, %p102
    %p104 = scmp.ne.s32.totalorder %s90, %s91
    %p105 = scmp.eq.s32.totalorder %s15, 1
    %p106 = por %p104, %p105
    %p108 = scmp.ne.s32.totalorder %s91, %s107
    %p109 = scmp.eq.s32.totalorder %s15, 0
    %p110 = por %p108, %p109
    %p111 = scmp.le.s32.totalorder 1, %s9
    %p112 = scmp.lt.s32.totalorder %s9, 3
    %p113 = pnand %p111, %p112
    %p114 = pneg %p113
    // Predicated region
    $region9: #{patchcore_forward.12} parent=5 // pred_check
      _
    $region10: #{patchcore_forward.12} parent=5 // pred_check_branch
      %116 = sbr.rel (%p113) target = $region12
    $region11: #{patchcore_forward.12} parent=5 // pred_region
      %s117 = ssub.s32 %s9, 1
      // Predicated region
      $region13: #{patchcore_forward.12} parent=11 // pred_check
        %p118 = pneg %p30
      $region14: #{patchcore_forward.12} parent=11 // pred_check_branch
        %120 = sbr.rel (%p118) target = $region16
      $region15: #{patchcore_forward.12} parent=11 // pred_region
        _
      $region16: #{patchcore_forward.12} parent=11 // pred_fallthru
        _
      // Predicated region
      $region17: #{patchcore_forward.12} parent=11 // pred_check
        %p121 = pneg %p51
      $region18: #{patchcore_forward.12} parent=11 // pred_check_branch
        %123 = sbr.rel (%p121) target = $region20
      $region19: #{patchcore_forward.12} parent=11 // pred_region
        _
      $region20: #{patchcore_forward.12} parent=11 // pred_fallthru
        _
    $region12: #{patchcore_forward.12} parent=5 // pred_fallthru
      _
    %p124 = scmp.lt.s32.totalorder %s9, 2
    // Predicated region
    $region21: #{patchcore_forward.12} parent=5 // pred_check
      %p125 = pneg %p124
    $region22: #{patchcore_forward.12} parent=5 // pred_check_branch
      %127 = sbr.rel (%p125) target = $region24
    $region23: #{patchcore_forward.12} parent=5 // pred_region
      // Predicated region
      $region25: #{patchcore_forward.12} parent=23 // pred_check
        %p128 = pneg %p71
      $region26: #{patchcore_forward.12} parent=23 // pred_check_branch
        %130 = sbr.rel (%p128) target = $region28
      $region27: #{patchcore_forward.12} parent=23 // pred_region
        %p131 = scmp.lt.s32.totalorder %s9, 1
        %s132 = scalar_select %p131, %s9, 1
        %s133 = smul.addr %s132, 8
        %s134 = smul.addr %s133, 8
        %s135 = scalar_lea.vmem %s2, %s134
      $region28: #{patchcore_forward.12} parent=23 // pred_fallthru
        _
    $region24: #{patchcore_forward.12} parent=5 // pred_fallthru
      _
    %p136 = scmp.le.s32.totalorder 1, %s9
    %p137 = scmp.lt.s32.totalorder %s9, 3
    %p138 = pnand %p136, %p137
    %p139 = pneg %p138
    // Predicated region
    $region29: #{patchcore_forward.12} parent=5 // pred_check
      _
    $region30: #{patchcore_forward.12} parent=5 // pred_check_branch
      %141 = sbr.rel (%p138) target = $region32
    $region31: #{patchcore_forward.12} parent=5 // pred_region
      %s142 = ssub.s32 %s9, 1
      %p143 = pneg %p30
      %p144 = pneg %p27
      %p145 = pneg %p51
      %p146 = pneg %p48
      %p147 = scmp.lt.s32.totalorder %s14, 1
      %s148 = scalar_select %p147, %s14, 1
      %s149 = smul.addr %s148, 8
      %s150 = smul.addr %s149, 8
      %s151 = scalar_lea.vmem %s2, %s150
      %p152 = pneg %p77
      %p153 = pneg %p74
      %p154 = pneg %p103
      %p155 = pneg %p100
      %p156 = scmp.lt.s32.totalorder %s14, 1
      %s157 = scalar_select %p156, %s14, 1
      %s158 = smul.addr %s157, 32
      %s159 = smul.addr %s158, 8
      %s160 = scalar_lea.vmem %s3, %s159
      %p161 = scmp.lt.s32.totalorder %s14, 1
      %s162 = scalar_select %p161, %s14, 1
      %s163 = smul.addr %s162, 8
      %s164 = smul.addr %s163, 8
      %s165 = scalar_lea.vmem %s2, %s164
      %p166 = scmp.lt.s32.totalorder %s14, 1
      %s167 = scalar_select %p166, %s14, 1
      %s168 = smul.addr %s167, 32
      %s169 = smul.addr %s168, 8
      %s170 = scalar_lea.vmem %s3, %s169
      %v171 = vld [vmem:[%s165] sm:$0xff]
      %v172 = vld [vmem:[%s165 + $0x8] sm:$0xff]
      %v173 = vld [vmem:[%s165 + $0x10] sm:$0xff]
      %v174 = vld [vmem:[%s165 + $0x18] sm:$0xff]
      %v175 = vld [vmem:[%s165 + $0x20] sm:$0xff]
      %v176 = vld [vmem:[%s165 + $0x28] sm:$0xff]
      %v177 = vld [vmem:[%s165 + $0x30] sm:$0xff]
      %v178 = vld [vmem:[%s165 + $0x38] sm:$0xff]
      %v179 = vld [vmem:[%s0] sm:$0xff]
      %v180 = vld [vmem:[%s0 + $0x8] sm:$0xff]
      %v181 = vcombine.low %v171, %v173
      %v182 = vcombine.high %v171, %v173
      %v184 = vunpack.c.l.s4 1983009808
      %v185 = vunpack.c.0.s8 %v184
      %v186 = vlaneseq
      %v187 = vshrl.u32 %v186, 7
      %v188 = vsub.s32 %v185, %v187
      %v189 = vrot.slane %v181, %v188
      %v191 = vunpack.c.l.s4 1983009808
      %v192 = vunpack.c.0.s8 %v191
      %v193 = vlaneseq
      %v194 = vshrl.u32 %v193, 7
      %v195 = vsub.s32 %v192, %v194
      %v196 = vrot.slane %v182, %v195
      %v197 = vcombine.low %v172, %v174
      %v198 = vcombine.high %v172, %v174
      %v200 = vunpack.c.l.s4 1983009808
      %v201 = vunpack.c.0.s8 %v200
      %v202 = vlaneseq
      %v203 = vshrl.u32 %v202, 7
      %v204 = vsub.s32 %v201, %v203
      %v205 = vrot.slane %v197, %v204
      %v207 = vunpack.c.l.s4 1983009808
      %v208 = vunpack.c.0.s8 %v207
      %v209 = vlaneseq
      %v210 = vshrl.u32 %v209, 7
      %v211 = vsub.s32 %v208, %v210
      %v212 = vrot.slane %v198, %v211
      %v213 = vcombine.low %v175, %v177
      %v214 = vcombine.high %v175, %v177
      %v216 = vunpack.c.l.s4 1983009808
      %v217 = vunpack.c.0.s8 %v216
      %v218 = vlaneseq
      %v219 = vshrl.u32 %v218, 7
      %v220 = vsub.s32 %v217, %v219
      %v221 = vrot.slane %v213, %v220
      %v223 = vunpack.c.l.s4 1983009808
      %v224 = vunpack.c.0.s8 %v223
      %v225 = vlaneseq
      %v226 = vshrl.u32 %v225, 7
      %v227 = vsub.s32 %v224, %v226
      %v228 = vrot.slane %v214, %v227
      %v229 = vcombine.low %v176, %v178
      %v230 = vcombine.high %v176, %v178
      %v232 = vunpack.c.l.s4 1983009808
      %v233 = vunpack.c.0.s8 %v232
      %v234 = vlaneseq
      %v235 = vshrl.u32 %v234, 7
      %v236 = vsub.s32 %v233, %v235
      %v237 = vrot.slane %v229, %v236
      %v239 = vunpack.c.l.s4 1983009808
      %v240 = vunpack.c.0.s8 %v239
      %v241 = vlaneseq
      %v242 = vshrl.u32 %v241, 7
      %v243 = vsub.s32 %v240, %v242
      %v244 = vrot.slane %v230, %v243
      %v245 = vcombine.low %v189, %v205
      %v246 = vcombine.high %v189, %v205
      %v248 = vunpack.c.l.s4 1934713408
      %v249 = vunpack.c.0.s8 %v248
      %v250 = vlaneseq
      %v251 = vshrl.u32 %v250, 7
      %v252 = vsub.s32 %v249, %v251
      %v253 = vrot.slane %v245, %v252
      %v255 = vunpack.c.l.s4 1934713408
      %v256 = vunpack.c.0.s8 %v255
      %v257 = vlaneseq
      %v258 = vshrl.u32 %v257, 7
      %v259 = vsub.s32 %v256, %v258
      %v260 = vrot.slane %v246, %v259
      %v261 = vcombine.low %v196, %v212
      %v262 = vcombine.high %v196, %v212
      %v264 = vunpack.c.l.s4 1934713408
      %v265 = vunpack.c.0.s8 %v264
      %v266 = vlaneseq
      %v267 = vshrl.u32 %v266, 7
      %v268 = vsub.s32 %v265, %v267
      %v269 = vrot.slane %v261, %v268
      %v271 = vunpack.c.l.s4 1934713408
      %v272 = vunpack.c.0.s8 %v271
      %v273 = vlaneseq
      %v274 = vshrl.u32 %v273, 7
      %v275 = vsub.s32 %v272, %v274
      %v276 = vrot.slane %v262, %v275
      %v277 = vcombine.low %v221, %v237
      %v278 = vcombine.high %v221, %v237
      %v280 = vunpack.c.l.s4 1934713408
      %v281 = vunpack.c.0.s8 %v280
      %v282 = vlaneseq
      %v283 = vshrl.u32 %v282, 7
      %v284 = vsub.s32 %v281, %v283
      %v285 = vrot.slane %v277, %v284
      %v287 = vunpack.c.l.s4 1934713408
      %v288 = vunpack.c.0.s8 %v287
      %v289 = vlaneseq
      %v290 = vshrl.u32 %v289, 7
      %v291 = vsub.s32 %v288, %v290
      %v292 = vrot.slane %v278, %v291
      %v293 = vcombine.low %v228, %v244
      %v294 = vcombine.high %v228, %v244
      %v296 = vunpack.c.l.s4 1934713408
      %v297 = vunpack.c.0.s8 %v296
      %v298 = vlaneseq
      %v299 = vshrl.u32 %v298, 7
      %v300 = vsub.s32 %v297, %v299
      %v301 = vrot.slane %v293, %v300
      %v303 = vunpack.c.l.s4 1934713408
      %v304 = vunpack.c.0.s8 %v303
      %v305 = vlaneseq
      %v306 = vshrl.u32 %v305, 7
      %v307 = vsub.s32 %v304, %v306
      %v308 = vrot.slane %v294, %v307
      %v309 = vcombine.low %v253, %v285
      %v310 = vcombine.high %v253, %v285
      %v311 = vcombine.low %v260, %v292
      %v312 = vcombine.high %v260, %v292
      %v313 = vcombine.low %v269, %v301
      %v314 = vcombine.high %v269, %v301
      %v315 = vcombine.low %v276, %v308
      %v316 = vcombine.high %v276, %v308
      %318 = vrot.lane.b32.xlu0 %v310, 32
      %v319 = vpop.permute.xlu0 %318
      %322 = vrot.lane.b32.xlu0 %v311, 64
      %v323 = vpop.permute.xlu0 %322
      %326 = vrot.lane.b32.xlu0 %v312, 96
      %v327 = vpop.permute.xlu0 %326
      %330 = vrot.lane.b32.xlu0 %v314, 32
      %v331 = vpop.permute.xlu0 %330
      %334 = vrot.lane.b32.xlu0 %v315, 64
      %v335 = vpop.permute.xlu0 %334
      %338 = vrot.lane.b32.xlu0 %v316, 96
      %v339 = vpop.permute.xlu0 %338
      %vm341 = vcmask 261120
      %v342 = vsel %vm341, %v309, %v319
      %vm343 = vcmask 523264
      %v344 = vsel %vm343, %v342, %v323
      %vm345 = vcmask 785408
      %v346 = vsel %vm345, %v344, %v327
      %v347 = vsel %vm341, %v313, %v331
      %v348 = vsel %vm343, %v347, %v335
      %v349 = vsel %vm345, %v348, %v339
      %vm350 = vcmask 64512
      %v352 = vsel %vm350, %v179, 0
      %v355 = vsel %vm350, %v180, 0
      %357 = vmatprep.subr.mxu0 %v349
      %358 = vmatpush1.msra.mxu0 %v346
      %359 = vmatprep.subr.mxu0 0.0
      %360 = vmatpush1.msra.mxu0 0.0
      %361 = vmatprep.subr.mxu0 0.0
      %362 = vmatpush1.msra.mxu0 0.0
      %363 = vmatprep.subr.mxu0 0.0
      %364 = vmatpush1.msra.mxu0 0.0
      %365 = vmatprep.subr.mxu0 0.0
      %366 = vmatpush1.msra.mxu0 0.0
      %367 = vmatprep.subr.mxu0 0.0
      %368 = vmatpush1.msra.mxu0 0.0
      %369 = vmatprep.subr.mxu0 0.0
      %370 = vmatpush1.msra.mxu0 0.0
      %371 = vmatprep.subr.mxu0 0.0
      %372 = vmatpush1.msra.mxu0 0.0
      %373 = vmatprep.subr.mxu0 0.0
      %374 = vmatpush1.msra.mxu0 0.0
      %375 = vmatprep.subr.mxu0 0.0
      %376 = vmatpush1.msra.mxu0 0.0
      %377 = vmatprep.subr.mxu0 0.0
      %378 = vmatpush1.msra.mxu0 0.0
      %379 = vmatprep.subr.mxu0 0.0
      %380 = vmatpush1.msra.mxu0 0.0
      %381 = vmatprep.subr.mxu0 0.0
      %382 = vmatpush1.msra.mxu0 0.0
      %383 = vmatprep.subr.mxu0 0.0
      %384 = vmatpush1.msra.mxu0 0.0
      %385 = vmatprep.subr.mxu0 0.0
      %386 = vmatpush1.msra.mxu0 0.0
      %387 = vmatprep.subr.mxu0 0.0
      %388 = vmatpush1.msra.mxu0 0.0
      %389 = vmatprep.subr.mxu0 0.0
      %390 = vmatpush1.msra.mxu0 0.0
      %391 = vmatprep.subr.mxu0 0.0
      %392 = vmatpush1.msra.mxu0 0.0
      %393 = vmatprep.subr.mxu0 0.0
      %394 = vmatpush1.msra.mxu0 0.0
      %395 = vmatprep.subr.mxu0 0.0
      %396 = vmatpush1.msra.mxu0 0.0
      %397 = vmatprep.subr.mxu0 0.0
      %398 = vmatpush1.msra.mxu0 0.0
      %399 = vmatprep.subr.mxu0 0.0
      %400 = vmatpush1.msra.mxu0 0.0
      %401 = vmatprep.subr.mxu0 0.0
      %402 = vmatpush1.msra.mxu0 0.0
      %403 = vmatprep.subr.mxu0 0.0
      %404 = vmatpush1.msra.mxu0 0.0
      %405 = vmatprep.subr.mxu0 0.0
      %406 = vmatpush1.msra.mxu0 0.0
      %407 = vmatprep.subr.mxu0 0.0
      %408 = vmatpush1.msra.mxu0 0.0
      %409 = vmatprep.subr.mxu0 0.0
      %410 = vmatpush1.msra.mxu0 0.0
      %411 = vmatprep.subr.mxu0 0.0
      %412 = vmatpush1.msra.mxu0 0.0
      %413 = vmatprep.subr.mxu0 0.0
      %414 = vmatpush1.msra.mxu0 0.0
      %415 = vmatprep.subr.mxu0 0.0
      %416 = vmatpush1.msra.mxu0 0.0
      %417 = vmatprep.subr.mxu0 0.0
      %418 = vmatpush1.msra.mxu0 0.0
      %419 = vmatprep.subr.mxu0 0.0
      %420 = vmatpush1.msra.mxu0 0.0
      %421 = vmatprep.mubr.f32.mxu0 0.0
      %422 = vmatmul.mubr.f32.gmra.mrb[0].mxu0 %v352
      %v423 = vpop.f32.mrb[0].mxu0
      %v424 = vadd.f32 0.0, %v423
      %v425 = vpop.f32.mrb[0].mxu0
      %v426 = vadd.f32 0.0, %v425
      %427 = vmatprep.mubr.f32.mxu0 0.0
      %428 = vmatmul.mubr.f32.gmra.mrb[0].mxu0 %v355
      %v429 = vpop.f32.mrb[0].mxu0
      %v430 = vadd.f32 0.0, %v429
      %v431 = vpop.f32.mrb[0].mxu0
      %v432 = vadd.f32 0.0, %v431
      %433 = vdwg.mxu0
      %436 = vrot.lane.b32.xlu0 %v424, 96
      %v437 = vpop.permute.xlu0 %436
      %438 = vrot.lane.b32.xlu0 %v430, 96
      %v439 = vpop.permute.xlu0 %438
      %442 = vrot.lane.b32.xlu0 %v424, 64
      %v443 = vpop.permute.xlu0 %442
      %444 = vrot.lane.b32.xlu0 %v430, 64
      %v445 = vpop.permute.xlu0 %444
      %448 = vrot.lane.b32.xlu0 %v424, 32
      %v449 = vpop.permute.xlu0 %448
      %450 = vrot.lane.b32.xlu0 %v430, 32
      %v451 = vpop.permute.xlu0 %450
      %456 = vrot.lane.b32.xlu0 %v426, 96
      %v457 = vpop.permute.xlu0 %456
      %458 = vrot.lane.b32.xlu0 %v432, 96
      %v459 = vpop.permute.xlu0 %458
      %462 = vrot.lane.b32.xlu0 %v426, 64
      %v463 = vpop.permute.xlu0 %462
      %464 = vrot.lane.b32.xlu0 %v432, 64
      %v465 = vpop.permute.xlu0 %464
      %468 = vrot.lane.b32.xlu0 %v426, 32
      %v469 = vpop.permute.xlu0 %468
      %470 = vrot.lane.b32.xlu0 %v432, 32
      %v471 = vpop.permute.xlu0 %470
      %v474 = vcombine.low %v424, %v443
      %v475 = vcombine.high %v424, %v443
      %v477 = vunpack.c.l.s4 1983009808
      %v478 = vunpack.c.0.s8 %v477
      %v479 = vlaneseq
      %v480 = vshrl.u32 %v479, 7
      %v481 = vsub.s32 %v478, %v480
      %v482 = vrot.slane %v474, %v481
      %v484 = vunpack.c.l.s4 1983009808
      %v485 = vunpack.c.0.s8 %v484
      %v486 = vlaneseq
      %v487 = vshrl.u32 %v486, 7
      %v488 = vsub.s32 %v485, %v487
      %v489 = vrot.slane %v475, %v488
      %v490 = vcombine.low %v437, %v449
      %v491 = vcombine.high %v437, %v449
      %v493 = vunpack.c.l.s4 1983009808
      %v494 = vunpack.c.0.s8 %v493
      %v495 = vlaneseq
      %v496 = vshrl.u32 %v495, 7
      %v497 = vsub.s32 %v494, %v496
      %v498 = vrot.slane %v490, %v497
      %v500 = vunpack.c.l.s4 1983009808
      %v501 = vunpack.c.0.s8 %v500
      %v502 = vlaneseq
      %v503 = vshrl.u32 %v502, 7
      %v504 = vsub.s32 %v501, %v503
      %v505 = vrot.slane %v491, %v504
      %v506 = vcombine.low %v426, %v463
      %v507 = vcombine.high %v426, %v463
      %v509 = vunpack.c.l.s4 1983009808
      %v510 = vunpack.c.0.s8 %v509
      %v511 = vlaneseq
      %v512 = vshrl.u32 %v511, 7
      %v513 = vsub.s32 %v510, %v512
      %v514 = vrot.slane %v506, %v513
      %v516 = vunpack.c.l.s4 1983009808
      %v517 = vunpack.c.0.s8 %v516
      %v518 = vlaneseq
      %v519 = vshrl.u32 %v518, 7
      %v520 = vsub.s32 %v517, %v519
      %v521 = vrot.slane %v507, %v520
      %v522 = vcombine.low %v457, %v469
      %v523 = vcombine.high %v457, %v469
      %v525 = vunpack.c.l.s4 1983009808
      %v526 = vunpack.c.0.s8 %v525
      %v527 = vlaneseq
      %v528 = vshrl.u32 %v527, 7
      %v529 = vsub.s32 %v526, %v528
      %v530 = vrot.slane %v522, %v529
      %v532 = vunpack.c.l.s4 1983009808
      %v533 = vunpack.c.0.s8 %v532
      %v534 = vlaneseq
      %v535 = vshrl.u32 %v534, 7
      %v536 = vsub.s32 %v533, %v535
      %v537 = vrot.slane %v523, %v536
      %v538 = vcombine.low %v482, %v498
      %v539 = vcombine.high %v482, %v498
      %v541 = vunpack.c.l.s4 1934713408
      %v542 = vunpack.c.0.s8 %v541
      %v543 = vlaneseq
      %v544 = vshrl.u32 %v543, 7
      %v545 = vsub.s32 %v542, %v544
      %v546 = vrot.slane %v538, %v545
      %v548 = vunpack.c.l.s4 1934713408
      %v549 = vunpack.c.0.s8 %v548
      %v550 = vlaneseq
      %v551 = vshrl.u32 %v550, 7
      %v552 = vsub.s32 %v549, %v551
      %v553 = vrot.slane %v539, %v552
      %v554 = vcombine.low %v489, %v505
      %v555 = vcombine.high %v489, %v505
      %v557 = vunpack.c.l.s4 1934713408
      %v558 = vunpack.c.0.s8 %v557
      %v559 = vlaneseq
      %v560 = vshrl.u32 %v559, 7
      %v561 = vsub.s32 %v558, %v560
      %v562 = vrot.slane %v554, %v561
      %v564 = vunpack.c.l.s4 1934713408
      %v565 = vunpack.c.0.s8 %v564
      %v566 = vlaneseq
      %v567 = vshrl.u32 %v566, 7
      %v568 = vsub.s32 %v565, %v567
      %v569 = vrot.slane %v555, %v568
      %v570 = vcombine.low %v514, %v530
      %v571 = vcombine.high %v514, %v530
      %v573 = vunpack.c.l.s4 1934713408
      %v574 = vunpack.c.0.s8 %v573
      %v575 = vlaneseq
      %v576 = vshrl.u32 %v575, 7
      %v577 = vsub.s32 %v574, %v576
      %v578 = vrot.slane %v570, %v577
      %v580 = vunpack.c.l.s4 1934713408
      %v581 = vunpack.c.0.s8 %v580
      %v582 = vlaneseq
      %v583 = vshrl.u32 %v582, 7
      %v584 = vsub.s32 %v581, %v583
      %v585 = vrot.slane %v571, %v584
      %v586 = vcombine.low %v521, %v537
      %v587 = vcombine.high %v521, %v537
      %v589 = vunpack.c.l.s4 1934713408
      %v590 = vunpack.c.0.s8 %v589
      %v591 = vlaneseq
      %v592 = vshrl.u32 %v591, 7
      %v593 = vsub.s32 %v590, %v592
      %v594 = vrot.slane %v586, %v593
      %v596 = vunpack.c.l.s4 1934713408
      %v597 = vunpack.c.0.s8 %v596
      %v598 = vlaneseq
      %v599 = vshrl.u32 %v598, 7
      %v600 = vsub.s32 %v597, %v599
      %v601 = vrot.slane %v587, %v600
      %v602 = vcombine.low %v546, %v578
      %v603 = vcombine.high %v546, %v578
      %v604 = vcombine.low %v553, %v585
      %v605 = vcombine.high %v553, %v585
      %v606 = vcombine.low %v562, %v594
      %v607 = vcombine.high %v562, %v594
      %v608 = vcombine.low %v569, %v601
      %v609 = vcombine.high %v569, %v601
      %v610 = vcombine.low %v430, %v445
      %v611 = vcombine.high %v430, %v445
      %v613 = vunpack.c.l.s4 1983009808
      %v614 = vunpack.c.0.s8 %v613
      %v615 = vlaneseq
      %v616 = vshrl.u32 %v615, 7
      %v617 = vsub.s32 %v614, %v616
      %v618 = vrot.slane %v610, %v617
      %v620 = vunpack.c.l.s4 1983009808
      %v621 = vunpack.c.0.s8 %v620
      %v622 = vlaneseq
      %v623 = vshrl.u32 %v622, 7
      %v624 = vsub.s32 %v621, %v623
      %v625 = vrot.slane %v611, %v624
      %v626 = vcombine.low %v439, %v451
      %v627 = vcombine.high %v439, %v451
      %v629 = vunpack.c.l.s4 1983009808
      %v630 = vunpack.c.0.s8 %v629
      %v631 = vlaneseq
      %v632 = vshrl.u32 %v631, 7
      %v633 = vsub.s32 %v630, %v632
      %v634 = vrot.slane %v626, %v633
      %v636 = vunpack.c.l.s4 1983009808
      %v637 = vunpack.c.0.s8 %v636
      %v638 = vlaneseq
      %v639 = vshrl.u32 %v638, 7
      %v640 = vsub.s32 %v637, %v639
      %v641 = vrot.slane %v627, %v640
      %v642 = vcombine.low %v432, %v465
      %v643 = vcombine.high %v432, %v465
      %v645 = vunpack.c.l.s4 1983009808
      %v646 = vunpack.c.0.s8 %v645
      %v647 = vlaneseq
      %v648 = vshrl.u32 %v647, 7
      %v649 = vsub.s32 %v646, %v648
      %v650 = vrot.slane %v642, %v649
      %v652 = vunpack.c.l.s4 1983009808
      %v653 = vunpack.c.0.s8 %v652
      %v654 = vlaneseq
      %v655 = vshrl.u32 %v654, 7
      %v656 = vsub.s32 %v653, %v655
      %v657 = vrot.slane %v643, %v656
      %v658 = vcombine.low %v459, %v471
      %v659 = vcombine.high %v459, %v471
      %v661 = vunpack.c.l.s4 1983009808
      %v662 = vunpack.c.0.s8 %v661
      %v663 = vlaneseq
      %v664 = vshrl.u32 %v663, 7
      %v665 = vsub.s32 %v662, %v664
      %v666 = vrot.slane %v658, %v665
      %v668 = vunpack.c.l.s4 1983009808
      %v669 = vunpack.c.0.s8 %v668
      %v670 = vlaneseq
      %v671 = vshrl.u32 %v670, 7
      %v672 = vsub.s32 %v669, %v671
      %v673 = vrot.slane %v659, %v672
      %v674 = vcombine.low %v618, %v634
      %v675 = vcombine.high %v618, %v634
      %v677 = vunpack.c.l.s4 1934713408
      %v678 = vunpack.c.0.s8 %v677
      %v679 = vlaneseq
      %v680 = vshrl.u32 %v679, 7
      %v681 = vsub.s32 %v678, %v680
      %v682 = vrot.slane %v674, %v681
      %v684 = vunpack.c.l.s4 1934713408
      %v685 = vunpack.c.0.s8 %v684
      %v686 = vlaneseq
      %v687 = vshrl.u32 %v686, 7
      %v688 = vsub.s32 %v685, %v687
      %v689 = vrot.slane %v675, %v688
      %v690 = vcombine.low %v625, %v641
      %v691 = vcombine.high %v625, %v641
      %v693 = vunpack.c.l.s4 1934713408
      %v694 = vunpack.c.0.s8 %v693
      %v695 = vlaneseq
      %v696 = vshrl.u32 %v695, 7
      %v697 = vsub.s32 %v694, %v696
      %v698 = vrot.slane %v690, %v697
      %v700 = vunpack.c.l.s4 1934713408
      %v701 = vunpack.c.0.s8 %v700
      %v702 = vlaneseq
      %v703 = vshrl.u32 %v702, 7
      %v704 = vsub.s32 %v701, %v703
      %v705 = vrot.slane %v691, %v704
      %v706 = vcombine.low %v650, %v666
      %v707 = vcombine.high %v650, %v666
      %v709 = vunpack.c.l.s4 1934713408
      %v710 = vunpack.c.0.s8 %v709
      %v711 = vlaneseq
      %v712 = vshrl.u32 %v711, 7
      %v713 = vsub.s32 %v710, %v712
      %v714 = vrot.slane %v706, %v713
      %v716 = vunpack.c.l.s4 1934713408
      %v717 = vunpack.c.0.s8 %v716
      %v718 = vlaneseq
      %v719 = vshrl.u32 %v718, 7
      %v720 = vsub.s32 %v717, %v719
      %v721 = vrot.slane %v707, %v720
      %v722 = vcombine.low %v657, %v673
      %v723 = vcombine.high %v657, %v673
      %v725 = vunpack.c.l.s4 1934713408
      %v726 = vunpack.c.0.s8 %v725
      %v727 = vlaneseq
      %v728 = vshrl.u32 %v727, 7
      %v729 = vsub.s32 %v726, %v728
      %v730 = vrot.slane %v722, %v729
      %v732 = vunpack.c.l.s4 1934713408
      %v733 = vunpack.c.0.s8 %v732
      %v734 = vlaneseq
      %v735 = vshrl.u32 %v734, 7
      %v736 = vsub.s32 %v733, %v735
      %v737 = vrot.slane %v723, %v736
      %v738 = vcombine.low %v682, %v714
      %v739 = vcombine.high %v682, %v714
      %v740 = vcombine.low %v689, %v721
      %v741 = vcombine.high %v689, %v721
      %v742 = vcombine.low %v698, %v730
      %v743 = vcombine.high %v698, %v730
      %v744 = vcombine.low %v705, %v737
      %v745 = vcombine.high %v705, %v737
      %v746 = vld [vmem:[%s1] sm:$0xff]
      %v747 = vld [vmem:[%s1 + $0x8] sm:$0xff]
      %v748 = vld [vmem:[%s1 + $0x10] sm:$0xff]
      %v749 = vld [vmem:[%s1 + $0x18] sm:$0xff]
      %v750 = vld [vmem:[%s1 + $0x20] sm:$0xff]
      %v751 = vld [vmem:[%s1 + $0x28] sm:$0xff]
      %v752 = vld [vmem:[%s1 + $0x30] sm:$0xff]
      %v753 = vld [vmem:[%s1 + $0x38] sm:$0xff]
      %v754 = vld [vmem:[%s1 + $0x40] sm:$0xff]
      %v755 = vld [vmem:[%s1 + $0x48] sm:$0xff]
      %v756 = vld [vmem:[%s1 + $0x50] sm:$0xff]
      %v757 = vld [vmem:[%s1 + $0x58] sm:$0xff]
      %v758 = vld [vmem:[%s1 + $0x60] sm:$0xff]
      %v759 = vld [vmem:[%s1 + $0x68] sm:$0xff]
      %v760 = vld [vmem:[%s1 + $0x70] sm:$0xff]
      %v761 = vld [vmem:[%s1 + $0x78] sm:$0xff]
      %v762 = vld [vmem:[%s1 + $0x80] sm:$0xff]
      %v763 = vld [vmem:[%s1 + $0x88] sm:$0xff]
      %v764 = vld [vmem:[%s1 + $0x90] sm:$0xff]
      %v765 = vld [vmem:[%s1 + $0x98] sm:$0xff]
      %v766 = vld [vmem:[%s1 + $0xa0] sm:$0xff]
      %v767 = vld [vmem:[%s1 + $0xa8] sm:$0xff]
      %v768 = vld [vmem:[%s1 + $0xb0] sm:$0xff]
      %v769 = vld [vmem:[%s1 + $0xb8] sm:$0xff]
      %v770 = vld [vmem:[%s1 + $0xc0] sm:$0xff]
      %v771 = vld [vmem:[%s1 + $0xc8] sm:$0xff]
      %v772 = vld [vmem:[%s1 + $0xd0] sm:$0xff]
      %v773 = vld [vmem:[%s1 + $0xd8] sm:$0xff]
      %v774 = vld [vmem:[%s1 + $0xe0] sm:$0xff]
      %v775 = vld [vmem:[%s1 + $0xe8] sm:$0xff]
      %v776 = vld [vmem:[%s1 + $0xf0] sm:$0xff]
      %v777 = vld [vmem:[%s1 + $0xf8] sm:$0xff]
      %v779 = vsel %vm350, %v746, 0
      %v782 = vsel %vm350, %v747, 0
      %784 = vmatprep.subr.mxu0 0.0
      %785 = vmatpush1.msra.mxu0 %v602
      %786 = vmatprep.subr.mxu0 0.0
      %787 = vmatpush1.msra.mxu0 0.0
      %788 = vmatprep.subr.mxu0 0.0
      %789 = vmatpush1.msra.mxu0 0.0
      %790 = vmatprep.subr.mxu0 0.0
      %791 = vmatpush1.msra.mxu0 0.0
      %792 = vmatprep.subr.mxu0 0.0
      %793 = vmatpush1.msra.mxu0 0.0
      %794 = vmatprep.subr.mxu0 0.0
      %795 = vmatpush1.msra.mxu0 0.0
      %796 = vmatprep.subr.mxu0 0.0
      %797 = vmatpush1.msra.mxu0 0.0
      %798 = vmatprep.subr.mxu0 0.0
      %799 = vmatpush1.msra.mxu0 0.0
      %800 = vmatprep.subr.mxu0 0.0
      %801 = vmatpush1.msra.mxu0 0.0
      %802 = vmatprep.subr.mxu0 0.0
      %803 = vmatpush1.msra.mxu0 0.0
      %804 = vmatprep.subr.mxu0 0.0
      %805 = vmatpush1.msra.mxu0 0.0
      %806 = vmatprep.subr.mxu0 0.0
      %807 = vmatpush1.msra.mxu0 0.0
      %808 = vmatprep.subr.mxu0 0.0
      %809 = vmatpush1.msra.mxu0 0.0
      %810 = vmatprep.subr.mxu0 0.0
      %811 = vmatpush1.msra.mxu0 0.0
      %812 = vmatprep.subr.mxu0 0.0
      %813 = vmatpush1.msra.mxu0 0.0
      %814 = vmatprep.subr.mxu0 0.0
      %815 = vmatpush1.msra.mxu0 0.0
      %816 = vmatprep.subr.mxu0 0.0
      %817 = vmatpush1.msra.mxu0 0.0
      %818 = vmatprep.subr.mxu0 0.0
      %819 = vmatpush1.msra.mxu0 0.0
      %820 = vmatprep.subr.mxu0 0.0
      %821 = vmatpush1.msra.mxu0 0.0
      %822 = vmatprep.subr.mxu0 0.0
      %823 = vmatpush1.msra.mxu0 0.0
      %824 = vmatprep.subr.mxu0 0.0
      %825 = vmatpush1.msra.mxu0 0.0
      %826 = vmatprep.subr.mxu0 0.0
      %827 = vmatpush1.msra.mxu0 0.0
      %828 = vmatprep.subr.mxu0 0.0
      %829 = vmatpush1.msra.mxu0 0.0
      %830 = vmatprep.subr.mxu0 0.0
      %831 = vmatpush1.msra.mxu0 0.0
      %832 = vmatprep.subr.mxu0 0.0
      %833 = vmatpush1.msra.mxu0 0.0
      %834 = vmatprep.subr.mxu0 0.0
      %835 = vmatpush1.msra.mxu0 0.0
      %836 = vmatprep.subr.mxu0 0.0
      %837 = vmatpush1.msra.mxu0 0.0
      %838 = vmatprep.subr.mxu0 0.0
      %839 = vmatpush1.msra.mxu0 0.0
      %840 = vmatprep.subr.mxu0 0.0
      %841 = vmatpush1.msra.mxu0 0.0
      %842 = vmatprep.subr.mxu0 0.0
      %843 = vmatpush1.msra.mxu0 0.0
      %844 = vmatprep.subr.mxu0 0.0
      %845 = vmatpush1.msra.mxu0 0.0
      %846 = vmatprep.subr.mxu0 0.0
      %847 = vmatpush1.msra.mxu0 0.0
      %848 = vmatprep.mubr.f32.mxu0 0.0
      %849 = vmatmul.mubr.f32.gmra.mrb[0].mxu0 %v779
      %v850 = vpop.f32.mrb[0].mxu0
      %v851 = vadd.f32 0.0, %v850
      %v852 = vpop.f32.mrb[0].mxu0
      %853 = vmatprep.mubr.f32.mxu0 0.0
      %854 = vmatmul.mubr.f32.gmra.mrb[0].mxu0 %v782
      %v855 = vpop.f32.mrb[0].mxu0
      %v856 = vadd.f32 0.0, %v855
      %v857 = vpop.f32.mrb[0].mxu0
      %858 = vdwg.mxu0
      %v860 = vsel %vm350, %v748, 0
      %v863 = vsel %vm350, %v749, 0
      %865 = vmatprep.subr.mxu0 0.0
      %866 = vmatpush1.msra.mxu0 %v603
      %867 = vmatprep.subr.mxu0 0.0
      %868 = vmatpush1.msra.mxu0 0.0
      %869 = vmatprep.subr.mxu0 0.0
      %870 = vmatpush1.msra.mxu0 0.0
      %871 = vmatprep.subr.mxu0 0.0
      %872 = vmatpush1.msra.mxu0 0.0
      %873 = vmatprep.subr.mxu0 0.0
      %874 = vmatpush1.msra.mxu0 0.0
      %875 = vmatprep.subr.mxu0 0.0
      %876 = vmatpush1.msra.mxu0 0.0
      %877 = vmatprep.subr.mxu0 0.0
      %878 = vmatpush1.msra.mxu0 0.0
      %879 = vmatprep.subr.mxu0 0.0
      %880 = vmatpush1.msra.mxu0 0.0
      %881 = vmatprep.subr.mxu0 0.0
      %882 = vmatpush1.msra.mxu0 0.0
      %883 = vmatprep.subr.mxu0 0.0
      %884 = vmatpush1.msra.mxu0 0.0
      %885 = vmatprep.subr.mxu0 0.0
      %886 = vmatpush1.msra.mxu0 0.0
      %887 = vmatprep.subr.mxu0 0.0
      %888 = vmatpush1.msra.mxu0 0.0
      %889 = vmatprep.subr.mxu0 0.0
      %890 = vmatpush1.msra.mxu0 0.0
      %891 = vmatprep.subr.mxu0 0.0
      %892 = vmatpush1.msra.mxu0 0.0
      %893 = vmatprep.subr.mxu0 0.0
      %894 = vmatpush1.msra.mxu0 0.0
      %895 = vmatprep.subr.mxu0 0.0
      %896 = vmatpush1.msra.mxu0 0.0
      %897 = vmatprep.subr.mxu0 0.0
      %898 = vmatpush1.msra.mxu0 0.0
      %899 = vmatprep.subr.mxu0 0.0
      %900 = vmatpush1.msra.mxu0 0.0
      %901 = vmatprep.subr.mxu0 0.0
      %902 = vmatpush1.msra.mxu0 0.0
      %903 = vmatprep.subr.mxu0 0.0
      %904 = vmatpush1.msra.mxu0 0.0
      %905 = vmatprep.subr.mxu0 0.0
      %906 = vmatpush1.msra.mxu0 0.0
      %907 = vmatprep.subr.mxu0 0.0
      %908 = vmatpush1.msra.mxu0 0.0
      %909 = vmatprep.subr.mxu0 0.0
      %910 = vmatpush1.msra.mxu0 0.0
      %911 = vmatprep.subr.mxu0 0.0
      %912 = vmatpush1.msra.mxu0 0.0
      %913 = vmatprep.subr.mxu0 0.0
      %914 = vmatpush1.msra.mxu0 0.0
      %915 = vmatprep.subr.mxu0 0.0
      %916 = vmatpush1.msra.mxu0 0.0
      %917 = vmatprep.subr.mxu0 0.0
      %918 = vmatpush1.msra.mxu0 0.0
      %919 = vmatprep.subr.mxu0 0.0
      %920 = vmatpush1.msra.mxu0 0.0
      %921 = vmatprep.subr.mxu0 0.0
      %922 = vmatpush1.msra.mxu0 0.0
      %923 = vmatprep.subr.mxu0 0.0
      %924 = vmatpush1.msra.mxu0 0.0
      %925 = vmatprep.subr.mxu0 0.0
      %926 = vmatpush1.msra.mxu0 0.0
      %927 = vmatprep.subr.mxu0 0.0
      %928 = vmatpush1.msra.mxu0 0.0
      %929 = vmatprep.mubr.f32.mxu0 0.0
      %930 = vmatmul.mubr.f32.gmra.mrb[0].mxu0 %v860
      %v931 = vpop.f32.mrb[0].mxu0
      %v932 = vadd.f32 0.0, %v931
      %v933 = vpop.f32.mrb[0].mxu0
      %934 = vmatprep.mubr.f32.mxu0 0.0
      %935 = vmatmul.mubr.f32.gmra.mrb[0].mxu0 %v863
      %v936 = vpop.f32.mrb[0].mxu0
      %v937 = vadd.f32 0.0, %v936
      %v938 = vpop.f32.mrb[0].mxu0
      %939 = vdwg.mxu0
      %v941 = vsel %vm350, %v750, 0
      %v944 = vsel %vm350, %v751, 0
      %946 = vmatprep.subr.mxu0 0.0
      %947 = vmatpush1.msra.mxu0 %v604
      %948 = vmatprep.subr.mxu0 0.0
      %949 = vmatpush1.msra.mxu0 0.0
      %950 = vmatprep.subr.mxu0 0.0
      %951 = vmatpush1.msra.mxu0 0.0
      %952 = vmatprep.subr.mxu0 0.0
      %953 = vmatpush1.msra.mxu0 0.0
      %954 = vmatprep.subr.mxu0 0.0
      %955 = vmatpush1.msra.mxu0 0.0
      %956 = vmatprep.subr.mxu0 0.0
      %957 = vmatpush1.msra.mxu0 0.0
      %958 = vmatprep.subr.mxu0 0.0
      %959 = vmatpush1.msra.mxu0 0.0
      %960 = vmatprep.subr.mxu0 0.0
      %961 = vmatpush1.msra.mxu0 0.0
      %962 = vmatprep.subr.mxu0 0.0
      %963 = vmatpush1.msra.mxu0 0.0
      %964 = vmatprep.subr.mxu0 0.0
      %965 = vmatpush1.msra.mxu0 0.0
      %966 = vmatprep.subr.mxu0 0.0
      %967 = vmatpush1.msra.mxu0 0.0
      %968 = vmatprep.subr.mxu0 0.0
      %969 = vmatpush1.msra.mxu0 0.0
      %970 = vmatprep.subr.mxu0 0.0
      %971 = vmatpush1.msra.mxu0 0.0
      %972 = vmatprep.subr.mxu0 0.0
      %973 = vmatpush1.msra.mxu0 0.0
      %974 = vmatprep.subr.mxu0 0.0
      %975 = vmatpush1.msra.mxu0 0.0
      %976 = vmatprep.subr.mxu0 0.0
      %977 = vmatpush1.msra.mxu0 0.0
      %978 = vmatprep.subr.mxu0 0.0
      %979 = vmatpush1.msra.mxu0 0.0
      %980 = vmatprep.subr.mxu0 0.0
      %981 = vmatpush1.msra.mxu0 0.0
      %982 = vmatprep.subr.mxu0 0.0
      %983 = vmatpush1.msra.mxu0 0.0
      %984 = vmatprep.subr.mxu0 0.0
      %985 = vmatpush1.msra.mxu0 0.0
      %986 = vmatprep.subr.mxu0 0.0
      %987 = vmatpush1.msra.mxu0 0.0
      %988 = vmatprep.subr.mxu0 0.0
      %989 = vmatpush1.msra.mxu0 0.0
      %990 = vmatprep.subr.mxu0 0.0
      %991 = vmatpush1.msra.mxu0 0.0
      %992 = vmatprep.subr.mxu0 0.0
      %993 = vmatpush1.msra.mxu0 0.0
      %994 = vmatprep.subr.mxu0 0.0
      %995 = vmatpush1.msra.mxu0 0.0
      %996 = vmatprep.subr.mxu0 0.0
      %997 = vmatpush1.msra.mxu0 0.0
      %998 = vmatprep.subr.mxu0 0.0
      %999 = vmatpush1.msra.mxu0 0.0
      %1000 = vmatprep.subr.mxu0 0.0
      %1001 = vmatpush1.msra.mxu0 0.0
      %1002 = vmatprep.subr.mxu0 0.0
      %1003 = vmatpush1.msra.mxu0 0.0
      %1004 = vmatprep.subr.mxu0 0.0
      %1005 = vmatpush1.msra.mxu0 0.0
      %1006 = vmatprep.subr.mxu0 0.0
      %1007 = vmatpush1.msra.mxu0 0.0
      %1008 = vmatprep.subr.mxu0 0.0
      %1009 = vmatpush1.msra.mxu0 0.0
      %1010 = vmatprep.mubr.f32.mxu0 0.0
      %1011 = vmatmul.mubr.f32.gmra.mrb[0].mxu0 %v941
      %v1012 = vpop.f32.mrb[0].mxu0
      %v1013 = vadd.f32 0.0, %v1012
      %v1014 = vpop.f32.mrb[0].mxu0
      %1015 = vmatprep.mubr.f32.mxu0 0.0
      %1016 = vmatmul.mubr.f32.gmra.mrb[0].mxu0 %v944
      %v1017 = vpop.f32.mrb[0].mxu0
      %v1018 = vadd.f32 0.0, %v1017
      %v1019 = vpop.f32.mrb[0].mxu0
      %1020 = vdwg.mxu0
      %v1022 = vsel %vm350, %v752, 0
      %v1025 = vsel %vm350, %v753, 0
      %1027 = vmatprep.subr.mxu0 0.0
      %1028 = vmatpush1.msra.mxu0 %v605
      %1029 = vmatprep.subr.mxu0 0.0
      %1030 = vmatpush1.msra.mxu0 0.0
      %1031 = vmatprep.subr.mxu0 0.0
      %1032 = vmatpush1.msra.mxu0 0.0
      %1033 = vmatprep.subr.mxu0 0.0
      %1034 = vmatpush1.msra.mxu0 0.0
      %1035 = vmatprep.subr.mxu0 0.0
      %1036 = vmatpush1.msra.mxu0 0.0
      %1037 = vmatprep.subr.mxu0 0.0
      %1038 = vmatpush1.msra.mxu0 0.0
      %1039 = vmatprep.subr.mxu0 0.0
      %1040 = vmatpush1.msra.mxu0 0.0
      %1041 = vmatprep.subr.mxu0 0.0
      %1042 = vmatpush1.msra.mxu0 0.0
      %1043 = vmatprep.subr.mxu0 0.0
      %1044 = vmatpush1.msra.mxu0 0.0
      %1045 = vmatprep.subr.mxu0 0.0
      %1046 = vmatpush1.msra.mxu0 0.0
      %1047 = vmatprep.subr.mxu0 0.0
      %1048 = vmatpush1.msra.mxu0 0.0
      %1049 = vmatprep.subr.mxu0 0.0
      %1050 = vmatpush1.msra.mxu0 0.0
      %1051 = vmatprep.subr.mxu0 0.0
      %1052 = vmatpush1.msra.mxu0 0.0
      %1053 = vmatprep.subr.mxu0 0.0
      %1054 = vmatpush1.msra.mxu0 0.0
      %1055 = vmatprep.subr.mxu0 0.0
      %1056 = vmatpush1.msra.mxu0 0.0
      %1057 = vmatprep.subr.mxu0 0.0
      %1058 = vmatpush1.msra.mxu0 0.0
      %1059 = vmatprep.subr.mxu0 0.0
      %1060 = vmatpush1.msra.mxu0 0.0
      %1061 = vmatprep.subr.mxu0 0.0
      %1062 = vmatpush1.msra.mxu0 0.0
      %1063 = vmatprep.subr.mxu0 0.0
      %1064 = vmatpush1.msra.mxu0 0.0
      %1065 = vmatprep.subr.mxu0 0.0
      %1066 = vmatpush1.msra.mxu0 0.0
      %1067 = vmatprep.subr.mxu0 0.0
      %1068 = vmatpush1.msra.mxu0 0.0
      %1069 = vmatprep.subr.mxu0 0.0
      %1070 = vmatpush1.msra.mxu0 0.0
      %1071 = vmatprep.subr.mxu0 0.0
      %1072 = vmatpush1.msra.mxu0 0.0
      %1073 = vmatprep.subr.mxu0 0.0
      %1074 = vmatpush1.msra.mxu0 0.0
      %1075 = vmatprep.subr.mxu0 0.0
      %1076 = vmatpush1.msra.mxu0 0.0
      %1077 = vmatprep.subr.mxu0 0.0
      %1078 = vmatpush1.msra.mxu0 0.0
      %1079 = vmatprep.subr.mxu0 0.0
      %1080 = vmatpush1.msra.mxu0 0.0
      %1081 = vmatprep.subr.mxu0 0.0
      %1082 = vmatpush1.msra.mxu0 0.0
      %1083 = vmatprep.subr.mxu0 0.0
      %1084 = vmatpush1.msra.mxu0 0.0
      %1085 = vmatprep.subr.mxu0 0.0
      %1086 = vmatpush1.msra.mxu0 0.0
      %1087 = vmatprep.subr.mxu0 0.0
      %1088 = vmatpush1.msra.mxu0 0.0
      %1089 = vmatprep.subr.mxu0 0.0
      %1090 = vmatpush1.msra.mxu0 0.0
      %1091 = vmatprep.mubr.f32.mxu0 0.0
      %1092 = vmatmul.mubr.f32.gmra.mrb[0].mxu0 %v1022
      %v1093 = vpop.f32.mrb[0].mxu0
      %v1094 = vadd.f32 0.0, %v1093
      %v1095 = vpop.f32.mrb[0].mxu0
      %1096 = vmatprep.mubr.f32.mxu0 0.0
      %1097 = vmatmul.mubr.f32.gmra.mrb[0].mxu0 %v1025
      %v1098 = vpop.f32.mrb[0].mxu0
      %v1099 = vadd.f32 0.0, %v1098
      %v1100 = vpop.f32.mrb[0].mxu0
      %1101 = vdwg.mxu0
      %v1103 = vsel %vm350, %v754, 0
      %v1106 = vsel %vm350, %v755, 0
      %1108 = vmatprep.subr.mxu0 0.0
      %1109 = vmatpush1.msra.mxu0 %v606
      %1110 = vmatprep.subr.mxu0 0.0
      %1111 = vmatpush1.msra.mxu0 0.0
      %1112 = vmatprep.subr.mxu0 0.0
      %1113 = vmatpush1.msra.mxu0 0.0
      %1114 = vmatprep.subr.mxu0 0.0
      %1115 = vmatpush1.msra.mxu0 0.0
      %1116 = vmatprep.subr.mxu0 0.0
      %1117 = vmatpush1.msra.mxu0 0.0
      %1118 = vmatprep.subr.mxu0 0.0
      %1119 = vmatpush1.msra.mxu0 0.0
      %1120 = vmatprep.subr.mxu0 0.0
      %1121 = vmatpush1.msra.mxu0 0.0
      %1122 = vmatprep.subr.mxu0 0.0
      %1123 = vmatpush1.msra.mxu0 0.0
      %1124 = vmatprep.subr.mxu0 0.0
      %1125 = vmatpush1.msra.mxu0 0.0
      %1126 = vmatprep.subr.mxu0 0.0
      %1127 = vmatpush1.msra.mxu0 0.0
      %1128 = vmatprep.subr.mxu0 0.0
      %1129 = vmatpush1.msra.mxu0 0.0
      %1130 = vmatprep.subr.mxu0 0.0
      %1131 = vmatpush1.msra.mxu0 0.0
      %1132 = vmatprep.subr.mxu0 0.0
      %1133 = vmatpush1.msra.mxu0 0.0
      %1134 = vmatprep.subr.mxu0 0.0
      %1135 = vmatpush1.msra.mxu0 0.0
      %1136 = vmatprep.subr.mxu0 0.0
      %1137 = vmatpush1.msra.mxu0 0.0
      %1138 = vmatprep.subr.mxu0 0.0
      %1139 = vmatpush1.msra.mxu0 0.0
      %1140 = vmatprep.subr.mxu0 0.0
      %1141 = vmatpush1.msra.mxu0 0.0
      %1142 = vmatprep.subr.mxu0 0.0
      %1143 = vmatpush1.msra.mxu0 0.0
      %1144 = vmatprep.subr.mxu0 0.0
      %1145 = vmatpush1.msra.mxu0 0.0
      %1146 = vmatprep.subr.mxu0 0.0
      %1147 = vmatpush1.msra.mxu0 0.0
      %1148 = vmatprep.subr.mxu0 0.0
      %1149 = vmatpush1.msra.mxu0 0.0
      %1150 = vmatprep.subr.mxu0 0.0
      %1151 = vmatpush1.msra.mxu0 0.0
      %1152 = vmatprep.subr.mxu0 0.0
      %1153 = vmatpush1.msra.mxu0 0.0
      %1154 = vmatprep.subr.mxu0 0.0
      %1155 = vmatpush1.msra.mxu0 0.0
      %1156 = vmatprep.subr.mxu0 0.0
      %1157 = vmatpush1.msra.mxu0 0.0
      %1158 = vmatprep.subr.mxu0 0.0
      %1159 = vmatpush1.msra.mxu0 0.0
      %1160 = vmatprep.subr.mxu0 0.0
      %1161 = vmatpush1.msra.mxu0 0.0
      %1162 = vmatprep.subr.mxu0 0.0
      %1163 = vmatpush1.msra.mxu0 0.0
      %1164 = vmatprep.subr.mxu0 0.0
      %1165 = vmatpush1.msra.mxu0 0.0
      %1166 = vmatprep.subr.mxu0 0.0
      %1167 = vmatpush1.msra.mxu0 0.0
      %1168 = vmatprep.subr.mxu0 0.0
      %1169 = vmatpush1.msra.mxu0 0.0
      %1170 = vmatprep.subr.mxu0 0.0
      %1171 = vmatpush1.msra.mxu0 0.0
      %1172 = vmatprep.mubr.f32.mxu0 0.0
      %1173 = vmatmul.mubr.f32.gmra.mrb[0].mxu0 %v1103
      %v1174 = vpop.f32.mrb[0].mxu0
      %v1175 = vadd.f32 0.0, %v1174
      %v1176 = vpop.f32.mrb[0].mxu0
      %1177 = vmatprep.mubr.f32.mxu0 0.0
      %1178 = vmatmul.mubr.f32.gmra.mrb[0].mxu0 %v1106
      %v1179 = vpop.f32.mrb[0].mxu0
      %v1180 = vadd.f32 0.0, %v1179
      %v1181 = vpop.f32.mrb[0].mxu0
      %1182 = vdwg.mxu0
      %v1184 = vsel %vm350, %v756, 0
      %v1187 = vsel %vm350, %v757, 0
      %1189 = vmatprep.subr.mxu0 0.0
      %1190 = vmatpush1.msra.mxu0 %v607
      %1191 = vmatprep.subr.mxu0 0.0
      %1192 = vmatpush1.msra.mxu0 0.0
      %1193 = vmatprep.subr.mxu0 0.0
      %1194 = vmatpush1.msra.mxu0 0.0
      %1195 = vmatprep.subr.mxu0 0.0
      %1196 = vmatpush1.msra.mxu0 0.0
      %1197 = vmatprep.subr.mxu0 0.0
      %1198 = vmatpush1.msra.mxu0 0.0
      %1199 = vmatprep.subr.mxu0 0.0
      %1200 = vmatpush1.msra.mxu0 0.0
      %1201 = vmatprep.subr.mxu0 0.0
      %1202 = vmatpush1.msra.mxu0 0.0
      %1203 = vmatprep.subr.mxu0 0.0
      %1204 = vmatpush1.msra.mxu0 0.0
      %1205 = vmatprep.subr.mxu0 0.0
      %1206 = vmatpush1.msra.mxu0 0.0
      %1207 = vmatprep.subr.mxu0 0.0
      %1208 = vmatpush1.msra.mxu0 0.0
      %1209 = vmatprep.subr.mxu0 0.0
      %1210 = vmatpush1.msra.mxu0 0.0
      %1211 = vmatprep.subr.mxu0 0.0
      %1212 = vmatpush1.msra.mxu0 0.0
      %1213 = vmatprep.subr.mxu0 0.0
      %1214 = vmatpush1.msra.mxu0 0.0
      %1215 = vmatprep.subr.mxu0 0.0
      %1216 = vmatpush1.msra.mxu0 0.0
      %1217 = vmatprep.subr.mxu0 0.0
      %1218 = vmatpush1.msra.mxu0 0.0
      %1219 = vmatprep.subr.mxu0 0.0
      %1220 = vmatpush1.msra.mxu0 0.0
      %1221 = vmatprep.subr.mxu0 0.0
      %1222 = vmatpush1.msra.mxu0 0.0
      %1223 = vmatprep.subr.mxu0 0.0
      %1224 = vmatpush1.msra.mxu0 0.0
      %1225 = vmatprep.subr.mxu0 0.0
      %1226 = vmatpush1.msra.mxu0 0.0
      %1227 = vmatprep.subr.mxu0 0.0
      %1228 = vmatpush1.msra.mxu0 0.0
      %1229 = vmatprep.subr.mxu0 0.0
      %1230 = vmatpush1.msra.mxu0 0.0
      %1231 = vmatprep.subr.mxu0 0.0
      %1232 = vmatpush1.msra.mxu0 0.0
      %1233 = vmatprep.subr.mxu0 0.0
      %1234 = vmatpush1.msra.mxu0 0.0
      %1235 = vmatprep.subr.mxu0 0.0
      %1236 = vmatpush1.msra.mxu0 0.0
      %1237 = vmatprep.subr.mxu0 0.0
      %1238 = vmatpush1.msra.mxu0 0.0
      %1239 = vmatprep.subr.mxu0 0.0
      %1240 = vmatpush1.msra.mxu0 0.0
      %1241 = vmatprep.subr.mxu0 0.0
      %1242 = vmatpush1.msra.mxu0 0.0
      %1243 = vmatprep.subr.mxu0 0.0
      %1244 = vmatpush1.msra.mxu0 0.0
      %1245 = vmatprep.subr.mxu0 0.0
      %1246 = vmatpush1.msra.mxu0 0.0
      %1247 = vmatprep.subr.mxu0 0.0
      %1248 = vmatpush1.msra.mxu0 0.0
      %1249 = vmatprep.subr.mxu0 0.0
      %1250 = vmatpush1.msra.mxu0 0.0
      %1251 = vmatprep.subr.mxu0 0.0
      %1252 = vmatpush1.msra.mxu0 0.0
      %1253 = vmatprep.mubr.f32.mxu0 0.0
      %1254 = vmatmul.mubr.f32.gmra.mrb[0].mxu0 %v1184
      %v1255 = vpop.f32.mrb[0].mxu0
      %v1256 = vadd.f32 0.0, %v1255
      %v1257 = vpop.f32.mrb[0].mxu0
      %1258 = vmatprep.mubr.f32.mxu0 0.0
      %1259 = vmatmul.mubr.f32.gmra.mrb[0].mxu0 %v1187
      %v1260 = vpop.f32.mrb[0].mxu0
      %v1261 = vadd.f32 0.0, %v1260
      %v1262 = vpop.f32.mrb[0].mxu0
      %1263 = vdwg.mxu0
      %v1265 = vsel %vm350, %v758, 0
      %v1268 = vsel %vm350, %v759, 0
      %1270 = vmatprep.subr.mxu0 0.0
      %1271 = vmatpush1.msra.mxu0 %v608
      %1272 = vmatprep.subr.mxu0 0.0
      %1273 = vmatpush1.msra.mxu0 0.0
      %1274 = vmatprep.subr.mxu0 0.0
      %1275 = vmatpush1.msra.mxu0 0.0
      %1276 = vmatprep.subr.mxu0 0.0
      %1277 = vmatpush1.msra.mxu0 0.0
      %1278 = vmatprep.subr.mxu0 0.0
      %1279 = vmatpush1.msra.mxu0 0.0
      %1280 = vmatprep.subr.mxu0 0.0
      %1281 = vmatpush1.msra.mxu0 0.0
      %1282 = vmatprep.subr.mxu0 0.0
      %1283 = vmatpush1.msra.mxu0 0.0
      %1284 = vmatprep.subr.mxu0 0.0
      %1285 = vmatpush1.msra.mxu0 0.0
      %1286 = vmatprep.subr.mxu0 0.0
      %1287 = vmatpush1.msra.mxu0 0.0
      %1288 = vmatprep.subr.mxu0 0.0
      %1289 = vmatpush1.msra.mxu0 0.0
      %1290 = vmatprep.subr.mxu0 0.0
      %1291 = vmatpush1.msra.mxu0 0.0
      %1292 = vmatprep.subr.mxu0 0.0
      %1293 = vmatpush1.msra.mxu0 0.0
      %1294 = vmatprep.subr.mxu0 0.0
      %1295 = vmatpush1.msra.mxu0 0.0
      %1296 = vmatprep.subr.mxu0 0.0
      %1297 = vmatpush1.msra.mxu0 0.0
      %1298 = vmatprep.subr.mxu0 0.0
      %1299 = vmatpush1.msra.mxu0 0.0
      %1300 = vmatprep.subr.mxu0 0.0
      %1301 = vmatpush1.msra.mxu0 0.0
      %1302 = vmatprep.subr.mxu0 0.0
      %1303 = vmatpush1.msra.mxu0 0.0
      %1304 = vmatprep.subr.mxu0 0.0
      %1305 = vmatpush1.msra.mxu0 0.0
      %1306 = vmatprep.subr.mxu0 0.0
      %1307 = vmatpush1.msra.mxu0 0.0
      %1308 = vmatprep.subr.mxu0 0.0
      %1309 = vmatpush1.msra.mxu0 0.0
      %1310 = vmatprep.subr.mxu0 0.0
      %1311 = vmatpush1.msra.mxu0 0.0
      %1312 = vmatprep.subr.mxu0 0.0
      %1313 = vmatpush1.msra.mxu0 0.0
      %1314 = vmatprep.subr.mxu0 0.0
      %1315 = vmatpush1.msra.mxu0 0.0
      %1316 = vmatprep.subr.mxu0 0.0
      %1317 = vmatpush1.msra.mxu0 0.0
      %1318 = vmatprep.subr.mxu0 0.0
      %1319 = vmatpush1.msra.mxu0 0.0
      %1320 = vmatprep.subr.mxu0 0.0
      %1321 = vmatpush1.msra.mxu0 0.0
      %1322 = vmatprep.subr.mxu0 0.0
      %1323 = vmatpush1.msra.mxu0 0.0
      %1324 = vmatprep.subr.mxu0 0.0
      %1325 = vmatpush1.msra.mxu0 0.0
      %1326 = vmatprep.subr.mxu0 0.0
      %1327 = vmatpush1.msra.mxu0 0.0
      %1328 = vmatprep.subr.mxu0 0.0
      %1329 = vmatpush1.msra.mxu0 0.0
      %1330 = vmatprep.subr.mxu0 0.0
      %1331 = vmatpush1.msra.mxu0 0.0
      %1332 = vmatprep.subr.mxu0 0.0
      %1333 = vmatpush1.msra.mxu0 0.0
      %1334 = vmatprep.mubr.f32.mxu0 0.0
      %1335 = vmatmul.mubr.f32.gmra.mrb[0].mxu0 %v1265
      %v1336 = vpop.f32.mrb[0].mxu0
      %v1337 = vadd.f32 0.0, %v1336
      %v1338 = vpop.f32.mrb[0].mxu0
      %1339 = vmatprep.mubr.f32.mxu0 0.0
      %1340 = vmatmul.mubr.f32.gmra.mrb[0].mxu0 %v1268
      %v1341 = vpop.f32.mrb[0].mxu0
      %v1342 = vadd.f32 0.0, %v1341
      %v1343 = vpop.f32.mrb[0].mxu0
      %1344 = vdwg.mxu0
      %v1346 = vsel %vm350, %v760, 0
      %v1349 = vsel %vm350, %v761, 0
      %1351 = vmatprep.subr.mxu0 0.0
      %1352 = vmatpush1.msra.mxu0 %v609
      %1353 = vmatprep.subr.mxu0 0.0
      %1354 = vmatpush1.msra.mxu0 0.0
      %1355 = vmatprep.subr.mxu0 0.0
      %1356 = vmatpush1.msra.mxu0 0.0
      %1357 = vmatprep.subr.mxu0 0.0
      %1358 = vmatpush1.msra.mxu0 0.0
      %1359 = vmatprep.subr.mxu0 0.0
      %1360 = vmatpush1.msra.mxu0 0.0
      %1361 = vmatprep.subr.mxu0 0.0
      %1362 = vmatpush1.msra.mxu0 0.0
      %1363 = vmatprep.subr.mxu0 0.0
      %1364 = vmatpush1.msra.mxu0 0.0
      %1365 = vmatprep.subr.mxu0 0.0
      %1366 = vmatpush1.msra.mxu0 0.0
      %1367 = vmatprep.subr.mxu0 0.0
      %1368 = vmatpush1.msra.mxu0 0.0
      %1369 = vmatprep.subr.mxu0 0.0
      %1370 = vmatpush1.msra.mxu0 0.0
      %1371 = vmatprep.subr.mxu0 0.0
      %1372 = vmatpush1.msra.mxu0 0.0
      %1373 = vmatprep.subr.mxu0 0.0
      %1374 = vmatpush1.msra.mxu0 0.0
      %1375 = vmatprep.subr.mxu0 0.0
      %1376 = vmatpush1.msra.mxu0 0.0
      %1377 = vmatprep.subr.mxu0 0.0
      %1378 = vmatpush1.msra.mxu0 0.0
      %1379 = vmatprep.subr.mxu0 0.0
      %1380 = vmatpush1.msra.mxu0 0.0
      %1381 = vmatprep.subr.mxu0 0.0
      %1382 = vmatpush1.msra.mxu0 0.0
      %1383 = vmatprep.subr.mxu0 0.0
      %1384 = vmatpush1.msra.mxu0 0.0
      %1385 = vmatprep.subr.mxu0 0.0
      %1386 = vmatpush1.msra.mxu0 0.0
      %1387 = vmatprep.subr.mxu0 0.0
      %1388 = vmatpush1.msra.mxu0 0.0
      %1389 = vmatprep.subr.mxu0 0.0
      %1390 = vmatpush1.msra.mxu0 0.0
      %1391 = vmatprep.subr.mxu0 0.0
      %1392 = vmatpush1.msra.mxu0 0.0
      %1393 = vmatprep.subr.mxu0 0.0
      %1394 = vmatpush1.msra.mxu0 0.0
      %1395 = vmatprep.subr.mxu0 0.0
      %1396 = vmatpush1.msra.mxu0 0.0
      %1397 = vmatprep.subr.mxu0 0.0
      %1398 = vmatpush1.msra.mxu0 0.0
      %1399 = vmatprep.subr.mxu0 0.0
      %1400 = vmatpush1.msra.mxu0 0.0
      %1401 = vmatprep.subr.mxu0 0.0
      %1402 = vmatpush1.msra.mxu0 0.0
      %1403 = vmatprep.subr.mxu0 0.0
      %1404 = vmatpush1.msra.mxu0 0.0
      %1405 = vmatprep.subr.mxu0 0.0
      %1406 = vmatpush1.msra.mxu0 0.0
      %1407 = vmatprep.subr.mxu0 0.0
      %1408 = vmatpush1.msra.mxu0 0.0
      %1409 = vmatprep.subr.mxu0 0.0
      %1410 = vmatpush1.msra.mxu0 0.0
      %1411 = vmatprep.subr.mxu0 0.0
      %1412 = vmatpush1.msra.mxu0 0.0
      %1413 = vmatprep.subr.mxu0 0.0
      %1414 = vmatpush1.msra.mxu0 0.0
      %1415 = vmatprep.mubr.f32.mxu0 0.0
      %1416 = vmatmul.mubr.f32.gmra.mrb[0].mxu0 %v1346
      %v1417 = vpop.f32.mrb[0].mxu0
      %v1418 = vadd.f32 0.0, %v1417
      %v1419 = vpop.f32.mrb[0].mxu0
      %1420 = vmatprep.mubr.f32.mxu0 0.0
      %1421 = vmatmul.mubr.f32.gmra.mrb[0].mxu0 %v1349
      %v1422 = vpop.f32.mrb[0].mxu0
      %v1423 = vadd.f32 0.0, %v1422
      %v1424 = vpop.f32.mrb[0].mxu0
      %1425 = vdwg.mxu0
      %v1427 = vsel %vm350, %v762, 0
      %v1430 = vsel %vm350, %v763, 0
      %1432 = vmatprep.subr.mxu0 0.0
      %1433 = vmatpush1.msra.mxu0 %v738
      %1434 = vmatprep.subr.mxu0 0.0
      %1435 = vmatpush1.msra.mxu0 0.0
      %1436 = vmatprep.subr.mxu0 0.0
      %1437 = vmatpush1.msra.mxu0 0.0
      %1438 = vmatprep.subr.mxu0 0.0
      %1439 = vmatpush1.msra.mxu0 0.0
      %1440 = vmatprep.subr.mxu0 0.0
      %1441 = vmatpush1.msra.mxu0 0.0
      %1442 = vmatprep.subr.mxu0 0.0
      %1443 = vmatpush1.msra.mxu0 0.0
      %1444 = vmatprep.subr.mxu0 0.0
      %1445 = vmatpush1.msra.mxu0 0.0
      %1446 = vmatprep.subr.mxu0 0.0
      %1447 = vmatpush1.msra.mxu0 0.0
      %1448 = vmatprep.subr.mxu0 0.0
      %1449 = vmatpush1.msra.mxu0 0.0
      %1450 = vmatprep.subr.mxu0 0.0
      %1451 = vmatpush1.msra.mxu0 0.0
      %1452 = vmatprep.subr.mxu0 0.0
      %1453 = vmatpush1.msra.mxu0 0.0
      %1454 = vmatprep.subr.mxu0 0.0
      %1455 = vmatpush1.msra.mxu0 0.0
      %1456 = vmatprep.subr.mxu0 0.0
      %1457 = vmatpush1.msra.mxu0 0.0
      %1458 = vmatprep.subr.mxu0 0.0
      %1459 = vmatpush1.msra.mxu0 0.0
      %1460 = vmatprep.subr.mxu0 0.0
      %1461 = vmatpush1.msra.mxu0 0.0
      %1462 = vmatprep.subr.mxu0 0.0
      %1463 = vmatpush1.msra.mxu0 0.0
      %1464 = vmatprep.subr.mxu0 0.0
      %1465 = vmatpush1.msra.mxu0 0.0
      %1466 = vmatprep.subr.mxu0 0.0
      %1467 = vmatpush1.msra.mxu0 0.0
      %1468 = vmatprep.subr.mxu0 0.0
      %1469 = vmatpush1.msra.mxu0 0.0
      %1470 = vmatprep.subr.mxu0 0.0
      %1471 = vmatpush1.msra.mxu0 0.0
      %1472 = vmatprep.subr.mxu0 0.0
      %1473 = vmatpush1.msra.mxu0 0.0
      %1474 = vmatprep.subr.mxu0 0.0
      %1475 = vmatpush1.msra.mxu0 0.0
      %1476 = vmatprep.subr.mxu0 0.0
      %1477 = vmatpush1.msra.mxu0 0.0
      %1478 = vmatprep.subr.mxu0 0.0
      %1479 = vmatpush1.msra.mxu0 0.0
      %1480 = vmatprep.subr.mxu0 0.0
      %1481 = vmatpush1.msra.mxu0 0.0
      %1482 = vmatprep.subr.mxu0 0.0
      %1483 = vmatpush1.msra.mxu0 0.0
      %1484 = vmatprep.subr.mxu0 0.0
      %1485 = vmatpush1.msra.mxu0 0.0
      %1486 = vmatprep.subr.mxu0 0.0
      %1487 = vmatpush1.msra.mxu0 0.0
      %1488 = vmatprep.subr.mxu0 0.0
      %1489 = vmatpush1.msra.mxu0 0.0
      %1490 = vmatprep.subr.mxu0 0.0
      %1491 = vmatpush1.msra.mxu0 0.0
      %1492 = vmatprep.subr.mxu0 0.0
      %1493 = vmatpush1.msra.mxu0 0.0
      %1494 = vmatprep.subr.mxu0 0.0
      %1495 = vmatpush1.msra.mxu0 0.0
      %1496 = vmatprep.mubr.f32.mxu0 0.0
      %1497 = vmatmul.mubr.f32.gmra.mrb[0].mxu0 %v1427
      %v1498 = vpop.f32.mrb[0].mxu0
      %v1499 = vadd.f32 0.0, %v1498
      %v1500 = vpop.f32.mrb[0].mxu0
      %1501 = vmatprep.mubr.f32.mxu0 0.0
      %1502 = vmatmul.mubr.f32.gmra.mrb[0].mxu0 %v1430
      %v1503 = vpop.f32.mrb[0].mxu0
      %v1504 = vadd.f32 0.0, %v1503
      %v1505 = vpop.f32.mrb[0].mxu0
      %1506 = vdwg.mxu0
      %v1508 = vsel %vm350, %v764, 0
      %v1511 = vsel %vm350, %v765, 0
      %1513 = vmatprep.subr.mxu0 0.0
      %1514 = vmatpush1.msra.mxu0 %v739
      %1515 = vmatprep.subr.mxu0 0.0
      %1516 = vmatpush1.msra.mxu0 0.0
      %1517 = vmatprep.subr.mxu0 0.0
      %1518 = vmatpush1.msra.mxu0 0.0
      %1519 = vmatprep.subr.mxu0 0.0
      %1520 = vmatpush1.msra.mxu0 0.0
      %1521 = vmatprep.subr.mxu0 0.0
      %1522 = vmatpush1.msra.mxu0 0.0
      %1523 = vmatprep.subr.mxu0 0.0
      %1524 = vmatpush1.msra.mxu0 0.0
      %1525 = vmatprep.subr.mxu0 0.0
      %1526 = vmatpush1.msra.mxu0 0.0
      %1527 = vmatprep.subr.mxu0 0.0
      %1528 = vmatpush1.msra.mxu0 0.0
      %1529 = vmatprep.subr.mxu0 0.0
      %1530 = vmatpush1.msra.mxu0 0.0
      %1531 = vmatprep.subr.mxu0 0.0
      %1532 = vmatpush1.msra.mxu0 0.0
      %1533 = vmatprep.subr.mxu0 0.0
      %1534 = vmatpush1.msra.mxu0 0.0
      %1535 = vmatprep.subr.mxu0 0.0
      %1536 = vmatpush1.msra.mxu0 0.0
      %1537 = vmatprep.subr.mxu0 0.0
      %1538 = vmatpush1.msra.mxu0 0.0
      %1539 = vmatprep.subr.mxu0 0.0
      %1540 = vmatpush1.msra.mxu0 0.0
      %1541 = vmatprep.subr.mxu0 0.0
      %1542 = vmatpush1.msra.mxu0 0.0
      %1543 = vmatprep.subr.mxu0 0.0
      %1544 = vmatpush1.msra.mxu0 0.0
      %1545 = vmatprep.subr.mxu0 0.0
      %1546 = vmatpush1.msra.mxu0 0.0
      %1547 = vmatprep.subr.mxu0 0.0
      %1548 = vmatpush1.msra.mxu0 0.0
      %1549 = vmatprep.subr.mxu0 0.0
      %1550 = vmatpush1.msra.mxu0 0.0
      %1551 = vmatprep.subr.mxu0 0.0
      %1552 = vmatpush1.msra.mxu0 0.0
      %1553 = vmatprep.subr.mxu0 0.0
      %1554 = vmatpush1.msra.mxu0 0.0
      %1555 = vmatprep.subr.mxu0 0.0
      %1556 = vmatpush1.msra.mxu0 0.0
      %1557 = vmatprep.subr.mxu0 0.0
      %1558 = vmatpush1.msra.mxu0 0.0
      %1559 = vmatprep.subr.mxu0 0.0
      %1560 = vmatpush1.msra.mxu0 0.0
      %1561 = vmatprep.subr.mxu0 0.0
      %1562 = vmatpush1.msra.mxu0 0.0
      %1563 = vmatprep.subr.mxu0 0.0
      %1564 = vmatpush1.msra.mxu0 0.0
      %1565 = vmatprep.subr.mxu0 0.0
      %1566 = vmatpush1.msra.mxu0 0.0
      %1567 = vmatprep.subr.mxu0 0.0
      %1568 = vmatpush1.msra.mxu0 0.0
      %1569 = vmatprep.subr.mxu0 0.0
      %1570 = vmatpush1.msra.mxu0 0.0
      %1571 = vmatprep.subr.mxu0 0.0
      %1572 = vmatpush1.msra.mxu0 0.0
      %1573 = vmatprep.subr.mxu0 0.0
      %1574 = vmatpush1.msra.mxu0 0.0
      %1575 = vmatprep.subr.mxu0 0.0
      %1576 = vmatpush1.msra.mxu0 0.0
      %1577 = vmatprep.mubr.f32.mxu0 0.0
      %1578 = vmatmul.mubr.f32.gmra.mrb[0].mxu0 %v1508
      %v1579 = vpop.f32.mrb[0].mxu0
      %v1580 = vadd.f32 0.0, %v1579
      %v1581 = vpop.f32.mrb[0].mxu0
      %1582 = vmatprep.mubr.f32.mxu0 0.0
      %1583 = vmatmul.mubr.f32.gmra.mrb[0].mxu0 %v1511
      %v1584 = vpop.f32.mrb[0].mxu0
      %v1585 = vadd.f32 0.0, %v1584
      %v1586 = vpop.f32.mrb[0].mxu0
      %1587 = vdwg.mxu0
      %v1589 = vsel %vm350, %v766, 0
      %v1592 = vsel %vm350, %v767, 0
      %1594 = vmatprep.subr.mxu0 0.0
      %1595 = vmatpush1.msra.mxu0 %v740
      %1596 = vmatprep.subr.mxu0 0.0
      %1597 = vmatpush1.msra.mxu0 0.0
      %1598 = vmatprep.subr.mxu0 0.0
      %1599 = vmatpush1.msra.mxu0 0.0
      %1600 = vmatprep.subr.mxu0 0.0
      %1601 = vmatpush1.msra.mxu0 0.0
      %1602 = vmatprep.subr.mxu0 0.0
      %1603 = vmatpush1.msra.mxu0 0.0
      %1604 = vmatprep.subr.mxu0 0.0
      %1605 = vmatpush1.msra.mxu0 0.0
      %1606 = vmatprep.subr.mxu0 0.0
      %1607 = vmatpush1.msra.mxu0 0.0
      %1608 = vmatprep.subr.mxu0 0.0
      %1609 = vmatpush1.msra.mxu0 0.0
      %1610 = vmatprep.subr.mxu0 0.0
      %1611 = vmatpush1.msra.mxu0 0.0
      %1612 = vmatprep.subr.mxu0 0.0
      %1613 = vmatpush1.msra.mxu0 0.0
      %1614 = vmatprep.subr.mxu0 0.0
      %1615 = vmatpush1.msra.mxu0 0.0
      %1616 = vmatprep.subr.mxu0 0.0
      %1617 = vmatpush1.msra.mxu0 0.0
      %1618 = vmatprep.subr.mxu0 0.0
      %1619 = vmatpush1.msra.mxu0 0.0
      %1620 = vmatprep.subr.mxu0 0.0
      %1621 = vmatpush1.msra.mxu0 0.0
      %1622 = vmatprep.subr.mxu0 0.0
      %1623 = vmatpush1.msra.mxu0 0.0
      %1624 = vmatprep.subr.mxu0 0.0
      %1625 = vmatpush1.msra.mxu0 0.0
      %1626 = vmatprep.subr.mxu0 0.0
      %1627 = vmatpush1.msra.mxu0 0.0
      %1628 = vmatprep.subr.mxu0 0.0
      %1629 = vmatpush1.msra.mxu0 0.0
      %1630 = vmatprep.subr.mxu0 0.0
      %1631 = vmatpush1.msra.mxu0 0.0
      %1632 = vmatprep.subr.mxu0 0.0
      %1633 = vmatpush1.msra.mxu0 0.0
      %1634 = vmatprep.subr.mxu0 0.0
      %1635 = vmatpush1.msra.mxu0 0.0
      %1636 = vmatprep.subr.mxu0 0.0
      %1637 = vmatpush1.msra.mxu0 0.0
      %1638 = vmatprep.subr.mxu0 0.0
      %1639 = vmatpush1.msra.mxu0 0.0
      %1640 = vmatprep.subr.mxu0 0.0
      %1641 = vmatpush1.msra.mxu0 0.0
      %1642 = vmatprep.subr.mxu0 0.0
      %1643 = vmatpush1.msra.mxu0 0.0
      %1644 = vmatprep.subr.mxu0 0.0
      %1645 = vmatpush1.msra.mxu0 0.0
      %1646 = vmatprep.subr.mxu0 0.0
      %1647 = vmatpush1.msra.mxu0 0.0
      %1648 = vmatprep.subr.mxu0 0.0
      %1649 = vmatpush1.msra.mxu0 0.0
      %1650 = vmatprep.subr.mxu0 0.0
      %1651 = vmatpush1.msra.mxu0 0.0
      %1652 = vmatprep.subr.mxu0 0.0
      %1653 = vmatpush1.msra.mxu0 0.0
      %1654 = vmatprep.subr.mxu0 0.0
      %1655 = vmatpush1.msra.mxu0 0.0
      %1656 = vmatprep.subr.mxu0 0.0
      %1657 = vmatpush1.msra.mxu0 0.0
      %1658 = vmatprep.mubr.f32.mxu0 0.0
      %1659 = vmatmul.mubr.f32.gmra.mrb[0].mxu0 %v1589
      %v1660 = vpop.f32.mrb[0].mxu0
      %v1661 = vadd.f32 0.0, %v1660
      %v1662 = vpop.f32.mrb[0].mxu0
      %1663 = vmatprep.mubr.f32.mxu0 0.0
      %1664 = vmatmul.mubr.f32.gmra.mrb[0].mxu0 %v1592
      %v1665 = vpop.f32.mrb[0].mxu0
      %v1666 = vadd.f32 0.0, %v1665
      %v1667 = vpop.f32.mrb[0].mxu0
      %1668 = vdwg.mxu0
      %v1670 = vsel %vm350, %v768, 0
      %v1673 = vsel %vm350, %v769, 0
      %1675 = vmatprep.subr.mxu0 0.0
      %1676 = vmatpush1.msra.mxu0 %v741
      %1677 = vmatprep.subr.mxu0 0.0
      %1678 = vmatpush1.msra.mxu0 0.0
      %1679 = vmatprep.subr.mxu0 0.0
      %1680 = vmatpush1.msra.mxu0 0.0
      %1681 = vmatprep.subr.mxu0 0.0
      %1682 = vmatpush1.msra.mxu0 0.0
      %1683 = vmatprep.subr.mxu0 0.0
      %1684 = vmatpush1.msra.mxu0 0.0
      %1685 = vmatprep.subr.mxu0 0.0
      %1686 = vmatpush1.msra.mxu0 0.0
      %1687 = vmatprep.subr.mxu0 0.0
      %1688 = vmatpush1.msra.mxu0 0.0
      %1689 = vmatprep.subr.mxu0 0.0
      %1690 = vmatpush1.msra.mxu0 0.0
      %1691 = vmatprep.subr.mxu0 0.0
      %1692 = vmatpush1.msra.mxu0 0.0
      %1693 = vmatprep.subr.mxu0 0.0
      %1694 = vmatpush1.msra.mxu0 0.0
      %1695 = vmatprep.subr.mxu0 0.0
      %1696 = vmatpush1.msra.mxu0 0.0
      %1697 = vmatprep.subr.mxu0 0.0
      %1698 = vmatpush1.msra.mxu0 0.0
      %1699 = vmatprep.subr.mxu0 0.0
      %1700 = vmatpush1.msra.mxu0 0.0
      %1701 = vmatprep.subr.mxu0 0.0
      %1702 = vmatpush1.msra.mxu0 0.0
      %1703 = vmatprep.subr.mxu0 0.0
      %1704 = vmatpush1.msra.mxu0 0.0
      %1705 = vmatprep.subr.mxu0 0.0
      %1706 = vmatpush1.msra.mxu0 0.0
      %1707 = vmatprep.subr.mxu0 0.0
      %1708 = vmatpush1.msra.mxu0 0.0
      %1709 = vmatprep.subr.mxu0 0.0
      %1710 = vmatpush1.msra.mxu0 0.0
      %1711 = vmatprep.subr.mxu0 0.0
      %1712 = vmatpush1.msra.mxu0 0.0
      %1713 = vmatprep.subr.mxu0 0.0
      %1714 = vmatpush1.msra.mxu0 0.0
      %1715 = vmatprep.subr.mxu0 0.0
      %1716 = vmatpush1.msra.mxu0 0.0
      %1717 = vmatprep.subr.mxu0 0.0
      %1718 = vmatpush1.msra.mxu0 0.0
      %1719 = vmatprep.subr.mxu0 0.0
      %1720 = vmatpush1.msra.mxu0 0.0
      %1721 = vmatprep.subr.mxu0 0.0
      %1722 = vmatpush1.msra.mxu0 0.0
      %1723 = vmatprep.subr.mxu0 0.0
      %1724 = vmatpush1.msra.mxu0 0.0
      %1725 = vmatprep.subr.mxu0 0.0
      %1726 = vmatpush1.msra.mxu0 0.0
      %1727 = vmatprep.subr.mxu0 0.0
      %1728 = vmatpush1.msra.mxu0 0.0
      %1729 = vmatprep.subr.mxu0 0.0
      %1730 = vmatpush1.msra.mxu0 0.0
      %1731 = vmatprep.subr.mxu0 0.0
      %1732 = vmatpush1.msra.mxu0 0.0
      %1733 = vmatprep.subr.mxu0 0.0
      %1734 = vmatpush1.msra.mxu0 0.0
      %1735 = vmatprep.subr.mxu0 0.0
      %1736 = vmatpush1.msra.mxu0 0.0
      %1737 = vmatprep.subr.mxu0 0.0
      %1738 = vmatpush1.msra.mxu0 0.0
      %1739 = vmatprep.mubr.f32.mxu0 0.0
      %1740 = vmatmul.mubr.f32.gmra.mrb[0].mxu0 %v1670
      %v1741 = vpop.f32.mrb[0].mxu0
      %v1742 = vadd.f32 0.0, %v1741
      %v1743 = vpop.f32.mrb[0].mxu0
      %1744 = vmatprep.mubr.f32.mxu0 0.0
      %1745 = vmatmul.mubr.f32.gmra.mrb[0].mxu0 %v1673
      %v1746 = vpop.f32.mrb[0].mxu0
      %v1747 = vadd.f32 0.0, %v1746
      %v1748 = vpop.f32.mrb[0].mxu0
      %1749 = vdwg.mxu0
      %v1751 = vsel %vm350, %v770, 0
      %v1754 = vsel %vm350, %v771, 0
      %1756 = vmatprep.subr.mxu0 0.0
      %1757 = vmatpush1.msra.mxu0 %v742
      %1758 = vmatprep.subr.mxu0 0.0
      %1759 = vmatpush1.msra.mxu0 0.0
      %1760 = vmatprep.subr.mxu0 0.0
      %1761 = vmatpush1.msra.mxu0 0.0
      %1762 = vmatprep.subr.mxu0 0.0
      %1763 = vmatpush1.msra.mxu0 0.0
      %1764 = vmatprep.subr.mxu0 0.0
      %1765 = vmatpush1.msra.mxu0 0.0
      %1766 = vmatprep.subr.mxu0 0.0
      %1767 = vmatpush1.msra.mxu0 0.0
      %1768 = vmatprep.subr.mxu0 0.0
      %1769 = vmatpush1.msra.mxu0 0.0
      %1770 = vmatprep.subr.mxu0 0.0
      %1771 = vmatpush1.msra.mxu0 0.0
      %1772 = vmatprep.subr.mxu0 0.0
      %1773 = vmatpush1.msra.mxu0 0.0
      %1774 = vmatprep.subr.mxu0 0.0
      %1775 = vmatpush1.msra.mxu0 0.0
      %1776 = vmatprep.subr.mxu0 0.0
      %1777 = vmatpush1.msra.mxu0 0.0
      %1778 = vmatprep.subr.mxu0 0.0
      %1779 = vmatpush1.msra.mxu0 0.0
      %1780 = vmatprep.subr.mxu0 0.0
      %1781 = vmatpush1.msra.mxu0 0.0
      %1782 = vmatprep.subr.mxu0 0.0
      %1783 = vmatpush1.msra.mxu0 0.0
      %1784 = vmatprep.subr.mxu0 0.0
      %1785 = vmatpush1.msra.mxu0 0.0
      %1786 = vmatprep.subr.mxu0 0.0
      %1787 = vmatpush1.msra.mxu0 0.0
      %1788 = vmatprep.subr.mxu0 0.0
      %1789 = vmatpush1.msra.mxu0 0.0
      %1790 = vmatprep.subr.mxu0 0.0
      %1791 = vmatpush1.msra.mxu0 0.0
      %1792 = vmatprep.subr.mxu0 0.0
      %1793 = vmatpush1.msra.mxu0 0.0
      %1794 = vmatprep.subr.mxu0 0.0
      %1795 = vmatpush1.msra.mxu0 0.0
      %1796 = vmatprep.subr.mxu0 0.0
      %1797 = vmatpush1.msra.mxu0 0.0
      %1798 = vmatprep.subr.mxu0 0.0
      %1799 = vmatpush1.msra.mxu0 0.0
      %1800 = vmatprep.subr.mxu0 0.0
      %1801 = vmatpush1.msra.mxu0 0.0
      %1802 = vmatprep.subr.mxu0 0.0
      %1803 = vmatpush1.msra.mxu0 0.0
      %1804 = vmatprep.subr.mxu0 0.0
      %1805 = vmatpush1.msra.mxu0 0.0
      %1806 = vmatprep.subr.mxu0 0.0
      %1807 = vmatpush1.msra.mxu0 0.0
      %1808 = vmatprep.subr.mxu0 0.0
      %1809 = vmatpush1.msra.mxu0 0.0
      %1810 = vmatprep.subr.mxu0 0.0
      %1811 = vmatpush1.msra.mxu0 0.0
      %1812 = vmatprep.subr.mxu0 0.0
      %1813 = vmatpush1.msra.mxu0 0.0
      %1814 = vmatprep.subr.mxu0 0.0
      %1815 = vmatpush1.msra.mxu0 0.0
      %1816 = vmatprep.subr.mxu0 0.0
      %1817 = vmatpush1.msra.mxu0 0.0
      %1818 = vmatprep.subr.mxu0 0.0
      %1819 = vmatpush1.msra.mxu0 0.0
      %1820 = vmatprep.mubr.f32.mxu0 0.0
      %1821 = vmatmul.mubr.f32.gmra.mrb[0].mxu0 %v1751
      %v1822 = vpop.f32.mrb[0].mxu0
      %v1823 = vadd.f32 0.0, %v1822
      %v1824 = vpop.f32.mrb[0].mxu0
      %1825 = vmatprep.mubr.f32.mxu0 0.0
      %1826 = vmatmul.mubr.f32.gmra.mrb[0].mxu0 %v1754
      %v1827 = vpop.f32.mrb[0].mxu0
      %v1828 = vadd.f32 0.0, %v1827
      %v1829 = vpop.f32.mrb[0].mxu0
      %1830 = vdwg.mxu0
      %v1832 = vsel %vm350, %v772, 0
      %v1835 = vsel %vm350, %v773, 0
      %1837 = vmatprep.subr.mxu0 0.0
      %1838 = vmatpush1.msra.mxu0 %v743
      %1839 = vmatprep.subr.mxu0 0.0
      %1840 = vmatpush1.msra.mxu0 0.0
      %1841 = vmatprep.subr.mxu0 0.0
      %1842 = vmatpush1.msra.mxu0 0.0
      %1843 = vmatprep.subr.mxu0 0.0
      %1844 = vmatpush1.msra.mxu0 0.0
      %1845 = vmatprep.subr.mxu0 0.0
      %1846 = vmatpush1.msra.mxu0 0.0
      %1847 = vmatprep.subr.mxu0 0.0
      %1848 = vmatpush1.msra.mxu0 0.0
      %1849 = vmatprep.subr.mxu0 0.0
      %1850 = vmatpush1.msra.mxu0 0.0
      %1851 = vmatprep.subr.mxu0 0.0
      %1852 = vmatpush1.msra.mxu0 0.0
      %1853 = vmatprep.subr.mxu0 0.0
      %1854 = vmatpush1.msra.mxu0 0.0
      %1855 = vmatprep.subr.mxu0 0.0
      %1856 = vmatpush1.msra.mxu0 0.0
      %1857 = vmatprep.subr.mxu0 0.0
      %1858 = vmatpush1.msra.mxu0 0.0
      %1859 = vmatprep.subr.mxu0 0.0
      %1860 = vmatpush1.msra.mxu0 0.0
      %1861 = vmatprep.subr.mxu0 0.0
      %1862 = vmatpush1.msra.mxu0 0.0
      %1863 = vmatprep.subr.mxu0 0.0
      %1864 = vmatpush1.msra.mxu0 0.0
      %1865 = vmatprep.subr.mxu0 0.0
      %1866 = vmatpush1.msra.mxu0 0.0
      %1867 = vmatprep.subr.mxu0 0.0
      %1868 = vmatpush1.msra.mxu0 0.0
      %1869 = vmatprep.subr.mxu0 0.0
      %1870 = vmatpush1.msra.mxu0 0.0
      %1871 = vmatprep.subr.mxu0 0.0
      %1872 = vmatpush1.msra.mxu0 0.0
      %1873 = vmatprep.subr.mxu0 0.0
      %1874 = vmatpush1.msra.mxu0 0.0
      %1875 = vmatprep.subr.mxu0 0.0
      %1876 = vmatpush1.msra.mxu0 0.0
      %1877 = vmatprep.subr.mxu0 0.0
      %1878 = vmatpush1.msra.mxu0 0.0
      %1879 = vmatprep.subr.mxu0 0.0
      %1880 = vmatpush1.msra.mxu0 0.0
      %1881 = vmatprep.subr.mxu0 0.0
      %1882 = vmatpush1.msra.mxu0 0.0
      %1883 = vmatprep.subr.mxu0 0.0
      %1884 = vmatpush1.msra.mxu0 0.0
      %1885 = vmatprep.subr.mxu0 0.0
      %1886 = vmatpush1.msra.mxu0 0.0
      %1887 = vmatprep.subr.mxu0 0.0
      %1888 = vmatpush1.msra.mxu0 0.0
      %1889 = vmatprep.subr.mxu0 0.0
      %1890 = vmatpush1.msra.mxu0 0.0
      %1891 = vmatprep.subr.mxu0 0.0
      %1892 = vmatpush1.msra.mxu0 0.0
      %1893 = vmatprep.subr.mxu0 0.0
      %1894 = vmatpush1.msra.mxu0 0.0
      %1895 = vmatprep.subr.mxu0 0.0
      %1896 = vmatpush1.msra.mxu0 0.0
      %1897 = vmatprep.subr.mxu0 0.0
      %1898 = vmatpush1.msra.mxu0 0.0
      %1899 = vmatprep.subr.mxu0 0.0
      %1900 = vmatpush1.msra.mxu0 0.0
      %1901 = vmatprep.mubr.f32.mxu0 0.0
      %1902 = vmatmul.mubr.f32.gmra.mrb[0].mxu0 %v1832
      %v1903 = vpop.f32.mrb[0].mxu0
      %v1904 = vadd.f32 0.0, %v1903
      %v1905 = vpop.f32.mrb[0].mxu0
      %1906 = vmatprep.mubr.f32.mxu0 0.0
      %1907 = vmatmul.mubr.f32.gmra.mrb[0].mxu0 %v1835
      %v1908 = vpop.f32.mrb[0].mxu0
      %v1909 = vadd.f32 0.0, %v1908
      %v1910 = vpop.f32.mrb[0].mxu0
      %1911 = vdwg.mxu0
      %v1913 = vsel %vm350, %v774, 0
      %v1916 = vsel %vm350, %v775, 0
      %1918 = vmatprep.subr.mxu0 0.0
      %1919 = vmatpush1.msra.mxu0 %v744
      %1920 = vmatprep.subr.mxu0 0.0
      %1921 = vmatpush1.msra.mxu0 0.0
      %1922 = vmatprep.subr.mxu0 0.0
      %1923 = vmatpush1.msra.mxu0 0.0
      %1924 = vmatprep.subr.mxu0 0.0
      %1925 = vmatpush1.msra.mxu0 0.0
      %1926 = vmatprep.subr.mxu0 0.0
      %1927 = vmatpush1.msra.mxu0 0.0
      %1928 = vmatprep.subr.mxu0 0.0
      %1929 = vmatpush1.msra.mxu0 0.0
      %1930 = vmatprep.subr.mxu0 0.0
      %1931 = vmatpush1.msra.mxu0 0.0
      %1932 = vmatprep.subr.mxu0 0.0
      %1933 = vmatpush1.msra.mxu0 0.0
      %1934 = vmatprep.subr.mxu0 0.0
      %1935 = vmatpush1.msra.mxu0 0.0
      %1936 = vmatprep.subr.mxu0 0.0
      %1937 = vmatpush1.msra.mxu0 0.0
      %1938 = vmatprep.subr.mxu0 0.0
      %1939 = vmatpush1.msra.mxu0 0.0
      %1940 = vmatprep.subr.mxu0 0.0
      %1941 = vmatpush1.msra.mxu0 0.0
      %1942 = vmatprep.subr.mxu0 0.0
      %1943 = vmatpush1.msra.mxu0 0.0
      %1944 = vmatprep.subr.mxu0 0.0
      %1945 = vmatpush1.msra.mxu0 0.0
      %1946 = vmatprep.subr.mxu0 0.0
      %1947 = vmatpush1.msra.mxu0 0.0
      %1948 = vmatprep.subr.mxu0 0.0
      %1949 = vmatpush1.msra.mxu0 0.0
      %1950 = vmatprep.subr.mxu0 0.0
      %1951 = vmatpush1.msra.mxu0 0.0
      %1952 = vmatprep.subr.mxu0 0.0
      %1953 = vmatpush1.msra.mxu0 0.0
      %1954 = vmatprep.subr.mxu0 0.0
      %1955 = vmatpush1.msra.mxu0 0.0
      %1956 = vmatprep.subr.mxu0 0.0
      %1957 = vmatpush1.msra.mxu0 0.0
      %1958 = vmatprep.subr.mxu0 0.0
      %1959 = vmatpush1.msra.mxu0 0.0
      %1960 = vmatprep.subr.mxu0 0.0
      %1961 = vmatpush1.msra.mxu0 0.0
      %1962 = vmatprep.subr.mxu0 0.0
      %1963 = vmatpush1.msra.mxu0 0.0
      %1964 = vmatprep.subr.mxu0 0.0
      %1965 = vmatpush1.msra.mxu0 0.0
      %1966 = vmatprep.subr.mxu0 0.0
      %1967 = vmatpush1.msra.mxu0 0.0
      %1968 = vmatprep.subr.mxu0 0.0
      %1969 = vmatpush1.msra.mxu0 0.0
      %1970 = vmatprep.subr.mxu0 0.0
      %1971 = vmatpush1.msra.mxu0 0.0
      %1972 = vmatprep.subr.mxu0 0.0
      %1973 = vmatpush1.msra.mxu0 0.0
      %1974 = vmatprep.subr.mxu0 0.0
      %1975 = vmatpush1.msra.mxu0 0.0
      %1976 = vmatprep.subr.mxu0 0.0
      %1977 = vmatpush1.msra.mxu0 0.0
      %1978 = vmatprep.subr.mxu0 0.0
      %1979 = vmatpush1.msra.mxu0 0.0
      %1980 = vmatprep.subr.mxu0 0.0
      %1981 = vmatpush1.msra.mxu0 0.0
      %1982 = vmatprep.mubr.f32.mxu0 0.0
      %1983 = vmatmul.mubr.f32.gmra.mrb[0].mxu0 %v1913
      %v1984 = vpop.f32.mrb[0].mxu0
      %v1985 = vadd.f32 0.0, %v1984
      %v1986 = vpop.f32.mrb[0].mxu0
      %1987 = vmatprep.mubr.f32.mxu0 0.0
      %1988 = vmatmul.mubr.f32.gmra.mrb[0].mxu0 %v1916
      %v1989 = vpop.f32.mrb[0].mxu0
      %v1990 = vadd.f32 0.0, %v1989
      %v1991 = vpop.f32.mrb[0].mxu0
      %1992 = vdwg.mxu0
      %v1994 = vsel %vm350, %v776, 0
      %v1997 = vsel %vm350, %v777, 0
      %1999 = vmatprep.subr.mxu0 0.0
      %2000 = vmatpush1.msra.mxu0 %v745
      %2001 = vmatprep.subr.mxu0 0.0
      %2002 = vmatpush1.msra.mxu0 0.0
      %2003 = vmatprep.subr.mxu0 0.0
      %2004 = vmatpush1.msra.mxu0 0.0
      %2005 = vmatprep.subr.mxu0 0.0
      %2006 = vmatpush1.msra.mxu0 0.0
      %2007 = vmatprep.subr.mxu0 0.0
      %2008 = vmatpush1.msra.mxu0 0.0
      %2009 = vmatprep.subr.mxu0 0.0
      %2010 = vmatpush1.msra.mxu0 0.0
      %2011 = vmatprep.subr.mxu0 0.0
      %2012 = vmatpush1.msra.mxu0 0.0
      %2013 = vmatprep.subr.mxu0 0.0
      %2014 = vmatpush1.msra.mxu0 0.0
      %2015 = vmatprep.subr.mxu0 0.0
      %2016 = vmatpush1.msra.mxu0 0.0
      %2017 = vmatprep.subr.mxu0 0.0
      %2018 = vmatpush1.msra.mxu0 0.0
      %2019 = vmatprep.subr.mxu0 0.0
      %2020 = vmatpush1.msra.mxu0 0.0
      %2021 = vmatprep.subr.mxu0 0.0
      %2022 = vmatpush1.msra.mxu0 0.0
      %2023 = vmatprep.subr.mxu0 0.0
      %2024 = vmatpush1.msra.mxu0 0.0
      %2025 = vmatprep.subr.mxu0 0.0
      %2026 = vmatpush1.msra.mxu0 0.0
      %2027 = vmatprep.subr.mxu0 0.0
      %2028 = vmatpush1.msra.mxu0 0.0
      %2029 = vmatprep.subr.mxu0 0.0
      %2030 = vmatpush1.msra.mxu0 0.0
      %2031 = vmatprep.subr.mxu0 0.0
      %2032 = vmatpush1.msra.mxu0 0.0
      %2033 = vmatprep.subr.mxu0 0.0
      %2034 = vmatpush1.msra.mxu0 0.0
      %2035 = vmatprep.subr.mxu0 0.0
      %2036 = vmatpush1.msra.mxu0 0.0
      %2037 = vmatprep.subr.mxu0 0.0
      %2038 = vmatpush1.msra.mxu0 0.0
      %2039 = vmatprep.subr.mxu0 0.0
      %2040 = vmatpush1.msra.mxu0 0.0
      %2041 = vmatprep.subr.mxu0 0.0
      %2042 = vmatpush1.msra.mxu0 0.0
      %2043 = vmatprep.subr.mxu0 0.0
      %2044 = vmatpush1.msra.mxu0 0.0
      %2045 = vmatprep.subr.mxu0 0.0
      %2046 = vmatpush1.msra.mxu0 0.0
      %2047 = vmatprep.subr.mxu0 0.0
      %2048 = vmatpush1.msra.mxu0 0.0
      %2049 = vmatprep.subr.mxu0 0.0
      %2050 = vmatpush1.msra.mxu0 0.0
      %2051 = vmatprep.subr.mxu0 0.0
      %2052 = vmatpush1.msra.mxu0 0.0
      %2053 = vmatprep.subr.mxu0 0.0
      %2054 = vmatpush1.msra.mxu0 0.0
      %2055 = vmatprep.subr.mxu0 0.0
      %2056 = vmatpush1.msra.mxu0 0.0
      %2057 = vmatprep.subr.mxu0 0.0
      %2058 = vmatpush1.msra.mxu0 0.0
      %2059 = vmatprep.subr.mxu0 0.0
      %2060 = vmatpush1.msra.mxu0 0.0
      %2061 = vmatprep.subr.mxu0 0.0
      %2062 = vmatpush1.msra.mxu0 0.0
      %2063 = vmatprep.mubr.f32.mxu0 0.0
      %2064 = vmatmul.mubr.f32.gmra.mrb[0].mxu0 %v1994
      %v2065 = vpop.f32.mrb[0].mxu0
      %v2066 = vadd.f32 0.0, %v2065
      %v2067 = vpop.f32.mrb[0].mxu0
      %2068 = vmatprep.mubr.f32.mxu0 0.0
      %2069 = vmatmul.mubr.f32.gmra.mrb[0].mxu0 %v1997
      %v2070 = vpop.f32.mrb[0].mxu0
      %v2071 = vadd.f32 0.0, %v2070
      %v2072 = vpop.f32.mrb[0].mxu0
      %2073 = vdwg.mxu0
      %2074 = vst.msk [vmem:[%s170] sm:$0xff] %vm341, %v851
      %2075 = vst.msk [vmem:[%s170 + $0x8] sm:$0xff] %vm341, %v856
      %2076 = vst.msk [vmem:[%s170 + $0x10] sm:$0xff] %vm341, %v932
      %2077 = vst.msk [vmem:[%s170 + $0x18] sm:$0xff] %vm341, %v937
      %2078 = vst.msk [vmem:[%s170 + $0x20] sm:$0xff] %vm341, %v1013
      %2079 = vst.msk [vmem:[%s170 + $0x28] sm:$0xff] %vm341, %v1018
      %2080 = vst.msk [vmem:[%s170 + $0x30] sm:$0xff] %vm341, %v1094
      %2081 = vst.msk [vmem:[%s170 + $0x38] sm:$0xff] %vm341, %v1099
      %2082 = vst.msk [vmem:[%s170 + $0x40] sm:$0xff] %vm341, %v1175
      %2083 = vst.msk [vmem:[%s170 + $0x48] sm:$0xff] %vm341, %v1180
      %2084 = vst.msk [vmem:[%s170 + $0x50] sm:$0xff] %vm341, %v1256
      %2085 = vst.msk [vmem:[%s170 + $0x58] sm:$0xff] %vm341, %v1261
      %2086 = vst.msk [vmem:[%s170 + $0x60] sm:$0xff] %vm341, %v1337
      %2087 = vst.msk [vmem:[%s170 + $0x68] sm:$0xff] %vm341, %v1342
      %2088 = vst.msk [vmem:[%s170 + $0x70] sm:$0xff] %vm341, %v1418
      %2089 = vst.msk [vmem:[%s170 + $0x78] sm:$0xff] %vm341, %v1423
      %2090 = vst.msk [vmem:[%s170 + $0x80] sm:$0xff] %vm341, %v1499
      %2091 = vst.msk [vmem:[%s170 + $0x88] sm:$0xff] %vm341, %v1504
      %2092 = vst.msk [vmem:[%s170 + $0x90] sm:$0xff] %vm341, %v1580
      %2093 = vst.msk [vmem:[%s170 + $0x98] sm:$0xff] %vm341, %v1585
      %2094 = vst.msk [vmem:[%s170 + $0xa0] sm:$0xff] %vm341, %v1661
      %2095 = vst.msk [vmem:[%s170 + $0xa8] sm:$0xff] %vm341, %v1666
      %2096 = vst.msk [vmem:[%s170 + $0xb0] sm:$0xff] %vm341, %v1742
      %2097 = vst.msk [vmem:[%s170 + $0xb8] sm:$0xff] %vm341, %v1747
      %2098 = vst.msk [vmem:[%s170 + $0xc0] sm:$0xff] %vm341, %v1823
      %2099 = vst.msk [vmem:[%s170 + $0xc8] sm:$0xff] %vm341, %v1828
      %2100 = vst.msk [vmem:[%s170 + $0xd0] sm:$0xff] %vm341, %v1904
      %2101 = vst.msk [vmem:[%s170 + $0xd8] sm:$0xff] %vm341, %v1909
      %2102 = vst.msk [vmem:[%s170 + $0xe0] sm:$0xff] %vm341, %v1985
      %2103 = vst.msk [vmem:[%s170 + $0xe8] sm:$0xff] %vm341, %v1990
      %2104 = vst.msk [vmem:[%s170 + $0xf0] sm:$0xff] %vm341, %v2066
      %2105 = vst.msk [vmem:[%s170 + $0xf8] sm:$0xff] %vm341, %v2071
      %p2106 = scmp.lt.s32.totalorder %s14, 1
      %s2107 = scalar_select %p2106, %s14, 1
      %s2108 = smul.addr %s2107, 32
      %s2109 = smul.addr %s2108, 8
      %s2110 = scalar_lea.vmem %s3, %s2109
      // Predicated region
      $region33: #{patchcore_forward.12} parent=31 // pred_check
        %p2111 = pneg %p100
      $region34: #{patchcore_forward.12} parent=31 // pred_check_branch
        %2113 = sbr.rel (%p2111) target = $region36
      $region35: #{patchcore_forward.12} parent=31 // pred_region
        _
      $region36: #{patchcore_forward.12} parent=31 // pred_fallthru
        _
    $region32: #{patchcore_forward.12} parent=5 // pred_fallthru
      _
    %p2114 = scmp.le.s32.totalorder 2, %s9
    // Predicated region
    $region37: #{patchcore_forward.12} parent=5 // pred_check
      %p2115 = pneg %p2114
    $region38: #{patchcore_forward.12} parent=5 // pred_check_branch
      %2117 = sbr.rel (%p2115) target = $region40
    $region39: #{patchcore_forward.12} parent=5 // pred_region
      %s2118 = ssub.s32 %s9, 2
      // Predicated region
      $region41: #{patchcore_forward.12} parent=39 // pred_check
        %p2119 = pneg %p106
      $region42: #{patchcore_forward.12} parent=39 // pred_check_branch
        %2121 = sbr.rel (%p2119) target = $region44
      $region43: #{patchcore_forward.12} parent=39 // pred_region
        %p2122 = scmp.lt.s32.totalorder %s15, 1
        %s2123 = scalar_select %p2122, %s15, 1
        %s2124 = smul.addr %s2123, 32
        %s2125 = smul.addr %s2124, 8
        %s2126 = scalar_lea.vmem %s3, %s2125
      $region44: #{patchcore_forward.12} parent=39 // pred_fallthru
        _
    $region40: #{patchcore_forward.12} parent=5 // pred_fallthru
      _
  $region6: #{patchcore_forward.12} parent=0 // loop_footer
    %s13 = sadd.s32 1, %s9
  $region7: #{patchcore_forward.12} parent=0 // loop_footer_branch
    %8 = sbr.rel target = $region3
  $region8: #{patchcore_forward.12} parent=0 // loop_exit
    _

// kernel: patchcore_forward.13
$region0: #{patchcore_forward.13}
  #allocation0 [shape = 'u32[]', space=smem, size = 0x4, offset = 0x4, fixed_abs, tag = 'smem constant byte address 0x4 - core index']
  #allocation1 [shape = 'u32[144,128]{1,0:T(1,128)}', space=vmem, size = 0x12000, scoped, tag = 'internal scratch']
  #allocation2 [shape = 'f32[1,512]{1,0:T(1,128)}', space=vmem, size = 0x800, scoped, tag = 'scratch operand']
  #allocation3 [shape = 's32[1,512]{1,0:T(1,128)}', space=vmem, size = 0x800, scoped, tag = 'scratch operand']
  #allocation4 [shape = 's32[128,512]{1,0:T(8,128)}', space=vmem, size = 0x40000, scoped, tag = 'scratch operand']
  %s0 = inlined_call_operand.vmem [shape: bf16[128,512], index: 0, kind: input, shape index: {}]
  %s1 = inlined_call_operand.vmem [shape: f32[1,512], index: 1, kind: input, shape index: {}]
  %s2 = inlined_call_operand.vmem [shape: bf16[128,128], index: 2, kind: input, shape index: {}]
  %s3 = inlined_call_operand.vmem [shape: f32[128,1], index: 3, kind: input, shape index: {}]
  %s4 = inlined_call_operand.vmem [shape: f32[1,512], index: 4, kind: output, shape index: {0}]
  %s5 = inlined_call_operand.vmem [shape: s32[1,512], index: 5, kind: output, shape index: {1}]
  %6 = xla_tuple %s4, %s5
  %s7 = sld [smem:[#allocation0]]
  $region42: #{patchcore_forward.13} parent=0
    _
  %s9 = ssub.s32 1, %s7
  %s10 = scalar_select 0, %s9, %s7
  // Predicated region
  $region2: #{patchcore_forward.13} parent=0 // pred_check
    _
  $region3: #{patchcore_forward.13} parent=0 // pred_check_branch
    %12 = sbr.rel (0) target = $region5
  $region4: #{patchcore_forward.13} parent=0 // pred_region
    _
  $region5: #{patchcore_forward.13} parent=0 // pred_fallthru
    _
  // Predicated region
  $region6: #{patchcore_forward.13} parent=0 // pred_check
    _
  $region7: #{patchcore_forward.13} parent=0 // pred_check_branch
    %14 = sbr.rel (0) target = $region9
  $region8: #{patchcore_forward.13} parent=0 // pred_region
    _
  $region9: #{patchcore_forward.13} parent=0 // pred_fallthru
    _
  // Predicated region
  $region10: #{patchcore_forward.13} parent=0 // pred_check
    _
  $region11: #{patchcore_forward.13} parent=0 // pred_check_branch
    %16 = sbr.rel (0) target = $region13
  $region12: #{patchcore_forward.13} parent=0 // pred_region
    _
  $region13: #{patchcore_forward.13} parent=0 // pred_fallthru
    _
  // Predicated region
  $region14: #{patchcore_forward.13} parent=0 // pred_check
    _
  $region15: #{patchcore_forward.13} parent=0 // pred_check_branch
    %18 = sbr.rel (0) target = $region17
  $region16: #{patchcore_forward.13} parent=0 // pred_region
    _
  $region17: #{patchcore_forward.13} parent=0 // pred_fallthru
    _
  %p20 = scmp.eq.s32.totalorder 0, 0
  // Predicated region
  $region18: #{patchcore_forward.13} parent=0 // pred_check
    %p21 = pneg %p20
  $region19: #{patchcore_forward.13} parent=0 // pred_check_branch
    %23 = sbr.rel (%p21) target = $region21
  $region20: #{patchcore_forward.13} parent=0 // pred_region
    %v24 = vlaneseq
    %vm25 = vcmp.ge.s32.totalorder %v24, 0
    %vm26 = vcmp.lt.s32.totalorder %v24, 512
    %vm27 = vmand %vm25, %vm26
    %28 = vst.msk [vmem:[#allocation2] sm:$0xf] %vm27, inf
    %29 = vst.msk [vmem:[#allocation3] sm:$0xf] %vm27, 0
    %v30 = vlaneseq
    %v31 = vshrl.u32 %v30, 7
    %v32 = vadd.s32 %v31, 8
    %v33 = vadd.s32 %v31, 16
    %v34 = vadd.s32 %v31, 24
    %v35 = vadd.s32 %v31, 32
    %v36 = vadd.s32 %v31, 40
    %v37 = vadd.s32 %v31, 48
    %v38 = vadd.s32 %v31, 56
    %v39 = vadd.s32 %v31, 64
    %v40 = vadd.s32 %v31, 72
    %v41 = vadd.s32 %v31, 80
    %v42 = vadd.s32 %v31, 88
    %v43 = vadd.s32 %v31, 96
    %v44 = vadd.s32 %v31, 104
    %v45 = vadd.s32 %v31, 112
    %v46 = vadd.s32 %v31, 120
    %47 = vst [vmem:[#allocation4] sm:$0xff] %v31
    %48 = vst [vmem:[#allocation4 + $0x8] sm:$0xff] %v31
    %49 = vst [vmem:[#allocation4 + $0x10] sm:$0xff] %v31
    %50 = vst [vmem:[#allocation4 + $0x18] sm:$0xff] %v31
    %51 = vst [vmem:[#allocation4 + $0x20] sm:$0xff] %v32
    %52 = vst [vmem:[#allocation4 + $0x28] sm:$0xff] %v32
    %53 = vst [vmem:[#allocation4 + $0x30] sm:$0xff] %v32
    %54 = vst [vmem:[#allocation4 + $0x38] sm:$0xff] %v32
    %55 = vst [vmem:[#allocation4 + $0x40] sm:$0xff] %v33
    %56 = vst [vmem:[#allocation4 + $0x48] sm:$0xff] %v33
    %57 = vst [vmem:[#allocation4 + $0x50] sm:$0xff] %v33
    %58 = vst [vmem:[#allocation4 + $0x58] sm:$0xff] %v33
    %59 = vst [vmem:[#allocation4 + $0x60] sm:$0xff] %v34
    %60 = vst [vmem:[#allocation4 + $0x68] sm:$0xff] %v34
    %61 = vst [vmem:[#allocation4 + $0x70] sm:$0xff] %v34
    %62 = vst [vmem:[#allocation4 + $0x78] sm:$0xff] %v34
    %63 = vst [vmem:[#allocation4 + $0x80] sm:$0xff] %v35
    %64 = vst [vmem:[#allocation4 + $0x88] sm:$0xff] %v35
    %65 = vst [vmem:[#allocation4 + $0x90] sm:$0xff] %v35
    %66 = vst [vmem:[#allocation4 + $0x98] sm:$0xff] %v35
    %67 = vst [vmem:[#allocation4 + $0xa0] sm:$0xff] %v36
    %68 = vst [vmem:[#allocation4 + $0xa8] sm:$0xff] %v36
    %69 = vst [vmem:[#allocation4 + $0xb0] sm:$0xff] %v36
    %70 = vst [vmem:[#allocation4 + $0xb8] sm:$0xff] %v36
    %71 = vst [vmem:[#allocation4 + $0xc0] sm:$0xff] %v37
    %72 = vst [vmem:[#allocation4 + $0xc8] sm:$0xff] %v37
    %73 = vst [vmem:[#allocation4 + $0xd0] sm:$0xff] %v37
    %74 = vst [vmem:[#allocation4 + $0xd8] sm:$0xff] %v37
    %75 = vst [vmem:[#allocation4 + $0xe0] sm:$0xff] %v38
    %76 = vst [vmem:[#allocation4 + $0xe8] sm:$0xff] %v38
    %77 = vst [vmem:[#allocation4 + $0xf0] sm:$0xff] %v38
    %78 = vst [vmem:[#allocation4 + $0xf8] sm:$0xff] %v38
    %79 = vst [vmem:[#allocation4 + $0x100] sm:$0xff] %v39
    %80 = vst [vmem:[#allocation4 + $0x108] sm:$0xff] %v39
    %81 = vst [vmem:[#allocation4 + $0x110] sm:$0xff] %v39
    %82 = vst [vmem:[#allocation4 + $0x118] sm:$0xff] %v39
    %83 = vst [vmem:[#allocation4 + $0x120] sm:$0xff] %v40
    %84 = vst [vmem:[#allocation4 + $0x128] sm:$0xff] %v40
    %85 = vst [vmem:[#allocation4 + $0x130] sm:$0xff] %v40
    %86 = vst [vmem:[#allocation4 + $0x138] sm:$0xff] %v40
    %87 = vst [vmem:[#allocation4 + $0x140] sm:$0xff] %v41
    %88 = vst [vmem:[#allocation4 + $0x148] sm:$0xff] %v41
    %89 = vst [vmem:[#allocation4 + $0x150] sm:$0xff] %v41
    %90 = vst [vmem:[#allocation4 + $0x158] sm:$0xff] %v41
    %91 = vst [vmem:[#allocation4 + $0x160] sm:$0xff] %v42
    %92 = vst [vmem:[#allocation4 + $0x168] sm:$0xff] %v42
    %93 = vst [vmem:[#allocation4 + $0x170] sm:$0xff] %v42
    %94 = vst [vmem:[#allocation4 + $0x178] sm:$0xff] %v42
    %95 = vst [vmem:[#allocation4 + $0x180] sm:$0xff] %v43
    %96 = vst [vmem:[#allocation4 + $0x188] sm:$0xff] %v43
    %97 = vst [vmem:[#allocation4 + $0x190] sm:$0xff] %v43
    %98 = vst [vmem:[#allocation4 + $0x198] sm:$0xff] %v43
    %99 = vst [vmem:[#allocation4 + $0x1a0] sm:$0xff] %v44
    %100 = vst [vmem:[#allocation4 + $0x1a8] sm:$0xff] %v44
    %101 = vst [vmem:[#allocation4 + $0x1b0] sm:$0xff] %v44
    %102 = vst [vmem:[#allocation4 + $0x1b8] sm:$0xff] %v44
    %103 = vst [vmem:[#allocation4 + $0x1c0] sm:$0xff] %v45
    %104 = vst [vmem:[#allocation4 + $0x1c8] sm:$0xff] %v45
    %105 = vst [vmem:[#allocation4 + $0x1d0] sm:$0xff] %v45
    %106 = vst [vmem:[#allocation4 + $0x1d8] sm:$0xff] %v45
    %107 = vst [vmem:[#allocation4 + $0x1e0] sm:$0xff] %v46
    %108 = vst [vmem:[#allocation4 + $0x1e8] sm:$0xff] %v46
    %109 = vst [vmem:[#allocation4 + $0x1f0] sm:$0xff] %v46
    %110 = vst [vmem:[#allocation4 + $0x1f8] sm:$0xff] %v46
  $region21: #{patchcore_forward.13} parent=0 // pred_fallthru
    _
  %v111 = vld [vmem:[%s2] sm:$0xf]
  %v112 = vld [vmem:[%s2 + $0x4] sm:$0xf]
  %v113 = vld [vmem:[%s2 + $0x8] sm:$0xf]
  %v114 = vld [vmem:[%s2 + $0xc] sm:$0xf]
  %v115 = vld [vmem:[%s2 + $0x10] sm:$0xf]
  %v116 = vld [vmem:[%s2 + $0x14] sm:$0xf]
  %v117 = vld [vmem:[%s2 + $0x18] sm:$0xf]
  %v118 = vld [vmem:[%s2 + $0x1c] sm:$0xf]
  %v119 = vld [vmem:[%s2 + $0x20] sm:$0xf]
  %v120 = vld [vmem:[%s2 + $0x24] sm:$0xf]
  %v121 = vld [vmem:[%s2 + $0x28] sm:$0xf]
  %v122 = vld [vmem:[%s2 + $0x2c] sm:$0xf]
  %v123 = vld [vmem:[%s2 + $0x30] sm:$0xf]
  %v124 = vld [vmem:[%s2 + $0x34] sm:$0xf]
  %v125 = vld [vmem:[%s2 + $0x38] sm:$0xf]
  %v126 = vld [vmem:[%s2 + $0x3c] sm:$0xf]
  %v127 = vld [vmem:[%s0] sm:$0xff]
  %v128 = vld [vmem:[%s0 + $0x8] sm:$0xff]
  %v129 = vld [vmem:[%s0 + $0x10] sm:$0xff]
  %v130 = vld [vmem:[%s0 + $0x18] sm:$0xff]
  %v131 = vld [vmem:[%s0 + $0x20] sm:$0xff]
  %v132 = vld [vmem:[%s0 + $0x28] sm:$0xff]
  %v133 = vld [vmem:[%s0 + $0x30] sm:$0xff]
  %v134 = vld [vmem:[%s0 + $0x38] sm:$0xff]
  %v135 = vld [vmem:[%s0 + $0x40] sm:$0xff]
  %v136 = vld [vmem:[%s0 + $0x48] sm:$0xff]
  %v137 = vld [vmem:[%s0 + $0x50] sm:$0xff]
  %v138 = vld [vmem:[%s0 + $0x58] sm:$0xff]
  %v139 = vld [vmem:[%s0 + $0x60] sm:$0xff]
  %v140 = vld [vmem:[%s0 + $0x68] sm:$0xff]
  %v141 = vld [vmem:[%s0 + $0x70] sm:$0xff]
  %v142 = vld [vmem:[%s0 + $0x78] sm:$0xff]
  %v143 = vld [vmem:[%s0 + $0x80] sm:$0xff]
  %v144 = vld [vmem:[%s0 + $0x88] sm:$0xff]
  %v145 = vld [vmem:[%s0 + $0x90] sm:$0xff]
  %v146 = vld [vmem:[%s0 + $0x98] sm:$0xff]
  %v147 = vld [vmem:[%s0 + $0xa0] sm:$0xff]
  %v148 = vld [vmem:[%s0 + $0xa8] sm:$0xff]
  %v149 = vld [vmem:[%s0 + $0xb0] sm:$0xff]
  %v150 = vld [vmem:[%s0 + $0xb8] sm:$0xff]
  %v151 = vld [vmem:[%s0 + $0xc0] sm:$0xff]
  %v152 = vld [vmem:[%s0 + $0xc8] sm:$0xff]
  %v153 = vld [vmem:[%s0 + $0xd0] sm:$0xff]
  %v154 = vld [vmem:[%s0 + $0xd8] sm:$0xff]
  %v155 = vld [vmem:[%s0 + $0xe0] sm:$0xff]
  %v156 = vld [vmem:[%s0 + $0xe8] sm:$0xff]
  %v157 = vld [vmem:[%s0 + $0xf0] sm:$0xff]
  %v158 = vld [vmem:[%s0 + $0xf8] sm:$0xff]
  %v175 = vunpack.c.l.b16 %v111
  %v176 = vunpack.c.l.b16 %v112
  %v177 = vunpack.c.l.b16 %v113
  %v178 = vunpack.c.l.b16 %v114
  %v179 = vunpack.c.l.b16 %v115
  %v180 = vunpack.c.l.b16 %v116
  %v181 = vunpack.c.l.b16 %v117
  %v182 = vunpack.c.l.b16 %v118
  %v183 = vunpack.c.l.b16 %v119
  %v184 = vunpack.c.l.b16 %v120
  %v185 = vunpack.c.l.b16 %v121
  %v186 = vunpack.c.l.b16 %v122
  %v187 = vunpack.c.l.b16 %v123
  %v188 = vunpack.c.l.b16 %v124
  %v189 = vunpack.c.l.b16 %v125
  %v190 = vunpack.c.l.b16 %v126
  %v191 = vpack.c.b16 %v176, %v175
  %v192 = vpack.c.b16 %v178, %v177
  %v193 = vpack.c.b16 %v180, %v179
  %v194 = vpack.c.b16 %v182, %v181
  %v195 = vpack.c.b16 %v184, %v183
  %v196 = vpack.c.b16 %v186, %v185
  %v197 = vpack.c.b16 %v188, %v187
  %v198 = vpack.c.b16 %v190, %v189
  %v239 = vunpack.c.l.b16 %v127
  %v240 = vunpack.c.h.b16 %v127
  %v241 = vunpack.c.l.b16 %v128
  %v242 = vunpack.c.h.b16 %v128
  %v243 = vunpack.c.l.b16 %v129
  %v244 = vunpack.c.h.b16 %v129
  %v245 = vunpack.c.l.b16 %v130
  %v246 = vunpack.c.h.b16 %v130
  %v247 = vunpack.c.l.b16 %v131
  %v248 = vunpack.c.h.b16 %v131
  %v249 = vunpack.c.l.b16 %v132
  %v250 = vunpack.c.h.b16 %v132
  %v251 = vunpack.c.l.b16 %v133
  %v252 = vunpack.c.h.b16 %v133
  %v253 = vunpack.c.l.b16 %v134
  %v254 = vunpack.c.h.b16 %v134
  %v255 = vunpack.c.l.b16 %v135
  %v256 = vunpack.c.h.b16 %v135
  %v257 = vunpack.c.l.b16 %v136
  %v258 = vunpack.c.h.b16 %v136
  %v259 = vunpack.c.l.b16 %v137
  %v260 = vunpack.c.h.b16 %v137
  %v261 = vunpack.c.l.b16 %v138
  %v262 = vunpack.c.h.b16 %v138
  %v263 = vunpack.c.l.b16 %v139
  %v264 = vunpack.c.h.b16 %v139
  %v265 = vunpack.c.l.b16 %v140
  %v266 = vunpack.c.h.b16 %v140
  %v267 = vunpack.c.l.b16 %v141
  %v268 = vunpack.c.h.b16 %v141
  %v269 = vunpack.c.l.b16 %v142
  %v270 = vunpack.c.h.b16 %v142
  %v271 = vunpack.c.l.b16 %v143
  %v272 = vunpack.c.h.b16 %v143
  %v273 = vunpack.c.l.b16 %v144
  %v274 = vunpack.c.h.b16 %v144
  %v275 = vunpack.c.l.b16 %v145
  %v276 = vunpack.c.h.b16 %v145
  %v277 = vunpack.c.l.b16 %v146
  %v278 = vunpack.c.h.b16 %v146
  %v279 = vunpack.c.l.b16 %v147
  %v280 = vunpack.c.h.b16 %v147
  %v281 = vunpack.c.l.b16 %v148
  %v282 = vunpack.c.h.b16 %v148
  %v283 = vunpack.c.l.b16 %v149
  %v284 = vunpack.c.h.b16 %v149
  %v285 = vunpack.c.l.b16 %v150
  %v286 = vunpack.c.h.b16 %v150
  %v287 = vunpack.c.l.b16 %v151
  %v288 = vunpack.c.h.b16 %v151
  %v289 = vunpack.c.l.b16 %v152
  %v290 = vunpack.c.h.b16 %v152
  %v291 = vunpack.c.l.b16 %v153
  %v292 = vunpack.c.h.b16 %v153
  %v293 = vunpack.c.l.b16 %v154
  %v294 = vunpack.c.h.b16 %v154
  %v295 = vunpack.c.l.b16 %v155
  %v296 = vunpack.c.h.b16 %v155
  %v297 = vunpack.c.l.b16 %v156
  %v298 = vunpack.c.h.b16 %v156
  %v299 = vunpack.c.l.b16 %v157
  %v300 = vunpack.c.h.b16 %v157
  %v301 = vunpack.c.l.b16 %v158
  %v302 = vunpack.c.h.b16 %v158
  %v303 = vpack.c.b16 %v243, %v239
  %v304 = vpack.c.b16 %v244, %v240
  %v305 = vpack.c.b16 %v245, %v241
  %v306 = vpack.c.b16 %v246, %v242
  %v307 = vpack.c.b16 %v251, %v247
  %v308 = vpack.c.b16 %v252, %v248
  %v309 = vpack.c.b16 %v253, %v249
  %v310 = vpack.c.b16 %v254, %v250
  %v311 = vpack.c.b16 %v259, %v255
  %v312 = vpack.c.b16 %v260, %v256
  %v313 = vpack.c.b16 %v261, %v257
  %v314 = vpack.c.b16 %v262, %v258
  %v315 = vpack.c.b16 %v267, %v263
  %v316 = vpack.c.b16 %v268, %v264
  %v317 = vpack.c.b16 %v269, %v265
  %v318 = vpack.c.b16 %v270, %v266
  %v319 = vpack.c.b16 %v275, %v271
  %v320 = vpack.c.b16 %v276, %v272
  %v321 = vpack.c.b16 %v277, %v273
  %v322 = vpack.c.b16 %v278, %v274
  %v323 = vpack.c.b16 %v283, %v279
  %v324 = vpack.c.b16 %v284, %v280
  %v325 = vpack.c.b16 %v285, %v281
  %v326 = vpack.c.b16 %v286, %v282
  %v327 = vpack.c.b16 %v291, %v287
  %v328 = vpack.c.b16 %v292, %v288
  %v329 = vpack.c.b16 %v293, %v289
  %v330 = vpack.c.b16 %v294, %v290
  %v331 = vpack.c.b16 %v299, %v295
  %v332 = vpack.c.b16 %v300, %v296
  %v333 = vpack.c.b16 %v301, %v297
  %v334 = vpack.c.b16 %v302, %v298
  %367 = vmatprep.subr.bf16.mxu0 %v304
  %368 = vmatpush1.bf16.msra.mxu0 %v303
  %369 = vmatprep.subr.bf16.mxu0 %v308
  %370 = vmatpush1.bf16.msra.mxu0 %v307
  %371 = vmatprep.subr.bf16.mxu0 %v312
  %372 = vmatpush1.bf16.msra.mxu0 %v311
  %373 = vmatprep.subr.bf16.mxu0 %v316
  %374 = vmatpush1.bf16.msra.mxu0 %v315
  %375 = vmatprep.subr.bf16.mxu0 %v320
  %376 = vmatpush1.bf16.msra.mxu0 %v319
  %377 = vmatprep.subr.bf16.mxu0 %v324
  %378 = vmatpush1.bf16.msra.mxu0 %v323
  %379 = vmatprep.subr.bf16.mxu0 %v328
  %380 = vmatpush1.bf16.msra.mxu0 %v327
  %381 = vmatprep.subr.bf16.mxu0 %v332
  %382 = vmatpush1.bf16.msra.mxu0 %v331
  %383 = vmatprep.subr.bf16.mxu0 0
  %384 = vmatpush1.bf16.msra.mxu0 0
  %385 = vmatprep.subr.bf16.mxu0 0
  %386 = vmatpush1.bf16.msra.mxu0 0
  %387 = vmatprep.subr.bf16.mxu0 0
  %388 = vmatpush1.bf16.msra.mxu0 0
  %389 = vmatprep.subr.bf16.mxu0 0
  %390 = vmatpush1.bf16.msra.mxu0 0
  %391 = vmatprep.subr.bf16.mxu0 0
  %392 = vmatpush1.bf16.msra.mxu0 0
  %393 = vmatprep.subr.bf16.mxu0 0
  %394 = vmatpush1.bf16.msra.mxu0 0
  %395 = vmatprep.subr.bf16.mxu0 0
  %396 = vmatpush1.bf16.msra.mxu0 0
  %397 = vmatprep.subr.bf16.mxu0 0
  %398 = vmatpush1.bf16.msra.mxu0 0
  %399 = vmatprep.mubr.bf16.mxu0 0
  %400 = vmatmul.mubr.bf16.gmra.mrb[0].mxu0 %v191
  %v401 = vpop.f32.mrb[0].mxu0
  %v402 = vadd.f32 0.0, %v401
  %v403 = vpop.f32.mrb[0].mxu0
  %v404 = vadd.f32 0.0, %v403
  %v405 = vpop.f32.mrb[0].mxu0
  %v406 = vadd.f32 0.0, %v405
  %v407 = vpop.f32.mrb[0].mxu0
  %v408 = vadd.f32 0.0, %v407
  %409 = vmatprep.mubr.bf16.mxu0 0
  %410 = vmatmul.mubr.bf16.gmra.mrb[0].mxu0 %v192
  %v411 = vpop.f32.mrb[0].mxu0
  %v412 = vadd.f32 0.0, %v411
  %v413 = vpop.f32.mrb[0].mxu0
  %v414 = vadd.f32 0.0, %v413
  %v415 = vpop.f32.mrb[0].mxu0
  %v416 = vadd.f32 0.0, %v415
  %v417 = vpop.f32.mrb[0].mxu0
  %v418 = vadd.f32 0.0, %v417
  %419 = vmatprep.mubr.bf16.mxu0 0
  %420 = vmatmul.mubr.bf16.gmra.mrb[0].mxu0 %v193
  %v421 = vpop.f32.mrb[0].mxu0
  %v422 = vadd.f32 0.0, %v421
  %v423 = vpop.f32.mrb[0].mxu0
  %v424 = vadd.f32 0.0, %v423
  %v425 = vpop.f32.mrb[0].mxu0
  %v426 = vadd.f32 0.0, %v425
  %v427 = vpop.f32.mrb[0].mxu0
  %v428 = vadd.f32 0.0, %v427
  %429 = vmatprep.mubr.bf16.mxu0 0
  %430 = vmatmul.mubr.bf16.gmra.mrb[0].mxu0 %v194
  %v431 = vpop.f32.mrb[0].mxu0
  %v432 = vadd.f32 0.0, %v431
  %v433 = vpop.f32.mrb[0].mxu0
  %v434 = vadd.f32 0.0, %v433
  %v435 = vpop.f32.mrb[0].mxu0
  %v436 = vadd.f32 0.0, %v435
  %v437 = vpop.f32.mrb[0].mxu0
  %v438 = vadd.f32 0.0, %v437
  %439 = vmatprep.mubr.bf16.mxu0 0
  %440 = vmatmul.mubr.bf16.gmra.mrb[0].mxu0 %v195
  %v441 = vpop.f32.mrb[0].mxu0
  %v442 = vadd.f32 0.0, %v441
  %v443 = vpop.f32.mrb[0].mxu0
  %v444 = vadd.f32 0.0, %v443
  %v445 = vpop.f32.mrb[0].mxu0
  %v446 = vadd.f32 0.0, %v445
  %v447 = vpop.f32.mrb[0].mxu0
  %v448 = vadd.f32 0.0, %v447
  %449 = vmatprep.mubr.bf16.mxu0 0
  %450 = vmatmul.mubr.bf16.gmra.mrb[0].mxu0 %v196
  %v451 = vpop.f32.mrb[0].mxu0
  %v452 = vadd.f32 0.0, %v451
  %v453 = vpop.f32.mrb[0].mxu0
  %v454 = vadd.f32 0.0, %v453
  %v455 = vpop.f32.mrb[0].mxu0
  %v456 = vadd.f32 0.0, %v455
  %v457 = vpop.f32.mrb[0].mxu0
  %v458 = vadd.f32 0.0, %v457
  %459 = vmatprep.mubr.bf16.mxu0 0
  %460 = vmatmul.mubr.bf16.gmra.mrb[0].mxu0 %v197
  %v461 = vpop.f32.mrb[0].mxu0
  %v462 = vadd.f32 0.0, %v461
  %v463 = vpop.f32.mrb[0].mxu0
  %v464 = vadd.f32 0.0, %v463
  %v465 = vpop.f32.mrb[0].mxu0
  %v466 = vadd.f32 0.0, %v465
  %v467 = vpop.f32.mrb[0].mxu0
  %v468 = vadd.f32 0.0, %v467
  %469 = vmatprep.mubr.bf16.mxu0 0
  %470 = vmatmul.mubr.bf16.gmra.mrb[0].mxu0 %v198
  %v471 = vpop.f32.mrb[0].mxu0
  %v472 = vadd.f32 0.0, %v471
  %v473 = vpop.f32.mrb[0].mxu0
  %v474 = vadd.f32 0.0, %v473
  %v475 = vpop.f32.mrb[0].mxu0
  %v476 = vadd.f32 0.0, %v475
  %v477 = vpop.f32.mrb[0].mxu0
  %v478 = vadd.f32 0.0, %v477
  %479 = vdwg.mxu0
  %480 = vmatprep.subr.bf16.mxu0 %v306
  %481 = vmatpush1.bf16.msra.mxu0 %v305
  %482 = vmatprep.subr.bf16.mxu0 %v310
  %483 = vmatpush1.bf16.msra.mxu0 %v309
  %484 = vmatprep.subr.bf16.mxu0 %v314
  %485 = vmatpush1.bf16.msra.mxu0 %v313
  %486 = vmatprep.subr.bf16.mxu0 %v318
  %487 = vmatpush1.bf16.msra.mxu0 %v317
  %488 = vmatprep.subr.bf16.mxu0 %v322
  %489 = vmatpush1.bf16.msra.mxu0 %v321
  %490 = vmatprep.subr.bf16.mxu0 %v326
  %491 = vmatpush1.bf16.msra.mxu0 %v325
  %492 = vmatprep.subr.bf16.mxu0 %v330
  %493 = vmatpush1.bf16.msra.mxu0 %v329
  %494 = vmatprep.subr.bf16.mxu0 %v334
  %495 = vmatpush1.bf16.msra.mxu0 %v333
  %496 = vmatprep.subr.bf16.mxu0 0
  %497 = vmatpush1.bf16.msra.mxu0 0
  %498 = vmatprep.subr.bf16.mxu0 0
  %499 = vmatpush1.bf16.msra.mxu0 0
  %500 = vmatprep.subr.bf16.mxu0 0
  %501 = vmatpush1.bf16.msra.mxu0 0
  %502 = vmatprep.subr.bf16.mxu0 0
  %503 = vmatpush1.bf16.msra.mxu0 0
  %504 = vmatprep.subr.bf16.mxu0 0
  %505 = vmatpush1.bf16.msra.mxu0 0
  %506 = vmatprep.subr.bf16.mxu0 0
  %507 = vmatpush1.bf16.msra.mxu0 0
  %508 = vmatprep.subr.bf16.mxu0 0
  %509 = vmatpush1.bf16.msra.mxu0 0
  %510 = vmatprep.subr.bf16.mxu0 0
  %511 = vmatpush1.bf16.msra.mxu0 0
  %512 = vmatprep.mubr.bf16.mxu0 0
  %513 = vmatmul.mubr.bf16.gmra.mrb[0].mxu0 %v191
  %v514 = vpop.f32.mrb[0].mxu0
  %v515 = vadd.f32 0.0, %v514
  %v516 = vpop.f32.mrb[0].mxu0
  %v517 = vadd.f32 0.0, %v516
  %v518 = vpop.f32.mrb[0].mxu0
  %v519 = vadd.f32 0.0, %v518
  %v520 = vpop.f32.mrb[0].mxu0
  %v521 = vadd.f32 0.0, %v520
  %522 = vmatprep.mubr.bf16.mxu0 0
  %523 = vmatmul.mubr.bf16.gmra.mrb[0].mxu0 %v192
  %v524 = vpop.f32.mrb[0].mxu0
  %v525 = vadd.f32 0.0, %v524
  %v526 = vpop.f32.mrb[0].mxu0
  %v527 = vadd.f32 0.0, %v526
  %v528 = vpop.f32.mrb[0].mxu0
  %v529 = vadd.f32 0.0, %v528
  %v530 = vpop.f32.mrb[0].mxu0
  %v531 = vadd.f32 0.0, %v530
  %532 = vmatprep.mubr.bf16.mxu0 0
  %533 = vmatmul.mubr.bf16.gmra.mrb[0].mxu0 %v193
  %v534 = vpop.f32.mrb[0].mxu0
  %v535 = vadd.f32 0.0, %v534
  %v536 = vpop.f32.mrb[0].mxu0
  %v537 = vadd.f32 0.0, %v536
  %v538 = vpop.f32.mrb[0].mxu0
  %v539 = vadd.f32 0.0, %v538
  %v540 = vpop.f32.mrb[0].mxu0
  %v541 = vadd.f32 0.0, %v540
  %542 = vmatprep.mubr.bf16.mxu0 0
  %543 = vmatmul.mubr.bf16.gmra.mrb[0].mxu0 %v194
  %v544 = vpop.f32.mrb[0].mxu0
  %v545 = vadd.f32 0.0, %v544
  %v546 = vpop.f32.mrb[0].mxu0
  %v547 = vadd.f32 0.0, %v546
  %v548 = vpop.f32.mrb[0].mxu0
  %v549 = vadd.f32 0.0, %v548
  %v550 = vpop.f32.mrb[0].mxu0
  %v551 = vadd.f32 0.0, %v550
  %552 = vmatprep.mubr.bf16.mxu0 0
  %553 = vmatmul.mubr.bf16.gmra.mrb[0].mxu0 %v195
  %v554 = vpop.f32.mrb[0].mxu0
  %v555 = vadd.f32 0.0, %v554
  %v556 = vpop.f32.mrb[0].mxu0
  %v557 = vadd.f32 0.0, %v556
  %v558 = vpop.f32.mrb[0].mxu0
  %v559 = vadd.f32 0.0, %v558
  %v560 = vpop.f32.mrb[0].mxu0
  %v561 = vadd.f32 0.0, %v560
  %562 = vmatprep.mubr.bf16.mxu0 0
  %563 = vmatmul.mubr.bf16.gmra.mrb[0].mxu0 %v196
  %v564 = vpop.f32.mrb[0].mxu0
  %v565 = vadd.f32 0.0, %v564
  %v566 = vpop.f32.mrb[0].mxu0
  %v567 = vadd.f32 0.0, %v566
  %v568 = vpop.f32.mrb[0].mxu0
  %v569 = vadd.f32 0.0, %v568
  %v570 = vpop.f32.mrb[0].mxu0
  %v571 = vadd.f32 0.0, %v570
  %572 = vmatprep.mubr.bf16.mxu0 0
  %573 = vmatmul.mubr.bf16.gmra.mrb[0].mxu0 %v197
  %v574 = vpop.f32.mrb[0].mxu0
  %v575 = vadd.f32 0.0, %v574
  %v576 = vpop.f32.mrb[0].mxu0
  %v577 = vadd.f32 0.0, %v576
  %v578 = vpop.f32.mrb[0].mxu0
  %v579 = vadd.f32 0.0, %v578
  %v580 = vpop.f32.mrb[0].mxu0
  %v581 = vadd.f32 0.0, %v580
  %582 = vmatprep.mubr.bf16.mxu0 0
  %583 = vmatmul.mubr.bf16.gmra.mrb[0].mxu0 %v198
  %v584 = vpop.f32.mrb[0].mxu0
  %v585 = vadd.f32 0.0, %v584
  %v586 = vpop.f32.mrb[0].mxu0
  %v587 = vadd.f32 0.0, %v586
  %v588 = vpop.f32.mrb[0].mxu0
  %v589 = vadd.f32 0.0, %v588
  %v590 = vpop.f32.mrb[0].mxu0
  %v591 = vadd.f32 0.0, %v590
  %592 = vdwg.mxu0
  %v593 = vld [vmem:[%s3] sm:$0xff]
  %v594 = vld [vmem:[%s3 + $0x8] sm:$0xff]
  %v595 = vld [vmem:[%s3 + $0x10] sm:$0xff]
  %v596 = vld [vmem:[%s3 + $0x18] sm:$0xff]
  %v597 = vld [vmem:[%s3 + $0x20] sm:$0xff]
  %v598 = vld [vmem:[%s3 + $0x28] sm:$0xff]
  %v599 = vld [vmem:[%s3 + $0x30] sm:$0xff]
  %v600 = vld [vmem:[%s3 + $0x38] sm:$0xff]
  %v601 = vld [vmem:[%s3 + $0x40] sm:$0xff]
  %v602 = vld [vmem:[%s3 + $0x48] sm:$0xff]
  %v603 = vld [vmem:[%s3 + $0x50] sm:$0xff]
  %v604 = vld [vmem:[%s3 + $0x58] sm:$0xff]
  %v605 = vld [vmem:[%s3 + $0x60] sm:$0xff]
  %v606 = vld [vmem:[%s3 + $0x68] sm:$0xff]
  %v607 = vld [vmem:[%s3 + $0x70] sm:$0xff]
  %v608 = vld [vmem:[%s3 + $0x78] sm:$0xff]
  %v609 = vmul.f32 %v402, 2.0
  %v610 = vmul.f32 %v404, 2.0
  %v611 = vmul.f32 %v515, 2.0
  %v612 = vmul.f32 %v517, 2.0
  %v613 = vmul.f32 %v406, 2.0
  %v614 = vmul.f32 %v408, 2.0
  %v615 = vmul.f32 %v519, 2.0
  %v616 = vmul.f32 %v521, 2.0
  %v617 = vmul.f32 %v412, 2.0
  %v618 = vmul.f32 %v414, 2.0
  %v619 = vmul.f32 %v525, 2.0
  %v620 = vmul.f32 %v527, 2.0
  %v621 = vmul.f32 %v416, 2.0
  %v622 = vmul.f32 %v418, 2.0
  %v623 = vmul.f32 %v529, 2.0
  %v624 = vmul.f32 %v531, 2.0
  %v625 = vmul.f32 %v422, 2.0
  %v626 = vmul.f32 %v424, 2.0
  %v627 = vmul.f32 %v535, 2.0
  %v628 = vmul.f32 %v537, 2.0
  %v629 = vmul.f32 %v426, 2.0
  %v630 = vmul.f32 %v428, 2.0
  %v631 = vmul.f32 %v539, 2.0
  %v632 = vmul.f32 %v541, 2.0
  %v633 = vmul.f32 %v432, 2.0
  %v634 = vmul.f32 %v434, 2.0
  %v635 = vmul.f32 %v545, 2.0
  %v636 = vmul.f32 %v547, 2.0
  %v637 = vmul.f32 %v436, 2.0
  %v638 = vmul.f32 %v438, 2.0
  %v639 = vmul.f32 %v549, 2.0
  %v640 = vmul.f32 %v551, 2.0
  %v641 = vmul.f32 %v442, 2.0
  %v642 = vmul.f32 %v444, 2.0
  %v643 = vmul.f32 %v555, 2.0
  %v644 = vmul.f32 %v557, 2.0
  %v645 = vmul.f32 %v446, 2.0
  %v646 = vmul.f32 %v448, 2.0
  %v647 = vmul.f32 %v559, 2.0
  %v648 = vmul.f32 %v561, 2.0
  %v649 = vmul.f32 %v452, 2.0
  %v650 = vmul.f32 %v454, 2.0
  %v651 = vmul.f32 %v565, 2.0
  %v652 = vmul.f32 %v567, 2.0
  %v653 = vmul.f32 %v456, 2.0
  %v654 = vmul.f32 %v458, 2.0
  %v655 = vmul.f32 %v569, 2.0
  %v656 = vmul.f32 %v571, 2.0
  %v657 = vmul.f32 %v462, 2.0
  %v658 = vmul.f32 %v464, 2.0
  %v659 = vmul.f32 %v575, 2.0
  %v660 = vmul.f32 %v577, 2.0
  %v661 = vmul.f32 %v466, 2.0
  %v662 = vmul.f32 %v468, 2.0
  %v663 = vmul.f32 %v579, 2.0
  %v664 = vmul.f32 %v581, 2.0
  %v665 = vmul.f32 %v472, 2.0
  %v666 = vmul.f32 %v474, 2.0
  %v667 = vmul.f32 %v585, 2.0
  %v668 = vmul.f32 %v587, 2.0
  %v669 = vmul.f32 %v476, 2.0
  %v670 = vmul.f32 %v478, 2.0
  %v671 = vmul.f32 %v589, 2.0
  %v672 = vmul.f32 %v591, 2.0
  %674 = vset.pattern.permute.xlu0 0
  %675 = vperm.xlu0 %674, %v593
  %v676 = vpop.permute.xlu0 %675
  %679 = vset.pattern.permute.xlu0 0
  %680 = vperm.xlu0 %679, %v594
  %v681 = vpop.permute.xlu0 %680
  %684 = vset.pattern.permute.xlu0 0
  %685 = vperm.xlu0 %684, %v595
  %v686 = vpop.permute.xlu0 %685
  %689 = vset.pattern.permute.xlu0 0
  %690 = vperm.xlu0 %689, %v596
  %v691 = vpop.permute.xlu0 %690
  %694 = vset.pattern.permute.xlu0 0
  %695 = vperm.xlu0 %694, %v597
  %v696 = vpop.permute.xlu0 %695
  %699 = vset.pattern.permute.xlu0 0
  %700 = vperm.xlu0 %699, %v598
  %v701 = vpop.permute.xlu0 %700
  %704 = vset.pattern.permute.xlu0 0
  %705 = vperm.xlu0 %704, %v599
  %v706 = vpop.permute.xlu0 %705
  %709 = vset.pattern.permute.xlu0 0
  %710 = vperm.xlu0 %709, %v600
  %v711 = vpop.permute.xlu0 %710
  %714 = vset.pattern.permute.xlu0 0
  %715 = vperm.xlu0 %714, %v601
  %v716 = vpop.permute.xlu0 %715
  %719 = vset.pattern.permute.xlu0 0
  %720 = vperm.xlu0 %719, %v602
  %v721 = vpop.permute.xlu0 %720
  %724 = vset.pattern.permute.xlu0 0
  %725 = vperm.xlu0 %724, %v603
  %v726 = vpop.permute.xlu0 %725
  %729 = vset.pattern.permute.xlu0 0
  %730 = vperm.xlu0 %729, %v604
  %v731 = vpop.permute.xlu0 %730
  %734 = vset.pattern.permute.xlu0 0
  %735 = vperm.xlu0 %734, %v605
  %v736 = vpop.permute.xlu0 %735
  %739 = vset.pattern.permute.xlu0 0
  %740 = vperm.xlu0 %739, %v606
  %v741 = vpop.permute.xlu0 %740
  %744 = vset.pattern.permute.xlu0 0
  %745 = vperm.xlu0 %744, %v607
  %v746 = vpop.permute.xlu0 %745
  %749 = vset.pattern.permute.xlu0 0
  %750 = vperm.xlu0 %749, %v608
  %v751 = vpop.permute.xlu0 %750
  %v753 = vsub.f32 %v676, %v609
  %v754 = vsub.f32 %v676, %v610
  %v755 = vsub.f32 %v676, %v611
  %v756 = vsub.f32 %v676, %v612
  %v757 = vsub.f32 %v681, %v613
  %v758 = vsub.f32 %v681, %v614
  %v759 = vsub.f32 %v681, %v615
  %v760 = vsub.f32 %v681, %v616
  %v761 = vsub.f32 %v686, %v617
  %v762 = vsub.f32 %v686, %v618
  %v763 = vsub.f32 %v686, %v619
  %v764 = vsub.f32 %v686, %v620
  %v765 = vsub.f32 %v691, %v621
  %v766 = vsub.f32 %v691, %v622
  %v767 = vsub.f32 %v691, %v623
  %v768 = vsub.f32 %v691, %v624
  %v769 = vsub.f32 %v696, %v625
  %v770 = vsub.f32 %v696, %v626
  %v771 = vsub.f32 %v696, %v627
  %v772 = vsub.f32 %v696, %v628
  %v773 = vsub.f32 %v701, %v629
  %v774 = vsub.f32 %v701, %v630
  %v775 = vsub.f32 %v701, %v631
  %v776 = vsub.f32 %v701, %v632
  %v777 = vsub.f32 %v706, %v633
  %v778 = vsub.f32 %v706, %v634
  %v779 = vsub.f32 %v706, %v635
  %v780 = vsub.f32 %v706, %v636
  %v781 = vsub.f32 %v711, %v637
  %v782 = vsub.f32 %v711, %v638
  %v783 = vsub.f32 %v711, %v639
  %v784 = vsub.f32 %v711, %v640
  %v785 = vsub.f32 %v716, %v641
  %v786 = vsub.f32 %v716, %v642
  %v787 = vsub.f32 %v716, %v643
  %v788 = vsub.f32 %v716, %v644
  %v789 = vsub.f32 %v721, %v645
  %v790 = vsub.f32 %v721, %v646
  %v791 = vsub.f32 %v721, %v647
  %v792 = vsub.f32 %v721, %v648
  %v793 = vsub.f32 %v726, %v649
  %v794 = vsub.f32 %v726, %v650
  %v795 = vsub.f32 %v726, %v651
  %v796 = vsub.f32 %v726, %v652
  %v797 = vsub.f32 %v731, %v653
  %v798 = vsub.f32 %v731, %v654
  %v799 = vsub.f32 %v731, %v655
  %v800 = vsub.f32 %v731, %v656
  %v801 = vsub.f32 %v736, %v657
  %v802 = vsub.f32 %v736, %v658
  %v803 = vsub.f32 %v736, %v659
  %v804 = vsub.f32 %v736, %v660
  %v805 = vsub.f32 %v741, %v661
  %v806 = vsub.f32 %v741, %v662
  %v807 = vsub.f32 %v741, %v663
  %v808 = vsub.f32 %v741, %v664
  %v809 = vsub.f32 %v746, %v665
  %v810 = vsub.f32 %v746, %v666
  %v811 = vsub.f32 %v746, %v667
  %v812 = vsub.f32 %v746, %v668
  %v813 = vsub.f32 %v751, %v669
  %v814 = vsub.f32 %v751, %v670
  %v815 = vsub.f32 %v751, %v671
  %v816 = vsub.f32 %v751, %v672
  %v817 = vld [vmem:[%s1] sm:$0xf]
  %v819 = vlaneseq
  %v820 = vshrl.u32 %v819, 7
  %v821 = vsub.s32 0, %v820
  %v822 = vrot.slane %v817, %v821
  %v823 = vlaneseq
  %v824 = vshrl.u32 %v823, 7
  %v825 = vsub.s32 1, %v824
  %v826 = vrot.slane %v817, %v825
  %v827 = vlaneseq
  %v828 = vshrl.u32 %v827, 7
  %v829 = vsub.s32 2, %v828
  %v830 = vrot.slane %v817, %v829
  %v831 = vlaneseq
  %v832 = vshrl.u32 %v831, 7
  %v833 = vsub.s32 3, %v832
  %v834 = vrot.slane %v817, %v833
  %v839 = vadd.f32 %v753, %v822
  %v840 = vadd.f32 %v754, %v826
  %v841 = vadd.f32 %v755, %v830
  %v842 = vadd.f32 %v756, %v834
  %v843 = vadd.f32 %v757, %v822
  %v844 = vadd.f32 %v758, %v826
  %v845 = vadd.f32 %v759, %v830
  %v846 = vadd.f32 %v760, %v834
  %v847 = vadd.f32 %v761, %v822
  %v848 = vadd.f32 %v762, %v826
  %v849 = vadd.f32 %v763, %v830
  %v850 = vadd.f32 %v764, %v834
  %v851 = vadd.f32 %v765, %v822
  %v852 = vadd.f32 %v766, %v826
  %v853 = vadd.f32 %v767, %v830
  %v854 = vadd.f32 %v768, %v834
  %v855 = vadd.f32 %v769, %v822
  %v856 = vadd.f32 %v770, %v826
  %v857 = vadd.f32 %v771, %v830
  %v858 = vadd.f32 %v772, %v834
  %v859 = vadd.f32 %v773, %v822
  %v860 = vadd.f32 %v774, %v826
  %v861 = vadd.f32 %v775, %v830
  %v862 = vadd.f32 %v776, %v834
  %v863 = vadd.f32 %v777, %v822
  %v864 = vadd.f32 %v778, %v826
  %v865 = vadd.f32 %v779, %v830
  %v866 = vadd.f32 %v780, %v834
  %v867 = vadd.f32 %v781, %v822
  %v868 = vadd.f32 %v782, %v826
  %v869 = vadd.f32 %v783, %v830
  %v870 = vadd.f32 %v784, %v834
  %v871 = vadd.f32 %v785, %v822
  %v872 = vadd.f32 %v786, %v826
  %v873 = vadd.f32 %v787, %v830
  %v874 = vadd.f32 %v788, %v834
  %v875 = vadd.f32 %v789, %v822
  %v876 = vadd.f32 %v790, %v826
  %v877 = vadd.f32 %v791, %v830
  %v878 = vadd.f32 %v792, %v834
  %v879 = vadd.f32 %v793, %v822
  %v880 = vadd.f32 %v794, %v826
  %v881 = vadd.f32 %v795, %v830
  %v882 = vadd.f32 %v796, %v834
  %v883 = vadd.f32 %v797, %v822
  %v884 = vadd.f32 %v798, %v826
  %v885 = vadd.f32 %v799, %v830
  %v886 = vadd.f32 %v800, %v834
  %v887 = vadd.f32 %v801, %v822
  %v888 = vadd.f32 %v802, %v826
  %v889 = vadd.f32 %v803, %v830
  %v890 = vadd.f32 %v804, %v834
  %v891 = vadd.f32 %v805, %v822
  %v892 = vadd.f32 %v806, %v826
  %v893 = vadd.f32 %v807, %v830
  %v894 = vadd.f32 %v808, %v834
  %v895 = vadd.f32 %v809, %v822
  %v896 = vadd.f32 %v810, %v826
  %v897 = vadd.f32 %v811, %v830
  %v898 = vadd.f32 %v812, %v834
  %v899 = vadd.f32 %v813, %v822
  %v900 = vadd.f32 %v814, %v826
  %v901 = vadd.f32 %v815, %v830
  %v902 = vadd.f32 %v816, %v834
  %v903 = vmin.f32 %v839, %v843
  %v904 = vmin.f32 %v903, %v847
  %v905 = vmin.f32 %v904, %v851
  %v906 = vmin.f32 %v905, %v855
  %v907 = vmin.f32 %v906, %v859
  %v908 = vmin.f32 %v907, %v863
  %v909 = vmin.f32 %v908, %v867
  %v910 = vmin.f32 %v909, %v871
  %v911 = vmin.f32 %v910, %v875
  %v912 = vmin.f32 %v911, %v879
  %v913 = vmin.f32 %v912, %v883
  %v914 = vmin.f32 %v913, %v887
  %v915 = vmin.f32 %v914, %v891
  %v916 = vmin.f32 %v915, %v895
  %v917 = vmin.f32 %v916, %v899
  %v918 = vrot.slane %v917, 4
  %v919 = vmin.f32 %v917, %v918
  %v920 = vrot.slane %v919, 2
  %v921 = vmin.f32 %v919, %v920
  %v922 = vrot.slane %v921, 1
  %v923 = vmin.f32 %v921, %v922
  %v924 = vmin.f32 %v840, %v844
  %v925 = vmin.f32 %v924, %v848
  %v926 = vmin.f32 %v925, %v852
  %v927 = vmin.f32 %v926, %v856
  %v928 = vmin.f32 %v927, %v860
  %v929 = vmin.f32 %v928, %v864
  %v930 = vmin.f32 %v929, %v868
  %v931 = vmin.f32 %v930, %v872
  %v932 = vmin.f32 %v931, %v876
  %v933 = vmin.f32 %v932, %v880
  %v934 = vmin.f32 %v933, %v884
  %v935 = vmin.f32 %v934, %v888
  %v936 = vmin.f32 %v935, %v892
  %v937 = vmin.f32 %v936, %v896
  %v938 = vmin.f32 %v937, %v900
  %v939 = vrot.slane %v938, 4
  %v940 = vmin.f32 %v938, %v939
  %v941 = vrot.slane %v940, 2
  %v942 = vmin.f32 %v940, %v941
  %v943 = vrot.slane %v942, 1
  %v944 = vmin.f32 %v942, %v943
  %v945 = vmin.f32 %v841, %v845
  %v946 = vmin.f32 %v945, %v849
  %v947 = vmin.f32 %v946, %v853
  %v948 = vmin.f32 %v947, %v857
  %v949 = vmin.f32 %v948, %v861
  %v950 = vmin.f32 %v949, %v865
  %v951 = vmin.f32 %v950, %v869
  %v952 = vmin.f32 %v951, %v873
  %v953 = vmin.f32 %v952, %v877
  %v954 = vmin.f32 %v953, %v881
  %v955 = vmin.f32 %v954, %v885
  %v956 = vmin.f32 %v955, %v889
  %v957 = vmin.f32 %v956, %v893
  %v958 = vmin.f32 %v957, %v897
  %v959 = vmin.f32 %v958, %v901
  %v960 = vrot.slane %v959, 4
  %v961 = vmin.f32 %v959, %v960
  %v962 = vrot.slane %v961, 2
  %v963 = vmin.f32 %v961, %v962
  %v964 = vrot.slane %v963, 1
  %v965 = vmin.f32 %v963, %v964
  %v966 = vmin.f32 %v842, %v846
  %v967 = vmin.f32 %v966, %v850
  %v968 = vmin.f32 %v967, %v854
  %v969 = vmin.f32 %v968, %v858
  %v970 = vmin.f32 %v969, %v862
  %v971 = vmin.f32 %v970, %v866
  %v972 = vmin.f32 %v971, %v870
  %v973 = vmin.f32 %v972, %v874
  %v974 = vmin.f32 %v973, %v878
  %v975 = vmin.f32 %v974, %v882
  %v976 = vmin.f32 %v975, %v886
  %v977 = vmin.f32 %v976, %v890
  %v978 = vmin.f32 %v977, %v894
  %v979 = vmin.f32 %v978, %v898
  %v980 = vmin.f32 %v979, %v902
  %v981 = vrot.slane %v980, 4
  %v982 = vmin.f32 %v980, %v981
  %v983 = vrot.slane %v982, 2
  %v984 = vmin.f32 %v982, %v983
  %v985 = vrot.slane %v984, 1
  %v986 = vmin.f32 %v984, %v985
  %vm987 = vcmp.le.f32.partialorder %v839, %v923
  %vm988 = vcmp.le.f32.partialorder %v840, %v944
  %vm989 = vcmp.le.f32.partialorder %v841, %v965
  %vm990 = vcmp.le.f32.partialorder %v842, %v986
  %vm991 = vcmp.le.f32.partialorder %v843, %v923
  %vm992 = vcmp.le.f32.partialorder %v844, %v944
  %vm993 = vcmp.le.f32.partialorder %v845, %v965
  %vm994 = vcmp.le.f32.partialorder %v846, %v986
  %vm995 = vcmp.le.f32.partialorder %v847, %v923
  %vm996 = vcmp.le.f32.partialorder %v848, %v944
  %vm997 = vcmp.le.f32.partialorder %v849, %v965
  %vm998 = vcmp.le.f32.partialorder %v850, %v986
  %vm999 = vcmp.le.f32.partialorder %v851, %v923
  %vm1000 = vcmp.le.f32.partialorder %v852, %v944
  %vm1001 = vcmp.le.f32.partialorder %v853, %v965
  %vm1002 = vcmp.le.f32.partialorder %v854, %v986
  %vm1003 = vcmp.le.f32.partialorder %v855, %v923
  %vm1004 = vcmp.le.f32.partialorder %v856, %v944
  %vm1005 = vcmp.le.f32.partialorder %v857, %v965
  %vm1006 = vcmp.le.f32.partialorder %v858, %v986
  %vm1007 = vcmp.le.f32.partialorder %v859, %v923
  %vm1008 = vcmp.le.f32.partialorder %v860, %v944
  %vm1009 = vcmp.le.f32.partialorder %v861, %v965
  %vm1010 = vcmp.le.f32.partialorder %v862, %v986
  %vm1011 = vcmp.le.f32.partialorder %v863, %v923
  %vm1012 = vcmp.le.f32.partialorder %v864, %v944
  %vm1013 = vcmp.le.f32.partialorder %v865, %v965
  %vm1014 = vcmp.le.f32.partialorder %v866, %v986
  %vm1015 = vcmp.le.f32.partialorder %v867, %v923
  %vm1016 = vcmp.le.f32.partialorder %v868, %v944
  %vm1017 = vcmp.le.f32.partialorder %v869, %v965
  %vm1018 = vcmp.le.f32.partialorder %v870, %v986
  %vm1019 = vcmp.le.f32.partialorder %v871, %v923
  %vm1020 = vcmp.le.f32.partialorder %v872, %v944
  %vm1021 = vcmp.le.f32.partialorder %v873, %v965
  %vm1022 = vcmp.le.f32.partialorder %v874, %v986
  %vm1023 = vcmp.le.f32.partialorder %v875, %v923
  %vm1024 = vcmp.le.f32.partialorder %v876, %v944
  %vm1025 = vcmp.le.f32.partialorder %v877, %v965
  %vm1026 = vcmp.le.f32.partialorder %v878, %v986
  %vm1027 = vcmp.le.f32.partialorder %v879, %v923
  %vm1028 = vcmp.le.f32.partialorder %v880, %v944
  %vm1029 = vcmp.le.f32.partialorder %v881, %v965
  %vm1030 = vcmp.le.f32.partialorder %v882, %v986
  %vm1031 = vcmp.le.f32.partialorder %v883, %v923
  %vm1032 = vcmp.le.f32.partialorder %v884, %v944
  %vm1033 = vcmp.le.f32.partialorder %v885, %v965
  %vm1034 = vcmp.le.f32.partialorder %v886, %v986
  %vm1035 = vcmp.le.f32.partialorder %v887, %v923
  %vm1036 = vcmp.le.f32.partialorder %v888, %v944
  %vm1037 = vcmp.le.f32.partialorder %v889, %v965
  %vm1038 = vcmp.le.f32.partialorder %v890, %v986
  %vm1039 = vcmp.le.f32.partialorder %v891, %v923
  %vm1040 = vcmp.le.f32.partialorder %v892, %v944
  %vm1041 = vcmp.le.f32.partialorder %v893, %v965
  %vm1042 = vcmp.le.f32.partialorder %v894, %v986
  %vm1043 = vcmp.le.f32.partialorder %v895, %v923
  %vm1044 = vcmp.le.f32.partialorder %v896, %v944
  %vm1045 = vcmp.le.f32.partialorder %v897, %v965
  %vm1046 = vcmp.le.f32.partialorder %v898, %v986
  %vm1047 = vcmp.le.f32.partialorder %v899, %v923
  %vm1048 = vcmp.le.f32.partialorder %v900, %v944
  %vm1049 = vcmp.le.f32.partialorder %v901, %v965
  %vm1050 = vcmp.le.f32.partialorder %v902, %v986
  %v1051 = vld [vmem:[#allocation4] sm:$0xff]
  %v1052 = vld [vmem:[#allocation4 + $0x8] sm:$0xff]
  %v1053 = vld [vmem:[#allocation4 + $0x10] sm:$0xff]
  %v1054 = vld [vmem:[#allocation4 + $0x18] sm:$0xff]
  %v1055 = vld [vmem:[#allocation4 + $0x20] sm:$0xff]
  %v1056 = vld [vmem:[#allocation4 + $0x28] sm:$0xff]
  %v1057 = vld [vmem:[#allocation4 + $0x30] sm:$0xff]
  %v1058 = vld [vmem:[#allocation4 + $0x38] sm:$0xff]
  %v1059 = vld [vmem:[#allocation4 + $0x40] sm:$0xff]
  %v1060 = vld [vmem:[#allocation4 + $0x48] sm:$0xff]
  %v1061 = vld [vmem:[#allocation4 + $0x50] sm:$0xff]
  %v1062 = vld [vmem:[#allocation4 + $0x58] sm:$0xff]
  %v1063 = vld [vmem:[#allocation4 + $0x60] sm:$0xff]
  %v1064 = vld [vmem:[#allocation4 + $0x68] sm:$0xff]
  %v1065 = vld [vmem:[#allocation4 + $0x70] sm:$0xff]
  %v1066 = vld [vmem:[#allocation4 + $0x78] sm:$0xff]
  %v1067 = vld [vmem:[#allocation4 + $0x80] sm:$0xff]
  %v1068 = vld [vmem:[#allocation4 + $0x88] sm:$0xff]
  %v1069 = vld [vmem:[#allocation4 + $0x90] sm:$0xff]
  %v1070 = vld [vmem:[#allocation4 + $0x98] sm:$0xff]
  %v1071 = vld [vmem:[#allocation4 + $0xa0] sm:$0xff]
  %v1072 = vld [vmem:[#allocation4 + $0xa8] sm:$0xff]
  %v1073 = vld [vmem:[#allocation4 + $0xb0] sm:$0xff]
  %v1074 = vld [vmem:[#allocation4 + $0xb8] sm:$0xff]
  %v1075 = vld [vmem:[#allocation4 + $0xc0] sm:$0xff]
  %v1076 = vld [vmem:[#allocation4 + $0xc8] sm:$0xff]
  %v1077 = vld [vmem:[#allocation4 + $0xd0] sm:$0xff]
  %v1078 = vld [vmem:[#allocation4 + $0xd8] sm:$0xff]
  %v1079 = vld [vmem:[#allocation4 + $0xe0] sm:$0xff]
  %v1080 = vld [vmem:[#allocation4 + $0xe8] sm:$0xff]
  %v1081 = vld [vmem:[#allocation4 + $0xf0] sm:$0xff]
  %v1082 = vld [vmem:[#allocation4 + $0xf8] sm:$0xff]
  %v1083 = vld [vmem:[#allocation4 + $0x100] sm:$0xff]
  %v1084 = vld [vmem:[#allocation4 + $0x108] sm:$0xff]
  %v1085 = vld [vmem:[#allocation4 + $0x110] sm:$0xff]
  %v1086 = vld [vmem:[#allocation4 + $0x118] sm:$0xff]
  %v1087 = vld [vmem:[#allocation4 + $0x120] sm:$0xff]
  %v1088 = vld [vmem:[#allocation4 + $0x128] sm:$0xff]
  %v1089 = vld [vmem:[#allocation4 + $0x130] sm:$0xff]
  %v1090 = vld [vmem:[#allocation4 + $0x138] sm:$0xff]
  %v1091 = vld [vmem:[#allocation4 + $0x140] sm:$0xff]
  %v1092 = vld [vmem:[#allocation4 + $0x148] sm:$0xff]
  %v1093 = vld [vmem:[#allocation4 + $0x150] sm:$0xff]
  %v1094 = vld [vmem:[#allocation4 + $0x158] sm:$0xff]
  %v1095 = vld [vmem:[#allocation4 + $0x160] sm:$0xff]
  %v1096 = vld [vmem:[#allocation4 + $0x168] sm:$0xff]
  %v1097 = vld [vmem:[#allocation4 + $0x170] sm:$0xff]
  %v1098 = vld [vmem:[#allocation4 + $0x178] sm:$0xff]
  %v1099 = vld [vmem:[#allocation4 + $0x180] sm:$0xff]
  %v1100 = vld [vmem:[#allocation4 + $0x188] sm:$0xff]
  %v1101 = vld [vmem:[#allocation4 + $0x190] sm:$0xff]
  %v1102 = vld [vmem:[#allocation4 + $0x198] sm:$0xff]
  %v1103 = vld [vmem:[#allocation4 + $0x1a0] sm:$0xff]
  %v1104 = vld [vmem:[#allocation4 + $0x1a8] sm:$0xff]
  %v1105 = vld [vmem:[#allocation4 + $0x1b0] sm:$0xff]
  %v1106 = vld [vmem:[#allocation4 + $0x1b8] sm:$0xff]
  %v1107 = vld [vmem:[#allocation4 + $0x1c0] sm:$0xff]
  %v1108 = vld [vmem:[#allocation4 + $0x1c8] sm:$0xff]
  %v1109 = vld [vmem:[#allocation4 + $0x1d0] sm:$0xff]
  %v1110 = vld [vmem:[#allocation4 + $0x1d8] sm:$0xff]
  %v1111 = vld [vmem:[#allocation4 + $0x1e0] sm:$0xff]
  %v1112 = vld [vmem:[#allocation4 + $0x1e8] sm:$0xff]
  %v1113 = vld [vmem:[#allocation4 + $0x1f0] sm:$0xff]
  %v1114 = vld [vmem:[#allocation4 + $0x1f8] sm:$0xff]
  %v1115 = vsel %vm987, %v1051, 1073741824
  %v1116 = vsel %vm988, %v1052, 1073741824
  %v1117 = vsel %vm989, %v1053, 1073741824
  %v1118 = vsel %vm990, %v1054, 1073741824
  %v1119 = vsel %vm991, %v1055, 1073741824
  %v1120 = vsel %vm992, %v1056, 1073741824
  %v1121 = vsel %vm993, %v1057, 1073741824
  %v1122 = vsel %vm994, %v1058, 1073741824
  %v1123 = vsel %vm995, %v1059, 1073741824
  %v1124 = vsel %vm996, %v1060, 1073741824
  %v1125 = vsel %vm997, %v1061, 1073741824
  %v1126 = vsel %vm998, %v1062, 1073741824
  %v1127 = vsel %vm999, %v1063, 1073741824
  %v1128 = vsel %vm1000, %v1064, 1073741824
  %v1129 = vsel %vm1001, %v1065, 1073741824
  %v1130 = vsel %vm1002, %v1066, 1073741824
  %v1131 = vsel %vm1003, %v1067, 1073741824
  %v1132 = vsel %vm1004, %v1068, 1073741824
  %v1133 = vsel %vm1005, %v1069, 1073741824
  %v1134 = vsel %vm1006, %v1070, 1073741824
  %v1135 = vsel %vm1007, %v1071, 1073741824
  %v1136 = vsel %vm1008, %v1072, 1073741824
  %v1137 = vsel %vm1009, %v1073, 1073741824
  %v1138 = vsel %vm1010, %v1074, 1073741824
  %v1139 = vsel %vm1011, %v1075, 1073741824
  %v1140 = vsel %vm1012, %v1076, 1073741824
  %v1141 = vsel %vm1013, %v1077, 1073741824
  %v1142 = vsel %vm1014, %v1078, 1073741824
  %v1143 = vsel %vm1015, %v1079, 1073741824
  %v1144 = vsel %vm1016, %v1080, 1073741824
  %v1145 = vsel %vm1017, %v1081, 1073741824
  %v1146 = vsel %vm1018, %v1082, 1073741824
  %v1147 = vsel %vm1019, %v1083, 1073741824
  %v1148 = vsel %vm1020, %v1084, 1073741824
  %v1149 = vsel %vm1021, %v1085, 1073741824
  %v1150 = vsel %vm1022, %v1086, 1073741824
  %v1151 = vsel %vm1023, %v1087, 1073741824
  %v1152 = vsel %vm1024, %v1088, 1073741824
  %v1153 = vsel %vm1025, %v1089, 1073741824
  %v1154 = vsel %vm1026, %v1090, 1073741824
  %v1155 = vsel %vm1027, %v1091, 1073741824
  %v1156 = vsel %vm1028, %v1092, 1073741824
  %v1157 = vsel %vm1029, %v1093, 1073741824
  %v1158 = vsel %vm1030, %v1094, 1073741824
  %v1159 = vsel %vm1031, %v1095, 1073741824
  %v1160 = vsel %vm1032, %v1096, 1073741824
  %v1161 = vsel %vm1033, %v1097, 1073741824
  %v1162 = vsel %vm1034, %v1098, 1073741824
  %v1163 = vsel %vm1035, %v1099, 1073741824
  %v1164 = vsel %vm1036, %v1100, 1073741824
  %v1165 = vsel %vm1037, %v1101, 1073741824
  %v1166 = vsel %vm1038, %v1102, 1073741824
  %v1167 = vsel %vm1039, %v1103, 1073741824
  %v1168 = vsel %vm1040, %v1104, 1073741824
  %v1169 = vsel %vm1041, %v1105, 1073741824
  %v1170 = vsel %vm1042, %v1106, 1073741824
  %v1171 = vsel %vm1043, %v1107, 1073741824
  %v1172 = vsel %vm1044, %v1108, 1073741824
  %v1173 = vsel %vm1045, %v1109, 1073741824
  %v1174 = vsel %vm1046, %v1110, 1073741824
  %v1175 = vsel %vm1047, %v1111, 1073741824
  %v1176 = vsel %vm1048, %v1112, 1073741824
  %v1177 = vsel %vm1049, %v1113, 1073741824
  %v1178 = vsel %vm1050, %v1114, 1073741824
  %vm1179 = vcmp.lt.s32.totalorder %v1115, %v1119
  %v1180 = vsel %vm1179, %v1115, %v1119
  %vm1181 = vcmp.lt.s32.totalorder %v1180, %v1123
  %v1182 = vsel %vm1181, %v1180, %v1123
  %vm1183 = vcmp.lt.s32.totalorder %v1182, %v1127
  %v1184 = vsel %vm1183, %v1182, %v1127
  %vm1185 = vcmp.lt.s32.totalorder %v1184, %v1131
  %v1186 = vsel %vm1185, %v1184, %v1131
  %vm1187 = vcmp.lt.s32.totalorder %v1186, %v1135
  %v1188 = vsel %vm1187, %v1186, %v1135
  %vm1189 = vcmp.lt.s32.totalorder %v1188, %v1139
  %v1190 = vsel %vm1189, %v1188, %v1139
  %vm1191 = vcmp.lt.s32.totalorder %v1190, %v1143
  %v1192 = vsel %vm1191, %v1190, %v1143
  %vm1193 = vcmp.lt.s32.totalorder %v1192, %v1147
  %v1194 = vsel %vm1193, %v1192, %v1147
  %vm1195 = vcmp.lt.s32.totalorder %v1194, %v1151
  %v1196 = vsel %vm1195, %v1194, %v1151
  %vm1197 = vcmp.lt.s32.totalorder %v1196, %v1155
  %v1198 = vsel %vm1197, %v1196, %v1155
  %vm1199 = vcmp.lt.s32.totalorder %v1198, %v1159
  %v1200 = vsel %vm1199, %v1198, %v1159
  %vm1201 = vcmp.lt.s32.totalorder %v1200, %v1163
  %v1202 = vsel %vm1201, %v1200, %v1163
  %vm1203 = vcmp.lt.s32.totalorder %v1202, %v1167
  %v1204 = vsel %vm1203, %v1202, %v1167
  %vm1205 = vcmp.lt.s32.totalorder %v1204, %v1171
  %v1206 = vsel %vm1205, %v1204, %v1171
  %vm1207 = vcmp.lt.s32.totalorder %v1206, %v1175
  %v1208 = vsel %vm1207, %v1206, %v1175
  %v1209 = vrot.slane %v1208, 4
  %vm1210 = vcmp.lt.s32.totalorder %v1208, %v1209
  %v1211 = vsel %vm1210, %v1208, %v1209
  %v1212 = vrot.slane %v1211, 2
  %vm1213 = vcmp.lt.s32.totalorder %v1211, %v1212
  %v1214 = vsel %vm1213, %v1211, %v1212
  %v1215 = vrot.slane %v1214, 1
  %vm1216 = vcmp.lt.s32.totalorder %v1214, %v1215
  %v1217 = vsel %vm1216, %v1214, %v1215
  %vm1218 = vcmp.lt.s32.totalorder %v1116, %v1120
  %v1219 = vsel %vm1218, %v1116, %v1120
  %vm1220 = vcmp.lt.s32.totalorder %v1219, %v1124
  %v1221 = vsel %vm1220, %v1219, %v1124
  %vm1222 = vcmp.lt.s32.totalorder %v1221, %v1128
  %v1223 = vsel %vm1222, %v1221, %v1128
  %vm1224 = vcmp.lt.s32.totalorder %v1223, %v1132
  %v1225 = vsel %vm1224, %v1223, %v1132
  %vm1226 = vcmp.lt.s32.totalorder %v1225, %v1136
  %v1227 = vsel %vm1226, %v1225, %v1136
  %vm1228 = vcmp.lt.s32.totalorder %v1227, %v1140
  %v1229 = vsel %vm1228, %v1227, %v1140
  %vm1230 = vcmp.lt.s32.totalorder %v1229, %v1144
  %v1231 = vsel %vm1230, %v1229, %v1144
  %vm1232 = vcmp.lt.s32.totalorder %v1231, %v1148
  %v1233 = vsel %vm1232, %v1231, %v1148
  %vm1234 = vcmp.lt.s32.totalorder %v1233, %v1152
  %v1235 = vsel %vm1234, %v1233, %v1152
  %vm1236 = vcmp.lt.s32.totalorder %v1235, %v1156
  %v1237 = vsel %vm1236, %v1235, %v1156
  %vm1238 = vcmp.lt.s32.totalorder %v1237, %v1160
  %v1239 = vsel %vm1238, %v1237, %v1160
  %vm1240 = vcmp.lt.s32.totalorder %v1239, %v1164
  %v1241 = vsel %vm1240, %v1239, %v1164
  %vm1242 = vcmp.lt.s32.totalorder %v1241, %v1168
  %v1243 = vsel %vm1242, %v1241, %v1168
  %vm1244 = vcmp.lt.s32.totalorder %v1243, %v1172
  %v1245 = vsel %vm1244, %v1243, %v1172
  %vm1246 = vcmp.lt.s32.totalorder %v1245, %v1176
  %v1247 = vsel %vm1246, %v1245, %v1176
  %v1248 = vrot.slane %v1247, 4
  %vm1249 = vcmp.lt.s32.totalorder %v1247, %v1248
  %v1250 = vsel %vm1249, %v1247, %v1248
  %v1251 = vrot.slane %v1250, 2
  %vm1252 = vcmp.lt.s32.totalorder %v1250, %v1251
  %v1253 = vsel %vm1252, %v1250, %v1251
  %v1254 = vrot.slane %v1253, 1
  %vm1255 = vcmp.lt.s32.totalorder %v1253, %v1254
  %v1256 = vsel %vm1255, %v1253, %v1254
  %vm1257 = vcmp.lt.s32.totalorder %v1117, %v1121
  %v1258 = vsel %vm1257, %v1117, %v1121
  %vm1259 = vcmp.lt.s32.totalorder %v1258, %v1125
  %v1260 = vsel %vm1259, %v1258, %v1125
  %vm1261 = vcmp.lt.s32.totalorder %v1260, %v1129
  %v1262 = vsel %vm1261, %v1260, %v1129
  %vm1263 = vcmp.lt.s32.totalorder %v1262, %v1133
  %v1264 = vsel %vm1263, %v1262, %v1133
  %vm1265 = vcmp.lt.s32.totalorder %v1264, %v1137
  %v1266 = vsel %vm1265, %v1264, %v1137
  %vm1267 = vcmp.lt.s32.totalorder %v1266, %v1141
  %v1268 = vsel %vm1267, %v1266, %v1141
  %vm1269 = vcmp.lt.s32.totalorder %v1268, %v1145
  %v1270 = vsel %vm1269, %v1268, %v1145
  %vm1271 = vcmp.lt.s32.totalorder %v1270, %v1149
  %v1272 = vsel %vm1271, %v1270, %v1149
  %vm1273 = vcmp.lt.s32.totalorder %v1272, %v1153
  %v1274 = vsel %vm1273, %v1272, %v1153
  %vm1275 = vcmp.lt.s32.totalorder %v1274, %v1157
  %v1276 = vsel %vm1275, %v1274, %v1157
  %vm1277 = vcmp.lt.s32.totalorder %v1276, %v1161
  %v1278 = vsel %vm1277, %v1276, %v1161
  %vm1279 = vcmp.lt.s32.totalorder %v1278, %v1165
  %v1280 = vsel %vm1279, %v1278, %v1165
  %vm1281 = vcmp.lt.s32.totalorder %v1280, %v1169
  %v1282 = vsel %vm1281, %v1280, %v1169
  %vm1283 = vcmp.lt.s32.totalorder %v1282, %v1173
  %v1284 = vsel %vm1283, %v1282, %v1173
  %vm1285 = vcmp.lt.s32.totalorder %v1284, %v1177
  %v1286 = vsel %vm1285, %v1284, %v1177
  %v1287 = vrot.slane %v1286, 4
  %vm1288 = vcmp.lt.s32.totalorder %v1286, %v1287
  %v1289 = vsel %vm1288, %v1286, %v1287
  %v1290 = vrot.slane %v1289, 2
  %vm1291 = vcmp.lt.s32.totalorder %v1289, %v1290
  %v1292 = vsel %vm1291, %v1289, %v1290
  %v1293 = vrot.slane %v1292, 1
  %vm1294 = vcmp.lt.s32.totalorder %v1292, %v1293
  %v1295 = vsel %vm1294, %v1292, %v1293
  %vm1296 = vcmp.lt.s32.totalorder %v1118, %v1122
  %v1297 = vsel %vm1296, %v1118, %v1122
  %vm1298 = vcmp.lt.s32.totalorder %v1297, %v1126
  %v1299 = vsel %vm1298, %v1297, %v1126
  %vm1300 = vcmp.lt.s32.totalorder %v1299, %v1130
  %v1301 = vsel %vm1300, %v1299, %v1130
  %vm1302 = vcmp.lt.s32.totalorder %v1301, %v1134
  %v1303 = vsel %vm1302, %v1301, %v1134
  %vm1304 = vcmp.lt.s32.totalorder %v1303, %v1138
  %v1305 = vsel %vm1304, %v1303, %v1138
  %vm1306 = vcmp.lt.s32.totalorder %v1305, %v1142
  %v1307 = vsel %vm1306, %v1305, %v1142
  %vm1308 = vcmp.lt.s32.totalorder %v1307, %v1146
  %v1309 = vsel %vm1308, %v1307, %v1146
  %vm1310 = vcmp.lt.s32.totalorder %v1309, %v1150
  %v1311 = vsel %vm1310, %v1309, %v1150
  %vm1312 = vcmp.lt.s32.totalorder %v1311, %v1154
  %v1313 = vsel %vm1312, %v1311, %v1154
  %vm1314 = vcmp.lt.s32.totalorder %v1313, %v1158
  %v1315 = vsel %vm1314, %v1313, %v1158
  %vm1316 = vcmp.lt.s32.totalorder %v1315, %v1162
  %v1317 = vsel %vm1316, %v1315, %v1162
  %vm1318 = vcmp.lt.s32.totalorder %v1317, %v1166
  %v1319 = vsel %vm1318, %v1317, %v1166
  %vm1320 = vcmp.lt.s32.totalorder %v1319, %v1170
  %v1321 = vsel %vm1320, %v1319, %v1170
  %vm1322 = vcmp.lt.s32.totalorder %v1321, %v1174
  %v1323 = vsel %vm1322, %v1321, %v1174
  %vm1324 = vcmp.lt.s32.totalorder %v1323, %v1178
  %v1325 = vsel %vm1324, %v1323, %v1178
  %v1326 = vrot.slane %v1325, 4
  %vm1327 = vcmp.lt.s32.totalorder %v1325, %v1326
  %v1328 = vsel %vm1327, %v1325, %v1326
  %v1329 = vrot.slane %v1328, 2
  %vm1330 = vcmp.lt.s32.totalorder %v1328, %v1329
  %v1331 = vsel %vm1330, %v1328, %v1329
  %v1332 = vrot.slane %v1331, 1
  %vm1333 = vcmp.lt.s32.totalorder %v1331, %v1332
  %v1334 = vsel %vm1333, %v1331, %v1332
  %s1335 = smul.u32 0, 128
  %v1336 = vstv %s1335
  %v1337 = vadd.s32 %v1217, %v1336
  %v1338 = vadd.s32 %v1256, %v1336
  %v1339 = vadd.s32 %v1295, %v1336
  %v1340 = vadd.s32 %v1334, %v1336
  %v1341 = vld [vmem:[#allocation2] sm:$0xf]
  %v1343 = vlaneseq
  %v1344 = vshrl.u32 %v1343, 7
  %v1345 = vsub.s32 0, %v1344
  %v1346 = vrot.slane %v1341, %v1345
  %v1347 = vlaneseq
  %v1348 = vshrl.u32 %v1347, 7
  %v1349 = vsub.s32 1, %v1348
  %v1350 = vrot.slane %v1341, %v1349
  %v1351 = vlaneseq
  %v1352 = vshrl.u32 %v1351, 7
  %v1353 = vsub.s32 2, %v1352
  %v1354 = vrot.slane %v1341, %v1353
  %v1355 = vlaneseq
  %v1356 = vshrl.u32 %v1355, 7
  %v1357 = vsub.s32 3, %v1356
  %v1358 = vrot.slane %v1341, %v1357
  %vm1363 = vcmp.lt.f32.partialorder %v923, %v1346
  %vm1364 = vcmp.lt.f32.partialorder %v944, %v1350
  %vm1365 = vcmp.lt.f32.partialorder %v965, %v1354
  %vm1366 = vcmp.lt.f32.partialorder %v986, %v1358
  %v1367 = vld [vmem:[#allocation3] sm:$0xf]
  %v1368 = vlaneseq
  %v1369 = vshrl.u32 %v1368, 7
  %v1370 = vsub.s32 0, %v1369
  %v1371 = vrot.slane %v1367, %v1370
  %v1372 = vlaneseq
  %v1373 = vshrl.u32 %v1372, 7
  %v1374 = vsub.s32 1, %v1373
  %v1375 = vrot.slane %v1367, %v1374
  %v1376 = vlaneseq
  %v1377 = vshrl.u32 %v1376, 7
  %v1378 = vsub.s32 2, %v1377
  %v1379 = vrot.slane %v1367, %v1378
  %v1380 = vlaneseq
  %v1381 = vshrl.u32 %v1380, 7
  %v1382 = vsub.s32 3, %v1381
  %v1383 = vrot.slane %v1367, %v1382
  %v1384 = vsel %vm1363, %v1337, %v1371
  %v1385 = vsel %vm1364, %v1338, %v1375
  %v1386 = vsel %vm1365, %v1339, %v1379
  %v1387 = vsel %vm1366, %v1340, %v1383
  %v1388 = vcombine.low %v1384, %v1385
  %v1389 = vcombine.low %v1386, %v1387
  %v1391 = vunpack.c.l.s4 1966171168
  %v1392 = vunpack.c.0.s8 %v1391
  %v1393 = vlaneseq
  %v1394 = vshrl.u32 %v1393, 7
  %v1395 = vsub.s32 %v1392, %v1394
  %v1396 = vrot.slane %v1388, %v1395
  %v1398 = vunpack.c.l.s4 1966171168
  %v1399 = vunpack.c.0.s8 %v1398
  %v1400 = vlaneseq
  %v1401 = vshrl.u32 %v1400, 7
  %v1402 = vsub.s32 %v1399, %v1401
  %v1403 = vrot.slane %v1389, %v1402
  %v1404 = vcombine.low %v1396, %v1403
  %v1406 = vunpack.c.l.s4 1966171168
  %v1407 = vunpack.c.0.s8 %v1406
  %v1408 = vlaneseq
  %v1409 = vshrl.u32 %v1408, 7
  %v1410 = vsub.s32 %v1407, %v1409
  %v1411 = vrot.slane %v1404, %v1410
  %v1412 = vlaneseq
  %vm1413 = vcmp.ge.s32.totalorder %v1412, 0
  %vm1414 = vcmp.lt.s32.totalorder %v1412, 512
  %vm1415 = vmand %vm1413, %vm1414
  %1416 = vst.msk [vmem:[#allocation3] sm:$0xf] %vm1415, %v1411
  %v1417 = vld [vmem:[#allocation2] sm:$0xf]
  %v1419 = vlaneseq
  %v1420 = vshrl.u32 %v1419, 7
  %v1421 = vsub.s32 0, %v1420
  %v1422 = vrot.slane %v1417, %v1421
  %v1423 = vlaneseq
  %v1424 = vshrl.u32 %v1423, 7
  %v1425 = vsub.s32 1, %v1424
  %v1426 = vrot.slane %v1417, %v1425
  %v1427 = vlaneseq
  %v1428 = vshrl.u32 %v1427, 7
  %v1429 = vsub.s32 2, %v1428
  %v1430 = vrot.slane %v1417, %v1429
  %v1431 = vlaneseq
  %v1432 = vshrl.u32 %v1431, 7
  %v1433 = vsub.s32 3, %v1432
  %v1434 = vrot.slane %v1417, %v1433
  %v1439 = vsel %vm1363, %v923, %v1422
  %v1440 = vsel %vm1364, %v944, %v1426
  %v1441 = vsel %vm1365, %v965, %v1430
  %v1442 = vsel %vm1366, %v986, %v1434
  %v1447 = vcombine.low %v1439, %v1440
  %v1448 = vcombine.low %v1441, %v1442
  %v1450 = vunpack.c.l.s4 1966171168
  %v1451 = vunpack.c.0.s8 %v1450
  %v1452 = vlaneseq
  %v1453 = vshrl.u32 %v1452, 7
  %v1454 = vsub.s32 %v1451, %v1453
  %v1455 = vrot.slane %v1447, %v1454
  %v1457 = vunpack.c.l.s4 1966171168
  %v1458 = vunpack.c.0.s8 %v1457
  %v1459 = vlaneseq
  %v1460 = vshrl.u32 %v1459, 7
  %v1461 = vsub.s32 %v1458, %v1460
  %v1462 = vrot.slane %v1448, %v1461
  %v1463 = vcombine.low %v1455, %v1462
  %v1465 = vunpack.c.l.s4 1966171168
  %v1466 = vunpack.c.0.s8 %v1465
  %v1467 = vlaneseq
  %v1468 = vshrl.u32 %v1467, 7
  %v1469 = vsub.s32 %v1466, %v1468
  %v1470 = vrot.slane %v1463, %v1469
  %1472 = vst.msk [vmem:[#allocation2] sm:$0xf] %vm1415, %v1470
  // Predicated region
  $region22: #{patchcore_forward.13} parent=0 // pred_check
    %p1473 = pneg %p20
  $region23: #{patchcore_forward.13} parent=0 // pred_check_branch
    %1475 = sbr.rel (%p1473) target = $region25
  $region24: #{patchcore_forward.13} parent=0 // pred_region
    %v1476 = vld [vmem:[#allocation2] sm:$0xf]
    %1477 = vst.msk [vmem:[%s4] sm:$0xf] %vm1415, %v1476
    %v1478 = vld [vmem:[#allocation3] sm:$0xf]
    %1479 = vst.msk [vmem:[%s5] sm:$0xf] %vm1415, %v1478
  $region25: #{patchcore_forward.13} parent=0 // pred_fallthru
    _
  // Predicated region
  $region26: #{patchcore_forward.13} parent=0 // pred_check
    _
  $region27: #{patchcore_forward.13} parent=0 // pred_check_branch
    %1481 = sbr.rel (0) target = $region29
  $region28: #{patchcore_forward.13} parent=0 // pred_region
    _
  $region29: #{patchcore_forward.13} parent=0 // pred_fallthru
    _
  // Predicated region
  $region30: #{patchcore_forward.13} parent=0 // pred_check
    _
  $region31: #{patchcore_forward.13} parent=0 // pred_check_branch
    %1483 = sbr.rel (0) target = $region33
  $region32: #{patchcore_forward.13} parent=0 // pred_region
    _
  $region33: #{patchcore_forward.13} parent=0 // pred_fallthru
    _
  // Predicated region
  $region34: #{patchcore_forward.13} parent=0 // pred_check
    _
  $region35: #{patchcore_forward.13} parent=0 // pred_check_branch
    %1485 = sbr.rel (0) target = $region37
  $region36: #{patchcore_forward.13} parent=0 // pred_region
    _
  $region37: #{patchcore_forward.13} parent=0 // pred_fallthru
    _
  // Predicated region
  $region38: #{patchcore_forward.13} parent=0 // pred_check
    _
  $region39: #{patchcore_forward.13} parent=0 // pred_check_branch
    %1487 = sbr.rel (0) target = $region41
  $region40: #{patchcore_forward.13} parent=0 // pred_region
    _
  $region41: #{patchcore_forward.13} parent=0 // pred_fallthru
    _

// kernel: patchcore_forward.14
$region0: #{patchcore_forward.14}
  #allocation0 [shape = 'u32[]', space=smem, size = 0x4, offset = 0x4, fixed_abs, tag = 'smem constant byte address 0x4 - core index']
  #allocation1 [shape = 'u32[144,128]{1,0:T(1,128)}', space=vmem, size = 0x12000, scoped, tag = 'internal scratch']
  %s0 = inlined_call_operand.vmem [shape: f32[8,128], index: 0, kind: input, shape index: {}]
  %s1 = inlined_call_operand.vmem [shape: f32[8,1], index: 1, kind: input, shape index: {}]
  %s2 = inlined_call_operand.vmem [shape: f32[128,128], index: 2, kind: input, shape index: {}]
  %s3 = inlined_call_operand.vmem [shape: f32[1,128], index: 3, kind: input, shape index: {}]
  %s4 = inlined_call_operand.vmem [shape: f32[8,128], index: 4, kind: output, shape index: {}]
  %s5 = sld [smem:[#allocation0]]
  $region26: #{patchcore_forward.14} parent=0
    _
  %s7 = ssub.s32 1, %s5
  %s8 = scalar_select 0, %s7, %s5
  // Predicated region
  $region2: #{patchcore_forward.14} parent=0 // pred_check
    _
  $region3: #{patchcore_forward.14} parent=0 // pred_check_branch
    %10 = sbr.rel (0) target = $region5
  $region4: #{patchcore_forward.14} parent=0 // pred_region
    _
  $region5: #{patchcore_forward.14} parent=0 // pred_fallthru
    _
  // Predicated region
  $region6: #{patchcore_forward.14} parent=0 // pred_check
    _
  $region7: #{patchcore_forward.14} parent=0 // pred_check_branch
    %12 = sbr.rel (0) target = $region9
  $region8: #{patchcore_forward.14} parent=0 // pred_region
    _
  $region9: #{patchcore_forward.14} parent=0 // pred_fallthru
    _
  // Predicated region
  $region10: #{patchcore_forward.14} parent=0 // pred_check
    _
  $region11: #{patchcore_forward.14} parent=0 // pred_check_branch
    %14 = sbr.rel (0) target = $region13
  $region12: #{patchcore_forward.14} parent=0 // pred_region
    _
  $region13: #{patchcore_forward.14} parent=0 // pred_fallthru
    _
  // Predicated region
  $region14: #{patchcore_forward.14} parent=0 // pred_check
    _
  $region15: #{patchcore_forward.14} parent=0 // pred_check_branch
    %16 = sbr.rel (0) target = $region17
  $region16: #{patchcore_forward.14} parent=0 // pred_region
    _
  $region17: #{patchcore_forward.14} parent=0 // pred_fallthru
    _
  %v17 = vld [vmem:[%s0] sm:$0xff]
  %v18 = vld [vmem:[%s2] sm:$0xff]
  %v19 = vld [vmem:[%s2 + $0x8] sm:$0xff]
  %v20 = vld [vmem:[%s2 + $0x10] sm:$0xff]
  %v21 = vld [vmem:[%s2 + $0x18] sm:$0xff]
  %v22 = vld [vmem:[%s2 + $0x20] sm:$0xff]
  %v23 = vld [vmem:[%s2 + $0x28] sm:$0xff]
  %v24 = vld [vmem:[%s2 + $0x30] sm:$0xff]
  %v25 = vld [vmem:[%s2 + $0x38] sm:$0xff]
  %v26 = vld [vmem:[%s2 + $0x40] sm:$0xff]
  %v27 = vld [vmem:[%s2 + $0x48] sm:$0xff]
  %v28 = vld [vmem:[%s2 + $0x50] sm:$0xff]
  %v29 = vld [vmem:[%s2 + $0x58] sm:$0xff]
  %v30 = vld [vmem:[%s2 + $0x60] sm:$0xff]
  %v31 = vld [vmem:[%s2 + $0x68] sm:$0xff]
  %v32 = vld [vmem:[%s2 + $0x70] sm:$0xff]
  %v33 = vld [vmem:[%s2 + $0x78] sm:$0xff]
  %34 = vmatprep.subr.mxu0 0.0
  %35 = vmatpush1.xpose.msra.mxu0 %v18
  %36 = vmatprep.subr.mxu0 0.0
  %37 = vmatpush1.xpose.msra.mxu0 %v19
  %38 = vmatprep.subr.mxu0 0.0
  %39 = vmatpush1.xpose.msra.mxu0 %v20
  %40 = vmatprep.subr.mxu0 0.0
  %41 = vmatpush1.xpose.msra.mxu0 %v21
  %42 = vmatprep.subr.mxu0 0.0
  %43 = vmatpush1.xpose.msra.mxu0 %v22
  %44 = vmatprep.subr.mxu0 0.0
  %45 = vmatpush1.xpose.msra.mxu0 %v23
  %46 = vmatprep.subr.mxu0 0.0
  %47 = vmatpush1.xpose.msra.mxu0 %v24
  %48 = vmatprep.subr.mxu0 0.0
  %49 = vmatpush1.xpose.msra.mxu0 %v25
  %50 = vmatprep.subr.mxu0 0.0
  %51 = vmatpush1.xpose.msra.mxu0 %v26
  %52 = vmatprep.subr.mxu0 0.0
  %53 = vmatpush1.xpose.msra.mxu0 %v27
  %54 = vmatprep.subr.mxu0 0.0
  %55 = vmatpush1.xpose.msra.mxu0 %v28
  %56 = vmatprep.subr.mxu0 0.0
  %57 = vmatpush1.xpose.msra.mxu0 %v29
  %58 = vmatprep.subr.mxu0 0.0
  %59 = vmatpush1.xpose.msra.mxu0 %v30
  %60 = vmatprep.subr.mxu0 0.0
  %61 = vmatpush1.xpose.msra.mxu0 %v31
  %62 = vmatprep.subr.mxu0 0.0
  %63 = vmatpush1.xpose.msra.mxu0 %v32
  %64 = vmatprep.subr.mxu0 0.0
  %65 = vmatpush1.xpose.msra.mxu0 %v33
  %66 = vmatprep.subr.mxu0 0.0
  %67 = vmatpush1.xpose.msra.mxu0 0.0
  %68 = vmatprep.subr.mxu0 0.0
  %69 = vmatpush1.xpose.msra.mxu0 0.0
  %70 = vmatprep.subr.mxu0 0.0
  %71 = vmatpush1.xpose.msra.mxu0 0.0
  %72 = vmatprep.subr.mxu0 0.0
  %73 = vmatpush1.xpose.msra.mxu0 0.0
  %74 = vmatprep.subr.mxu0 0.0
  %75 = vmatpush1.xpose.msra.mxu0 0.0
  %76 = vmatprep.subr.mxu0 0.0
  %77 = vmatpush1.xpose.msra.mxu0 0.0
  %78 = vmatprep.subr.mxu0 0.0
  %79 = vmatpush1.xpose.msra.mxu0 0.0
  %80 = vmatprep.subr.mxu0 0.0
  %81 = vmatpush1.xpose.msra.mxu0 0.0
  %82 = vmatprep.subr.mxu0 0.0
  %83 = vmatpush1.xpose.msra.mxu0 0.0
  %84 = vmatprep.subr.mxu0 0.0
  %85 = vmatpush1.xpose.msra.mxu0 0.0
  %86 = vmatprep.subr.mxu0 0.0
  %87 = vmatpush1.xpose.msra.mxu0 0.0
  %88 = vmatprep.subr.mxu0 0.0
  %89 = vmatpush1.xpose.msra.mxu0 0.0
  %90 = vmatprep.subr.mxu0 0.0
  %91 = vmatpush1.xpose.msra.mxu0 0.0
  %92 = vmatprep.subr.mxu0 0.0
  %93 = vmatpush1.xpose.msra.mxu0 0.0
  %94 = vmatprep.subr.mxu0 0.0
  %95 = vmatpush1.xpose.msra.mxu0 0.0
  %96 = vmatprep.subr.mxu0 0.0
  %97 = vmatpush1.xpose.msra.mxu0 0.0
  %98 = vmatprep.mubr.f32.mxu0 0.0
  %99 = vmatmul.mubr.f32.gmra.mrb[0].mxu0 %v17
  %v100 = vpop.f32.mrb[0].mxu0
  %v101 = vadd.f32 0.0, %v100
  %v102 = vpop.f32.mrb[0].mxu0
  %103 = vdwg.mxu0
  %v104 = vld [vmem:[%s1] sm:$0xff]
  %v105 = vmul.f32 %v101, 2.0
  %107 = vset.pattern.permute.xlu0 0
  %108 = vperm.xlu0 %107, %v104
  %v109 = vpop.permute.xlu0 %108
  %v111 = vsub.f32 %v109, %v105
  %v112 = vld [vmem:[%s3] sm:$0x1]
  %v114 = vlaneseq
  %v115 = vshrl.u32 %v114, 7
  %v116 = vsub.s32 0, %v115
  %v117 = vrot.slane %v112, %v116
  %v119 = vadd.f32 %v111, %v117
  %120 = vst [vmem:[%s4] sm:$0xff] %v119
  // Predicated region
  $region18: #{patchcore_forward.14} parent=0 // pred_check
    _
  $region19: #{patchcore_forward.14} parent=0 // pred_check_branch
    %122 = sbr.rel (0) target = $region21
  $region20: #{patchcore_forward.14} parent=0 // pred_region
    _
  $region21: #{patchcore_forward.14} parent=0 // pred_fallthru
    _
  // Predicated region
  $region22: #{patchcore_forward.14} parent=0 // pred_check
    _
  $region23: #{patchcore_forward.14} parent=0 // pred_check_branch
    %124 = sbr.rel (0) target = $region25
  $region24: #{patchcore_forward.14} parent=0 // pred_region
    _
  $region25: #{patchcore_forward.14} parent=0 // pred_fallthru
    _

// kernel: patchcore_forward.15
$region0: #{patchcore_forward.15}
  #allocation0 [shape = 'u32[]', space=smem, size = 0x4, offset = 0x4, fixed_abs, tag = 'smem constant byte address 0x4 - core index']
  #allocation1 [shape = 'u32[144,128]{1,0:T(1,128)}', space=vmem, size = 0x12000, scoped, tag = 'internal scratch']
  %s0 = inlined_call_operand.vmem [shape: f32[32,16], index: 0, kind: input, shape index: {}]
  %s1 = inlined_call_operand.vmem [shape: f32[16,32], index: 1, kind: input, shape index: {}]
  %s2 = inlined_call_operand.vmem [shape: f32[2,16,16], index: 2, kind: input, shape index: {}]
  %s3 = inlined_call_operand.hbm [shape: f32[2,32,32], index: 3, kind: output, shape index: {}]
  %s4 = sld [smem:[#allocation0]]
  $region45: #{patchcore_forward.15} parent=0
    _
  %s6 = ssub.s32 1, %s4
  %s7 = scalar_select 0, %s6, %s4
  $region1: #{patchcore_forward.15} parent=0
    #allocation2 [shape = 'u8[32768]{0}', space=vmem, size = 0x8000, scoped, tag = 'output window, operand 0']
    #allocation3 [shape = 's32[2]{0}', space=sflag, size = 0x8, scoped, tag = 'scoped memory for patchcore_forward.15']
    %8 = vsyncpa [#allocation3], 0
    %s9 = scalar_lea.sflag [#allocation3], 1
    %10 = vsyncpa %s9, 0
    loop: start=0, step=1, limit=4
    $region2: #{patchcore_forward.15} parent=1 // loop_pre_header
      _
    $region3: #{patchcore_forward.15} parent=1 // loop_header
      %s12 = sphi 0, %s16
      %p13 = scmp.ge.s32.totalorder %s12, 4
      %s20 = sphi 0, %s20
      %s22 = sphi 0, %s20
      %s23 = sphi 0, %s22
      %s37 = sphi 0, %s23
      %s41 = sphi 0, %s41
      %s43 = sphi 0, %s41
      %s44 = sphi 0, %s43
      %s58 = sphi 0, %s44
      %s64 = sphi 0, %s66
      %s67 = sphi 0, %s64
      %s68 = sphi 0, %s67
      %s84 = sphi 0, %s68
      %s90 = sphi 0, %s92
      %s93 = sphi 0, %s90
      %s94 = sphi 0, %s93
      %s110 = sphi 0, %s94
    $region4: #{patchcore_forward.15} parent=1 // loop_header_branch
      %15 = sbr.rel (%p13) target = $region8
    $region5: #{patchcore_forward.15} parent=1 // loop_body
      %s17 = ssub.s32 %s12, 1
      %s18 = ssub.s32 %s12, 2
      %s19 = sadd.s32 %s12, 1
      %s21 = sadd.s32 %s20, 1
      %p24 = scmp.eq.s32.totalorder %s12, 1
      %p25 = scmp.ne.s32.totalorder %s20, %s22
      %p26 = scmp.eq.s32.totalorder %s12, 0
      %p27 = por %p25, %p26
      %p28 = scmp.ne.s32.totalorder %s20, %s22
      %p29 = scmp.eq.s32.totalorder %s17, 1
      %p30 = por %p28, %p29
      %p31 = scmp.ne.s32.totalorder %s22, %s23
      %p32 = scmp.eq.s32.totalorder %s17, 0
      %p33 = por %p31, %p32
      %p34 = scmp.ne.s32.totalorder %s22, %s23
      %p35 = scmp.eq.s32.totalorder %s18, 1
      %p36 = por %p34, %p35
      %p38 = scmp.ne.s32.totalorder %s23, %s37
      %p39 = scmp.eq.s32.totalorder %s18, 0
      %p40 = por %p38, %p39
      %s42 = sadd.s32 %s41, 1
      %p45 = scmp.eq.s32.totalorder %s12, 1
      %p46 = scmp.ne.s32.totalorder %s41, %s43
      %p47 = scmp.eq.s32.totalorder %s12, 0
      %p48 = por %p46, %p47
      %p49 = scmp.ne.s32.totalorder %s41, %s43
      %p50 = scmp.eq.s32.totalorder %s17, 1
      %p51 = por %p49, %p50
      %p52 = scmp.ne.s32.totalorder %s43, %s44
      %p53 = scmp.eq.s32.totalorder %s17, 0
      %p54 = por %p52, %p53
      %p55 = scmp.ne.s32.totalorder %s43, %s44
      %p56 = scmp.eq.s32.totalorder %s18, 1
      %p57 = por %p55, %p56
      %p59 = scmp.ne.s32.totalorder %s44, %s58
      %p60 = scmp.eq.s32.totalorder %s18, 0
      %p61 = por %p59, %p60
      %s62 = ssub.s32 %s12, %s19
      %p63 = scmp.eq.s32.totalorder %s62, 0
      %s65 = sadd.s32 %s64, 1
      %s66 = scalar_select %p63, %s64, %s65
      %p69 = pneg %p63
      %p70 = scmp.eq.s32.totalorder %s12, 1
      %p71 = por %p69, %p70
      %p72 = scmp.ne.s32.totalorder %s64, %s67
      %p73 = scmp.eq.s32.totalorder %s12, 0
      %p74 = por %p72, %p73
      %p75 = scmp.ne.s32.totalorder %s64, %s67
      %p76 = scmp.eq.s32.totalorder %s17, 1
      %p77 = por %p75, %p76
      %p78 = scmp.ne.s32.totalorder %s67, %s68
      %p79 = scmp.eq.s32.totalorder %s17, 0
      %p80 = por %p78, %p79
      %p81 = scmp.ne.s32.totalorder %s67, %s68
      %p82 = scmp.eq.s32.totalorder %s18, 1
      %p83 = por %p81, %p82
      %p85 = scmp.ne.s32.totalorder %s68, %s84
      %p86 = scmp.eq.s32.totalorder %s18, 0
      %p87 = por %p85, %p86
      %s88 = ssub.s32 %s12, %s19
      %p89 = scmp.eq.s32.totalorder %s88, 0
      %s91 = sadd.s32 %s90, 1
      %s92 = scalar_select %p89, %s90, %s91
      %p95 = pneg %p89
      %p96 = scmp.eq.s32.totalorder %s12, 1
      %p97 = por %p95, %p96
      %p98 = scmp.ne.s32.totalorder %s90, %s93
      %p99 = scmp.eq.s32.totalorder %s12, 0
      %p100 = por %p98, %p99
      %p101 = scmp.ne.s32.totalorder %s90, %s93
      %p102 = scmp.eq.s32.totalorder %s17, 1
      %p103 = por %p101, %p102
      %p104 = scmp.ne.s32.totalorder %s93, %s94
      %p105 = scmp.eq.s32.totalorder %s17, 0
      %p106 = por %p104, %p105
      %p107 = scmp.ne.s32.totalorder %s93, %s94
      %p108 = scmp.eq.s32.totalorder %s18, 1
      %p109 = por %p107, %p108
      %p111 = scmp.ne.s32.totalorder %s94, %s110
      %p112 = scmp.eq.s32.totalorder %s18, 0
      %p113 = por %p111, %p112
      %p114 = scmp.le.s32.totalorder 1, %s12
      %p115 = scmp.lt.s32.totalorder %s12, 3
      %p116 = pnand %p114, %p115
      %p117 = pneg %p116
      // Predicated region
      $region9: #{patchcore_forward.15} parent=5 // pred_check
        _
      $region10: #{patchcore_forward.15} parent=5 // pred_check_branch
        %119 = sbr.rel (%p116) target = $region12
      $region11: #{patchcore_forward.15} parent=5 // pred_region
        %s120 = ssub.s32 %s12, 1
        // Predicated region
        $region13: #{patchcore_forward.15} parent=11 // pred_check
          %p121 = pneg %p33
        $region14: #{patchcore_forward.15} parent=11 // pred_check_branch
          %123 = sbr.rel (%p121) target = $region16
        $region15: #{patchcore_forward.15} parent=11 // pred_region
          _
        $region16: #{patchcore_forward.15} parent=11 // pred_fallthru
          _
        // Predicated region
        $region17: #{patchcore_forward.15} parent=11 // pred_check
          %p124 = pneg %p54
        $region18: #{patchcore_forward.15} parent=11 // pred_check_branch
          %126 = sbr.rel (%p124) target = $region20
        $region19: #{patchcore_forward.15} parent=11 // pred_region
          _
        $region20: #{patchcore_forward.15} parent=11 // pred_fallthru
          _
      $region12: #{patchcore_forward.15} parent=5 // pred_fallthru
        _
      %p127 = scmp.lt.s32.totalorder %s12, 2
      // Predicated region
      $region21: #{patchcore_forward.15} parent=5 // pred_check
        %p128 = pneg %p127
      $region22: #{patchcore_forward.15} parent=5 // pred_check_branch
        %130 = sbr.rel (%p128) target = $region24
      $region23: #{patchcore_forward.15} parent=5 // pred_region
        // Predicated region
        $region25: #{patchcore_forward.15} parent=23 // pred_check
          %p131 = pneg %p74
        $region26: #{patchcore_forward.15} parent=23 // pred_check_branch
          %133 = sbr.rel (%p131) target = $region28
        $region27: #{patchcore_forward.15} parent=23 // pred_region
          %p134 = scmp.lt.s32.totalorder %s12, 1
          %s135 = scalar_select %p134, %s12, 1
          %s136 = smul.addr %s135, 2
          %s137 = smul.addr %s136, 8
          %s138 = scalar_lea.vmem %s2, %s137
        $region28: #{patchcore_forward.15} parent=23 // pred_fallthru
          _
      $region24: #{patchcore_forward.15} parent=5 // pred_fallthru
        _
      %p139 = scmp.le.s32.totalorder 1, %s12
      %p140 = scmp.lt.s32.totalorder %s12, 3
      %p141 = pnand %p139, %p140
      %p142 = pneg %p141
      // Predicated region
      $region29: #{patchcore_forward.15} parent=5 // pred_check
        _
      $region30: #{patchcore_forward.15} parent=5 // pred_check_branch
        %144 = sbr.rel (%p141) target = $region32
      $region31: #{patchcore_forward.15} parent=5 // pred_region
        %s145 = ssub.s32 %s12, 1
        %p146 = pneg %p33
        %p147 = pneg %p30
        %p148 = pneg %p54
        %p149 = pneg %p51
        %p150 = scmp.lt.s32.totalorder %s17, 1
        %s151 = scalar_select %p150, %s17, 1
        %s152 = smul.addr %s151, 2
        %s153 = smul.addr %s152, 8
        %s154 = scalar_lea.vmem %s2, %s153
        %p155 = pneg %p80
        %p156 = pneg %p77
        %p157 = pneg %p106
        %p158 = pneg %p103
        %s159 = sand.u32 %s93, 1
        %s160 = scalar_lea.sflag [#allocation3], %s159
        %s161 = sand.u32 %s93, 1
        %s162 = smul.addr %s161, 32
        %s163 = scalar_lea.vmem [#allocation2], %s162
        %p164 = scmp.lt.s32.totalorder %s17, 1
        %s165 = scalar_select %p164, %s17, 1
        %s166 = smul.addr %s165, 2
        %s167 = smul.addr %s166, 8
        %s168 = scalar_lea.vmem %s2, %s167
        %v169 = vld [vmem:[%s0] sm:$0xff]
        %v170 = vld [vmem:[%s0 + $0x8] sm:$0xff]
        %v171 = vld [vmem:[%s0 + $0x10] sm:$0xff]
        %v172 = vld [vmem:[%s0 + $0x18] sm:$0xff]
        %v173 = vld [vmem:[%s168] sm:$0xff]
        %v174 = vld [vmem:[%s168 + $0x8] sm:$0xff]
        %vm175 = vcmask 130048
        %v177 = vsel %vm175, %v169, 0
        %v180 = vsel %vm175, %v170, 0
        %v183 = vsel %vm175, %v171, 0
        %v186 = vsel %vm175, %v172, 0
        %188 = vmatprep.subr.mxu0 0.0
        %189 = vmatpush1.msra.mxu0 %v173
        %190 = vmatprep.subr.mxu0 0.0
        %191 = vmatpush1.msra.mxu0 %v174
        %192 = vmatprep.subr.mxu0 0.0
        %193 = vmatpush1.msra.mxu0 0.0
        %194 = vmatprep.subr.mxu0 0.0
        %195 = vmatpush1.msra.mxu0 0.0
        %196 = vmatprep.subr.mxu0 0.0
        %197 = vmatpush1.msra.mxu0 0.0
        %198 = vmatprep.subr.mxu0 0.0
        %199 = vmatpush1.msra.mxu0 0.0
        %200 = vmatprep.subr.mxu0 0.0
        %201 = vmatpush1.msra.mxu0 0.0
        %202 = vmatprep.subr.mxu0 0.0
        %203 = vmatpush1.msra.mxu0 0.0
        %204 = vmatprep.subr.mxu0 0.0
        %205 = vmatpush1.msra.mxu0 0.0
        %206 = vmatprep.subr.mxu0 0.0
        %207 = vmatpush1.msra.mxu0 0.0
        %208 = vmatprep.subr.mxu0 0.0
        %209 = vmatpush1.msra.mxu0 0.0
        %210 = vmatprep.subr.mxu0 0.0
        %211 = vmatpush1.msra.mxu0 0.0
        %212 = vmatprep.subr.mxu0 0.0
        %213 = vmatpush1.msra.mxu0 0.0
        %214 = vmatprep.subr.mxu0 0.0
        %215 = vmatpush1.msra.mxu0 0.0
        %216 = vmatprep.subr.mxu0 0.0
        %217 = vmatpush1.msra.mxu0 0.0
        %218 = vmatprep.subr.mxu0 0.0
        %219 = vmatpush1.msra.mxu0 0.0
        %220 = vmatprep.subr.mxu0 0.0
        %221 = vmatpush1.msra.mxu0 0.0
        %222 = vmatprep.subr.mxu0 0.0
        %223 = vmatpush1.msra.mxu0 0.0
        %224 = vmatprep.subr.mxu0 0.0
        %225 = vmatpush1.msra.mxu0 0.0
        %226 = vmatprep.subr.mxu0 0.0
        %227 = vmatpush1.msra.mxu0 0.0
        %228 = vmatprep.subr.mxu0 0.0
        %229 = vmatpush1.msra.mxu0 0.0
        %230 = vmatprep.subr.mxu0 0.0
        %231 = vmatpush1.msra.mxu0 0.0
        %232 = vmatprep.subr.mxu0 0.0
        %233 = vmatpush1.msra.mxu0 0.0
        %234 = vmatprep.subr.mxu0 0.0
        %235 = vmatpush1.msra.mxu0 0.0
        %236 = vmatprep.subr.mxu0 0.0
        %237 = vmatpush1.msra.mxu0 0.0
        %238 = vmatprep.subr.mxu0 0.0
        %239 = vmatpush1.msra.mxu0 0.0
        %240 = vmatprep.subr.mxu0 0.0
        %241 = vmatpush1.msra.mxu0 0.0
        %242 = vmatprep.subr.mxu0 0.0
        %243 = vmatpush1.msra.mxu0 0.0
        %244 = vmatprep.subr.mxu0 0.0
        %245 = vmatpush1.msra.mxu0 0.0
        %246 = vmatprep.subr.mxu0 0.0
        %247 = vmatpush1.msra.mxu0 0.0
        %248 = vmatprep.subr.mxu0 0.0
        %249 = vmatpush1.msra.mxu0 0.0
        %250 = vmatprep.subr.mxu0 0.0
        %251 = vmatpush1.msra.mxu0 0.0
        %252 = vmatprep.mubr.f32.mxu0 0.0
        %253 = vmatmul.mubr.f32.gmra.mrb[0].mxu0 %v177
        %v254 = vpop.f32.mrb[0].mxu0
        %v255 = vadd.f32 0.0, %v254
        %v256 = vpop.f32.mrb[0].mxu0
        %257 = vmatprep.mubr.f32.mxu0 0.0
        %258 = vmatmul.mubr.f32.gmra.mrb[0].mxu0 %v180
        %v259 = vpop.f32.mrb[0].mxu0
        %v260 = vadd.f32 0.0, %v259
        %v261 = vpop.f32.mrb[0].mxu0
        %262 = vmatprep.mubr.f32.mxu0 0.0
        %263 = vmatmul.mubr.f32.gmra.mrb[0].mxu0 %v183
        %v264 = vpop.f32.mrb[0].mxu0
        %v265 = vadd.f32 0.0, %v264
        %v266 = vpop.f32.mrb[0].mxu0
        %267 = vmatprep.mubr.f32.mxu0 0.0
        %268 = vmatmul.mubr.f32.gmra.mrb[0].mxu0 %v186
        %v269 = vpop.f32.mrb[0].mxu0
        %v270 = vadd.f32 0.0, %v269
        %v271 = vpop.f32.mrb[0].mxu0
        %272 = vdwg.mxu0
        %v273 = vld [vmem:[%s1] sm:$0xff]
        %v274 = vld [vmem:[%s1 + $0x8] sm:$0xff]
        %v276 = vsel %vm175, %v255, 0
        %v279 = vsel %vm175, %v260, 0
        %v282 = vsel %vm175, %v265, 0
        %v285 = vsel %vm175, %v270, 0
        %287 = vmatprep.subr.mxu0 0.0
        %288 = vmatpush1.msra.mxu0 %v273
        %289 = vmatprep.subr.mxu0 0.0
        %290 = vmatpush1.msra.mxu0 %v274
        %291 = vmatprep.subr.mxu0 0.0
        %292 = vmatpush1.msra.mxu0 0.0
        %293 = vmatprep.subr.mxu0 0.0
        %294 = vmatpush1.msra.mxu0 0.0
        %295 = vmatprep.subr.mxu0 0.0
        %296 = vmatpush1.msra.mxu0 0.0
        %297 = vmatprep.subr.mxu0 0.0
        %298 = vmatpush1.msra.mxu0 0.0
        %299 = vmatprep.subr.mxu0 0.0
        %300 = vmatpush1.msra.mxu0 0.0
        %301 = vmatprep.subr.mxu0 0.0
        %302 = vmatpush1.msra.mxu0 0.0
        %303 = vmatprep.subr.mxu0 0.0
        %304 = vmatpush1.msra.mxu0 0.0
        %305 = vmatprep.subr.mxu0 0.0
        %306 = vmatpush1.msra.mxu0 0.0
        %307 = vmatprep.subr.mxu0 0.0
        %308 = vmatpush1.msra.mxu0 0.0
        %309 = vmatprep.subr.mxu0 0.0
        %310 = vmatpush1.msra.mxu0 0.0
        %311 = vmatprep.subr.mxu0 0.0
        %312 = vmatpush1.msra.mxu0 0.0
        %313 = vmatprep.subr.mxu0 0.0
        %314 = vmatpush1.msra.mxu0 0.0
        %315 = vmatprep.subr.mxu0 0.0
        %316 = vmatpush1.msra.mxu0 0.0
        %317 = vmatprep.subr.mxu0 0.0
        %318 = vmatpush1.msra.mxu0 0.0
        %319 = vmatprep.subr.mxu0 0.0
        %320 = vmatpush1.msra.mxu0 0.0
        %321 = vmatprep.subr.mxu0 0.0
        %322 = vmatpush1.msra.mxu0 0.0
        %323 = vmatprep.subr.mxu0 0.0
        %324 = vmatpush1.msra.mxu0 0.0
        %325 = vmatprep.subr.mxu0 0.0
        %326 = vmatpush1.msra.mxu0 0.0
        %327 = vmatprep.subr.mxu0 0.0
        %328 = vmatpush1.msra.mxu0 0.0
        %329 = vmatprep.subr.mxu0 0.0
        %330 = vmatpush1.msra.mxu0 0.0
        %331 = vmatprep.subr.mxu0 0.0
        %332 = vmatpush1.msra.mxu0 0.0
        %333 = vmatprep.subr.mxu0 0.0
        %334 = vmatpush1.msra.mxu0 0.0
        %335 = vmatprep.subr.mxu0 0.0
        %336 = vmatpush1.msra.mxu0 0.0
        %337 = vmatprep.subr.mxu0 0.0
        %338 = vmatpush1.msra.mxu0 0.0
        %339 = vmatprep.subr.mxu0 0.0
        %340 = vmatpush1.msra.mxu0 0.0
        %341 = vmatprep.subr.mxu0 0.0
        %342 = vmatpush1.msra.mxu0 0.0
        %343 = vmatprep.subr.mxu0 0.0
        %344 = vmatpush1.msra.mxu0 0.0
        %345 = vmatprep.subr.mxu0 0.0
        %346 = vmatpush1.msra.mxu0 0.0
        %347 = vmatprep.subr.mxu0 0.0
        %348 = vmatpush1.msra.mxu0 0.0
        %349 = vmatprep.subr.mxu0 0.0
        %350 = vmatpush1.msra.mxu0 0.0
        %351 = vmatprep.mubr.f32.mxu0 0.0
        %352 = vmatmul.mubr.f32.gmra.mrb[0].mxu0 %v276
        %v353 = vpop.f32.mrb[0].mxu0
        %v354 = vadd.f32 0.0, %v353
        %v355 = vpop.f32.mrb[0].mxu0
        %356 = vmatprep.mubr.f32.mxu0 0.0
        %357 = vmatmul.mubr.f32.gmra.mrb[0].mxu0 %v279
        %v358 = vpop.f32.mrb[0].mxu0
        %v359 = vadd.f32 0.0, %v358
        %v360 = vpop.f32.mrb[0].mxu0
        %361 = vmatprep.mubr.f32.mxu0 0.0
        %362 = vmatmul.mubr.f32.gmra.mrb[0].mxu0 %v282
        %v363 = vpop.f32.mrb[0].mxu0
        %v364 = vadd.f32 0.0, %v363
        %v365 = vpop.f32.mrb[0].mxu0
        %366 = vmatprep.mubr.f32.mxu0 0.0
        %367 = vmatmul.mubr.f32.gmra.mrb[0].mxu0 %v285
        %v368 = vpop.f32.mrb[0].mxu0
        %v369 = vadd.f32 0.0, %v368
        %v370 = vpop.f32.mrb[0].mxu0
        %371 = vdwg.mxu0
        %vm372 = vcmask 261120
        %373 = vst.msk [vmem:[%s163] sm:$0xff] %vm372, %v354
        %374 = vst.msk [vmem:[%s163 + $0x8] sm:$0xff] %vm372, %v359
        %375 = vst.msk [vmem:[%s163 + $0x10] sm:$0xff] %vm372, %v364
        %376 = vst.msk [vmem:[%s163 + $0x18] sm:$0xff] %vm372, %v369
        %s377 = sand.u32 %s93, 1
        %s378 = scalar_lea.sflag [#allocation3], %s377
        %s379 = sand.u32 %s93, 1
        %s380 = smul.addr %s379, 32
        %s381 = scalar_lea.vmem [#allocation2], %s380
        // Predicated region
        $region33: #{patchcore_forward.15} parent=31 // pred_check
          %p382 = pneg %p103
        $region34: #{patchcore_forward.15} parent=31 // pred_check_branch
          %384 = sbr.rel (%p382) target = $region36
        $region35: #{patchcore_forward.15} parent=31 // pred_region
          %s386 = ssub.s32 512, 512
          %387 = vsyncadd %s378, %s386
          %s388 = smul.addr %s17, 4
          %s389 = smul.addr %s388, 128
          %s390 = scalar_lea.hbm %s3, %s389
          %s391 = sshll.u32 %s381, 4
          %s392 = int_to_ptr.vmem [resolvable:$true] %s391
          %397 = dma.vmem_to_hbm [thread:$0]  %s392, 512, %s390, %s378, 128, 128, 8
        $region36: #{patchcore_forward.15} parent=31 // pred_fallthru
          _
      $region32: #{patchcore_forward.15} parent=5 // pred_fallthru
        _
      %p398 = scmp.le.s32.totalorder 2, %s12
      // Predicated region
      $region37: #{patchcore_forward.15} parent=5 // pred_check
        %p399 = pneg %p398
      $region38: #{patchcore_forward.15} parent=5 // pred_check_branch
        %401 = sbr.rel (%p399) target = $region40
      $region39: #{patchcore_forward.15} parent=5 // pred_region
        %s402 = ssub.s32 %s12, 2
        // Predicated region
        $region41: #{patchcore_forward.15} parent=39 // pred_check
          %p403 = pneg %p109
        $region42: #{patchcore_forward.15} parent=39 // pred_check_branch
          %405 = sbr.rel (%p403) target = $region44
        $region43: #{patchcore_forward.15} parent=39 // pred_region
          %s406 = sand.u32 %s94, 1
          %s407 = scalar_lea.sflag [#allocation3], %s406
          %s408 = sand.u32 %s94, 1
          %s409 = smul.addr %s408, 32
          %s410 = scalar_lea.vmem [#allocation2], %s409
          %411 = dma.done %s407, 512
        $region44: #{patchcore_forward.15} parent=39 // pred_fallthru
          _
      $region40: #{patchcore_forward.15} parent=5 // pred_fallthru
        _
    $region6: #{patchcore_forward.15} parent=1 // loop_footer
      %s16 = sadd.s32 1, %s12
    $region7: #{patchcore_forward.15} parent=1 // loop_footer_branch
      %11 = sbr.rel target = $region3
    $region8: #{patchcore_forward.15} parent=1 // loop_exit
      _
    %412 = vsyncpa [#allocation3], 1
    %s413 = scalar_lea.sflag [#allocation3], 1
    %414 = vsyncpa %s413, 1

</llo_original>
